<compile_context>
chip_gen: v6e
topology: v6e:2x2x1
jax: 0.10.0
libtpu: 0.0.40
codegen_flags: <defaults>
</compile_context>

<pallas_src>
import functools

import jax
import jax.numpy as jnp
from jax import lax
from jax.experimental import pallas as pl
from jax.experimental.pallas import tpu as pltpu

EPS = 1e-5
LANE = 128


def _ceil_to(x, m):
    return (x + m - 1) // m * m


def _pad_axis(v, size, axis):
    pad = size - v.shape[axis]
    if pad <= 0:
        return v
    widths = [(0, 0)] * v.ndim
    widths[axis] = (0, pad)
    return jnp.pad(v, widths)


def _vmem_limit_bytes():
    cap = 128 * 1024 * 1024
    try:
        cap = int(pltpu.get_tpu_info().vmem_capacity_bytes)
    except Exception:
        pass
    return min(cap * 3 // 4, 96 * 1024 * 1024)


def _resblock_kernel(*refs, dilation, same_shape):
    d = dilation
    if same_shape:
        (x_hbm, sa_ref, ba_ref, wa_ref, sb1_ref, bb1_ref, wb1_ref,
         sb2_ref, bb2_ref, wb2_ref,
         out_ref, bnrelu_ref, xwin, dma_sem, pad_ref) = refs
        w1_ref = None
    else:
        (x_hbm, sa_ref, ba_ref, wa_ref, sb1_ref, bb1_ref, wb1_ref,
         sb2_ref, bb2_ref, wb2_ref, w1_ref,
         out_ref, bnrelu_ref, xwin, dma_sem, pad_ref) = refs

    _, TH, W, Coutp = out_ref.shape
    Cinp = xwin.shape[3]
    C4p = wa_ref.shape[1]
    C2p = wb2_ref.shape[0]
    THE = TH + 2 * d                       # rows owned by this tile + halo

    n = pl.program_id(0)
    r = pl.program_id(1)
    n_rows = pl.num_programs(1)
    slot = lax.rem(r, 2)

    # ---- manual double-buffered row-window DMA (pattern P4) -----------------
    def window_copy(row_tile, buf_slot):
        row0 = pl.multiple_of(row_tile * TH, TH)
        return pltpu.make_async_copy(
            x_hbm.at[n, pl.ds(row0, THE)], xwin.at[buf_slot], dma_sem.at[buf_slot])

    @pl.when(r == 0)
    def _():
        window_copy(0, 0).start()            # prime slot 0 at the first row tile

    @pl.when(r + 1 < n_rows)
    def _():
        window_copy(r + 1, 1 - slot).start()  # prefetch next row tile

    window_copy(r, slot).wait()
    xe = xwin[slot]                           # (THE, W, Cinp) f32

    # ---- bn_branch2a (folded, inference) + ReLU ------------------------------
    t = jnp.maximum(xe.reshape(THE * W, Cinp) * sa_ref[...] + ba_ref[...], 0.0)
    t_own = t[d * W:(d + TH) * W]             # rows owned by this tile
    bnrelu_ref[0] = t_own.reshape(TH, W, Cinp).astype(bnrelu_ref.dtype)
    t_bf = t.astype(jnp.bfloat16)             # single cast, reused below

    # ---- branch1 (shortcut) ---------------------------------------------------
    if same_shape:
        b1 = xe[d:d + TH].reshape(TH * W, Cinp)          # raw input residual (f32)
    else:
        b1 = jnp.dot(t_bf[d * W:(d + TH) * W], w1_ref[...],
                     preferred_element_type=jnp.float32)  # (TH*W, Coutp)

    # ---- conv_branch2a (1x1) + bn_branch2b1 + ReLU ---------------------------
    a = jnp.dot(t_bf, wa_ref[...], preferred_element_type=jnp.float32)
    a = jnp.maximum(a * sb1_ref[...] + bb1_ref[...], 0.0)

    # ---- conv_branch2b1: 3x3 conv, dilation=d, padding=d ---------------------
    # Write the activation into the interior of the padded scratch; zero the
    # column border every step (cheap) and the row halo only on the first /
    # last row tile (where the wrapper's zero-padded image rows would
    # otherwise leak relu(shift_a) into the 3x3 conv).
    pad_ref[:, d:d + W, :] = a.reshape(THE, W, C4p).astype(jnp.bfloat16)
    zcol = jnp.zeros((THE, d, C4p), jnp.bfloat16)
    pad_ref[:, 0:d, :] = zcol
    pad_ref[:, W + d:W + 2 * d, :] = zcol
    zrow = jnp.zeros((d, W, C4p), jnp.bfloat16)

    @pl.when(r == 0)
    def _():
        pad_ref[0:d, d:d + W, :] = zrow

    @pl.when(r == n_rows - 1)
    def _():
        pad_ref[TH + d:THE, d:d + W, :] = zrow

    # Nine accumulating matmuls (K = C4p per tap) instead of an im2col slab:
    # no (TH*W, 9*C4) staging stores; accumulation stays in f32.
    acc = jnp.zeros((TH * W, C2p), jnp.float32)
    for ky in range(3):
        for kx in range(3):
            win = pad_ref[ky * d:ky * d + TH, kx * d:kx * d + W, :]   # (TH, W, C4p)
            acc = acc + jnp.dot(win.reshape(TH * W, C4p), wb1_ref[ky * 3 + kx],
                                preferred_element_type=jnp.float32)

    # ---- bn_branch2b2 + ReLU + Dropout2d(p=0.0) == identity ------------------
    # TODO(synk): Dropout2d with p > 0 (training-mode RNG channel mask) not implemented.
    # TODO(synk): training-mode BatchNorm (batch statistics) not implemented;
    #             inference-mode (running stats) semantics are used instead.
    h = jnp.maximum(acc * sb2_ref[...] + bb2_ref[...], 0.0)

    # ---- conv_branch2b2 (1x1) + residual add ---------------------------------
    out = jnp.dot(h.astype(jnp.bfloat16), wb2_ref[...],
                  preferred_element_type=jnp.float32) + b1
    out_ref[0] = out.reshape(TH, W, Coutp).astype(out_ref.dtype)


def resblock_bottleneck_forward(x_nchw, params, *, dilation_padding=1,
                                row_tile=32, bnrelu_dtype=jnp.float32):
    """Inference-mode ResBlockBottleneck forward. Inputs/outputs are NCHW/OIHW."""
    d = int(dilation_padding)
    x = jnp.transpose(x_nchw, (0, 2, 3, 1)).astype(jnp.float32)      # NHWC
    N, H, W, Cin = x.shape

    wa_oihw = params["conv_branch2a_w"]          # (C4, Cin, 1, 1)
    wb1_oihw = params["conv_branch2b1_w"]        # (C2, C4, 3, 3)
    wb2_oihw = params["conv_branch2b2_w"]        # (Cout, C2, 1, 1)
    C4, C2, Cout = wa_oihw.shape[0], wb1_oihw.shape[0], wb2_oihw.shape[0]
    same_shape = (Cin == Cout)

    # Lane-dense channel padding (multiples of 128) -> unmasked vst / dense DMA.
    Cinp, C4p = _ceil_to(Cin, LANE), _ceil_to(C4, LANE)
    C2p, Coutp = _ceil_to(C2, LANE), _ceil_to(Cout, LANE)

    # Fold BN running stats into per-channel scale/shift (f32); pad with zeros
    # so padded channels stay exactly zero through the whole block.
    def fold(prefix, Cp):
        g, b = params[prefix + "_gamma"], params[prefix + "_beta"]
        m, v = params[prefix + "_mean"], params[prefix + "_var"]
        s = g / jnp.sqrt(v + EPS)
        scale = _pad_axis(s.astype(jnp.float32), Cp, 0).reshape(1, Cp)
        shift = _pad_axis((b - m * s).astype(jnp.float32), Cp, 0).reshape(1, Cp)
        return scale, shift

    scale_a, shift_a = fold("bn_branch2a", Cinp)
    scale_b1, shift_b1 = fold("bn_branch2b1", C4p)
    scale_b2, shift_b2 = fold("bn_branch2b2", C2p)

    def pad2(w, rows, cols):
        return _pad_axis(_pad_axis(w, rows, 0), cols, 1)

    # Conv weights as (K, N) matmul operands, bf16 for the MXU.
    wa = pad2(jnp.transpose(wa_oihw.reshape(C4, Cin)), Cinp, C4p).astype(jnp.bfloat16)
    wb1 = jnp.transpose(wb1_oihw, (2, 3, 1, 0)).reshape(9, C4, C2)
    wb1 = _pad_axis(_pad_axis(wb1, C4p, 1), C2p, 2).astype(jnp.bfloat16)   # (9, C4p, C2p)
    wb2 = pad2(jnp.transpose(wb2_oihw.reshape(Cout, C2)), C2p, Coutp).astype(jnp.bfloat16)

    inputs = [scale_a, shift_a, wa, scale_b1, shift_b1, wb1, scale_b2, shift_b2, wb2]
    if not same_shape:
        w1 = pad2(jnp.transpose(params["conv_branch1_w"].reshape(Cout, Cin)),
                  Cinp, Coutp).astype(jnp.bfloat16)
        inputs.append(w1)                       # only passed when actually used

    # Row tiling: largest divisor of H that is <= row_tile (keeps halo overhead
    # 2d/TH small without ever falling back to TH == H for awkward H).
    TH = 1
    for t in range(min(row_tile, H), 0, -1):
        if H % t == 0:
            TH = t
            break
    HT = H // TH
    THE = TH + 2 * d

    # Pad channels + halo rows once in HBM; the kernel DMAs (THE, W, Cinp)
    # row windows per step instead of keeping the whole image VMEM-resident.
    xp = _pad_axis(x, Cinp, 3)
    xp = jnp.pad(xp, ((0, 0), (d, d), (0, 0), (0, 0)))     # (N, H+2d, W, Cinp)

    kernel = functools.partial(_resblock_kernel, dilation=d, same_shape=same_shape)

    out_specs = [
        pl.BlockSpec((1, TH, W, Coutp), lambda n, r: (n, r, 0, 0)),
        pl.BlockSpec((1, TH, W, Cinp), lambda n, r: (n, r, 0, 0)),
    ]
    out_shape = [
        jax.ShapeDtypeStruct((N, H, W, Coutp), jnp.float32),
        jax.ShapeDtypeStruct((N, H, W, Cinp), bnrelu_dtype),
    ]
    scratch_shapes = [
        pltpu.VMEM((2, THE, W, Cinp), jnp.float32),        # dbl-buffered input window
        pltpu.SemaphoreType.DMA((2,)),
        pltpu.VMEM((THE, W + 2 * d, C4p), jnp.bfloat16),    # padded 3x3 activation
    ]

    flops = 2 * N * H * W * (Cinp * C4p + 9 * C4p * C2p + C2p * Coutp
                             + (0 if same_shape else Cinp * Coutp))
    bytes_accessed = (int(xp.size) * 4 + N * H * W * (Coutp + Cinp) * 4
                      + sum(int(a.size) * 2 for a in inputs))

    def build(conservative):
        def const_spec(arr):
            nz = (0,) * arr.ndim
            if conservative:
                return pl.BlockSpec(arr.shape, lambda n, r: nz)
            # Constant index map -> single buffer (no wasted second copy).
            return pl.BlockSpec(arr.shape, lambda n, r: nz,
                                pipeline_mode=pl.Buffered(1))

        in_specs = [pl.BlockSpec(memory_space=pl.ANY)] + [const_spec(a) for a in inputs]
        extra = {}
        if not conservative:
            extra["cost_estimate"] = pl.CostEstimate(
                flops=int(flops), transcendentals=0,
                bytes_accessed=int(bytes_accessed))
        return pl.pallas_call(
            kernel,
            out_shape=out_shape,
            grid_spec=pltpu.PrefetchScalarGridSpec(
                num_scalar_prefetch=0,
                grid=(N, HT),
                in_specs=in_specs,
                out_specs=out_specs,
                scratch_shapes=scratch_shapes,
            ),
            compiler_params=pltpu.CompilerParams(
                # Row axis must be "arbitrary": the manual double-buffer
                # prefetch relies on sequential row-tile order per core.
                dimension_semantics=("parallel", "arbitrary"),
                vmem_limit_bytes=_vmem_limit_bytes()),
            **extra,
        )

    try:
        out_nhwc, bnrelu_nhwc = build(conservative=False)(xp, *inputs)
    except Exception:
        # Fallback for Pallas versions without pipeline_mode / cost_estimate.
        out_nhwc, bnrelu_nhwc = build(conservative=True)(xp, *inputs)

    out = jnp.transpose(out_nhwc[..., :Cout], (0, 3, 1, 2))
    x_bn_relu = jnp.transpose(bnrelu_nhwc[..., :Cin], (0, 3, 1, 2)).astype(jnp.float32)
    return out, x_bn_relu


# ------------------------- pure-JAX reference (for checking) -----------------
def _bn_infer(v, g, b, m, var):
    shp = (1, -1, 1, 1)
    return ((v - m.reshape(shp)) / jnp.sqrt(var.reshape(shp) + EPS)
            * g.reshape(shp) + b.reshape(shp))


def _conv_ref(x, w, *, dilation=1, padding=0):
    # Mirrors the kernel's bf16 matmul inputs with f32 accumulation.
    return lax.conv_general_dilated(
        x.astype(jnp.bfloat16), w.astype(jnp.bfloat16),
        window_strides=(1, 1),
        padding=((padding, padding), (padding, padding)),
        rhs_dilation=(dilation, dilation),
        dimension_numbers=("NCHW", "OIHW", "NCHW"),
        preferred_element_type=jnp.float32)


def ref_forward(x, p, *, dilation_padding=1):
    d = dilation_padding
    t = jax.nn.relu(_bn_infer(x, p["bn_branch2a_gamma"], p["bn_branch2a_beta"],
                              p["bn_branch2a_mean"], p["bn_branch2a_var"]))
    x_bn_relu = t
    same_shape = x.shape[1] == p["conv_branch2b2_w"].shape[0]
    b1 = x if same_shape else _conv_ref(t, p["conv_branch1_w"])
    a = _conv_ref(t, p["conv_branch2a_w"])
    a = jax.nn.relu(_bn_infer(a, p["bn_branch2b1_gamma"], p["bn_branch2b1_beta"],
                              p["bn_branch2b1_mean"], p["bn_branch2b1_var"]))
    b = _conv_ref(a, p["conv_branch2b1_w"], dilation=d, padding=d)
    b = jax.nn.relu(_bn_infer(b, p["bn_branch2b2_gamma"], p["bn_branch2b2_beta"],
                              p["bn_branch2b2_mean"], p["bn_branch2b2_var"]))
    b2 = _conv_ref(b, p["conv_branch2b2_w"])
    return b1 + b2, x_bn_relu


if __name__ == "__main__":
    def make_params(key, Cin, Cout):
        C4, C2 = Cout // 4, Cout // 2
        ks = iter(jax.random.split(key, 20))
        p = {}

        def bn(C, name):
            p[name + "_gamma"] = jax.random.uniform(next(ks), (C,), jnp.float32, 0.5, 1.5)
            p[name + "_beta"] = 0.1 * jax.random.normal(next(ks), (C,), jnp.float32)
            p[name + "_mean"] = 0.1 * jax.random.normal(next(ks), (C,), jnp.float32)
            p[name + "_var"] = jax.random.uniform(next(ks), (C,), jnp.float32, 0.5, 1.5)

        bn(Cin, "bn_branch2a")
        bn(C4, "bn_branch2b1")
        bn(C2, "bn_branch2b2")
        p["conv_branch2a_w"] = 0.2 * jax.random.normal(next(ks), (C4, Cin, 1, 1), jnp.float32)
        p["conv_branch2b1_w"] = 0.2 * jax.random.normal(next(ks), (C2, C4, 3, 3), jnp.float32)
        p["conv_branch2b2_w"] = 0.2 * jax.random.normal(next(ks), (Cout, C2, 1, 1), jnp.float32)
        if Cin != Cout:
            p["conv_branch1_w"] = 0.2 * jax.random.normal(next(ks), (Cout, Cin, 1, 1), jnp.float32)
        return p

    key = jax.random.PRNGKey(0)
    k1, k2, k3, k4 = jax.random.split(key, 4)

    # Case 1: channel-expanding block (uses conv_branch1), dilation/padding = 2,
    # two row tiles -> exercises the halo prefetch + boundary zeroing paths.
    N, Cin, Cout, H, W, d = 2, 4, 8, 16, 16, 2
    params = make_params(k1, Cin, Cout)
    x = jax.random.normal(k2, (N, Cin, H, W), jnp.float32)
    out, xbr = resblock_bottleneck_forward(x, params, dilation_padding=d, row_tile=8)
    out = jax.block_until_ready(out)
    xbr = jax.block_until_ready(xbr)
    ref_out, ref_xbr = ref_forward(x, params, dilation_padding=d)
    assert jnp.allclose(out, ref_out, atol=2e-2, rtol=2e-2), "case1 output mismatch"
    assert jnp.allclose(xbr, ref_xbr, atol=1e-4, rtol=1e-4), "case1 bn_relu mismatch"

    # Case 2: same-shape block (identity shortcut), dilation/padding = 1.
    N2, C, H2, W2, d2 = 2, 8, 16, 16, 1
    params2 = make_params(k3, C, C)
    x2 = jax.random.normal(k4, (N2, C, H2, W2), jnp.float32)
    out2, xbr2 = resblock_bottleneck_forward(x2, params2, dilation_padding=d2)
    out2 = jax.block_until_ready(out2)
    xbr2 = jax.block_until_ready(xbr2)
    ref_out2, ref_xbr2 = ref_forward(x2, params2, dilation_padding=d2)
    assert jnp.allclose(out2, ref_out2, atol=2e-2, rtol=2e-2), "case2 output mismatch"
    assert jnp.allclose(xbr2, ref_xbr2, atol=1e-4, rtol=1e-4), "case2 bn_relu mismatch"

    print("KERNEL_OK")
</pallas_src>

<mosaic_0001>
module attributes {stable_mosaic.version = 11 : i64} {
  func.func @_resblock_kernel(%arg0: i32, %arg1: i32, %arg2: memref<2x20x16x128xf32, #tpu.memory_space<any>>, %arg3: memref<1x128xf32, #tpu.memory_space<vmem>>, %arg4: memref<1x128xf32, #tpu.memory_space<vmem>>, %arg5: memref<128x128xbf16, #tpu.memory_space<vmem>>, %arg6: memref<1x128xf32, #tpu.memory_space<vmem>>, %arg7: memref<1x128xf32, #tpu.memory_space<vmem>>, %arg8: memref<9x128x128xbf16, #tpu.memory_space<vmem>>, %arg9: memref<1x128xf32, #tpu.memory_space<vmem>>, %arg10: memref<1x128xf32, #tpu.memory_space<vmem>>, %arg11: memref<128x128xbf16, #tpu.memory_space<vmem>>, %arg12: memref<128x128xbf16, #tpu.memory_space<vmem>>, %arg13: memref<1x8x16x128xf32, #tpu.memory_space<vmem>>, %arg14: memref<1x8x16x128xf32, #tpu.memory_space<vmem>>, %arg15: memref<2x12x16x128xf32, #tpu.memory_space<vmem>>, %arg16: memref<2x!tpu.dma_semaphore, #tpu.memory_space<semaphore_mem>>, %arg17: memref<12x20x128xbf16, #tpu.memory_space<vmem>>) attributes {dimension_semantics = [#tpu.dimension_semantics<parallel>, #tpu.dimension_semantics<arbitrary>], iteration_bounds = array<i64: 2, 2>, scalar_prefetch = 0 : i64, scratch_operands = 3 : i64, tpu.core_type = #tpu.core_type<tc>, window_params = [{}, {pipeline_mode = #tpu.pipeline_mode<synchronous>, transform_indices = @transform_1, window_bounds = array<i64: 1, 128>}, {pipeline_mode = #tpu.pipeline_mode<synchronous>, transform_indices = @transform_2, window_bounds = array<i64: 1, 128>}, {pipeline_mode = #tpu.pipeline_mode<synchronous>, transform_indices = @transform_3, window_bounds = array<i64: 128, 128>}, {pipeline_mode = #tpu.pipeline_mode<synchronous>, transform_indices = @transform_4, window_bounds = array<i64: 1, 128>}, {pipeline_mode = #tpu.pipeline_mode<synchronous>, transform_indices = @transform_5, window_bounds = array<i64: 1, 128>}, {pipeline_mode = #tpu.pipeline_mode<synchronous>, transform_indices = @transform_6, window_bounds = array<i64: 9, 128, 128>}, {pipeline_mode = #tpu.pipeline_mode<synchronous>, transform_indices = @transform_7, window_bounds = array<i64: 1, 128>}, {pipeline_mode = #tpu.pipeline_mode<synchronous>, transform_indices = @transform_8, window_bounds = array<i64: 1, 128>}, {pipeline_mode = #tpu.pipeline_mode<synchronous>, transform_indices = @transform_9, window_bounds = array<i64: 128, 128>}, {pipeline_mode = #tpu.pipeline_mode<synchronous>, transform_indices = @transform_10, window_bounds = array<i64: 128, 128>}, {transform_indices = @transform_11, window_bounds = array<i64: 1, 8, 16, 128>}, {transform_indices = @transform_12, window_bounds = array<i64: 1, 8, 16, 128>}]} {
    %c2_i32 = arith.constant 2 : i32
    %0 = arith.remsi %arg1, %c2_i32 : i32
    %c0_i32 = arith.constant 0 : i32
    %1 = arith.cmpi eq, %arg1, %c0_i32 : i32
    %2 = arith.extui %1 : i1 to i32
    %c0_i32_0 = arith.constant 0 : i32
    %3 = arith.cmpi ne, %2, %c0_i32_0 : i32
    scf.if %3 {
      %c0_i32_111 = arith.constant 0 : i32
      %131 = tpu.assume_multiple %c0_i32_111, 8 : i32
      %c0_i32_112 = arith.constant 0 : i32
      %c0_i32_113 = arith.constant 0 : i32
      %c0_i32_114 = arith.constant 0 : i32
      %c0_i32_115 = arith.constant 0 : i32
      %132 = tpu.memref_slice %arg2[%arg0, %131, %c0_i32_114, %c0_i32_115] : memref<2x20x16x128xf32, #tpu.memory_space<any>> -> memref<1x12x16x128xf32, #tpu.memory_space<any>>
      %133 = tpu.memref_squeeze %132 : memref<1x12x16x128xf32, #tpu.memory_space<any>> -> memref<12x16x128xf32, #tpu.memory_space<any>>
      %c0_i32_116 = arith.constant 0 : i32
      %c0_i32_117 = arith.constant 0 : i32
      %c0_i32_118 = arith.constant 0 : i32
      %134 = tpu.memref_slice %arg15[%c0_i32_112, %c0_i32_116, %c0_i32_117, %c0_i32_118] : memref<2x12x16x128xf32, #tpu.memory_space<vmem>> -> memref<1x12x16x128xf32, #tpu.memory_space<vmem>>
      %135 = tpu.memref_squeeze %134 : memref<1x12x16x128xf32, #tpu.memory_space<vmem>> -> memref<12x16x128xf32, #tpu.memory_space<vmem>>
      %136 = tpu.memref_slice %arg16[%c0_i32_113] : memref<2x!tpu.dma_semaphore, #tpu.memory_space<semaphore_mem>> -> memref<1x!tpu.dma_semaphore, #tpu.memory_space<semaphore_mem>>
      %137 = tpu.memref_squeeze %136 : memref<1x!tpu.dma_semaphore, #tpu.memory_space<semaphore_mem>> -> memref<!tpu.dma_semaphore, #tpu.memory_space<semaphore_mem>>
      tpu.enqueue_dma source(%133 : memref<12x16x128xf32, #tpu.memory_space<any>>) target(%135 : memref<12x16x128xf32, #tpu.memory_space<vmem>>) target_semaphore(%137 : memref<!tpu.dma_semaphore, #tpu.memory_space<semaphore_mem>>)
    } else {
    }
    %c1_i32 = arith.constant 1 : i32
    %4 = arith.addi %arg1, %c1_i32 : i32
    %c2_i32_1 = arith.constant 2 : i32
    %5 = arith.cmpi slt, %4, %c2_i32_1 : i32
    %6 = arith.extui %5 : i1 to i32
    %c0_i32_2 = arith.constant 0 : i32
    %7 = arith.cmpi ne, %6, %c0_i32_2 : i32
    scf.if %7 {
      %c1_i32_111 = arith.constant 1 : i32
      %131 = arith.addi %arg1, %c1_i32_111 : i32
      %c1_i32_112 = arith.constant 1 : i32
      %132 = arith.subi %c1_i32_112, %0 : i32
      %c8_i32_113 = arith.constant 8 : i32
      %133 = arith.muli %131, %c8_i32_113 : i32
      %134 = tpu.assume_multiple %133, 8 : i32
      %c0_i32_114 = arith.constant 0 : i32
      %c0_i32_115 = arith.constant 0 : i32
      %135 = tpu.memref_slice %arg2[%arg0, %134, %c0_i32_114, %c0_i32_115] : memref<2x20x16x128xf32, #tpu.memory_space<any>> -> memref<1x12x16x128xf32, #tpu.memory_space<any>>
      %136 = tpu.memref_squeeze %135 : memref<1x12x16x128xf32, #tpu.memory_space<any>> -> memref<12x16x128xf32, #tpu.memory_space<any>>
      %c0_i32_116 = arith.constant 0 : i32
      %c0_i32_117 = arith.constant 0 : i32
      %c0_i32_118 = arith.constant 0 : i32
      %137 = tpu.memref_slice %arg15[%132, %c0_i32_116, %c0_i32_117, %c0_i32_118] : memref<2x12x16x128xf32, #tpu.memory_space<vmem>> -> memref<1x12x16x128xf32, #tpu.memory_space<vmem>>
      %138 = tpu.memref_squeeze %137 : memref<1x12x16x128xf32, #tpu.memory_space<vmem>> -> memref<12x16x128xf32, #tpu.memory_space<vmem>>
      %139 = tpu.memref_slice %arg16[%132] : memref<2x!tpu.dma_semaphore, #tpu.memory_space<semaphore_mem>> -> memref<1x!tpu.dma_semaphore, #tpu.memory_space<semaphore_mem>>
      %140 = tpu.memref_squeeze %139 : memref<1x!tpu.dma_semaphore, #tpu.memory_space<semaphore_mem>> -> memref<!tpu.dma_semaphore, #tpu.memory_space<semaphore_mem>>
      tpu.enqueue_dma source(%136 : memref<12x16x128xf32, #tpu.memory_space<any>>) target(%138 : memref<12x16x128xf32, #tpu.memory_space<vmem>>) target_semaphore(%140 : memref<!tpu.dma_semaphore, #tpu.memory_space<semaphore_mem>>)
    } else {
    }
    %c8_i32 = arith.constant 8 : i32
    %8 = arith.muli %arg1, %c8_i32 : i32
    %9 = tpu.assume_multiple %8, 8 : i32
    %c0_i32_3 = arith.constant 0 : i32
    %c0_i32_4 = arith.constant 0 : i32
    %10 = tpu.memref_slice %arg2[%arg0, %9, %c0_i32_3, %c0_i32_4] : memref<2x20x16x128xf32, #tpu.memory_space<any>> -> memref<1x12x16x128xf32, #tpu.memory_space<any>>
    %11 = tpu.memref_squeeze %10 : memref<1x12x16x128xf32, #tpu.memory_space<any>> -> memref<12x16x128xf32, #tpu.memory_space<any>>
    %c0_i32_5 = arith.constant 0 : i32
    %c0_i32_6 = arith.constant 0 : i32
    %c0_i32_7 = arith.constant 0 : i32
    %12 = tpu.memref_slice %arg15[%0, %c0_i32_5, %c0_i32_6, %c0_i32_7] : memref<2x12x16x128xf32, #tpu.memory_space<vmem>> -> memref<1x12x16x128xf32, #tpu.memory_space<vmem>>
    %13 = tpu.memref_squeeze %12 : memref<1x12x16x128xf32, #tpu.memory_space<vmem>> -> memref<12x16x128xf32, #tpu.memory_space<vmem>>
    %14 = tpu.memref_slice %arg16[%0] : memref<2x!tpu.dma_semaphore, #tpu.memory_space<semaphore_mem>> -> memref<1x!tpu.dma_semaphore, #tpu.memory_space<semaphore_mem>>
    %15 = tpu.memref_squeeze %14 : memref<1x!tpu.dma_semaphore, #tpu.memory_space<semaphore_mem>> -> memref<!tpu.dma_semaphore, #tpu.memory_space<semaphore_mem>>
    tpu.wait_dma2 semaphore(%15 : memref<!tpu.dma_semaphore, #tpu.memory_space<semaphore_mem>>) src(%11 : memref<12x16x128xf32, #tpu.memory_space<any>>) dst(%13 : memref<12x16x128xf32, #tpu.memory_space<vmem>>)
    %16 = arith.index_cast %0 : i32 to index
    %c0 = arith.constant 0 : index
    %c0_8 = arith.constant 0 : index
    %c0_9 = arith.constant 0 : index
    %17 = vector.load %arg15[%16, %c0, %c0_8, %c0_9] : memref<2x12x16x128xf32, #tpu.memory_space<vmem>>, vector<1x12x16x128xf32>
    %18 = vector.shape_cast %17 : vector<1x12x16x128xf32> to vector<12x16x128xf32>
    %19 = vector.shape_cast %18 : vector<12x16x128xf32> to vector<192x128xf32>
    %c0_10 = arith.constant 0 : index
    %c0_11 = arith.constant 0 : index
    %20 = vector.load %arg3[%c0_10, %c0_11] : memref<1x128xf32, #tpu.memory_space<vmem>>, vector<1x128xf32>
    %21 = vector.broadcast %20 : vector<1x128xf32> to vector<192x128xf32>
    %22 = arith.mulf %19, %21 : vector<192x128xf32>
    %c0_12 = arith.constant 0 : index
    %c0_13 = arith.constant 0 : index
    %23 = vector.load %arg4[%c0_12, %c0_13] : memref<1x128xf32, #tpu.memory_space<vmem>>, vector<1x128xf32>
    %24 = vector.broadcast %23 : vector<1x128xf32> to vector<192x128xf32>
    %25 = arith.addf %22, %24 : vector<192x128xf32>
    %cst = arith.constant 0.000000e+00 : f32
    %26 = vector.broadcast %cst : f32 to vector<192x128xf32>
    %27 = arith.maximumf %25, %26 : vector<192x128xf32>
    %28 = vector.extract_strided_slice %27 {offsets = [32, 0], sizes = [128, 128], strides = [1, 1]} : vector<192x128xf32> to vector<128x128xf32>
    %29 = vector.shape_cast %28 : vector<128x128xf32> to vector<8x16x128xf32>
    %c0_14 = arith.constant 0 : index
    %c0_15 = arith.constant 0 : index
    %c0_16 = arith.constant 0 : index
    %c0_17 = arith.constant 0 : index
    %30 = vector.load %arg14[%c0_14, %c0_15, %c0_16, %c0_17] : memref<1x8x16x128xf32, #tpu.memory_space<vmem>>, vector<1x8x16x128xf32>
    %31 = vector.shape_cast %30 : vector<1x8x16x128xf32> to vector<8x16x128xf32>
    %32 = vector.shape_cast %29 : vector<8x16x128xf32> to vector<1x8x16x128xf32>
    tpu.vector_store %arg14[%c0_14, %c0_15, %c0_16, %c0_17], %32 {strides = array<i32>} : memref<1x8x16x128xf32, #tpu.memory_space<vmem>>, vector<1x8x16x128xf32>,
    %33 = arith.truncf %27 : vector<192x128xf32> to vector<192x128xbf16>
    %34 = vector.extract_strided_slice %33 {offsets = [32, 0], sizes = [128, 128], strides = [1, 1]} : vector<192x128xbf16> to vector<128x128xbf16>
    %c0_18 = arith.constant 0 : index
    %c0_19 = arith.constant 0 : index
    %35 = vector.load %arg12[%c0_18, %c0_19] : memref<128x128xbf16, #tpu.memory_space<vmem>>, vector<128x128xbf16>
    %cst_20 = arith.constant dense<0.000000e+00> : vector<128x128xf32>
    %36 = tpu.matmul %34, %35, %cst_20 {dimension_numbers = #tpu.dot_dimension_numbers<[1], [0], [0], [1], [0, 0, 1, 1], [], []>} : vector<128x128xbf16>, vector<128x128xbf16>, vector<128x128xf32> -> vector<128x128xf32>
    %c0_21 = arith.constant 0 : index
    %c0_22 = arith.constant 0 : index
    %37 = vector.load %arg5[%c0_21, %c0_22] : memref<128x128xbf16, #tpu.memory_space<vmem>>, vector<128x128xbf16>
    %cst_23 = arith.constant dense<0.000000e+00> : vector<192x128xf32>
    %38 = tpu.matmul %33, %37, %cst_23 {dimension_numbers = #tpu.dot_dimension_numbers<[1], [0], [0], [1], [0, 0, 1, 1], [], []>} : vector<192x128xbf16>, vector<128x128xbf16>, vector<192x128xf32> -> vector<192x128xf32>
    %c0_24 = arith.constant 0 : index
    %c0_25 = arith.constant 0 : index
    %39 = vector.load %arg6[%c0_24, %c0_25] : memref<1x128xf32, #tpu.memory_space<vmem>>, vector<1x128xf32>
    %40 = vector.broadcast %39 : vector<1x128xf32> to vector<192x128xf32>
    %41 = arith.mulf %38, %40 : vector<192x128xf32>
    %c0_26 = arith.constant 0 : index
    %c0_27 = arith.constant 0 : index
    %42 = vector.load %arg7[%c0_26, %c0_27] : memref<1x128xf32, #tpu.memory_space<vmem>>, vector<1x128xf32>
    %43 = vector.broadcast %42 : vector<1x128xf32> to vector<192x128xf32>
    %44 = arith.addf %41, %43 : vector<192x128xf32>
    %cst_28 = arith.constant 0.000000e+00 : f32
    %45 = vector.broadcast %cst_28 : f32 to vector<192x128xf32>
    %46 = arith.maximumf %44, %45 : vector<192x128xf32>
    %47 = vector.shape_cast %46 : vector<192x128xf32> to vector<12x16x128xf32>
    %48 = arith.truncf %47 : vector<12x16x128xf32> to vector<12x16x128xbf16>
    %c0_29 = arith.constant 0 : index
    %c2 = arith.constant 2 : index
    %c0_30 = arith.constant 0 : index
    %49 = vector.load %arg17[%c0_29, %c2, %c0_30] : memref<12x20x128xbf16, #tpu.memory_space<vmem>>, vector<12x16x128xbf16>
    tpu.vector_store %arg17[%c0_29, %c2, %c0_30], %48 {strides = array<i32>} : memref<12x20x128xbf16, #tpu.memory_space<vmem>>, vector<12x16x128xbf16>,
    %cst_31 = arith.constant 0.000000e+00 : bf16
    %50 = vector.broadcast %cst_31 : bf16 to vector<12x2x128xbf16>
    %c0_32 = arith.constant 0 : index
    %c0_33 = arith.constant 0 : index
    %c0_34 = arith.constant 0 : index
    %51 = vector.load %arg17[%c0_32, %c0_33, %c0_34] : memref<12x20x128xbf16, #tpu.memory_space<vmem>>, vector<12x2x128xbf16>
    tpu.vector_store %arg17[%c0_32, %c0_33, %c0_34], %50 {strides = array<i32>} : memref<12x20x128xbf16, #tpu.memory_space<vmem>>, vector<12x2x128xbf16>,
    %c0_35 = arith.constant 0 : index
    %c18 = arith.constant 18 : index
    %c0_36 = arith.constant 0 : index
    %52 = vector.load %arg17[%c0_35, %c18, %c0_36] : memref<12x20x128xbf16, #tpu.memory_space<vmem>>, vector<12x2x128xbf16>
    tpu.vector_store %arg17[%c0_35, %c18, %c0_36], %50 {strides = array<i32>} : memref<12x20x128xbf16, #tpu.memory_space<vmem>>, vector<12x2x128xbf16>,
    %cst_37 = arith.constant 0.000000e+00 : bf16
    %53 = vector.broadcast %cst_37 : bf16 to vector<2x16x128xbf16>
    %c0_i32_38 = arith.constant 0 : i32
    %54 = arith.cmpi eq, %arg1, %c0_i32_38 : i32
    %55 = arith.extui %54 : i1 to i32
    %c0_i32_39 = arith.constant 0 : i32
    %56 = arith.cmpi ne, %55, %c0_i32_39 : i32
    scf.if %56 {
      %c0_111 = arith.constant 0 : index
      %c2_112 = arith.constant 2 : index
      %c0_113 = arith.constant 0 : index
      %131 = vector.load %arg17[%c0_111, %c2_112, %c0_113] : memref<12x20x128xbf16, #tpu.memory_space<vmem>>, vector<2x16x128xbf16>
      tpu.vector_store %arg17[%c0_111, %c2_112, %c0_113], %53 {strides = array<i32>} : memref<12x20x128xbf16, #tpu.memory_space<vmem>>, vector<2x16x128xbf16>,
    } else {
    }
    %c1_i32_40 = arith.constant 1 : i32
    %57 = arith.cmpi eq, %arg1, %c1_i32_40 : i32
    %58 = arith.extui %57 : i1 to i32
    %c0_i32_41 = arith.constant 0 : i32
    %59 = arith.cmpi ne, %58, %c0_i32_41 : i32
    scf.if %59 {
      %c10 = arith.constant 10 : index
      %c2_111 = arith.constant 2 : index
      %c0_112 = arith.constant 0 : index
      %131 = vector.load %arg17[%c10, %c2_111, %c0_112] : memref<12x20x128xbf16, #tpu.memory_space<vmem>>, vector<2x16x128xbf16>
      tpu.vector_store %arg17[%c10, %c2_111, %c0_112], %53 {strides = array<i32>} : memref<12x20x128xbf16, #tpu.memory_space<vmem>>, vector<2x16x128xbf16>,
    } else {
    }
    %cst_42 = arith.constant 0.000000e+00 : f32
    %60 = vector.broadcast %cst_42 : f32 to vector<128x128xf32>
    %c0_43 = arith.constant 0 : index
    %c0_44 = arith.constant 0 : index
    %c0_45 = arith.constant 0 : index
    %61 = vector.load %arg17[%c0_43, %c0_44, %c0_45] : memref<12x20x128xbf16, #tpu.memory_space<vmem>>, vector<8x16x128xbf16>
    %62 = vector.shape_cast %61 : vector<8x16x128xbf16> to vector<128x128xbf16>
    %c0_46 = arith.constant 0 : index
    %c0_47 = arith.constant 0 : index
    %c0_48 = arith.constant 0 : index
    %63 = vector.load %arg8[%c0_46, %c0_47, %c0_48] : memref<9x128x128xbf16, #tpu.memory_space<vmem>>, vector<1x128x128xbf16>
    %64 = vector.shape_cast %63 : vector<1x128x128xbf16> to vector<128x128xbf16>
    %cst_49 = arith.constant dense<0.000000e+00> : vector<128x128xf32>
    %65 = tpu.matmul %62, %64, %cst_49 {dimension_numbers = #tpu.dot_dimension_numbers<[1], [0], [0], [1], [0, 0, 1, 1], [], []>} : vector<128x128xbf16>, vector<128x128xbf16>, vector<128x128xf32> -> vector<128x128xf32>
    %66 = arith.addf %60, %65 : vector<128x128xf32>
    %c0_50 = arith.constant 0 : index
    %c2_51 = arith.constant 2 : index
    %c0_52 = arith.constant 0 : index
    %67 = vector.load %arg17[%c0_50, %c2_51, %c0_52] : memref<12x20x128xbf16, #tpu.memory_space<vmem>>, vector<8x16x128xbf16>
    %68 = vector.shape_cast %67 : vector<8x16x128xbf16> to vector<128x128xbf16>
    %c1 = arith.constant 1 : index
    %c0_53 = arith.constant 0 : index
    %c0_54 = arith.constant 0 : index
    %69 = vector.load %arg8[%c1, %c0_53, %c0_54] : memref<9x128x128xbf16, #tpu.memory_space<vmem>>, vector<1x128x128xbf16>
    %70 = vector.shape_cast %69 : vector<1x128x128xbf16> to vector<128x128xbf16>
    %cst_55 = arith.constant dense<0.000000e+00> : vector<128x128xf32>
    %71 = tpu.matmul %68, %70, %cst_55 {dimension_numbers = #tpu.dot_dimension_numbers<[1], [0], [0], [1], [0, 0, 1, 1], [], []>} : vector<128x128xbf16>, vector<128x128xbf16>, vector<128x128xf32> -> vector<128x128xf32>
    %72 = arith.addf %66, %71 : vector<128x128xf32>
    %c0_56 = arith.constant 0 : index
    %c4 = arith.constant 4 : index
    %c0_57 = arith.constant 0 : index
    %73 = vector.load %arg17[%c0_56, %c4, %c0_57] : memref<12x20x128xbf16, #tpu.memory_space<vmem>>, vector<8x16x128xbf16>
    %74 = vector.shape_cast %73 : vector<8x16x128xbf16> to vector<128x128xbf16>
    %c2_58 = arith.constant 2 : index
    %c0_59 = arith.constant 0 : index
    %c0_60 = arith.constant 0 : index
    %75 = vector.load %arg8[%c2_58, %c0_59, %c0_60] : memref<9x128x128xbf16, #tpu.memory_space<vmem>>, vector<1x128x128xbf16>
    %76 = vector.shape_cast %75 : vector<1x128x128xbf16> to vector<128x128xbf16>
    %cst_61 = arith.constant dense<0.000000e+00> : vector<128x128xf32>
    %77 = tpu.matmul %74, %76, %cst_61 {dimension_numbers = #tpu.dot_dimension_numbers<[1], [0], [0], [1], [0, 0, 1, 1], [], []>} : vector<128x128xbf16>, vector<128x128xbf16>, vector<128x128xf32> -> vector<128x128xf32>
    %78 = arith.addf %72, %77 : vector<128x128xf32>
    %c2_62 = arith.constant 2 : index
    %c0_63 = arith.constant 0 : index
    %c0_64 = arith.constant 0 : index
    %79 = vector.load %arg17[%c2_62, %c0_63, %c0_64] : memref<12x20x128xbf16, #tpu.memory_space<vmem>>, vector<8x16x128xbf16>
    %80 = vector.shape_cast %79 : vector<8x16x128xbf16> to vector<128x128xbf16>
    %c3 = arith.constant 3 : index
    %c0_65 = arith.constant 0 : index
    %c0_66 = arith.constant 0 : index
    %81 = vector.load %arg8[%c3, %c0_65, %c0_66] : memref<9x128x128xbf16, #tpu.memory_space<vmem>>, vector<1x128x128xbf16>
    %82 = vector.shape_cast %81 : vector<1x128x128xbf16> to vector<128x128xbf16>
    %cst_67 = arith.constant dense<0.000000e+00> : vector<128x128xf32>
    %83 = tpu.matmul %80, %82, %cst_67 {dimension_numbers = #tpu.dot_dimension_numbers<[1], [0], [0], [1], [0, 0, 1, 1], [], []>} : vector<128x128xbf16>, vector<128x128xbf16>, vector<128x128xf32> -> vector<128x128xf32>
    %84 = arith.addf %78, %83 : vector<128x128xf32>
    %c2_68 = arith.constant 2 : index
    %c2_69 = arith.constant 2 : index
    %c0_70 = arith.constant 0 : index
    %85 = vector.load %arg17[%c2_68, %c2_69, %c0_70] : memref<12x20x128xbf16, #tpu.memory_space<vmem>>, vector<8x16x128xbf16>
    %86 = vector.shape_cast %85 : vector<8x16x128xbf16> to vector<128x128xbf16>
    %c4_71 = arith.constant 4 : index
    %c0_72 = arith.constant 0 : index
    %c0_73 = arith.constant 0 : index
    %87 = vector.load %arg8[%c4_71, %c0_72, %c0_73] : memref<9x128x128xbf16, #tpu.memory_space<vmem>>, vector<1x128x128xbf16>
    %88 = vector.shape_cast %87 : vector<1x128x128xbf16> to vector<128x128xbf16>
    %cst_74 = arith.constant dense<0.000000e+00> : vector<128x128xf32>
    %89 = tpu.matmul %86, %88, %cst_74 {dimension_numbers = #tpu.dot_dimension_numbers<[1], [0], [0], [1], [0, 0, 1, 1], [], []>} : vector<128x128xbf16>, vector<128x128xbf16>, vector<128x128xf32> -> vector<128x128xf32>
    %90 = arith.addf %84, %89 : vector<128x128xf32>
    %c2_75 = arith.constant 2 : index
    %c4_76 = arith.constant 4 : index
    %c0_77 = arith.constant 0 : index
    %91 = vector.load %arg17[%c2_75, %c4_76, %c0_77] : memref<12x20x128xbf16, #tpu.memory_space<vmem>>, vector<8x16x128xbf16>
    %92 = vector.shape_cast %91 : vector<8x16x128xbf16> to vector<128x128xbf16>
    %c5 = arith.constant 5 : index
    %c0_78 = arith.constant 0 : index
    %c0_79 = arith.constant 0 : index
    %93 = vector.load %arg8[%c5, %c0_78, %c0_79] : memref<9x128x128xbf16, #tpu.memory_space<vmem>>, vector<1x128x128xbf16>
    %94 = vector.shape_cast %93 : vector<1x128x128xbf16> to vector<128x128xbf16>
    %cst_80 = arith.constant dense<0.000000e+00> : vector<128x128xf32>
    %95 = tpu.matmul %92, %94, %cst_80 {dimension_numbers = #tpu.dot_dimension_numbers<[1], [0], [0], [1], [0, 0, 1, 1], [], []>} : vector<128x128xbf16>, vector<128x128xbf16>, vector<128x128xf32> -> vector<128x128xf32>
    %96 = arith.addf %90, %95 : vector<128x128xf32>
    %c4_81 = arith.constant 4 : index
    %c0_82 = arith.constant 0 : index
    %c0_83 = arith.constant 0 : index
    %97 = vector.load %arg17[%c4_81, %c0_82, %c0_83] : memref<12x20x128xbf16, #tpu.memory_space<vmem>>, vector<8x16x128xbf16>
    %98 = vector.shape_cast %97 : vector<8x16x128xbf16> to vector<128x128xbf16>
    %c6 = arith.constant 6 : index
    %c0_84 = arith.constant 0 : index
    %c0_85 = arith.constant 0 : index
    %99 = vector.load %arg8[%c6, %c0_84, %c0_85] : memref<9x128x128xbf16, #tpu.memory_space<vmem>>, vector<1x128x128xbf16>
    %100 = vector.shape_cast %99 : vector<1x128x128xbf16> to vector<128x128xbf16>
    %cst_86 = arith.constant dense<0.000000e+00> : vector<128x128xf32>
    %101 = tpu.matmul %98, %100, %cst_86 {dimension_numbers = #tpu.dot_dimension_numbers<[1], [0], [0], [1], [0, 0, 1, 1], [], []>} : vector<128x128xbf16>, vector<128x128xbf16>, vector<128x128xf32> -> vector<128x128xf32>
    %102 = arith.addf %96, %101 : vector<128x128xf32>
    %c4_87 = arith.constant 4 : index
    %c2_88 = arith.constant 2 : index
    %c0_89 = arith.constant 0 : index
    %103 = vector.load %arg17[%c4_87, %c2_88, %c0_89] : memref<12x20x128xbf16, #tpu.memory_space<vmem>>, vector<8x16x128xbf16>
    %104 = vector.shape_cast %103 : vector<8x16x128xbf16> to vector<128x128xbf16>
    %c7 = arith.constant 7 : index
    %c0_90 = arith.constant 0 : index
    %c0_91 = arith.constant 0 : index
    %105 = vector.load %arg8[%c7, %c0_90, %c0_91] : memref<9x128x128xbf16, #tpu.memory_space<vmem>>, vector<1x128x128xbf16>
    %106 = vector.shape_cast %105 : vector<1x128x128xbf16> to vector<128x128xbf16>
    %cst_92 = arith.constant dense<0.000000e+00> : vector<128x128xf32>
    %107 = tpu.matmul %104, %106, %cst_92 {dimension_numbers = #tpu.dot_dimension_numbers<[1], [0], [0], [1], [0, 0, 1, 1], [], []>} : vector<128x128xbf16>, vector<128x128xbf16>, vector<128x128xf32> -> vector<128x128xf32>
    %108 = arith.addf %102, %107 : vector<128x128xf32>
    %c4_93 = arith.constant 4 : index
    %c4_94 = arith.constant 4 : index
    %c0_95 = arith.constant 0 : index
    %109 = vector.load %arg17[%c4_93, %c4_94, %c0_95] : memref<12x20x128xbf16, #tpu.memory_space<vmem>>, vector<8x16x128xbf16>
    %110 = vector.shape_cast %109 : vector<8x16x128xbf16> to vector<128x128xbf16>
    %c8 = arith.constant 8 : index
    %c0_96 = arith.constant 0 : index
    %c0_97 = arith.constant 0 : index
    %111 = vector.load %arg8[%c8, %c0_96, %c0_97] : memref<9x128x128xbf16, #tpu.memory_space<vmem>>, vector<1x128x128xbf16>
    %112 = vector.shape_cast %111 : vector<1x128x128xbf16> to vector<128x128xbf16>
    %cst_98 = arith.constant dense<0.000000e+00> : vector<128x128xf32>
    %113 = tpu.matmul %110, %112, %cst_98 {dimension_numbers = #tpu.dot_dimension_numbers<[1], [0], [0], [1], [0, 0, 1, 1], [], []>} : vector<128x128xbf16>, vector<128x128xbf16>, vector<128x128xf32> -> vector<128x128xf32>
    %114 = arith.addf %108, %113 : vector<128x128xf32>
    %c0_99 = arith.constant 0 : index
    %c0_100 = arith.constant 0 : index
    %115 = vector.load %arg9[%c0_99, %c0_100] : memref<1x128xf32, #tpu.memory_space<vmem>>, vector<1x128xf32>
    %116 = vector.broadcast %115 : vector<1x128xf32> to vector<128x128xf32>
    %117 = arith.mulf %114, %116 : vector<128x128xf32>
    %c0_101 = arith.constant 0 : index
    %c0_102 = arith.constant 0 : index
    %118 = vector.load %arg10[%c0_101, %c0_102] : memref<1x128xf32, #tpu.memory_space<vmem>>, vector<1x128xf32>
    %119 = vector.broadcast %118 : vector<1x128xf32> to vector<128x128xf32>
    %120 = arith.addf %117, %119 : vector<128x128xf32>
    %cst_103 = arith.constant 0.000000e+00 : f32
    %121 = vector.broadcast %cst_103 : f32 to vector<128x128xf32>
    %122 = arith.maximumf %120, %121 : vector<128x128xf32>
    %123 = arith.truncf %122 : vector<128x128xf32> to vector<128x128xbf16>
    %c0_104 = arith.constant 0 : index
    %c0_105 = arith.constant 0 : index
    %124 = vector.load %arg11[%c0_104, %c0_105] : memref<128x128xbf16, #tpu.memory_space<vmem>>, vector<128x128xbf16>
    %cst_106 = arith.constant dense<0.000000e+00> : vector<128x128xf32>
    %125 = tpu.matmul %123, %124, %cst_106 {dimension_numbers = #tpu.dot_dimension_numbers<[1], [0], [0], [1], [0, 0, 1, 1], [], []>} : vector<128x128xbf16>, vector<128x128xbf16>, vector<128x128xf32> -> vector<128x128xf32>
    %126 = arith.addf %125, %36 : vector<128x128xf32>
    %127 = vector.shape_cast %126 : vector<128x128xf32> to vector<8x16x128xf32>
    %c0_107 = arith.constant 0 : index
    %c0_108 = arith.constant 0 : index
    %c0_109 = arith.constant 0 : index
    %c0_110 = arith.constant 0 : index
    %128 = vector.load %arg13[%c0_107, %c0_108, %c0_109, %c0_110] : memref<1x8x16x128xf32, #tpu.memory_space<vmem>>, vector<1x8x16x128xf32>
    %129 = vector.shape_cast %128 : vector<1x8x16x128xf32> to vector<8x16x128xf32>
    %130 = vector.shape_cast %127 : vector<8x16x128xf32> to vector<1x8x16x128xf32>
    tpu.vector_store %arg13[%c0_107, %c0_108, %c0_109, %c0_110], %130 {strides = array<i32>} : memref<1x8x16x128xf32, #tpu.memory_space<vmem>>, vector<1x8x16x128xf32>,
    return
  }
  func.func @transform_1(%arg0: i32, %arg1: i32) -> (i32, i32) {
    %c0_i32 = arith.constant 0 : i32
    %c0_i32_0 = arith.constant 0 : i32
    %c0_i32_1 = arith.constant 0 : i32
    return %c0_i32, %c0_i32_0 : i32, i32
  }
  func.func @transform_2(%arg0: i32, %arg1: i32) -> (i32, i32) {
    %c0_i32 = arith.constant 0 : i32
    %c0_i32_0 = arith.constant 0 : i32
    %c0_i32_1 = arith.constant 0 : i32
    return %c0_i32, %c0_i32_0 : i32, i32
  }
  func.func @transform_3(%arg0: i32, %arg1: i32) -> (i32, i32) {
    %c0_i32 = arith.constant 0 : i32
    %c0_i32_0 = arith.constant 0 : i32
    %c0_i32_1 = arith.constant 0 : i32
    return %c0_i32, %c0_i32_0 : i32, i32
  }
  func.func @transform_4(%arg0: i32, %arg1: i32) -> (i32, i32) {
    %c0_i32 = arith.constant 0 : i32
    %c0_i32_0 = arith.constant 0 : i32
    %c0_i32_1 = arith.constant 0 : i32
    return %c0_i32, %c0_i32_0 : i32, i32
  }
  func.func @transform_5(%arg0: i32, %arg1: i32) -> (i32, i32) {
    %c0_i32 = arith.constant 0 : i32
    %c0_i32_0 = arith.constant 0 : i32
    %c0_i32_1 = arith.constant 0 : i32
    return %c0_i32, %c0_i32_0 : i32, i32
  }
  func.func @transform_6(%arg0: i32, %arg1: i32) -> (i32, i32, i32) {
    %c0_i32 = arith.constant 0 : i32
    %c0_i32_0 = arith.constant 0 : i32
    %c0_i32_1 = arith.constant 0 : i32
    %c0_i32_2 = arith.constant 0 : i32
    return %c0_i32, %c0_i32_0, %c0_i32_1 : i32, i32, i32
  }
  func.func @transform_7(%arg0: i32, %arg1: i32) -> (i32, i32) {
    %c0_i32 = arith.constant 0 : i32
    %c0_i32_0 = arith.constant 0 : i32
    %c0_i32_1 = arith.constant 0 : i32
    return %c0_i32, %c0_i32_0 : i32, i32
  }
  func.func @transform_8(%arg0: i32, %arg1: i32) -> (i32, i32) {
    %c0_i32 = arith.constant 0 : i32
    %c0_i32_0 = arith.constant 0 : i32
    %c0_i32_1 = arith.constant 0 : i32
    return %c0_i32, %c0_i32_0 : i32, i32
  }
  func.func @transform_9(%arg0: i32, %arg1: i32) -> (i32, i32) {
    %c0_i32 = arith.constant 0 : i32
    %c0_i32_0 = arith.constant 0 : i32
    %c0_i32_1 = arith.constant 0 : i32
    return %c0_i32, %c0_i32_0 : i32, i32
  }
  func.func @transform_10(%arg0: i32, %arg1: i32) -> (i32, i32) {
    %c0_i32 = arith.constant 0 : i32
    %c0_i32_0 = arith.constant 0 : i32
    %c0_i32_1 = arith.constant 0 : i32
    return %c0_i32, %c0_i32_0 : i32, i32
  }
  func.func @transform_11(%arg0: i32, %arg1: i32) -> (i32, i32, i32, i32) {
    %c0_i32 = arith.constant 0 : i32
    %c0_i32_0 = arith.constant 0 : i32
    %c0_i32_1 = arith.constant 0 : i32
    return %arg0, %arg1, %c0_i32, %c0_i32_0 : i32, i32, i32, i32
  }
  func.func @transform_12(%arg0: i32, %arg1: i32) -> (i32, i32, i32, i32) {
    %c0_i32 = arith.constant 0 : i32
    %c0_i32_0 = arith.constant 0 : i32
    %c0_i32_1 = arith.constant 0 : i32
    return %arg0, %arg1, %c0_i32, %c0_i32_0 : i32, i32, i32, i32
  }
}

module attributes {stable_mosaic.version = 11 : i64} {
  func.func @_resblock_kernel(%arg0: i32, %arg1: i32, %arg2: memref<2x20x16x128xf32, #tpu.memory_space<any>>, %arg3: memref<1x128xf32, #tpu.memory_space<vmem>>, %arg4: memref<1x128xf32, #tpu.memory_space<vmem>>, %arg5: memref<128x128xbf16, #tpu.memory_space<vmem>>, %arg6: memref<1x128xf32, #tpu.memory_space<vmem>>, %arg7: memref<1x128xf32, #tpu.memory_space<vmem>>, %arg8: memref<9x128x128xbf16, #tpu.memory_space<vmem>>, %arg9: memref<1x128xf32, #tpu.memory_space<vmem>>, %arg10: memref<1x128xf32, #tpu.memory_space<vmem>>, %arg11: memref<128x128xbf16, #tpu.memory_space<vmem>>, %arg12: memref<128x128xbf16, #tpu.memory_space<vmem>>, %arg13: memref<1x8x16x128xf32, #tpu.memory_space<vmem>>, %arg14: memref<1x8x16x128xf32, #tpu.memory_space<vmem>>, %arg15: memref<2x12x16x128xf32, #tpu.memory_space<vmem>>, %arg16: memref<2x!tpu.dma_semaphore, #tpu.memory_space<semaphore_mem>>, %arg17: memref<12x20x128xbf16, #tpu.memory_space<vmem>>) attributes {dimension_semantics = [#tpu.dimension_semantics<parallel>, #tpu.dimension_semantics<arbitrary>], iteration_bounds = array<i64: 2, 2>, scalar_prefetch = 0 : i64, scratch_operands = 3 : i64, tpu.core_type = #tpu.core_type<tc>, window_params = [{}, {pipeline_mode = #tpu.pipeline_mode<synchronous>, transform_indices = @transform_1, window_bounds = array<i64: 1, 128>}, {pipeline_mode = #tpu.pipeline_mode<synchronous>, transform_indices = @transform_2, window_bounds = array<i64: 1, 128>}, {pipeline_mode = #tpu.pipeline_mode<synchronous>, transform_indices = @transform_3, window_bounds = array<i64: 128, 128>}, {pipeline_mode = #tpu.pipeline_mode<synchronous>, transform_indices = @transform_4, window_bounds = array<i64: 1, 128>}, {pipeline_mode = #tpu.pipeline_mode<synchronous>, transform_indices = @transform_5, window_bounds = array<i64: 1, 128>}, {pipeline_mode = #tpu.pipeline_mode<synchronous>, transform_indices = @transform_6, window_bounds = array<i64: 9, 128, 128>}, {pipeline_mode = #tpu.pipeline_mode<synchronous>, transform_indices = @transform_7, window_bounds = array<i64: 1, 128>}, {pipeline_mode = #tpu.pipeline_mode<synchronous>, transform_indices = @transform_8, window_bounds = array<i64: 1, 128>}, {pipeline_mode = #tpu.pipeline_mode<synchronous>, transform_indices = @transform_9, window_bounds = array<i64: 128, 128>}, {pipeline_mode = #tpu.pipeline_mode<synchronous>, transform_indices = @transform_10, window_bounds = array<i64: 128, 128>}, {transform_indices = @transform_11, window_bounds = array<i64: 1, 8, 16, 128>}, {transform_indices = @transform_12, window_bounds = array<i64: 1, 8, 16, 128>}]} {
    %c2_i32 = arith.constant 2 : i32
    %0 = arith.remsi %arg1, %c2_i32 : i32
    %c0_i32 = arith.constant 0 : i32
    %1 = arith.cmpi eq, %arg1, %c0_i32 : i32
    %2 = arith.extui %1 : i1 to i32
    %c0_i32_0 = arith.constant 0 : i32
    %3 = arith.cmpi ne, %2, %c0_i32_0 : i32
    scf.if %3 {
      %c0_i32_111 = arith.constant 0 : i32
      %131 = tpu.assume_multiple %c0_i32_111, 8 : i32
      %c0_i32_112 = arith.constant 0 : i32
      %c0_i32_113 = arith.constant 0 : i32
      %c0_i32_114 = arith.constant 0 : i32
      %c0_i32_115 = arith.constant 0 : i32
      %132 = tpu.memref_slice %arg2[%arg0, %131, %c0_i32_114, %c0_i32_115] : memref<2x20x16x128xf32, #tpu.memory_space<any>> -> memref<1x12x16x128xf32, #tpu.memory_space<any>>
      %133 = tpu.memref_squeeze %132 : memref<1x12x16x128xf32, #tpu.memory_space<any>> -> memref<12x16x128xf32, #tpu.memory_space<any>>
      %c0_i32_116 = arith.constant 0 : i32
      %c0_i32_117 = arith.constant 0 : i32
      %c0_i32_118 = arith.constant 0 : i32
      %134 = tpu.memref_slice %arg15[%c0_i32_112, %c0_i32_116, %c0_i32_117, %c0_i32_118] : memref<2x12x16x128xf32, #tpu.memory_space<vmem>> -> memref<1x12x16x128xf32, #tpu.memory_space<vmem>>
      %135 = tpu.memref_squeeze %134 : memref<1x12x16x128xf32, #tpu.memory_space<vmem>> -> memref<12x16x128xf32, #tpu.memory_space<vmem>>
      %136 = tpu.memref_slice %arg16[%c0_i32_113] : memref<2x!tpu.dma_semaphore, #tpu.memory_space<semaphore_mem>> -> memref<1x!tpu.dma_semaphore, #tpu.memory_space<semaphore_mem>>
      %137 = tpu.memref_squeeze %136 : memref<1x!tpu.dma_semaphore, #tpu.memory_space<semaphore_mem>> -> memref<!tpu.dma_semaphore, #tpu.memory_space<semaphore_mem>>
      tpu.enqueue_dma source(%133 : memref<12x16x128xf32, #tpu.memory_space<any>>) target(%135 : memref<12x16x128xf32, #tpu.memory_space<vmem>>) target_semaphore(%137 : memref<!tpu.dma_semaphore, #tpu.memory_space<semaphore_mem>>)
    } else {
    }
    %c1_i32 = arith.constant 1 : i32
    %4 = arith.addi %arg1, %c1_i32 : i32
    %c2_i32_1 = arith.constant 2 : i32
    %5 = arith.cmpi slt, %4, %c2_i32_1 : i32
    %6 = arith.extui %5 : i1 to i32
    %c0_i32_2 = arith.constant 0 : i32
    %7 = arith.cmpi ne, %6, %c0_i32_2 : i32
    scf.if %7 {
      %c1_i32_111 = arith.constant 1 : i32
      %131 = arith.addi %arg1, %c1_i32_111 : i32
      %c1_i32_112 = arith.constant 1 : i32
      %132 = arith.subi %c1_i32_112, %0 : i32
      %c8_i32_113 = arith.constant 8 : i32
      %133 = arith.muli %131, %c8_i32_113 : i32
      %134 = tpu.assume_multiple %133, 8 : i32
      %c0_i32_114 = arith.constant 0 : i32
      %c0_i32_115 = arith.constant 0 : i32
      %135 = tpu.memref_slice %arg2[%arg0, %134, %c0_i32_114, %c0_i32_115] : memref<2x20x16x128xf32, #tpu.memory_space<any>> -> memref<1x12x16x128xf32, #tpu.memory_space<any>>
      %136 = tpu.memref_squeeze %135 : memref<1x12x16x128xf32, #tpu.memory_space<any>> -> memref<12x16x128xf32, #tpu.memory_space<any>>
      %c0_i32_116 = arith.constant 0 : i32
      %c0_i32_117 = arith.constant 0 : i32
      %c0_i32_118 = arith.constant 0 : i32
      %137 = tpu.memref_slice %arg15[%132, %c0_i32_116, %c0_i32_117, %c0_i32_118] : memref<2x12x16x128xf32, #tpu.memory_space<vmem>> -> memref<1x12x16x128xf32, #tpu.memory_space<vmem>>
      %138 = tpu.memref_squeeze %137 : memref<1x12x16x128xf32, #tpu.memory_space<vmem>> -> memref<12x16x128xf32, #tpu.memory_space<vmem>>
      %139 = tpu.memref_slice %arg16[%132] : memref<2x!tpu.dma_semaphore, #tpu.memory_space<semaphore_mem>> -> memref<1x!tpu.dma_semaphore, #tpu.memory_space<semaphore_mem>>
      %140 = tpu.memref_squeeze %139 : memref<1x!tpu.dma_semaphore, #tpu.memory_space<semaphore_mem>> -> memref<!tpu.dma_semaphore, #tpu.memory_space<semaphore_mem>>
      tpu.enqueue_dma source(%136 : memref<12x16x128xf32, #tpu.memory_space<any>>) target(%138 : memref<12x16x128xf32, #tpu.memory_space<vmem>>) target_semaphore(%140 : memref<!tpu.dma_semaphore, #tpu.memory_space<semaphore_mem>>)
    } else {
    }
    %c8_i32 = arith.constant 8 : i32
    %8 = arith.muli %arg1, %c8_i32 : i32
    %9 = tpu.assume_multiple %8, 8 : i32
    %c0_i32_3 = arith.constant 0 : i32
    %c0_i32_4 = arith.constant 0 : i32
    %10 = tpu.memref_slice %arg2[%arg0, %9, %c0_i32_3, %c0_i32_4] : memref<2x20x16x128xf32, #tpu.memory_space<any>> -> memref<1x12x16x128xf32, #tpu.memory_space<any>>
    %11 = tpu.memref_squeeze %10 : memref<1x12x16x128xf32, #tpu.memory_space<any>> -> memref<12x16x128xf32, #tpu.memory_space<any>>
    %c0_i32_5 = arith.constant 0 : i32
    %c0_i32_6 = arith.constant 0 : i32
    %c0_i32_7 = arith.constant 0 : i32
    %12 = tpu.memref_slice %arg15[%0, %c0_i32_5, %c0_i32_6, %c0_i32_7] : memref<2x12x16x128xf32, #tpu.memory_space<vmem>> -> memref<1x12x16x128xf32, #tpu.memory_space<vmem>>
    %13 = tpu.memref_squeeze %12 : memref<1x12x16x128xf32, #tpu.memory_space<vmem>> -> memref<12x16x128xf32, #tpu.memory_space<vmem>>
    %14 = tpu.memref_slice %arg16[%0] : memref<2x!tpu.dma_semaphore, #tpu.memory_space<semaphore_mem>> -> memref<1x!tpu.dma_semaphore, #tpu.memory_space<semaphore_mem>>
    %15 = tpu.memref_squeeze %14 : memref<1x!tpu.dma_semaphore, #tpu.memory_space<semaphore_mem>> -> memref<!tpu.dma_semaphore, #tpu.memory_space<semaphore_mem>>
    tpu.wait_dma2 semaphore(%15 : memref<!tpu.dma_semaphore, #tpu.memory_space<semaphore_mem>>) src(%11 : memref<12x16x128xf32, #tpu.memory_space<any>>) dst(%13 : memref<12x16x128xf32, #tpu.memory_space<vmem>>)
    %16 = arith.index_cast %0 : i32 to index
    %c0 = arith.constant 0 : index
    %c0_8 = arith.constant 0 : index
    %c0_9 = arith.constant 0 : index
    %17 = vector.load %arg15[%16, %c0, %c0_8, %c0_9] : memref<2x12x16x128xf32, #tpu.memory_space<vmem>>, vector<1x12x16x128xf32>
    %18 = vector.shape_cast %17 : vector<1x12x16x128xf32> to vector<12x16x128xf32>
    %19 = vector.shape_cast %18 : vector<12x16x128xf32> to vector<192x128xf32>
    %c0_10 = arith.constant 0 : index
    %c0_11 = arith.constant 0 : index
    %20 = vector.load %arg3[%c0_10, %c0_11] : memref<1x128xf32, #tpu.memory_space<vmem>>, vector<1x128xf32>
    %21 = vector.broadcast %20 : vector<1x128xf32> to vector<192x128xf32>
    %22 = arith.mulf %19, %21 : vector<192x128xf32>
    %c0_12 = arith.constant 0 : index
    %c0_13 = arith.constant 0 : index
    %23 = vector.load %arg4[%c0_12, %c0_13] : memref<1x128xf32, #tpu.memory_space<vmem>>, vector<1x128xf32>
    %24 = vector.broadcast %23 : vector<1x128xf32> to vector<192x128xf32>
    %25 = arith.addf %22, %24 : vector<192x128xf32>
    %cst = arith.constant 0.000000e+00 : f32
    %26 = vector.broadcast %cst : f32 to vector<192x128xf32>
    %27 = arith.maximumf %25, %26 : vector<192x128xf32>
    %28 = vector.extract_strided_slice %27 {offsets = [32, 0], sizes = [128, 128], strides = [1, 1]} : vector<192x128xf32> to vector<128x128xf32>
    %29 = vector.shape_cast %28 : vector<128x128xf32> to vector<8x16x128xf32>
    %c0_14 = arith.constant 0 : index
    %c0_15 = arith.constant 0 : index
    %c0_16 = arith.constant 0 : index
    %c0_17 = arith.constant 0 : index
    %30 = vector.load %arg14[%c0_14, %c0_15, %c0_16, %c0_17] : memref<1x8x16x128xf32, #tpu.memory_space<vmem>>, vector<1x8x16x128xf32>
    %31 = vector.shape_cast %30 : vector<1x8x16x128xf32> to vector<8x16x128xf32>
    %32 = vector.shape_cast %29 : vector<8x16x128xf32> to vector<1x8x16x128xf32>
    tpu.vector_store %arg14[%c0_14, %c0_15, %c0_16, %c0_17], %32 {strides = array<i32>} : memref<1x8x16x128xf32, #tpu.memory_space<vmem>>, vector<1x8x16x128xf32>,
    %33 = arith.truncf %27 : vector<192x128xf32> to vector<192x128xbf16>
    %34 = vector.extract_strided_slice %33 {offsets = [32, 0], sizes = [128, 128], strides = [1, 1]} : vector<192x128xbf16> to vector<128x128xbf16>
    %c0_18 = arith.constant 0 : index
    %c0_19 = arith.constant 0 : index
    %35 = vector.load %arg12[%c0_18, %c0_19] : memref<128x128xbf16, #tpu.memory_space<vmem>>, vector<128x128xbf16>
    %cst_20 = arith.constant dense<0.000000e+00> : vector<128x128xf32>
    %36 = tpu.matmul %34, %35, %cst_20 {dimension_numbers = #tpu.dot_dimension_numbers<[1], [0], [0], [1], [0, 0, 1, 1], [], []>} : vector<128x128xbf16>, vector<128x128xbf16>, vector<128x128xf32> -> vector<128x128xf32>
    %c0_21 = arith.constant 0 : index
    %c0_22 = arith.constant 0 : index
    %37 = vector.load %arg5[%c0_21, %c0_22] : memref<128x128xbf16, #tpu.memory_space<vmem>>, vector<128x128xbf16>
    %cst_23 = arith.constant dense<0.000000e+00> : vector<192x128xf32>
    %38 = tpu.matmul %33, %37, %cst_23 {dimension_numbers = #tpu.dot_dimension_numbers<[1], [0], [0], [1], [0, 0, 1, 1], [], []>} : vector<192x128xbf16>, vector<128x128xbf16>, vector<192x128xf32> -> vector<192x128xf32>
    %c0_24 = arith.constant 0 : index
    %c0_25 = arith.constant 0 : index
    %39 = vector.load %arg6[%c0_24, %c0_25] : memref<1x128xf32, #tpu.memory_space<vmem>>, vector<1x128xf32>
    %40 = vector.broadcast %39 : vector<1x128xf32> to vector<192x128xf32>
    %41 = arith.mulf %38, %40 : vector<192x128xf32>
    %c0_26 = arith.constant 0 : index
    %c0_27 = arith.constant 0 : index
    %42 = vector.load %arg7[%c0_26, %c0_27] : memref<1x128xf32, #tpu.memory_space<vmem>>, vector<1x128xf32>
    %43 = vector.broadcast %42 : vector<1x128xf32> to vector<192x128xf32>
    %44 = arith.addf %41, %43 : vector<192x128xf32>
    %cst_28 = arith.constant 0.000000e+00 : f32
    %45 = vector.broadcast %cst_28 : f32 to vector<192x128xf32>
    %46 = arith.maximumf %44, %45 : vector<192x128xf32>
    %47 = vector.shape_cast %46 : vector<192x128xf32> to vector<12x16x128xf32>
    %48 = arith.truncf %47 : vector<12x16x128xf32> to vector<12x16x128xbf16>
    %c0_29 = arith.constant 0 : index
    %c2 = arith.constant 2 : index
    %c0_30 = arith.constant 0 : index
    %49 = vector.load %arg17[%c0_29, %c2, %c0_30] : memref<12x20x128xbf16, #tpu.memory_space<vmem>>, vector<12x16x128xbf16>
    tpu.vector_store %arg17[%c0_29, %c2, %c0_30], %48 {strides = array<i32>} : memref<12x20x128xbf16, #tpu.memory_space<vmem>>, vector<12x16x128xbf16>,
    %cst_31 = arith.constant 0.000000e+00 : bf16
    %50 = vector.broadcast %cst_31 : bf16 to vector<12x2x128xbf16>
    %c0_32 = arith.constant 0 : index
    %c0_33 = arith.constant 0 : index
    %c0_34 = arith.constant 0 : index
    %51 = vector.load %arg17[%c0_32, %c0_33, %c0_34] : memref<12x20x128xbf16, #tpu.memory_space<vmem>>, vector<12x2x128xbf16>
    tpu.vector_store %arg17[%c0_32, %c0_33, %c0_34], %50 {strides = array<i32>} : memref<12x20x128xbf16, #tpu.memory_space<vmem>>, vector<12x2x128xbf16>,
    %c0_35 = arith.constant 0 : index
    %c18 = arith.constant 18 : index
    %c0_36 = arith.constant 0 : index
    %52 = vector.load %arg17[%c0_35, %c18, %c0_36] : memref<12x20x128xbf16, #tpu.memory_space<vmem>>, vector<12x2x128xbf16>
    tpu.vector_store %arg17[%c0_35, %c18, %c0_36], %50 {strides = array<i32>} : memref<12x20x128xbf16, #tpu.memory_space<vmem>>, vector<12x2x128xbf16>,
    %cst_37 = arith.constant 0.000000e+00 : bf16
    %53 = vector.broadcast %cst_37 : bf16 to vector<2x16x128xbf16>
    %c0_i32_38 = arith.constant 0 : i32
    %54 = arith.cmpi eq, %arg1, %c0_i32_38 : i32
    %55 = arith.extui %54 : i1 to i32
    %c0_i32_39 = arith.constant 0 : i32
    %56 = arith.cmpi ne, %55, %c0_i32_39 : i32
    scf.if %56 {
      %c0_111 = arith.constant 0 : index
      %c2_112 = arith.constant 2 : index
      %c0_113 = arith.constant 0 : index
      %131 = vector.load %arg17[%c0_111, %c2_112, %c0_113] : memref<12x20x128xbf16, #tpu.memory_space<vmem>>, vector<2x16x128xbf16>
      tpu.vector_store %arg17[%c0_111, %c2_112, %c0_113], %53 {strides = array<i32>} : memref<12x20x128xbf16, #tpu.memory_space<vmem>>, vector<2x16x128xbf16>,
    } else {
    }
    %c1_i32_40 = arith.constant 1 : i32
    %57 = arith.cmpi eq, %arg1, %c1_i32_40 : i32
    %58 = arith.extui %57 : i1 to i32
    %c0_i32_41 = arith.constant 0 : i32
    %59 = arith.cmpi ne, %58, %c0_i32_41 : i32
    scf.if %59 {
      %c10 = arith.constant 10 : index
      %c2_111 = arith.constant 2 : index
      %c0_112 = arith.constant 0 : index
      %131 = vector.load %arg17[%c10, %c2_111, %c0_112] : memref<12x20x128xbf16, #tpu.memory_space<vmem>>, vector<2x16x128xbf16>
      tpu.vector_store %arg17[%c10, %c2_111, %c0_112], %53 {strides = array<i32>} : memref<12x20x128xbf16, #tpu.memory_space<vmem>>, vector<2x16x128xbf16>,
    } else {
    }
    %cst_42 = arith.constant 0.000000e+00 : f32
    %60 = vector.broadcast %cst_42 : f32 to vector<128x128xf32>
    %c0_43 = arith.constant 0 : index
    %c0_44 = arith.constant 0 : index
    %c0_45 = arith.constant 0 : index
    %61 = vector.load %arg17[%c0_43, %c0_44, %c0_45] : memref<12x20x128xbf16, #tpu.memory_space<vmem>>, vector<8x16x128xbf16>
    %62 = vector.shape_cast %61 : vector<8x16x128xbf16> to vector<128x128xbf16>
    %c0_46 = arith.constant 0 : index
    %c0_47 = arith.constant 0 : index
    %c0_48 = arith.constant 0 : index
    %63 = vector.load %arg8[%c0_46, %c0_47, %c0_48] : memref<9x128x128xbf16, #tpu.memory_space<vmem>>, vector<1x128x128xbf16>
    %64 = vector.shape_cast %63 : vector<1x128x128xbf16> to vector<128x128xbf16>
    %cst_49 = arith.constant dense<0.000000e+00> : vector<128x128xf32>
    %65 = tpu.matmul %62, %64, %cst_49 {dimension_numbers = #tpu.dot_dimension_numbers<[1], [0], [0], [1], [0, 0, 1, 1], [], []>} : vector<128x128xbf16>, vector<128x128xbf16>, vector<128x128xf32> -> vector<128x128xf32>
    %66 = arith.addf %60, %65 : vector<128x128xf32>
    %c0_50 = arith.constant 0 : index
    %c2_51 = arith.constant 2 : index
    %c0_52 = arith.constant 0 : index
    %67 = vector.load %arg17[%c0_50, %c2_51, %c0_52] : memref<12x20x128xbf16, #tpu.memory_space<vmem>>, vector<8x16x128xbf16>
    %68 = vector.shape_cast %67 : vector<8x16x128xbf16> to vector<128x128xbf16>
    %c1 = arith.constant 1 : index
    %c0_53 = arith.constant 0 : index
    %c0_54 = arith.constant 0 : index
    %69 = vector.load %arg8[%c1, %c0_53, %c0_54] : memref<9x128x128xbf16, #tpu.memory_space<vmem>>, vector<1x128x128xbf16>
    %70 = vector.shape_cast %69 : vector<1x128x128xbf16> to vector<128x128xbf16>
    %cst_55 = arith.constant dense<0.000000e+00> : vector<128x128xf32>
    %71 = tpu.matmul %68, %70, %cst_55 {dimension_numbers = #tpu.dot_dimension_numbers<[1], [0], [0], [1], [0, 0, 1, 1], [], []>} : vector<128x128xbf16>, vector<128x128xbf16>, vector<128x128xf32> -> vector<128x128xf32>
    %72 = arith.addf %66, %71 : vector<128x128xf32>
    %c0_56 = arith.constant 0 : index
    %c4 = arith.constant 4 : index
    %c0_57 = arith.constant 0 : index
    %73 = vector.load %arg17[%c0_56, %c4, %c0_57] : memref<12x20x128xbf16, #tpu.memory_space<vmem>>, vector<8x16x128xbf16>
    %74 = vector.shape_cast %73 : vector<8x16x128xbf16> to vector<128x128xbf16>
    %c2_58 = arith.constant 2 : index
    %c0_59 = arith.constant 0 : index
    %c0_60 = arith.constant 0 : index
    %75 = vector.load %arg8[%c2_58, %c0_59, %c0_60] : memref<9x128x128xbf16, #tpu.memory_space<vmem>>, vector<1x128x128xbf16>
    %76 = vector.shape_cast %75 : vector<1x128x128xbf16> to vector<128x128xbf16>
    %cst_61 = arith.constant dense<0.000000e+00> : vector<128x128xf32>
    %77 = tpu.matmul %74, %76, %cst_61 {dimension_numbers = #tpu.dot_dimension_numbers<[1], [0], [0], [1], [0, 0, 1, 1], [], []>} : vector<128x128xbf16>, vector<128x128xbf16>, vector<128x128xf32> -> vector<128x128xf32>
    %78 = arith.addf %72, %77 : vector<128x128xf32>
    %c2_62 = arith.constant 2 : index
    %c0_63 = arith.constant 0 : index
    %c0_64 = arith.constant 0 : index
    %79 = vector.load %arg17[%c2_62, %c0_63, %c0_64] : memref<12x20x128xbf16, #tpu.memory_space<vmem>>, vector<8x16x128xbf16>
    %80 = vector.shape_cast %79 : vector<8x16x128xbf16> to vector<128x128xbf16>
    %c3 = arith.constant 3 : index
    %c0_65 = arith.constant 0 : index
    %c0_66 = arith.constant 0 : index
    %81 = vector.load %arg8[%c3, %c0_65, %c0_66] : memref<9x128x128xbf16, #tpu.memory_space<vmem>>, vector<1x128x128xbf16>
    %82 = vector.shape_cast %81 : vector<1x128x128xbf16> to vector<128x128xbf16>
    %cst_67 = arith.constant dense<0.000000e+00> : vector<128x128xf32>
    %83 = tpu.matmul %80, %82, %cst_67 {dimension_numbers = #tpu.dot_dimension_numbers<[1], [0], [0], [1], [0, 0, 1, 1], [], []>} : vector<128x128xbf16>, vector<128x128xbf16>, vector<128x128xf32> -> vector<128x128xf32>
    %84 = arith.addf %78, %83 : vector<128x128xf32>
    %c2_68 = arith.constant 2 : index
    %c2_69 = arith.constant 2 : index
    %c0_70 = arith.constant 0 : index
    %85 = vector.load %arg17[%c2_68, %c2_69, %c0_70] : memref<12x20x128xbf16, #tpu.memory_space<vmem>>, vector<8x16x128xbf16>
    %86 = vector.shape_cast %85 : vector<8x16x128xbf16> to vector<128x128xbf16>
    %c4_71 = arith.constant 4 : index
    %c0_72 = arith.constant 0 : index
    %c0_73 = arith.constant 0 : index
    %87 = vector.load %arg8[%c4_71, %c0_72, %c0_73] : memref<9x128x128xbf16, #tpu.memory_space<vmem>>, vector<1x128x128xbf16>
    %88 = vector.shape_cast %87 : vector<1x128x128xbf16> to vector<128x128xbf16>
    %cst_74 = arith.constant dense<0.000000e+00> : vector<128x128xf32>
    %89 = tpu.matmul %86, %88, %cst_74 {dimension_numbers = #tpu.dot_dimension_numbers<[1], [0], [0], [1], [0, 0, 1, 1], [], []>} : vector<128x128xbf16>, vector<128x128xbf16>, vector<128x128xf32> -> vector<128x128xf32>
    %90 = arith.addf %84, %89 : vector<128x128xf32>
    %c2_75 = arith.constant 2 : index
    %c4_76 = arith.constant 4 : index
    %c0_77 = arith.constant 0 : index
    %91 = vector.load %arg17[%c2_75, %c4_76, %c0_77] : memref<12x20x128xbf16, #tpu.memory_space<vmem>>, vector<8x16x128xbf16>
    %92 = vector.shape_cast %91 : vector<8x16x128xbf16> to vector<128x128xbf16>
    %c5 = arith.constant 5 : index
    %c0_78 = arith.constant 0 : index
    %c0_79 = arith.constant 0 : index
    %93 = vector.load %arg8[%c5, %c0_78, %c0_79] : memref<9x128x128xbf16, #tpu.memory_space<vmem>>, vector<1x128x128xbf16>
    %94 = vector.shape_cast %93 : vector<1x128x128xbf16> to vector<128x128xbf16>
    %cst_80 = arith.constant dense<0.000000e+00> : vector<128x128xf32>
    %95 = tpu.matmul %92, %94, %cst_80 {dimension_numbers = #tpu.dot_dimension_numbers<[1], [0], [0], [1], [0, 0, 1, 1], [], []>} : vector<128x128xbf16>, vector<128x128xbf16>, vector<128x128xf32> -> vector<128x128xf32>
    %96 = arith.addf %90, %95 : vector<128x128xf32>
    %c4_81 = arith.constant 4 : index
    %c0_82 = arith.constant 0 : index
    %c0_83 = arith.constant 0 : index
    %97 = vector.load %arg17[%c4_81, %c0_82, %c0_83] : memref<12x20x128xbf16, #tpu.memory_space<vmem>>, vector<8x16x128xbf16>
    %98 = vector.shape_cast %97 : vector<8x16x128xbf16> to vector<128x128xbf16>
    %c6 = arith.constant 6 : index
    %c0_84 = arith.constant 0 : index
    %c0_85 = arith.constant 0 : index
    %99 = vector.load %arg8[%c6, %c0_84, %c0_85] : memref<9x128x128xbf16, #tpu.memory_space<vmem>>, vector<1x128x128xbf16>
    %100 = vector.shape_cast %99 : vector<1x128x128xbf16> to vector<128x128xbf16>
    %cst_86 = arith.constant dense<0.000000e+00> : vector<128x128xf32>
    %101 = tpu.matmul %98, %100, %cst_86 {dimension_numbers = #tpu.dot_dimension_numbers<[1], [0], [0], [1], [0, 0, 1, 1], [], []>} : vector<128x128xbf16>, vector<128x128xbf16>, vector<128x128xf32> -> vector<128x128xf32>
    %102 = arith.addf %96, %101 : vector<128x128xf32>
    %c4_87 = arith.constant 4 : index
    %c2_88 = arith.constant 2 : index
    %c0_89 = arith.constant 0 : index
    %103 = vector.load %arg17[%c4_87, %c2_88, %c0_89] : memref<12x20x128xbf16, #tpu.memory_space<vmem>>, vector<8x16x128xbf16>
    %104 = vector.shape_cast %103 : vector<8x16x128xbf16> to vector<128x128xbf16>
    %c7 = arith.constant 7 : index
    %c0_90 = arith.constant 0 : index
    %c0_91 = arith.constant 0 : index
    %105 = vector.load %arg8[%c7, %c0_90, %c0_91] : memref<9x128x128xbf16, #tpu.memory_space<vmem>>, vector<1x128x128xbf16>
    %106 = vector.shape_cast %105 : vector<1x128x128xbf16> to vector<128x128xbf16>
    %cst_92 = arith.constant dense<0.000000e+00> : vector<128x128xf32>
    %107 = tpu.matmul %104, %106, %cst_92 {dimension_numbers = #tpu.dot_dimension_numbers<[1], [0], [0], [1], [0, 0, 1, 1], [], []>} : vector<128x128xbf16>, vector<128x128xbf16>, vector<128x128xf32> -> vector<128x128xf32>
    %108 = arith.addf %102, %107 : vector<128x128xf32>
    %c4_93 = arith.constant 4 : index
    %c4_94 = arith.constant 4 : index
    %c0_95 = arith.constant 0 : index
    %109 = vector.load %arg17[%c4_93, %c4_94, %c0_95] : memref<12x20x128xbf16, #tpu.memory_space<vmem>>, vector<8x16x128xbf16>
    %110 = vector.shape_cast %109 : vector<8x16x128xbf16> to vector<128x128xbf16>
    %c8 = arith.constant 8 : index
    %c0_96 = arith.constant 0 : index
    %c0_97 = arith.constant 0 : index
    %111 = vector.load %arg8[%c8, %c0_96, %c0_97] : memref<9x128x128xbf16, #tpu.memory_space<vmem>>, vector<1x128x128xbf16>
    %112 = vector.shape_cast %111 : vector<1x128x128xbf16> to vector<128x128xbf16>
    %cst_98 = arith.constant dense<0.000000e+00> : vector<128x128xf32>
    %113 = tpu.matmul %110, %112, %cst_98 {dimension_numbers = #tpu.dot_dimension_numbers<[1], [0], [0], [1], [0, 0, 1, 1], [], []>} : vector<128x128xbf16>, vector<128x128xbf16>, vector<128x128xf32> -> vector<128x128xf32>
    %114 = arith.addf %108, %113 : vector<128x128xf32>
    %c0_99 = arith.constant 0 : index
    %c0_100 = arith.constant 0 : index
    %115 = vector.load %arg9[%c0_99, %c0_100] : memref<1x128xf32, #tpu.memory_space<vmem>>, vector<1x128xf32>
    %116 = vector.broadcast %115 : vector<1x128xf32> to vector<128x128xf32>
    %117 = arith.mulf %114, %116 : vector<128x128xf32>
    %c0_101 = arith.constant 0 : index
    %c0_102 = arith.constant 0 : index
    %118 = vector.load %arg10[%c0_101, %c0_102] : memref<1x128xf32, #tpu.memory_space<vmem>>, vector<1x128xf32>
    %119 = vector.broadcast %118 : vector<1x128xf32> to vector<128x128xf32>
    %120 = arith.addf %117, %119 : vector<128x128xf32>
    %cst_103 = arith.constant 0.000000e+00 : f32
    %121 = vector.broadcast %cst_103 : f32 to vector<128x128xf32>
    %122 = arith.maximumf %120, %121 : vector<128x128xf32>
    %123 = arith.truncf %122 : vector<128x128xf32> to vector<128x128xbf16>
    %c0_104 = arith.constant 0 : index
    %c0_105 = arith.constant 0 : index
    %124 = vector.load %arg11[%c0_104, %c0_105] : memref<128x128xbf16, #tpu.memory_space<vmem>>, vector<128x128xbf16>
    %cst_106 = arith.constant dense<0.000000e+00> : vector<128x128xf32>
    %125 = tpu.matmul %123, %124, %cst_106 {dimension_numbers = #tpu.dot_dimension_numbers<[1], [0], [0], [1], [0, 0, 1, 1], [], []>} : vector<128x128xbf16>, vector<128x128xbf16>, vector<128x128xf32> -> vector<128x128xf32>
    %126 = arith.addf %125, %36 : vector<128x128xf32>
    %127 = vector.shape_cast %126 : vector<128x128xf32> to vector<8x16x128xf32>
    %c0_107 = arith.constant 0 : index
    %c0_108 = arith.constant 0 : index
    %c0_109 = arith.constant 0 : index
    %c0_110 = arith.constant 0 : index
    %128 = vector.load %arg13[%c0_107, %c0_108, %c0_109, %c0_110] : memref<1x8x16x128xf32, #tpu.memory_space<vmem>>, vector<1x8x16x128xf32>
    %129 = vector.shape_cast %128 : vector<1x8x16x128xf32> to vector<8x16x128xf32>
    %130 = vector.shape_cast %127 : vector<8x16x128xf32> to vector<1x8x16x128xf32>
    tpu.vector_store %arg13[%c0_107, %c0_108, %c0_109, %c0_110], %130 {strides = array<i32>} : memref<1x8x16x128xf32, #tpu.memory_space<vmem>>, vector<1x8x16x128xf32>,
    return
  }
  func.func @transform_1(%arg0: i32, %arg1: i32) -> (i32, i32) {
    %c0_i32 = arith.constant 0 : i32
    %c0_i32_0 = arith.constant 0 : i32
    %c0_i32_1 = arith.constant 0 : i32
    return %c0_i32, %c0_i32_0 : i32, i32
  }
  func.func @transform_2(%arg0: i32, %arg1: i32) -> (i32, i32) {
    %c0_i32 = arith.constant 0 : i32
    %c0_i32_0 = arith.constant 0 : i32
    %c0_i32_1 = arith.constant 0 : i32
    return %c0_i32, %c0_i32_0 : i32, i32
  }
  func.func @transform_3(%arg0: i32, %arg1: i32) -> (i32, i32) {
    %c0_i32 = arith.constant 0 : i32
    %c0_i32_0 = arith.constant 0 : i32
    %c0_i32_1 = arith.constant 0 : i32
    return %c0_i32, %c0_i32_0 : i32, i32
  }
  func.func @transform_4(%arg0: i32, %arg1: i32) -> (i32, i32) {
    %c0_i32 = arith.constant 0 : i32
    %c0_i32_0 = arith.constant 0 : i32
    %c0_i32_1 = arith.constant 0 : i32
    return %c0_i32, %c0_i32_0 : i32, i32
  }
  func.func @transform_5(%arg0: i32, %arg1: i32) -> (i32, i32) {
    %c0_i32 = arith.constant 0 : i32
    %c0_i32_0 = arith.constant 0 : i32
    %c0_i32_1 = arith.constant 0 : i32
    return %c0_i32, %c0_i32_0 : i32, i32
  }
  func.func @transform_6(%arg0: i32, %arg1: i32) -> (i32, i32, i32) {
    %c0_i32 = arith.constant 0 : i32
    %c0_i32_0 = arith.constant 0 : i32
    %c0_i32_1 = arith.constant 0 : i32
    %c0_i32_2 = arith.constant 0 : i32
    return %c0_i32, %c0_i32_0, %c0_i32_1 : i32, i32, i32
  }
  func.func @transform_7(%arg0: i32, %arg1: i32) -> (i32, i32) {
    %c0_i32 = arith.constant 0 : i32
    %c0_i32_0 = arith.constant 0 : i32
    %c0_i32_1 = arith.constant 0 : i32
    return %c0_i32, %c0_i32_0 : i32, i32
  }
  func.func @transform_8(%arg0: i32, %arg1: i32) -> (i32, i32) {
    %c0_i32 = arith.constant 0 : i32
    %c0_i32_0 = arith.constant 0 : i32
    %c0_i32_1 = arith.constant 0 : i32
    return %c0_i32, %c0_i32_0 : i32, i32
  }
  func.func @transform_9(%arg0: i32, %arg1: i32) -> (i32, i32) {
    %c0_i32 = arith.constant 0 : i32
    %c0_i32_0 = arith.constant 0 : i32
    %c0_i32_1 = arith.constant 0 : i32
    return %c0_i32, %c0_i32_0 : i32, i32
  }
  func.func @transform_10(%arg0: i32, %arg1: i32) -> (i32, i32) {
    %c0_i32 = arith.constant 0 : i32
    %c0_i32_0 = arith.constant 0 : i32
    %c0_i32_1 = arith.constant 0 : i32
    return %c0_i32, %c0_i32_0 : i32, i32
  }
  func.func @transform_11(%arg0: i32, %arg1: i32) -> (i32, i32, i32, i32) {
    %c0_i32 = arith.constant 0 : i32
    %c0_i32_0 = arith.constant 0 : i32
    %c0_i32_1 = arith.constant 0 : i32
    return %arg0, %arg1, %c0_i32, %c0_i32_0 : i32, i32, i32, i32
  }
  func.func @transform_12(%arg0: i32, %arg1: i32) -> (i32, i32, i32, i32) {
    %c0_i32 = arith.constant 0 : i32
    %c0_i32_0 = arith.constant 0 : i32
    %c0_i32_1 = arith.constant 0 : i32
    return %arg0, %arg1, %c0_i32, %c0_i32_0 : i32, i32, i32, i32
  }
}

</mosaic_0001>

<llo_original>
// kernel: tpu_custom_call.1
$region0: #{tpu_custom_call.1}
  #allocation0 [shape = 'u32[]', space=smem, size = 0x4, offset = 0x4, fixed_abs, tag = 'smem constant byte address 0x4 - core index']
  #allocation1 [shape = 'u32[144,128]{1,0:T(1,128)}', space=vmem, size = 0x12000, scoped, tag = 'internal scratch']
  #allocation2 [shape = 'f32[2,12,16,128]{3,2,1,0:T(8,128)}', space=vmem, size = 0x30000, scoped, tag = 'scratch operand']
  #allocation3 [shape = 's32[2]{0}', space=sflag, size = 0x8, scoped, tag = 'scratch operand']
  #allocation4 [shape = 'bf16[12,20,128]{2,1,0:T(8,128)(2,1)}', space=vmem, size = 0x12000, scoped, tag = 'scratch operand']
  #allocation16 [shape = 's32[]', space=sflag, size = 0x4, offset = 0, fixed_abs, tag = 'sflag constant byte address 0x0 - dummy sync flag']
  #allocation17 [shape = 's32[]', space=sflag, size = 0x4, offset = 0, fixed_abs, tag = 'sflag constant byte address 0x0 - dummy sync flag']
  #allocation18 [shape = 'u32[]', space=smem, size = 0x4, offset = 0x44, fixed_abs, tag = 'smem constant byte address 0x44 - assertion arg 0']
  #allocation19 [shape = 'u32[]', space=smem, size = 0x4, offset = 0x48, fixed_abs, tag = 'smem constant byte address 0x48 - assertion arg 1']
  #allocation20 [shape = 's32[]', space=sflag, size = 0x4, offset = 0, fixed_abs, tag = 'sflag constant byte address 0x0 - dummy sync flag']
  #allocation21 [shape = 's32[]', space=sflag, size = 0x4, offset = 0, fixed_abs, tag = 'sflag constant byte address 0x0 - dummy sync flag']
  %s0 = inlined_call_operand.hbm [shape: f32[2,20,16,128], index: 0, kind: input, shape index: {}]
  %s1 = inlined_call_operand.vmem [shape: f32[1,128], index: 1, kind: input, shape index: {}]
  %s2 = inlined_call_operand.vmem [shape: f32[1,128], index: 2, kind: input, shape index: {}]
  %s3 = inlined_call_operand.hbm [shape: bf16[128,128], index: 3, kind: input, shape index: {}]
  %s4 = inlined_call_operand.vmem [shape: f32[1,128], index: 4, kind: input, shape index: {}]
  %s5 = inlined_call_operand.vmem [shape: f32[1,128], index: 5, kind: input, shape index: {}]
  %s6 = inlined_call_operand.hbm [shape: bf16[9,128,128], index: 6, kind: input, shape index: {}]
  %s7 = inlined_call_operand.vmem [shape: f32[1,128], index: 7, kind: input, shape index: {}]
  %s8 = inlined_call_operand.vmem [shape: f32[1,128], index: 8, kind: input, shape index: {}]
  %s9 = inlined_call_operand.hbm [shape: bf16[128,128], index: 9, kind: input, shape index: {}]
  %s10 = inlined_call_operand.hbm [shape: bf16[128,128], index: 10, kind: input, shape index: {}]
  %s11 = inlined_call_operand.hbm [shape: f32[2,16,16,128], index: 11, kind: output, shape index: {0}]
  %s12 = inlined_call_operand.hbm [shape: f32[2,16,16,128], index: 12, kind: output, shape index: {1}]
  %13 = xla_tuple %s11, %s12
  %s14 = sld [smem:[#allocation0]]
  $region121: #{tpu_custom_call.1} parent=0
    _
  %s16 = ssub.s32 1, %s14
  %s17 = scalar_select 0, %s16, %s14
  $region1: #{tpu_custom_call.1} parent=0
    #allocation5 [shape = 'u8[32768]{0}', space=vmem, size = 0x8000, scoped, tag = 'input window, operand 3, single buffered']
    #allocation6 [shape = 's32[2]{0}', space=sflag, size = 0x8, scoped, tag = 'scoped memory for tpu_custom_call.1']
    #allocation7 [shape = 's32[2]{0}', space=sflag, size = 0x8, scoped, tag = 'scoped memory for tpu_custom_call.1']
    #allocation8 [shape = 'u8[294912]{0}', space=vmem, size = 0x48000, scoped, tag = 'input window, operand 6, single buffered']
    #allocation9 [shape = 's32[1]{0}', space=sflag, size = 0x4, scoped, tag = 'scoped memory for tpu_custom_call.1']
    #allocation10 [shape = 'u8[32768]{0}', space=vmem, size = 0x8000, scoped, tag = 'input window, operand 9, single buffered']
    #allocation11 [shape = 'u8[32768]{0}', space=vmem, size = 0x8000, scoped, tag = 'input window, operand 10, single buffered']
    #allocation12 [shape = 's32[1]{0}', space=sflag, size = 0x4, scoped, tag = 'scoped memory for tpu_custom_call.1']
    #allocation13 [shape = 'u8[131072]{0}', space=vmem, size = 0x20000, scoped, tag = 'output window, operand 0']
    #allocation14 [shape = 'u8[131072]{0}', space=vmem, size = 0x20000, scoped, tag = 'output window, operand 1']
    #allocation15 [shape = 's32[2]{0}', space=sflag, size = 0x8, scoped, tag = 'scoped memory for tpu_custom_call.1']
    %18 = vsyncpa [#allocation6], 0
    %19 = vsyncpa [#allocation9], 0
    %20 = vsyncpa [#allocation12], 0
    %21 = vsyncpa [#allocation7], 0
    %s22 = scalar_lea.sflag [#allocation7], 1
    %23 = vsyncpa %s22, 0
    %24 = vsyncpa [#allocation15], 0
    %s25 = scalar_lea.sflag [#allocation15], 1
    %26 = vsyncpa %s25, 0
    loop: start=0, step=1, limit=6
    $region2: #{tpu_custom_call.1} parent=1 // loop_pre_header
      _
    $region3: #{tpu_custom_call.1} parent=1 // loop_header
      %s28 = sphi 0, %s32
      %p29 = scmp.ge.s32.totalorder %s28, 6
      %s35 = sphi 0, %s47
      %s36 = sphi 0, %s43
      %s37 = sphi 0, %s35
      %s38 = sphi 0, %s36
      %s39 = sphi 0, %s37
      %s40 = sphi 0, %s38
      %s48 = sphi 0, %s48
      %s50 = sphi 0, %s48
      %s51 = sphi 0, %s50
      %s65 = sphi 0, %s51
      %s69 = sphi 0, %s69
      %s71 = sphi 0, %s69
      %s72 = sphi 0, %s71
      %s86 = sphi 0, %s72
      %s90 = sphi 0, %s90
      %s92 = sphi 0, %s90
      %s93 = sphi 0, %s92
      %s107 = sphi 0, %s93
      %s111 = sphi 0, %s111
      %s113 = sphi 0, %s111
      %s114 = sphi 0, %s113
      %s128 = sphi 0, %s114
      %s132 = sphi 0, %s132
      %s134 = sphi 0, %s132
      %s135 = sphi 0, %s134
      %s149 = sphi 0, %s135
      %s153 = sphi 0, %s153
      %s155 = sphi 0, %s153
      %s156 = sphi 0, %s155
      %s170 = sphi 0, %s156
      %s174 = sphi 0, %s174
      %s176 = sphi 0, %s174
      %s177 = sphi 0, %s176
      %s191 = sphi 0, %s177
      %s195 = sphi 0, %s195
      %s197 = sphi 0, %s195
      %s198 = sphi 0, %s197
      %s212 = sphi 0, %s198
      %s216 = sphi 0, %s216
      %s218 = sphi 0, %s216
      %s219 = sphi 0, %s218
      %s233 = sphi 0, %s219
      %s237 = sphi 0, %s237
      %s239 = sphi 0, %s237
      %s240 = sphi 0, %s239
      %s254 = sphi 0, %s240
      %s262 = sphi 0, %s264
      %s265 = sphi 0, %s262
      %s266 = sphi 0, %s265
      %s282 = sphi 0, %s266
      %s290 = sphi 0, %s292
      %s293 = sphi 0, %s290
      %s294 = sphi 0, %s293
      %s310 = sphi 0, %s294
    $region4: #{tpu_custom_call.1} parent=1 // loop_header_branch
      %31 = sbr.rel (%p29) target = $region8
    $region5: #{tpu_custom_call.1} parent=1 // loop_body
      %s33 = ssub.s32 %s28, 1
      %s34 = ssub.s32 %s28, 2
      %s41 = sadd.s32 1, %s36
      %p42 = scmp.ge.s32.totalorder %s41, 2
      %s43 = scalar_select %p42, 0, %s41
      %s44 = sadd.s32 1, %s35
      %s45 = scalar_select %p42, %s44, %s35
      %p46 = scmp.ge.s32.totalorder %s45, 2
      %s47 = scalar_select %p46, 0, %s45
      %s49 = sadd.s32 %s48, 1
      %p52 = scmp.eq.s32.totalorder %s28, 3
      %p53 = scmp.ne.s32.totalorder %s48, %s50
      %p54 = scmp.eq.s32.totalorder %s28, 0
      %p55 = por %p53, %p54
      %p56 = scmp.ne.s32.totalorder %s48, %s50
      %p57 = scmp.eq.s32.totalorder %s33, 3
      %p58 = por %p56, %p57
      %p59 = scmp.ne.s32.totalorder %s50, %s51
      %p60 = scmp.eq.s32.totalorder %s33, 0
      %p61 = por %p59, %p60
      %p62 = scmp.ne.s32.totalorder %s50, %s51
      %p63 = scmp.eq.s32.totalorder %s34, 3
      %p64 = por %p62, %p63
      %p66 = scmp.ne.s32.totalorder %s51, %s65
      %p67 = scmp.eq.s32.totalorder %s34, 0
      %p68 = por %p66, %p67
      %s70 = sadd.s32 %s69, 1
      %p73 = scmp.eq.s32.totalorder %s28, 3
      %p74 = scmp.ne.s32.totalorder %s69, %s71
      %p75 = scmp.eq.s32.totalorder %s28, 0
      %p76 = por %p74, %p75
      %p77 = scmp.ne.s32.totalorder %s69, %s71
      %p78 = scmp.eq.s32.totalorder %s33, 3
      %p79 = por %p77, %p78
      %p80 = scmp.ne.s32.totalorder %s71, %s72
      %p81 = scmp.eq.s32.totalorder %s33, 0
      %p82 = por %p80, %p81
      %p83 = scmp.ne.s32.totalorder %s71, %s72
      %p84 = scmp.eq.s32.totalorder %s34, 3
      %p85 = por %p83, %p84
      %p87 = scmp.ne.s32.totalorder %s72, %s86
      %p88 = scmp.eq.s32.totalorder %s34, 0
      %p89 = por %p87, %p88
      %s91 = sadd.s32 %s90, 1
      %p94 = scmp.eq.s32.totalorder %s28, 3
      %p95 = scmp.ne.s32.totalorder %s90, %s92
      %p96 = scmp.eq.s32.totalorder %s28, 0
      %p97 = por %p95, %p96
      %p98 = scmp.ne.s32.totalorder %s90, %s92
      %p99 = scmp.eq.s32.totalorder %s33, 3
      %p100 = por %p98, %p99
      %p101 = scmp.ne.s32.totalorder %s92, %s93
      %p102 = scmp.eq.s32.totalorder %s33, 0
      %p103 = por %p101, %p102
      %p104 = scmp.ne.s32.totalorder %s92, %s93
      %p105 = scmp.eq.s32.totalorder %s34, 3
      %p106 = por %p104, %p105
      %p108 = scmp.ne.s32.totalorder %s93, %s107
      %p109 = scmp.eq.s32.totalorder %s34, 0
      %p110 = por %p108, %p109
      %s112 = sadd.s32 %s111, 1
      %p115 = scmp.eq.s32.totalorder %s28, 3
      %p116 = scmp.ne.s32.totalorder %s111, %s113
      %p117 = scmp.eq.s32.totalorder %s28, 0
      %p118 = por %p116, %p117
      %p119 = scmp.ne.s32.totalorder %s111, %s113
      %p120 = scmp.eq.s32.totalorder %s33, 3
      %p121 = por %p119, %p120
      %p122 = scmp.ne.s32.totalorder %s113, %s114
      %p123 = scmp.eq.s32.totalorder %s33, 0
      %p124 = por %p122, %p123
      %p125 = scmp.ne.s32.totalorder %s113, %s114
      %p126 = scmp.eq.s32.totalorder %s34, 3
      %p127 = por %p125, %p126
      %p129 = scmp.ne.s32.totalorder %s114, %s128
      %p130 = scmp.eq.s32.totalorder %s34, 0
      %p131 = por %p129, %p130
      %s133 = sadd.s32 %s132, 1
      %p136 = scmp.eq.s32.totalorder %s28, 3
      %p137 = scmp.ne.s32.totalorder %s132, %s134
      %p138 = scmp.eq.s32.totalorder %s28, 0
      %p139 = por %p137, %p138
      %p140 = scmp.ne.s32.totalorder %s132, %s134
      %p141 = scmp.eq.s32.totalorder %s33, 3
      %p142 = por %p140, %p141
      %p143 = scmp.ne.s32.totalorder %s134, %s135
      %p144 = scmp.eq.s32.totalorder %s33, 0
      %p145 = por %p143, %p144
      %p146 = scmp.ne.s32.totalorder %s134, %s135
      %p147 = scmp.eq.s32.totalorder %s34, 3
      %p148 = por %p146, %p147
      %p150 = scmp.ne.s32.totalorder %s135, %s149
      %p151 = scmp.eq.s32.totalorder %s34, 0
      %p152 = por %p150, %p151
      %s154 = sadd.s32 %s153, 1
      %p157 = scmp.eq.s32.totalorder %s28, 3
      %p158 = scmp.ne.s32.totalorder %s153, %s155
      %p159 = scmp.eq.s32.totalorder %s28, 0
      %p160 = por %p158, %p159
      %p161 = scmp.ne.s32.totalorder %s153, %s155
      %p162 = scmp.eq.s32.totalorder %s33, 3
      %p163 = por %p161, %p162
      %p164 = scmp.ne.s32.totalorder %s155, %s156
      %p165 = scmp.eq.s32.totalorder %s33, 0
      %p166 = por %p164, %p165
      %p167 = scmp.ne.s32.totalorder %s155, %s156
      %p168 = scmp.eq.s32.totalorder %s34, 3
      %p169 = por %p167, %p168
      %p171 = scmp.ne.s32.totalorder %s156, %s170
      %p172 = scmp.eq.s32.totalorder %s34, 0
      %p173 = por %p171, %p172
      %s175 = sadd.s32 %s174, 1
      %p178 = scmp.eq.s32.totalorder %s28, 3
      %p179 = scmp.ne.s32.totalorder %s174, %s176
      %p180 = scmp.eq.s32.totalorder %s28, 0
      %p181 = por %p179, %p180
      %p182 = scmp.ne.s32.totalorder %s174, %s176
      %p183 = scmp.eq.s32.totalorder %s33, 3
      %p184 = por %p182, %p183
      %p185 = scmp.ne.s32.totalorder %s176, %s177
      %p186 = scmp.eq.s32.totalorder %s33, 0
      %p187 = por %p185, %p186
      %p188 = scmp.ne.s32.totalorder %s176, %s177
      %p189 = scmp.eq.s32.totalorder %s34, 3
      %p190 = por %p188, %p189
      %p192 = scmp.ne.s32.totalorder %s177, %s191
      %p193 = scmp.eq.s32.totalorder %s34, 0
      %p194 = por %p192, %p193
      %s196 = sadd.s32 %s195, 1
      %p199 = scmp.eq.s32.totalorder %s28, 3
      %p200 = scmp.ne.s32.totalorder %s195, %s197
      %p201 = scmp.eq.s32.totalorder %s28, 0
      %p202 = por %p200, %p201
      %p203 = scmp.ne.s32.totalorder %s195, %s197
      %p204 = scmp.eq.s32.totalorder %s33, 3
      %p205 = por %p203, %p204
      %p206 = scmp.ne.s32.totalorder %s197, %s198
      %p207 = scmp.eq.s32.totalorder %s33, 0
      %p208 = por %p206, %p207
      %p209 = scmp.ne.s32.totalorder %s197, %s198
      %p210 = scmp.eq.s32.totalorder %s34, 3
      %p211 = por %p209, %p210
      %p213 = scmp.ne.s32.totalorder %s198, %s212
      %p214 = scmp.eq.s32.totalorder %s34, 0
      %p215 = por %p213, %p214
      %s217 = sadd.s32 %s216, 1
      %p220 = scmp.eq.s32.totalorder %s28, 3
      %p221 = scmp.ne.s32.totalorder %s216, %s218
      %p222 = scmp.eq.s32.totalorder %s28, 0
      %p223 = por %p221, %p222
      %p224 = scmp.ne.s32.totalorder %s216, %s218
      %p225 = scmp.eq.s32.totalorder %s33, 3
      %p226 = por %p224, %p225
      %p227 = scmp.ne.s32.totalorder %s218, %s219
      %p228 = scmp.eq.s32.totalorder %s33, 0
      %p229 = por %p227, %p228
      %p230 = scmp.ne.s32.totalorder %s218, %s219
      %p231 = scmp.eq.s32.totalorder %s34, 3
      %p232 = por %p230, %p231
      %p234 = scmp.ne.s32.totalorder %s219, %s233
      %p235 = scmp.eq.s32.totalorder %s34, 0
      %p236 = por %p234, %p235
      %s238 = sadd.s32 %s237, 1
      %p241 = scmp.eq.s32.totalorder %s28, 3
      %p242 = scmp.ne.s32.totalorder %s237, %s239
      %p243 = scmp.eq.s32.totalorder %s28, 0
      %p244 = por %p242, %p243
      %p245 = scmp.ne.s32.totalorder %s237, %s239
      %p246 = scmp.eq.s32.totalorder %s33, 3
      %p247 = por %p245, %p246
      %p248 = scmp.ne.s32.totalorder %s239, %s240
      %p249 = scmp.eq.s32.totalorder %s33, 0
      %p250 = por %p248, %p249
      %p251 = scmp.ne.s32.totalorder %s239, %s240
      %p252 = scmp.eq.s32.totalorder %s34, 3
      %p253 = por %p251, %p252
      %p255 = scmp.ne.s32.totalorder %s240, %s254
      %p256 = scmp.eq.s32.totalorder %s34, 0
      %p257 = por %p255, %p256
      %s258 = ssub.s32 %s35, %s47
      %s259 = ssub.s32 %s36, %s43
      %s260 = sor.u32 %s258, %s259
      %p261 = scmp.eq.s32.totalorder %s260, 0
      %s263 = sadd.s32 %s262, 1
      %s264 = scalar_select %p261, %s262, %s263
      %p267 = pneg %p261
      %p268 = scmp.eq.s32.totalorder %s28, 3
      %p269 = por %p267, %p268
      %p270 = scmp.ne.s32.totalorder %s262, %s265
      %p271 = scmp.eq.s32.totalorder %s28, 0
      %p272 = por %p270, %p271
      %p273 = scmp.ne.s32.totalorder %s262, %s265
      %p274 = scmp.eq.s32.totalorder %s33, 3
      %p275 = por %p273, %p274
      %p276 = scmp.ne.s32.totalorder %s265, %s266
      %p277 = scmp.eq.s32.totalorder %s33, 0
      %p278 = por %p276, %p277
      %p279 = scmp.ne.s32.totalorder %s265, %s266
      %p280 = scmp.eq.s32.totalorder %s34, 3
      %p281 = por %p279, %p280
      %p283 = scmp.ne.s32.totalorder %s266, %s282
      %p284 = scmp.eq.s32.totalorder %s34, 0
      %p285 = por %p283, %p284
      %s286 = ssub.s32 %s35, %s47
      %s287 = ssub.s32 %s36, %s43
      %s288 = sor.u32 %s286, %s287
      %p289 = scmp.eq.s32.totalorder %s288, 0
      %s291 = sadd.s32 %s290, 1
      %s292 = scalar_select %p289, %s290, %s291
      %p295 = pneg %p289
      %p296 = scmp.eq.s32.totalorder %s28, 3
      %p297 = por %p295, %p296
      %p298 = scmp.ne.s32.totalorder %s290, %s293
      %p299 = scmp.eq.s32.totalorder %s28, 0
      %p300 = por %p298, %p299
      %p301 = scmp.ne.s32.totalorder %s290, %s293
      %p302 = scmp.eq.s32.totalorder %s33, 3
      %p303 = por %p301, %p302
      %p304 = scmp.ne.s32.totalorder %s293, %s294
      %p305 = scmp.eq.s32.totalorder %s33, 0
      %p306 = por %p304, %p305
      %p307 = scmp.ne.s32.totalorder %s293, %s294
      %p308 = scmp.eq.s32.totalorder %s34, 3
      %p309 = por %p307, %p308
      %p311 = scmp.ne.s32.totalorder %s294, %s310
      %p312 = scmp.eq.s32.totalorder %s34, 0
      %p313 = por %p311, %p312
      %p314 = scmp.le.s32.totalorder 1, %s28
      %p315 = scmp.lt.s32.totalorder %s28, 5
      %p316 = pnand %p314, %p315
      %p317 = pneg %p316
      // Predicated region
      $region9: #{tpu_custom_call.1} parent=5 // pred_check
        _
      $region10: #{tpu_custom_call.1} parent=5 // pred_check_branch
        %319 = sbr.rel (%p316) target = $region12
      $region11: #{tpu_custom_call.1} parent=5 // pred_region
        %s320 = ssub.s32 %s28, 1
        // Predicated region
        $region13: #{tpu_custom_call.1} parent=11 // pred_check
          %p321 = pneg %p61
        $region14: #{tpu_custom_call.1} parent=11 // pred_check_branch
          %323 = sbr.rel (%p321) target = $region16
        $region15: #{tpu_custom_call.1} parent=11 // pred_region
          _
        $region16: #{tpu_custom_call.1} parent=11 // pred_fallthru
          _
        // Predicated region
        $region17: #{tpu_custom_call.1} parent=11 // pred_check
          %p324 = pneg %p82
        $region18: #{tpu_custom_call.1} parent=11 // pred_check_branch
          %326 = sbr.rel (%p324) target = $region20
        $region19: #{tpu_custom_call.1} parent=11 // pred_region
          _
        $region20: #{tpu_custom_call.1} parent=11 // pred_fallthru
          _
        // Predicated region
        $region21: #{tpu_custom_call.1} parent=11 // pred_check
          %p327 = pneg %p103
        $region22: #{tpu_custom_call.1} parent=11 // pred_check_branch
          %329 = sbr.rel (%p327) target = $region24
        $region23: #{tpu_custom_call.1} parent=11 // pred_region
          %s331 = ssub.s32 1024, 1024
          %332 = vsyncadd [#allocation6], %s331
          %s333 = sshll.u32 [#allocation5], 4
          %s334 = int_to_ptr.vmem [resolvable:$true] %s333
          %339 = dma.hbm_to_vmem [thread:$0]  %s3, 1024, %s334, [#allocation6], 64, 64, 4
        $region24: #{tpu_custom_call.1} parent=11 // pred_fallthru
          _
        // Predicated region
        $region25: #{tpu_custom_call.1} parent=11 // pred_check
          %p340 = pneg %p124
        $region26: #{tpu_custom_call.1} parent=11 // pred_check_branch
          %342 = sbr.rel (%p340) target = $region28
        $region27: #{tpu_custom_call.1} parent=11 // pred_region
          _
        $region28: #{tpu_custom_call.1} parent=11 // pred_fallthru
          _
        // Predicated region
        $region29: #{tpu_custom_call.1} parent=11 // pred_check
          %p343 = pneg %p145
        $region30: #{tpu_custom_call.1} parent=11 // pred_check_branch
          %345 = sbr.rel (%p343) target = $region32
        $region31: #{tpu_custom_call.1} parent=11 // pred_region
          _
        $region32: #{tpu_custom_call.1} parent=11 // pred_fallthru
          _
        // Predicated region
        $region33: #{tpu_custom_call.1} parent=11 // pred_check
          %p346 = pneg %p166
        $region34: #{tpu_custom_call.1} parent=11 // pred_check_branch
          %348 = sbr.rel (%p346) target = $region36
        $region35: #{tpu_custom_call.1} parent=11 // pred_region
          %s350 = ssub.s32 9216, 9216
          %351 = vsyncadd [#allocation9], %s350
          %s352 = sshll.u32 [#allocation8], 4
          %s353 = int_to_ptr.vmem [resolvable:$true] %s352
          %358 = dma.hbm_to_vmem [thread:$0]  %s6, 9216, %s353, [#allocation9], 64, 64, 4
        $region36: #{tpu_custom_call.1} parent=11 // pred_fallthru
          _
        // Predicated region
        $region37: #{tpu_custom_call.1} parent=11 // pred_check
          %p359 = pneg %p187
        $region38: #{tpu_custom_call.1} parent=11 // pred_check_branch
          %361 = sbr.rel (%p359) target = $region40
        $region39: #{tpu_custom_call.1} parent=11 // pred_region
          _
        $region40: #{tpu_custom_call.1} parent=11 // pred_fallthru
          _
        // Predicated region
        $region41: #{tpu_custom_call.1} parent=11 // pred_check
          %p362 = pneg %p208
        $region42: #{tpu_custom_call.1} parent=11 // pred_check_branch
          %364 = sbr.rel (%p362) target = $region44
        $region43: #{tpu_custom_call.1} parent=11 // pred_region
          _
        $region44: #{tpu_custom_call.1} parent=11 // pred_fallthru
          _
        // Predicated region
        $region45: #{tpu_custom_call.1} parent=11 // pred_check
          %p365 = pneg %p229
        $region46: #{tpu_custom_call.1} parent=11 // pred_check_branch
          %367 = sbr.rel (%p365) target = $region48
        $region47: #{tpu_custom_call.1} parent=11 // pred_region
          %s369 = ssub.s32 1024, 1024
          %370 = vsyncadd [#allocation9], %s369
          %s371 = sshll.u32 [#allocation10], 4
          %s372 = int_to_ptr.vmem [resolvable:$true] %s371
          %377 = dma.hbm_to_vmem [thread:$0]  %s9, 1024, %s372, [#allocation9], 64, 64, 4
        $region48: #{tpu_custom_call.1} parent=11 // pred_fallthru
          _
        // Predicated region
        $region49: #{tpu_custom_call.1} parent=11 // pred_check
          %p378 = pneg %p250
        $region50: #{tpu_custom_call.1} parent=11 // pred_check_branch
          %380 = sbr.rel (%p378) target = $region52
        $region51: #{tpu_custom_call.1} parent=11 // pred_region
          %s382 = ssub.s32 1024, 1024
          %383 = vsyncadd [#allocation12], %s382
          %s384 = sshll.u32 [#allocation11], 4
          %s385 = int_to_ptr.vmem [resolvable:$true] %s384
          %390 = dma.hbm_to_vmem [thread:$0]  %s10, 1024, %s385, [#allocation12], 64, 64, 4
        $region52: #{tpu_custom_call.1} parent=11 // pred_fallthru
          _
      $region12: #{tpu_custom_call.1} parent=5 // pred_fallthru
        _
      %p391 = scmp.lt.s32.totalorder %s28, 4
      // Predicated region
      $region53: #{tpu_custom_call.1} parent=5 // pred_check
        %p392 = pneg %p391
      $region54: #{tpu_custom_call.1} parent=5 // pred_check_branch
        %394 = sbr.rel (%p392) target = $region56
      $region55: #{tpu_custom_call.1} parent=5 // pred_region
        _
      $region56: #{tpu_custom_call.1} parent=5 // pred_fallthru
        _
      %p395 = scmp.le.s32.totalorder 1, %s28
      %p396 = scmp.lt.s32.totalorder %s28, 5
      %p397 = pnand %p395, %p396
      %p398 = pneg %p397
      // Predicated region
      $region57: #{tpu_custom_call.1} parent=5 // pred_check
        _
      $region58: #{tpu_custom_call.1} parent=5 // pred_check_branch
        %400 = sbr.rel (%p397) target = $region60
      $region59: #{tpu_custom_call.1} parent=5 // pred_region
        %s401 = ssub.s32 %s28, 1
        // Predicated region
        $region61: #{tpu_custom_call.1} parent=59 // pred_check
          %p402 = pneg %p103
        $region62: #{tpu_custom_call.1} parent=59 // pred_check_branch
          %404 = sbr.rel (%p402) target = $region64
        $region63: #{tpu_custom_call.1} parent=59 // pred_region
          %405 = dma.done [#allocation6], 1024
        $region64: #{tpu_custom_call.1} parent=59 // pred_fallthru
          _
        // Predicated region
        $region65: #{tpu_custom_call.1} parent=59 // pred_check
          %p406 = pneg %p166
        $region66: #{tpu_custom_call.1} parent=59 // pred_check_branch
          %408 = sbr.rel (%p406) target = $region68
        $region67: #{tpu_custom_call.1} parent=59 // pred_region
          %409 = dma.done [#allocation9], 9216
        $region68: #{tpu_custom_call.1} parent=59 // pred_fallthru
          _
        // Predicated region
        $region69: #{tpu_custom_call.1} parent=59 // pred_check
          %p410 = pneg %p229
        $region70: #{tpu_custom_call.1} parent=59 // pred_check_branch
          %412 = sbr.rel (%p410) target = $region72
        $region71: #{tpu_custom_call.1} parent=59 // pred_region
          %413 = dma.done [#allocation9], 1024
        $region72: #{tpu_custom_call.1} parent=59 // pred_fallthru
          _
        // Predicated region
        $region73: #{tpu_custom_call.1} parent=59 // pred_check
          %p414 = pneg %p250
        $region74: #{tpu_custom_call.1} parent=59 // pred_check_branch
          %416 = sbr.rel (%p414) target = $region76
        $region75: #{tpu_custom_call.1} parent=59 // pred_region
          %417 = dma.done [#allocation12], 1024
        $region76: #{tpu_custom_call.1} parent=59 // pred_fallthru
          _
        %p418 = pneg %p61
        %p419 = pneg %p58
        %p420 = pneg %p82
        %p421 = pneg %p79
        %p422 = pneg %p103
        %p423 = pneg %p100
        %p424 = pneg %p124
        %p425 = pneg %p121
        %p426 = pneg %p145
        %p427 = pneg %p142
        %p428 = pneg %p166
        %p429 = pneg %p163
        %p430 = pneg %p187
        %p431 = pneg %p184
        %p432 = pneg %p208
        %p433 = pneg %p205
        %p434 = pneg %p229
        %p435 = pneg %p226
        %p436 = pneg %p250
        %p437 = pneg %p247
        %p438 = pneg %p278
        %p439 = pneg %p275
        %s440 = sand.u32 %s265, 1
        %s441 = scalar_lea.sflag [#allocation7], %s440
        %s442 = sand.u32 %s265, 1
        %s443 = smul.addr %s442, 128
        %s444 = scalar_lea.vmem [#allocation13], %s443
        %p445 = pneg %p306
        %p446 = pneg %p303
        %s447 = sand.u32 %s293, 1
        %s448 = scalar_lea.sflag [#allocation15], %s447
        %s449 = sand.u32 %s293, 1
        %s450 = smul.addr %s449, 128
        %s451 = scalar_lea.vmem [#allocation14], %s450
        %s452 = smul.u32 8, %s38
        %s453 = smul.u32 8, %s38
        %p455 = scmp.lt.s32.totalorder %s38, 0
        %s456 = ssub.s32 0, %s38
        %s457 = scalar_select %p455, %s456, %s38
        %s458 = sand.u32 %s457, 1
        %s459 = ssub.s32 0, %s458
        %s460 = scalar_select %p455, %s459, %s458
        %p461 = scmp.eq.s32.totalorder %s38, 0
        // Predicated region
        $region77: #{tpu_custom_call.1} parent=59 // pred_check
          %p462 = pneg %p461
        $region78: #{tpu_custom_call.1} parent=59 // pred_check_branch
          %464 = sbr.rel (%p462) target = $region80
        $region79: #{tpu_custom_call.1} parent=59 // pred_region
          %s465 = smul.u32 0, 16
          %s466 = smul.u32 %s37, 320
          %s467 = sadd.s32 %s465, %s466
          %s468 = smul.addr %s467, 16
          %s469 = scalar_lea.hbm %s0, %s468
          // Predicated region
          $region81: #{tpu_custom_call.1} parent=79 // pred_check
            _
          $region82: #{tpu_custom_call.1} parent=79 // pred_check_branch
            %471 = sbr.rel target = $region84
          $region83: #{tpu_custom_call.1} parent=79 // pred_region
            %472 = sst [smem:[#allocation18]] [#allocation17]
            %473 = sst [smem:[#allocation19]] [#allocation16]
          $region84: #{tpu_custom_call.1} parent=79 // pred_fallthru
            _
          %475 = shalt.err (0)
          %s477 = sshll.u32 [#allocation2], 4
          %s478 = int_to_ptr.vmem [resolvable:$true] %s477
          %480 = dma.hbm_to_vmem [thread:$0]  %s469, 3072, %s478, [#allocation3]
        $region80: #{tpu_custom_call.1} parent=59 // pred_fallthru
          _
        %s481 = sadd.s32 %s38, 1
        %p482 = scmp.lt.s32.totalorder %s481, 2
        // Predicated region
        $region85: #{tpu_custom_call.1} parent=59 // pred_check
          %p483 = pneg %p482
        $region86: #{tpu_custom_call.1} parent=59 // pred_check_branch
          %485 = sbr.rel (%p483) target = $region88
        $region87: #{tpu_custom_call.1} parent=59 // pred_region
          %s486 = ssub.s32 1, %s460
          %s487 = smul.u32 %s481, 8
          %s488 = smul.u32 %s487, 16
          %s489 = smul.u32 %s37, 320
          %s490 = sadd.s32 %s488, %s489
          %s491 = smul.addr %s490, 16
          %s492 = scalar_lea.hbm %s0, %s491
          %s493 = smul.u32 %s486, 192
          %s494 = scalar_lea.vmem [#allocation2], %s493
          %s495 = scalar_lea.sflag [#allocation3], %s486
          // Predicated region
          $region89: #{tpu_custom_call.1} parent=87 // pred_check
            _
          $region90: #{tpu_custom_call.1} parent=87 // pred_check_branch
            %497 = sbr.rel target = $region92
          $region91: #{tpu_custom_call.1} parent=87 // pred_region
            %498 = sst [smem:[#allocation18]] [#allocation21]
            %499 = sst [smem:[#allocation19]] [#allocation20]
          $region92: #{tpu_custom_call.1} parent=87 // pred_fallthru
            _
          %501 = shalt.err (0)
          %s503 = sshll.u32 %s494, 4
          %s504 = int_to_ptr.vmem [resolvable:$true] %s503
          %506 = dma.hbm_to_vmem [thread:$0]  %s492, 3072, %s504, %s495
        $region88: #{tpu_custom_call.1} parent=59 // pred_fallthru
          _
        %s507 = smul.u32 %s38, 8
        %s508 = smul.u32 %s460, 192
        %s509 = scalar_lea.vmem [#allocation2], %s508
        %s510 = scalar_lea.sflag [#allocation3], %s460
        %s511 = smul.u32 12, 16
        %s512 = smul.u32 %s511, 1
        %s513 = sshll.u32 %s512, 4
        %514 = dma.done %s510, %s513
        %v515 = vld [vmem:[%s509] sm:$0xff]
        %v516 = vld [vmem:[%s509 + $0x8] sm:$0xff]
        %v517 = vld [vmem:[%s509 + $0x10] sm:$0xff]
        %v518 = vld [vmem:[%s509 + $0x18] sm:$0xff]
        %v519 = vld [vmem:[%s509 + $0x20] sm:$0xff]
        %v520 = vld [vmem:[%s509 + $0x28] sm:$0xff]
        %v521 = vld [vmem:[%s509 + $0x30] sm:$0xff]
        %v522 = vld [vmem:[%s509 + $0x38] sm:$0xff]
        %v523 = vld [vmem:[%s509 + $0x40] sm:$0xff]
        %v524 = vld [vmem:[%s509 + $0x48] sm:$0xff]
        %v525 = vld [vmem:[%s509 + $0x50] sm:$0xff]
        %v526 = vld [vmem:[%s509 + $0x58] sm:$0xff]
        %v527 = vld [vmem:[%s509 + $0x60] sm:$0xff]
        %v528 = vld [vmem:[%s509 + $0x68] sm:$0xff]
        %v529 = vld [vmem:[%s509 + $0x70] sm:$0xff]
        %v530 = vld [vmem:[%s509 + $0x78] sm:$0xff]
        %v531 = vld [vmem:[%s509 + $0x80] sm:$0xff]
        %v532 = vld [vmem:[%s509 + $0x88] sm:$0xff]
        %v533 = vld [vmem:[%s509 + $0x90] sm:$0xff]
        %v534 = vld [vmem:[%s509 + $0x98] sm:$0xff]
        %v535 = vld [vmem:[%s509 + $0xa0] sm:$0xff]
        %v536 = vld [vmem:[%s509 + $0xa8] sm:$0xff]
        %v537 = vld [vmem:[%s509 + $0xb0] sm:$0xff]
        %v538 = vld [vmem:[%s509 + $0xb8] sm:$0xff]
        %v539 = vld [vmem:[%s1] sm:$0x1]
        %v541 = vlaneseq
        %v542 = vshrl.u32 %v541, 7
        %v543 = vsub.s32 0, %v542
        %v544 = vrot.slane %v539, %v543
        %v546 = vmul.f32 %v515, %v544
        %v547 = vmul.f32 %v516, %v544
        %v548 = vmul.f32 %v517, %v544
        %v549 = vmul.f32 %v518, %v544
        %v550 = vmul.f32 %v519, %v544
        %v551 = vmul.f32 %v520, %v544
        %v552 = vmul.f32 %v521, %v544
        %v553 = vmul.f32 %v522, %v544
        %v554 = vmul.f32 %v523, %v544
        %v555 = vmul.f32 %v524, %v544
        %v556 = vmul.f32 %v525, %v544
        %v557 = vmul.f32 %v526, %v544
        %v558 = vmul.f32 %v527, %v544
        %v559 = vmul.f32 %v528, %v544
        %v560 = vmul.f32 %v529, %v544
        %v561 = vmul.f32 %v530, %v544
        %v562 = vmul.f32 %v531, %v544
        %v563 = vmul.f32 %v532, %v544
        %v564 = vmul.f32 %v533, %v544
        %v565 = vmul.f32 %v534, %v544
        %v566 = vmul.f32 %v535, %v544
        %v567 = vmul.f32 %v536, %v544
        %v568 = vmul.f32 %v537, %v544
        %v569 = vmul.f32 %v538, %v544
        %v570 = vld [vmem:[%s2] sm:$0x1]
        %v572 = vlaneseq
        %v573 = vshrl.u32 %v572, 7
        %v574 = vsub.s32 0, %v573
        %v575 = vrot.slane %v570, %v574
        %v577 = vadd.f32 %v546, %v575
        %v578 = vadd.f32 %v547, %v575
        %v579 = vadd.f32 %v548, %v575
        %v580 = vadd.f32 %v549, %v575
        %v581 = vadd.f32 %v550, %v575
        %v582 = vadd.f32 %v551, %v575
        %v583 = vadd.f32 %v552, %v575
        %v584 = vadd.f32 %v553, %v575
        %v585 = vadd.f32 %v554, %v575
        %v586 = vadd.f32 %v555, %v575
        %v587 = vadd.f32 %v556, %v575
        %v588 = vadd.f32 %v557, %v575
        %v589 = vadd.f32 %v558, %v575
        %v590 = vadd.f32 %v559, %v575
        %v591 = vadd.f32 %v560, %v575
        %v592 = vadd.f32 %v561, %v575
        %v593 = vadd.f32 %v562, %v575
        %v594 = vadd.f32 %v563, %v575
        %v595 = vadd.f32 %v564, %v575
        %v596 = vadd.f32 %v565, %v575
        %v597 = vadd.f32 %v566, %v575
        %v598 = vadd.f32 %v567, %v575
        %v599 = vadd.f32 %v568, %v575
        %v600 = vadd.f32 %v569, %v575
        %v601 = vmax.f32 %v577, 0.0
        %v602 = vmax.f32 %v578, 0.0
        %v603 = vmax.f32 %v579, 0.0
        %v604 = vmax.f32 %v580, 0.0
        %v605 = vmax.f32 %v581, 0.0
        %v606 = vmax.f32 %v582, 0.0
        %v607 = vmax.f32 %v583, 0.0
        %v608 = vmax.f32 %v584, 0.0
        %v609 = vmax.f32 %v585, 0.0
        %v610 = vmax.f32 %v586, 0.0
        %v611 = vmax.f32 %v587, 0.0
        %v612 = vmax.f32 %v588, 0.0
        %v613 = vmax.f32 %v589, 0.0
        %v614 = vmax.f32 %v590, 0.0
        %v615 = vmax.f32 %v591, 0.0
        %v616 = vmax.f32 %v592, 0.0
        %v617 = vmax.f32 %v593, 0.0
        %v618 = vmax.f32 %v594, 0.0
        %v619 = vmax.f32 %v595, 0.0
        %v620 = vmax.f32 %v596, 0.0
        %v621 = vmax.f32 %v597, 0.0
        %v622 = vmax.f32 %v598, 0.0
        %v623 = vmax.f32 %v599, 0.0
        %v624 = vmax.f32 %v600, 0.0
        %625 = vst [vmem:[%s451] sm:$0xff] %v605
        %626 = vst [vmem:[%s451 + $0x8] sm:$0xff] %v606
        %627 = vst [vmem:[%s451 + $0x10] sm:$0xff] %v607
        %628 = vst [vmem:[%s451 + $0x18] sm:$0xff] %v608
        %629 = vst [vmem:[%s451 + $0x20] sm:$0xff] %v609
        %630 = vst [vmem:[%s451 + $0x28] sm:$0xff] %v610
        %631 = vst [vmem:[%s451 + $0x30] sm:$0xff] %v611
        %632 = vst [vmem:[%s451 + $0x38] sm:$0xff] %v612
        %633 = vst [vmem:[%s451 + $0x40] sm:$0xff] %v613
        %634 = vst [vmem:[%s451 + $0x48] sm:$0xff] %v614
        %635 = vst [vmem:[%s451 + $0x50] sm:$0xff] %v615
        %636 = vst [vmem:[%s451 + $0x58] sm:$0xff] %v616
        %637 = vst [vmem:[%s451 + $0x60] sm:$0xff] %v617
        %638 = vst [vmem:[%s451 + $0x68] sm:$0xff] %v618
        %639 = vst [vmem:[%s451 + $0x70] sm:$0xff] %v619
        %640 = vst [vmem:[%s451 + $0x78] sm:$0xff] %v620
        %v641 = vpack.c.bf16 %v602, %v601
        %v642 = vpack.c.bf16 %v604, %v603
        %v643 = vpack.c.bf16 %v606, %v605
        %v644 = vpack.c.bf16 %v608, %v607
        %v645 = vpack.c.bf16 %v610, %v609
        %v646 = vpack.c.bf16 %v612, %v611
        %v647 = vpack.c.bf16 %v614, %v613
        %v648 = vpack.c.bf16 %v616, %v615
        %v649 = vpack.c.bf16 %v618, %v617
        %v650 = vpack.c.bf16 %v620, %v619
        %v651 = vpack.c.bf16 %v622, %v621
        %v652 = vpack.c.bf16 %v624, %v623
        %v653 = vld [vmem:[#allocation11] sm:$0xf]
        %v654 = vld [vmem:[#allocation11 + $0x4] sm:$0xf]
        %v655 = vld [vmem:[#allocation11 + $0x8] sm:$0xf]
        %v656 = vld [vmem:[#allocation11 + $0xc] sm:$0xf]
        %v657 = vld [vmem:[#allocation11 + $0x10] sm:$0xf]
        %v658 = vld [vmem:[#allocation11 + $0x14] sm:$0xf]
        %v659 = vld [vmem:[#allocation11 + $0x18] sm:$0xf]
        %v660 = vld [vmem:[#allocation11 + $0x1c] sm:$0xf]
        %v661 = vld [vmem:[#allocation11 + $0x20] sm:$0xf]
        %v662 = vld [vmem:[#allocation11 + $0x24] sm:$0xf]
        %v663 = vld [vmem:[#allocation11 + $0x28] sm:$0xf]
        %v664 = vld [vmem:[#allocation11 + $0x2c] sm:$0xf]
        %v665 = vld [vmem:[#allocation11 + $0x30] sm:$0xf]
        %v666 = vld [vmem:[#allocation11 + $0x34] sm:$0xf]
        %v667 = vld [vmem:[#allocation11 + $0x38] sm:$0xf]
        %v668 = vld [vmem:[#allocation11 + $0x3c] sm:$0xf]
        %v685 = vunpack.c.l.b16 %v653
        %v686 = vunpack.c.l.b16 %v654
        %v687 = vunpack.c.l.b16 %v655
        %v688 = vunpack.c.l.b16 %v656
        %v689 = vunpack.c.l.b16 %v657
        %v690 = vunpack.c.l.b16 %v658
        %v691 = vunpack.c.l.b16 %v659
        %v692 = vunpack.c.l.b16 %v660
        %v693 = vunpack.c.l.b16 %v661
        %v694 = vunpack.c.l.b16 %v662
        %v695 = vunpack.c.l.b16 %v663
        %v696 = vunpack.c.l.b16 %v664
        %v697 = vunpack.c.l.b16 %v665
        %v698 = vunpack.c.l.b16 %v666
        %v699 = vunpack.c.l.b16 %v667
        %v700 = vunpack.c.l.b16 %v668
        %v701 = vpack.c.b16 %v686, %v685
        %v702 = vpack.c.b16 %v688, %v687
        %v703 = vpack.c.b16 %v690, %v689
        %v704 = vpack.c.b16 %v692, %v691
        %v705 = vpack.c.b16 %v694, %v693
        %v706 = vpack.c.b16 %v696, %v695
        %v707 = vpack.c.b16 %v698, %v697
        %v708 = vpack.c.b16 %v700, %v699
        %717 = vmatprep.subr.bf16.mxu0 0
        %718 = vmatpush1.bf16.msra.mxu0 %v708
        %719 = vmatprep.subr.bf16.mxu0 0
        %720 = vmatpush1.bf16.msra.mxu0 %v707
        %721 = vmatprep.subr.bf16.mxu0 0
        %722 = vmatpush1.bf16.msra.mxu0 %v706
        %723 = vmatprep.subr.bf16.mxu0 0
        %724 = vmatpush1.bf16.msra.mxu0 %v705
        %725 = vmatprep.subr.bf16.mxu0 0
        %726 = vmatpush1.bf16.msra.mxu0 %v704
        %727 = vmatprep.subr.bf16.mxu0 0
        %728 = vmatpush1.bf16.msra.mxu0 %v703
        %729 = vmatprep.subr.bf16.mxu0 0
        %730 = vmatpush1.bf16.msra.mxu0 %v702
        %731 = vmatprep.subr.bf16.mxu0 0
        %732 = vmatpush1.bf16.msra.mxu0 %v701
        %733 = vmatprep.subr.bf16.mxu0 0
        %734 = vmatpush2.bf16.msra.mxu0 0
        %735 = vmatprep.subr.bf16.mxu0 0
        %736 = vmatpush2.bf16.msra.mxu0 0
        %737 = vmatprep.subr.bf16.mxu0 0
        %738 = vmatpush2.bf16.msra.mxu0 0
        %739 = vmatprep.subr.bf16.mxu0 0
        %740 = vmatpush2.bf16.msra.mxu0 0
        %741 = vmatprep.subr.bf16.mxu0 0
        %742 = vmatpush2.bf16.msra.mxu0 0
        %743 = vmatprep.subr.bf16.mxu0 0
        %744 = vmatpush2.bf16.msra.mxu0 0
        %745 = vmatprep.subr.bf16.mxu0 0
        %746 = vmatpush2.bf16.msra.mxu0 0
        %747 = vmatprep.subr.bf16.mxu0 0
        %748 = vmatpush2.bf16.msra.mxu0 0
        %749 = vmatprep.mubr.bf16.mxu0 0
        %750 = vmatmul.mubr.bf16.gmra.mxu0 %v643
        %v751 = vpop.f32.mrf.mxu0
        %v752 = vadd.f32 0.0, %v751
        %v753 = vpop.f32.mrf.mxu0
        %v754 = vpop.f32.mrf.mxu0
        %v755 = vadd.f32 0.0, %v754
        %v756 = vpop.f32.mrf.mxu0
        %757 = vmatprep.mubr.bf16.mxu0 0
        %758 = vmatmul.mubr.bf16.gmra.mxu0 %v644
        %v759 = vpop.f32.mrf.mxu0
        %v760 = vadd.f32 0.0, %v759
        %v761 = vpop.f32.mrf.mxu0
        %v762 = vpop.f32.mrf.mxu0
        %v763 = vadd.f32 0.0, %v762
        %v764 = vpop.f32.mrf.mxu0
        %765 = vmatprep.mubr.bf16.mxu0 0
        %766 = vmatmul.mubr.bf16.gmra.mxu0 %v645
        %v767 = vpop.f32.mrf.mxu0
        %v768 = vadd.f32 0.0, %v767
        %v769 = vpop.f32.mrf.mxu0
        %v770 = vpop.f32.mrf.mxu0
        %v771 = vadd.f32 0.0, %v770
        %v772 = vpop.f32.mrf.mxu0
        %773 = vmatprep.mubr.bf16.mxu0 0
        %774 = vmatmul.mubr.bf16.gmra.mxu0 %v646
        %v775 = vpop.f32.mrf.mxu0
        %v776 = vadd.f32 0.0, %v775
        %v777 = vpop.f32.mrf.mxu0
        %v778 = vpop.f32.mrf.mxu0
        %v779 = vadd.f32 0.0, %v778
        %v780 = vpop.f32.mrf.mxu0
        %781 = vmatprep.mubr.bf16.mxu0 0
        %782 = vmatmul.mubr.bf16.gmra.mxu0 %v647
        %v783 = vpop.f32.mrf.mxu0
        %v784 = vadd.f32 0.0, %v783
        %v785 = vpop.f32.mrf.mxu0
        %v786 = vpop.f32.mrf.mxu0
        %v787 = vadd.f32 0.0, %v786
        %v788 = vpop.f32.mrf.mxu0
        %789 = vmatprep.mubr.bf16.mxu0 0
        %790 = vmatmul.mubr.bf16.gmra.mxu0 %v648
        %v791 = vpop.f32.mrf.mxu0
        %v792 = vadd.f32 0.0, %v791
        %v793 = vpop.f32.mrf.mxu0
        %v794 = vpop.f32.mrf.mxu0
        %v795 = vadd.f32 0.0, %v794
        %v796 = vpop.f32.mrf.mxu0
        %797 = vmatprep.mubr.bf16.mxu0 0
        %798 = vmatmul.mubr.bf16.gmra.mxu0 %v649
        %v799 = vpop.f32.mrf.mxu0
        %v800 = vadd.f32 0.0, %v799
        %v801 = vpop.f32.mrf.mxu0
        %v802 = vpop.f32.mrf.mxu0
        %v803 = vadd.f32 0.0, %v802
        %v804 = vpop.f32.mrf.mxu0
        %805 = vmatprep.mubr.bf16.mxu0 0
        %806 = vmatmul.mubr.bf16.gmra.mxu0 %v650
        %v807 = vpop.f32.mrf.mxu0
        %v808 = vadd.f32 0.0, %v807
        %v809 = vpop.f32.mrf.mxu0
        %v810 = vpop.f32.mrf.mxu0
        %v811 = vadd.f32 0.0, %v810
        %v812 = vpop.f32.mrf.mxu0
        %813 = vdwg.mxu0
        %v814 = vld [vmem:[#allocation5] sm:$0xf]
        %v815 = vld [vmem:[#allocation5 + $0x4] sm:$0xf]
        %v816 = vld [vmem:[#allocation5 + $0x8] sm:$0xf]
        %v817 = vld [vmem:[#allocation5 + $0xc] sm:$0xf]
        %v818 = vld [vmem:[#allocation5 + $0x10] sm:$0xf]
        %v819 = vld [vmem:[#allocation5 + $0x14] sm:$0xf]
        %v820 = vld [vmem:[#allocation5 + $0x18] sm:$0xf]
        %v821 = vld [vmem:[#allocation5 + $0x1c] sm:$0xf]
        %v822 = vld [vmem:[#allocation5 + $0x20] sm:$0xf]
        %v823 = vld [vmem:[#allocation5 + $0x24] sm:$0xf]
        %v824 = vld [vmem:[#allocation5 + $0x28] sm:$0xf]
        %v825 = vld [vmem:[#allocation5 + $0x2c] sm:$0xf]
        %v826 = vld [vmem:[#allocation5 + $0x30] sm:$0xf]
        %v827 = vld [vmem:[#allocation5 + $0x34] sm:$0xf]
        %v828 = vld [vmem:[#allocation5 + $0x38] sm:$0xf]
        %v829 = vld [vmem:[#allocation5 + $0x3c] sm:$0xf]
        %v846 = vunpack.c.l.b16 %v814
        %v847 = vunpack.c.l.b16 %v815
        %v848 = vunpack.c.l.b16 %v816
        %v849 = vunpack.c.l.b16 %v817
        %v850 = vunpack.c.l.b16 %v818
        %v851 = vunpack.c.l.b16 %v819
        %v852 = vunpack.c.l.b16 %v820
        %v853 = vunpack.c.l.b16 %v821
        %v854 = vunpack.c.l.b16 %v822
        %v855 = vunpack.c.l.b16 %v823
        %v856 = vunpack.c.l.b16 %v824
        %v857 = vunpack.c.l.b16 %v825
        %v858 = vunpack.c.l.b16 %v826
        %v859 = vunpack.c.l.b16 %v827
        %v860 = vunpack.c.l.b16 %v828
        %v861 = vunpack.c.l.b16 %v829
        %v862 = vpack.c.b16 %v847, %v846
        %v863 = vpack.c.b16 %v849, %v848
        %v864 = vpack.c.b16 %v851, %v850
        %v865 = vpack.c.b16 %v853, %v852
        %v866 = vpack.c.b16 %v855, %v854
        %v867 = vpack.c.b16 %v857, %v856
        %v868 = vpack.c.b16 %v859, %v858
        %v869 = vpack.c.b16 %v861, %v860
        %878 = vmatprep.subr.bf16.mxu0 0
        %879 = vmatpush1.bf16.msra.mxu0 %v869
        %880 = vmatprep.subr.bf16.mxu0 0
        %881 = vmatpush1.bf16.msra.mxu0 %v868
        %882 = vmatprep.subr.bf16.mxu0 0
        %883 = vmatpush1.bf16.msra.mxu0 %v867
        %884 = vmatprep.subr.bf16.mxu0 0
        %885 = vmatpush1.bf16.msra.mxu0 %v866
        %886 = vmatprep.subr.bf16.mxu0 0
        %887 = vmatpush1.bf16.msra.mxu0 %v865
        %888 = vmatprep.subr.bf16.mxu0 0
        %889 = vmatpush1.bf16.msra.mxu0 %v864
        %890 = vmatprep.subr.bf16.mxu0 0
        %891 = vmatpush1.bf16.msra.mxu0 %v863
        %892 = vmatprep.subr.bf16.mxu0 0
        %893 = vmatpush1.bf16.msra.mxu0 %v862
        %894 = vmatprep.subr.bf16.mxu0 0
        %895 = vmatpush2.bf16.msra.mxu0 0
        %896 = vmatprep.subr.bf16.mxu0 0
        %897 = vmatpush2.bf16.msra.mxu0 0
        %898 = vmatprep.subr.bf16.mxu0 0
        %899 = vmatpush2.bf16.msra.mxu0 0
        %900 = vmatprep.subr.bf16.mxu0 0
        %901 = vmatpush2.bf16.msra.mxu0 0
        %902 = vmatprep.subr.bf16.mxu0 0
        %903 = vmatpush2.bf16.msra.mxu0 0
        %904 = vmatprep.subr.bf16.mxu0 0
        %905 = vmatpush2.bf16.msra.mxu0 0
        %906 = vmatprep.subr.bf16.mxu0 0
        %907 = vmatpush2.bf16.msra.mxu0 0
        %908 = vmatprep.subr.bf16.mxu0 0
        %909 = vmatpush2.bf16.msra.mxu0 0
        %910 = vmatprep.mubr.bf16.mxu0 0
        %911 = vmatmul.mubr.bf16.gmra.mxu0 %v641
        %v912 = vpop.f32.mrf.mxu0
        %v913 = vadd.f32 0.0, %v912
        %v914 = vpop.f32.mrf.mxu0
        %v915 = vpop.f32.mrf.mxu0
        %v916 = vadd.f32 0.0, %v915
        %v917 = vpop.f32.mrf.mxu0
        %918 = vmatprep.mubr.bf16.mxu0 0
        %919 = vmatmul.mubr.bf16.gmra.mxu0 %v642
        %v920 = vpop.f32.mrf.mxu0
        %v921 = vadd.f32 0.0, %v920
        %v922 = vpop.f32.mrf.mxu0
        %v923 = vpop.f32.mrf.mxu0
        %v924 = vadd.f32 0.0, %v923
        %v925 = vpop.f32.mrf.mxu0
        %926 = vmatprep.mubr.bf16.mxu0 0
        %927 = vmatmul.mubr.bf16.gmra.mxu0 %v643
        %v928 = vpop.f32.mrf.mxu0
        %v929 = vadd.f32 0.0, %v928
        %v930 = vpop.f32.mrf.mxu0
        %v931 = vpop.f32.mrf.mxu0
        %v932 = vadd.f32 0.0, %v931
        %v933 = vpop.f32.mrf.mxu0
        %934 = vmatprep.mubr.bf16.mxu0 0
        %935 = vmatmul.mubr.bf16.gmra.mxu0 %v644
        %v936 = vpop.f32.mrf.mxu0
        %v937 = vadd.f32 0.0, %v936
        %v938 = vpop.f32.mrf.mxu0
        %v939 = vpop.f32.mrf.mxu0
        %v940 = vadd.f32 0.0, %v939
        %v941 = vpop.f32.mrf.mxu0
        %942 = vmatprep.mubr.bf16.mxu0 0
        %943 = vmatmul.mubr.bf16.gmra.mxu0 %v645
        %v944 = vpop.f32.mrf.mxu0
        %v945 = vadd.f32 0.0, %v944
        %v946 = vpop.f32.mrf.mxu0
        %v947 = vpop.f32.mrf.mxu0
        %v948 = vadd.f32 0.0, %v947
        %v949 = vpop.f32.mrf.mxu0
        %950 = vmatprep.mubr.bf16.mxu0 0
        %951 = vmatmul.mubr.bf16.gmra.mxu0 %v646
        %v952 = vpop.f32.mrf.mxu0
        %v953 = vadd.f32 0.0, %v952
        %v954 = vpop.f32.mrf.mxu0
        %v955 = vpop.f32.mrf.mxu0
        %v956 = vadd.f32 0.0, %v955
        %v957 = vpop.f32.mrf.mxu0
        %958 = vmatprep.mubr.bf16.mxu0 0
        %959 = vmatmul.mubr.bf16.gmra.mxu0 %v647
        %v960 = vpop.f32.mrf.mxu0
        %v961 = vadd.f32 0.0, %v960
        %v962 = vpop.f32.mrf.mxu0
        %v963 = vpop.f32.mrf.mxu0
        %v964 = vadd.f32 0.0, %v963
        %v965 = vpop.f32.mrf.mxu0
        %966 = vmatprep.mubr.bf16.mxu0 0
        %967 = vmatmul.mubr.bf16.gmra.mxu0 %v648
        %v968 = vpop.f32.mrf.mxu0
        %v969 = vadd.f32 0.0, %v968
        %v970 = vpop.f32.mrf.mxu0
        %v971 = vpop.f32.mrf.mxu0
        %v972 = vadd.f32 0.0, %v971
        %v973 = vpop.f32.mrf.mxu0
        %974 = vmatprep.mubr.bf16.mxu0 0
        %975 = vmatmul.mubr.bf16.gmra.mxu0 %v649
        %v976 = vpop.f32.mrf.mxu0
        %v977 = vadd.f32 0.0, %v976
        %v978 = vpop.f32.mrf.mxu0
        %v979 = vpop.f32.mrf.mxu0
        %v980 = vadd.f32 0.0, %v979
        %v981 = vpop.f32.mrf.mxu0
        %982 = vmatprep.mubr.bf16.mxu0 0
        %983 = vmatmul.mubr.bf16.gmra.mxu0 %v650
        %v984 = vpop.f32.mrf.mxu0
        %v985 = vadd.f32 0.0, %v984
        %v986 = vpop.f32.mrf.mxu0
        %v987 = vpop.f32.mrf.mxu0
        %v988 = vadd.f32 0.0, %v987
        %v989 = vpop.f32.mrf.mxu0
        %990 = vmatprep.mubr.bf16.mxu0 0
        %991 = vmatmul.mubr.bf16.gmra.mxu0 %v651
        %v992 = vpop.f32.mrf.mxu0
        %v993 = vadd.f32 0.0, %v992
        %v994 = vpop.f32.mrf.mxu0
        %v995 = vpop.f32.mrf.mxu0
        %v996 = vadd.f32 0.0, %v995
        %v997 = vpop.f32.mrf.mxu0
        %998 = vmatprep.mubr.bf16.mxu0 0
        %999 = vmatmul.mubr.bf16.gmra.mxu0 %v652
        %v1000 = vpop.f32.mrf.mxu0
        %v1001 = vadd.f32 0.0, %v1000
        %v1002 = vpop.f32.mrf.mxu0
        %v1003 = vpop.f32.mrf.mxu0
        %v1004 = vadd.f32 0.0, %v1003
        %v1005 = vpop.f32.mrf.mxu0
        %1006 = vdwg.mxu0
        %v1007 = vld [vmem:[%s4] sm:$0x1]
        %v1009 = vlaneseq
        %v1010 = vshrl.u32 %v1009, 7
        %v1011 = vsub.s32 0, %v1010
        %v1012 = vrot.slane %v1007, %v1011
        %v1014 = vmul.f32 %v913, %v1012
        %v1015 = vmul.f32 %v916, %v1012
        %v1016 = vmul.f32 %v921, %v1012
        %v1017 = vmul.f32 %v924, %v1012
        %v1018 = vmul.f32 %v929, %v1012
        %v1019 = vmul.f32 %v932, %v1012
        %v1020 = vmul.f32 %v937, %v1012
        %v1021 = vmul.f32 %v940, %v1012
        %v1022 = vmul.f32 %v945, %v1012
        %v1023 = vmul.f32 %v948, %v1012
        %v1024 = vmul.f32 %v953, %v1012
        %v1025 = vmul.f32 %v956, %v1012
        %v1026 = vmul.f32 %v961, %v1012
        %v1027 = vmul.f32 %v964, %v1012
        %v1028 = vmul.f32 %v969, %v1012
        %v1029 = vmul.f32 %v972, %v1012
        %v1030 = vmul.f32 %v977, %v1012
        %v1031 = vmul.f32 %v980, %v1012
        %v1032 = vmul.f32 %v985, %v1012
        %v1033 = vmul.f32 %v988, %v1012
        %v1034 = vmul.f32 %v993, %v1012
        %v1035 = vmul.f32 %v996, %v1012
        %v1036 = vmul.f32 %v1001, %v1012
        %v1037 = vmul.f32 %v1004, %v1012
        %v1038 = vld [vmem:[%s5] sm:$0x1]
        %v1040 = vlaneseq
        %v1041 = vshrl.u32 %v1040, 7
        %v1042 = vsub.s32 0, %v1041
        %v1043 = vrot.slane %v1038, %v1042
        %v1045 = vadd.f32 %v1014, %v1043
        %v1046 = vadd.f32 %v1015, %v1043
        %v1047 = vadd.f32 %v1016, %v1043
        %v1048 = vadd.f32 %v1017, %v1043
        %v1049 = vadd.f32 %v1018, %v1043
        %v1050 = vadd.f32 %v1019, %v1043
        %v1051 = vadd.f32 %v1020, %v1043
        %v1052 = vadd.f32 %v1021, %v1043
        %v1053 = vadd.f32 %v1022, %v1043
        %v1054 = vadd.f32 %v1023, %v1043
        %v1055 = vadd.f32 %v1024, %v1043
        %v1056 = vadd.f32 %v1025, %v1043
        %v1057 = vadd.f32 %v1026, %v1043
        %v1058 = vadd.f32 %v1027, %v1043
        %v1059 = vadd.f32 %v1028, %v1043
        %v1060 = vadd.f32 %v1029, %v1043
        %v1061 = vadd.f32 %v1030, %v1043
        %v1062 = vadd.f32 %v1031, %v1043
        %v1063 = vadd.f32 %v1032, %v1043
        %v1064 = vadd.f32 %v1033, %v1043
        %v1065 = vadd.f32 %v1034, %v1043
        %v1066 = vadd.f32 %v1035, %v1043
        %v1067 = vadd.f32 %v1036, %v1043
        %v1068 = vadd.f32 %v1037, %v1043
        %v1069 = vmax.f32 %v1045, 0.0
        %v1070 = vmax.f32 %v1046, 0.0
        %v1071 = vmax.f32 %v1047, 0.0
        %v1072 = vmax.f32 %v1048, 0.0
        %v1073 = vmax.f32 %v1049, 0.0
        %v1074 = vmax.f32 %v1050, 0.0
        %v1075 = vmax.f32 %v1051, 0.0
        %v1076 = vmax.f32 %v1052, 0.0
        %v1077 = vmax.f32 %v1053, 0.0
        %v1078 = vmax.f32 %v1054, 0.0
        %v1079 = vmax.f32 %v1055, 0.0
        %v1080 = vmax.f32 %v1056, 0.0
        %v1081 = vmax.f32 %v1057, 0.0
        %v1082 = vmax.f32 %v1058, 0.0
        %v1083 = vmax.f32 %v1059, 0.0
        %v1084 = vmax.f32 %v1060, 0.0
        %v1085 = vmax.f32 %v1061, 0.0
        %v1086 = vmax.f32 %v1062, 0.0
        %v1087 = vmax.f32 %v1063, 0.0
        %v1088 = vmax.f32 %v1064, 0.0
        %v1089 = vmax.f32 %v1065, 0.0
        %v1090 = vmax.f32 %v1066, 0.0
        %v1091 = vmax.f32 %v1067, 0.0
        %v1092 = vmax.f32 %v1068, 0.0
        %v1093 = vpack.c.bf16 %v1070, %v1069
        %v1094 = vpack.c.bf16 %v1072, %v1071
        %v1095 = vpack.c.bf16 %v1074, %v1073
        %v1096 = vpack.c.bf16 %v1076, %v1075
        %v1097 = vpack.c.bf16 %v1078, %v1077
        %v1098 = vpack.c.bf16 %v1080, %v1079
        %v1099 = vpack.c.bf16 %v1082, %v1081
        %v1100 = vpack.c.bf16 %v1084, %v1083
        %v1101 = vpack.c.bf16 %v1086, %v1085
        %v1102 = vpack.c.bf16 %v1088, %v1087
        %v1103 = vpack.c.bf16 %v1090, %v1089
        %v1104 = vpack.c.bf16 %v1092, %v1091
        %v1117 = vunpack.c.l.b16 %v1093
        %v1118 = vunpack.c.h.b16 %v1093
        %v1119 = vunpack.c.l.b16 %v1094
        %v1120 = vunpack.c.h.b16 %v1094
        %v1121 = vunpack.c.l.b16 %v1095
        %v1122 = vunpack.c.h.b16 %v1095
        %v1123 = vunpack.c.l.b16 %v1096
        %v1124 = vunpack.c.h.b16 %v1096
        %v1125 = vunpack.c.l.b16 %v1097
        %v1126 = vunpack.c.h.b16 %v1097
        %v1127 = vunpack.c.l.b16 %v1098
        %v1128 = vunpack.c.h.b16 %v1098
        %v1129 = vunpack.c.l.b16 %v1099
        %v1130 = vunpack.c.h.b16 %v1099
        %v1131 = vunpack.c.l.b16 %v1100
        %v1132 = vunpack.c.h.b16 %v1100
        %v1133 = vunpack.c.l.b16 %v1101
        %v1134 = vunpack.c.h.b16 %v1101
        %v1135 = vunpack.c.l.b16 %v1102
        %v1136 = vunpack.c.h.b16 %v1102
        %v1137 = vunpack.c.l.b16 %v1103
        %v1138 = vunpack.c.h.b16 %v1103
        %v1139 = vunpack.c.l.b16 %v1104
        %v1140 = vunpack.c.h.b16 %v1104
        %v1141 = vpack.c.b16 %v1117, %v1117
        %v1142 = vpack.c.b16 %v1118, %v1118
        %v1143 = vpack.c.b16 %v1119, %v1119
        %v1144 = vpack.c.b16 %v1120, %v1120
        %v1145 = vpack.c.b16 %v1121, %v1121
        %v1146 = vpack.c.b16 %v1122, %v1122
        %v1147 = vpack.c.b16 %v1123, %v1123
        %v1148 = vpack.c.b16 %v1124, %v1124
        %v1149 = vpack.c.b16 %v1125, %v1125
        %v1150 = vpack.c.b16 %v1126, %v1126
        %v1151 = vpack.c.b16 %v1127, %v1127
        %v1152 = vpack.c.b16 %v1128, %v1128
        %v1153 = vpack.c.b16 %v1129, %v1129
        %v1154 = vpack.c.b16 %v1130, %v1130
        %v1155 = vpack.c.b16 %v1131, %v1131
        %v1156 = vpack.c.b16 %v1132, %v1132
        %v1157 = vpack.c.b16 %v1133, %v1133
        %v1158 = vpack.c.b16 %v1134, %v1134
        %v1159 = vpack.c.b16 %v1135, %v1135
        %v1160 = vpack.c.b16 %v1136, %v1136
        %v1161 = vpack.c.b16 %v1137, %v1137
        %v1162 = vpack.c.b16 %v1138, %v1138
        %v1163 = vpack.c.b16 %v1139, %v1139
        %v1164 = vpack.c.b16 %v1140, %v1140
        %vm1165 = vcmask 1040384
        %vm1166 = vcmask 1044484
        %vm1167 = vmor %vm1165, %vm1166
        %v1168 = vrot.slane %v1141, 7
        %v1169 = vrot.slane %v1168, 4
        %v1170 = vrot.slane %v1142, 7
        %v1171 = vsel %vm1167, %v1169, %v1170
        %v1172 = vrot.slane %v1170, 4
        %v1173 = vrot.slane %v1143, 7
        %v1174 = vrot.slane %v1173, 4
        %v1175 = vrot.slane %v1144, 7
        %v1176 = vsel %vm1167, %v1174, %v1175
        %v1177 = vrot.slane %v1175, 4
        %v1178 = vrot.slane %v1145, 7
        %v1179 = vrot.slane %v1178, 4
        %v1180 = vrot.slane %v1146, 7
        %v1181 = vsel %vm1167, %v1179, %v1180
        %v1182 = vrot.slane %v1180, 4
        %v1183 = vrot.slane %v1147, 7
        %v1184 = vrot.slane %v1183, 4
        %v1185 = vrot.slane %v1148, 7
        %v1186 = vsel %vm1167, %v1184, %v1185
        %v1187 = vrot.slane %v1185, 4
        %v1188 = vrot.slane %v1149, 7
        %v1189 = vrot.slane %v1188, 4
        %v1190 = vrot.slane %v1150, 7
        %v1191 = vsel %vm1167, %v1189, %v1190
        %v1192 = vrot.slane %v1190, 4
        %v1193 = vrot.slane %v1151, 7
        %v1194 = vrot.slane %v1193, 4
        %v1195 = vrot.slane %v1152, 7
        %v1196 = vsel %vm1167, %v1194, %v1195
        %v1197 = vrot.slane %v1195, 4
        %v1198 = vrot.slane %v1153, 7
        %v1199 = vrot.slane %v1198, 4
        %v1200 = vrot.slane %v1154, 7
        %v1201 = vsel %vm1167, %v1199, %v1200
        %v1202 = vrot.slane %v1200, 4
        %v1203 = vrot.slane %v1155, 7
        %v1204 = vrot.slane %v1203, 4
        %v1205 = vrot.slane %v1156, 7
        %v1206 = vsel %vm1167, %v1204, %v1205
        %v1207 = vrot.slane %v1205, 4
        %v1208 = vrot.slane %v1157, 7
        %v1209 = vrot.slane %v1208, 4
        %v1210 = vrot.slane %v1158, 7
        %v1211 = vsel %vm1167, %v1209, %v1210
        %v1212 = vrot.slane %v1210, 4
        %v1213 = vrot.slane %v1159, 7
        %v1214 = vrot.slane %v1213, 4
        %v1215 = vrot.slane %v1160, 7
        %v1216 = vsel %vm1167, %v1214, %v1215
        %v1217 = vrot.slane %v1215, 4
        %v1218 = vrot.slane %v1161, 7
        %v1219 = vrot.slane %v1218, 4
        %v1220 = vrot.slane %v1162, 7
        %v1221 = vsel %vm1167, %v1219, %v1220
        %v1222 = vrot.slane %v1220, 4
        %v1223 = vrot.slane %v1163, 7
        %v1224 = vrot.slane %v1223, 4
        %v1225 = vrot.slane %v1164, 7
        %v1226 = vsel %vm1167, %v1224, %v1225
        %v1227 = vrot.slane %v1225, 4
        %1264 = vst [vmem:[#allocation4] sm:$0xe] %v1168
        %1265 = vst [vmem:[#allocation4 + $0x4] sm:$0xf] %v1171
        %1266 = vst [vmem:[#allocation4 + $0x8] sm:$0x1] %v1172
        %1267 = vst [vmem:[#allocation4 + $0xc] sm:$0xe] %v1173
        %1268 = vst [vmem:[#allocation4 + $0x10] sm:$0xf] %v1176
        %1269 = vst [vmem:[#allocation4 + $0x14] sm:$0x1] %v1177
        %1270 = vst [vmem:[#allocation4 + $0x18] sm:$0xe] %v1178
        %1271 = vst [vmem:[#allocation4 + $0x1c] sm:$0xf] %v1181
        %1272 = vst [vmem:[#allocation4 + $0x20] sm:$0x1] %v1182
        %1273 = vst [vmem:[#allocation4 + $0x24] sm:$0xe] %v1183
        %1274 = vst [vmem:[#allocation4 + $0x28] sm:$0xf] %v1186
        %1275 = vst [vmem:[#allocation4 + $0x2c] sm:$0x1] %v1187
        %1276 = vst [vmem:[#allocation4 + $0x30] sm:$0xe] %v1188
        %1277 = vst [vmem:[#allocation4 + $0x34] sm:$0xf] %v1191
        %1278 = vst [vmem:[#allocation4 + $0x38] sm:$0x1] %v1192
        %1279 = vst [vmem:[#allocation4 + $0x3c] sm:$0xe] %v1193
        %1280 = vst [vmem:[#allocation4 + $0x40] sm:$0xf] %v1196
        %1281 = vst [vmem:[#allocation4 + $0x44] sm:$0x1] %v1197
        %1282 = vst [vmem:[#allocation4 + $0x48] sm:$0xe] %v1198
        %1283 = vst [vmem:[#allocation4 + $0x4c] sm:$0xf] %v1201
        %1284 = vst [vmem:[#allocation4 + $0x50] sm:$0x1] %v1202
        %1285 = vst [vmem:[#allocation4 + $0x54] sm:$0xe] %v1203
        %1286 = vst [vmem:[#allocation4 + $0x58] sm:$0xf] %v1206
        %1287 = vst [vmem:[#allocation4 + $0x5c] sm:$0x1] %v1207
        %1288 = vst [vmem:[#allocation4 + $0x60] sm:$0xe] %v1208
        %1289 = vst [vmem:[#allocation4 + $0x64] sm:$0xf] %v1211
        %1290 = vst [vmem:[#allocation4 + $0x68] sm:$0x1] %v1212
        %1291 = vst [vmem:[#allocation4 + $0x6c] sm:$0xe] %v1213
        %1292 = vst [vmem:[#allocation4 + $0x70] sm:$0xf] %v1216
        %1293 = vst [vmem:[#allocation4 + $0x74] sm:$0x1] %v1217
        %1294 = vst [vmem:[#allocation4 + $0x78] sm:$0xe] %v1218
        %1295 = vst [vmem:[#allocation4 + $0x7c] sm:$0xf] %v1221
        %1296 = vst [vmem:[#allocation4 + $0x80] sm:$0x1] %v1222
        %1297 = vst [vmem:[#allocation4 + $0x84] sm:$0xe] %v1223
        %1298 = vst [vmem:[#allocation4 + $0x88] sm:$0xf] %v1226
        %1299 = vst [vmem:[#allocation4 + $0x8c] sm:$0x1] %v1227
        %1300 = vst [vmem:[#allocation4] sm:$0x1] 0
        %1301 = vst [vmem:[#allocation4 + $0xc] sm:$0x1] 0
        %1302 = vst [vmem:[#allocation4 + $0x18] sm:$0x1] 0
        %1303 = vst [vmem:[#allocation4 + $0x24] sm:$0x1] 0
        %1304 = vst [vmem:[#allocation4 + $0x30] sm:$0x1] 0
        %1305 = vst [vmem:[#allocation4 + $0x3c] sm:$0x1] 0
        %1306 = vst [vmem:[#allocation4 + $0x48] sm:$0x1] 0
        %1307 = vst [vmem:[#allocation4 + $0x54] sm:$0x1] 0
        %1308 = vst [vmem:[#allocation4 + $0x60] sm:$0x1] 0
        %1309 = vst [vmem:[#allocation4 + $0x6c] sm:$0x1] 0
        %1310 = vst [vmem:[#allocation4 + $0x78] sm:$0x1] 0
        %1311 = vst [vmem:[#allocation4 + $0x84] sm:$0x1] 0
        %1312 = vst [vmem:[#allocation4 + $0x8] sm:$0x2] 0
        %1313 = vst [vmem:[#allocation4 + $0x14] sm:$0x2] 0
        %1314 = vst [vmem:[#allocation4 + $0x20] sm:$0x2] 0
        %1315 = vst [vmem:[#allocation4 + $0x2c] sm:$0x2] 0
        %1316 = vst [vmem:[#allocation4 + $0x38] sm:$0x2] 0
        %1317 = vst [vmem:[#allocation4 + $0x44] sm:$0x2] 0
        %1318 = vst [vmem:[#allocation4 + $0x50] sm:$0x2] 0
        %1319 = vst [vmem:[#allocation4 + $0x5c] sm:$0x2] 0
        %1320 = vst [vmem:[#allocation4 + $0x68] sm:$0x2] 0
        %1321 = vst [vmem:[#allocation4 + $0x74] sm:$0x2] 0
        %1322 = vst [vmem:[#allocation4 + $0x80] sm:$0x2] 0
        %1323 = vst [vmem:[#allocation4 + $0x8c] sm:$0x2] 0
        // Predicated region
        $region93: #{tpu_custom_call.1} parent=59 // pred_check
          %p1324 = pneg %p461
        $region94: #{tpu_custom_call.1} parent=59 // pred_check_branch
          %1326 = sbr.rel (%p1324) target = $region96
        $region95: #{tpu_custom_call.1} parent=59 // pred_region
          %1327 = vst [vmem:[#allocation4] sm:$0xe] 0
          %1328 = vst [vmem:[#allocation4 + $0x4] sm:$0xf] 0
          %1329 = vst [vmem:[#allocation4 + $0x8] sm:$0x1] 0
          %1330 = vst [vmem:[#allocation4 + $0xc] sm:$0xe] 0
          %1331 = vst [vmem:[#allocation4 + $0x10] sm:$0xf] 0
          %1332 = vst [vmem:[#allocation4 + $0x14] sm:$0x1] 0
        $region96: #{tpu_custom_call.1} parent=59 // pred_fallthru
          _
        %p1333 = scmp.eq.s32.totalorder %s38, 1
        // Predicated region
        $region97: #{tpu_custom_call.1} parent=59 // pred_check
          %p1334 = pneg %p1333
        $region98: #{tpu_custom_call.1} parent=59 // pred_check_branch
          %1336 = sbr.rel (%p1334) target = $region100
        $region99: #{tpu_custom_call.1} parent=59 // pred_region
          %s1337 = scalar_lea.vmem [#allocation4], 120
          %1338 = vst [vmem:[%s1337] sm:$0xe] 0
          %1339 = vst [vmem:[%s1337 + $0x4] sm:$0xf] 0
          %1340 = vst [vmem:[%s1337 + $0x8] sm:$0x1] 0
          %1341 = vst [vmem:[%s1337 + $0xc] sm:$0xe] 0
          %1342 = vst [vmem:[%s1337 + $0x10] sm:$0xf] 0
          %1343 = vst [vmem:[%s1337 + $0x14] sm:$0x1] 0
        $region100: #{tpu_custom_call.1} parent=59 // pred_fallthru
          _
        %v1344 = vld [vmem:[#allocation4] sm:$0xf]
        %v1345 = vld [vmem:[#allocation4 + $0x4] sm:$0xf]
        %v1346 = vld [vmem:[#allocation4 + $0xc] sm:$0xf]
        %v1347 = vld [vmem:[#allocation4 + $0x10] sm:$0xf]
        %v1348 = vld [vmem:[#allocation4 + $0x18] sm:$0xf]
        %v1349 = vld [vmem:[#allocation4 + $0x1c] sm:$0xf]
        %v1350 = vld [vmem:[#allocation4 + $0x24] sm:$0xf]
        %v1351 = vld [vmem:[#allocation4 + $0x28] sm:$0xf]
        %v1352 = vld [vmem:[#allocation4 + $0x30] sm:$0xf]
        %v1353 = vld [vmem:[#allocation4 + $0x34] sm:$0xf]
        %v1354 = vld [vmem:[#allocation4 + $0x3c] sm:$0xf]
        %v1355 = vld [vmem:[#allocation4 + $0x40] sm:$0xf]
        %v1356 = vld [vmem:[#allocation4 + $0x48] sm:$0xf]
        %v1357 = vld [vmem:[#allocation4 + $0x4c] sm:$0xf]
        %v1358 = vld [vmem:[#allocation4 + $0x54] sm:$0xf]
        %v1359 = vld [vmem:[#allocation4 + $0x58] sm:$0xf]
        %v1360 = vld [vmem:[#allocation8] sm:$0xf]
        %v1361 = vld [vmem:[#allocation8 + $0x4] sm:$0xf]
        %v1362 = vld [vmem:[#allocation8 + $0x8] sm:$0xf]
        %v1363 = vld [vmem:[#allocation8 + $0xc] sm:$0xf]
        %v1364 = vld [vmem:[#allocation8 + $0x10] sm:$0xf]
        %v1365 = vld [vmem:[#allocation8 + $0x14] sm:$0xf]
        %v1366 = vld [vmem:[#allocation8 + $0x18] sm:$0xf]
        %v1367 = vld [vmem:[#allocation8 + $0x1c] sm:$0xf]
        %v1368 = vld [vmem:[#allocation8 + $0x20] sm:$0xf]
        %v1369 = vld [vmem:[#allocation8 + $0x24] sm:$0xf]
        %v1370 = vld [vmem:[#allocation8 + $0x28] sm:$0xf]
        %v1371 = vld [vmem:[#allocation8 + $0x2c] sm:$0xf]
        %v1372 = vld [vmem:[#allocation8 + $0x30] sm:$0xf]
        %v1373 = vld [vmem:[#allocation8 + $0x34] sm:$0xf]
        %v1374 = vld [vmem:[#allocation8 + $0x38] sm:$0xf]
        %v1375 = vld [vmem:[#allocation8 + $0x3c] sm:$0xf]
        %v1376 = vld [vmem:[#allocation4] sm:$0xe]
        %v1377 = vld [vmem:[#allocation4 + $0x8] sm:$0x1]
        %v1378 = vld [vmem:[#allocation4 + $0xc] sm:$0xe]
        %v1379 = vld [vmem:[#allocation4 + $0x14] sm:$0x1]
        %v1380 = vld [vmem:[#allocation4 + $0x18] sm:$0xe]
        %v1381 = vld [vmem:[#allocation4 + $0x20] sm:$0x1]
        %v1382 = vld [vmem:[#allocation4 + $0x24] sm:$0xe]
        %v1383 = vld [vmem:[#allocation4 + $0x2c] sm:$0x1]
        %v1384 = vld [vmem:[#allocation4 + $0x30] sm:$0xe]
        %v1385 = vld [vmem:[#allocation4 + $0x38] sm:$0x1]
        %v1386 = vld [vmem:[#allocation4 + $0x3c] sm:$0xe]
        %v1387 = vld [vmem:[#allocation4 + $0x44] sm:$0x1]
        %v1388 = vld [vmem:[#allocation4 + $0x48] sm:$0xe]
        %v1389 = vld [vmem:[#allocation4 + $0x50] sm:$0x1]
        %v1390 = vld [vmem:[#allocation4 + $0x54] sm:$0xe]
        %v1391 = vld [vmem:[#allocation4 + $0x5c] sm:$0x1]
        %vm1416 = vcmask 1042432
        %vm1417 = vcmask 1046532
        %vm1418 = vmor %vm1416, %vm1417
        %v1419 = vrot.slane %v1376, 5
        %v1420 = vrot.slane %v1419, 4
        %v1421 = vrot.slane %v1345, 5
        %v1422 = vsel %vm1418, %v1420, %v1421
        %v1423 = vrot.slane %v1421, 4
        %v1424 = vrot.slane %v1377, 5
        %v1425 = vsel %vm1418, %v1423, %v1424
        %v1426 = vrot.slane %v1378, 5
        %v1427 = vrot.slane %v1426, 4
        %v1428 = vrot.slane %v1347, 5
        %v1429 = vsel %vm1418, %v1427, %v1428
        %v1430 = vrot.slane %v1428, 4
        %v1431 = vrot.slane %v1379, 5
        %v1432 = vsel %vm1418, %v1430, %v1431
        %v1433 = vrot.slane %v1380, 5
        %v1434 = vrot.slane %v1433, 4
        %v1435 = vrot.slane %v1349, 5
        %v1436 = vsel %vm1418, %v1434, %v1435
        %v1437 = vrot.slane %v1435, 4
        %v1438 = vrot.slane %v1381, 5
        %v1439 = vsel %vm1418, %v1437, %v1438
        %v1440 = vrot.slane %v1382, 5
        %v1441 = vrot.slane %v1440, 4
        %v1442 = vrot.slane %v1351, 5
        %v1443 = vsel %vm1418, %v1441, %v1442
        %v1444 = vrot.slane %v1442, 4
        %v1445 = vrot.slane %v1383, 5
        %v1446 = vsel %vm1418, %v1444, %v1445
        %v1447 = vrot.slane %v1384, 5
        %v1448 = vrot.slane %v1447, 4
        %v1449 = vrot.slane %v1353, 5
        %v1450 = vsel %vm1418, %v1448, %v1449
        %v1451 = vrot.slane %v1449, 4
        %v1452 = vrot.slane %v1385, 5
        %v1453 = vsel %vm1418, %v1451, %v1452
        %v1454 = vrot.slane %v1386, 5
        %v1455 = vrot.slane %v1454, 4
        %v1456 = vrot.slane %v1355, 5
        %v1457 = vsel %vm1418, %v1455, %v1456
        %v1458 = vrot.slane %v1456, 4
        %v1459 = vrot.slane %v1387, 5
        %v1460 = vsel %vm1418, %v1458, %v1459
        %v1461 = vrot.slane %v1388, 5
        %v1462 = vrot.slane %v1461, 4
        %v1463 = vrot.slane %v1357, 5
        %v1464 = vsel %vm1418, %v1462, %v1463
        %v1465 = vrot.slane %v1463, 4
        %v1466 = vrot.slane %v1389, 5
        %v1467 = vsel %vm1418, %v1465, %v1466
        %v1468 = vrot.slane %v1390, 5
        %v1469 = vrot.slane %v1468, 4
        %v1470 = vrot.slane %v1359, 5
        %v1471 = vsel %vm1418, %v1469, %v1470
        %v1472 = vrot.slane %v1470, 4
        %v1473 = vrot.slane %v1391, 5
        %v1474 = vsel %vm1418, %v1472, %v1473
        %s1475 = scalar_lea.vmem [#allocation8], 64
        %v1476 = vld [vmem:[%s1475] sm:$0xf]
        %v1477 = vld [vmem:[%s1475 + $0x4] sm:$0xf]
        %v1478 = vld [vmem:[%s1475 + $0x8] sm:$0xf]
        %v1479 = vld [vmem:[%s1475 + $0xc] sm:$0xf]
        %v1480 = vld [vmem:[%s1475 + $0x10] sm:$0xf]
        %v1481 = vld [vmem:[%s1475 + $0x14] sm:$0xf]
        %v1482 = vld [vmem:[%s1475 + $0x18] sm:$0xf]
        %v1483 = vld [vmem:[%s1475 + $0x1c] sm:$0xf]
        %v1484 = vld [vmem:[%s1475 + $0x20] sm:$0xf]
        %v1485 = vld [vmem:[%s1475 + $0x24] sm:$0xf]
        %v1486 = vld [vmem:[%s1475 + $0x28] sm:$0xf]
        %v1487 = vld [vmem:[%s1475 + $0x2c] sm:$0xf]
        %v1488 = vld [vmem:[%s1475 + $0x30] sm:$0xf]
        %v1489 = vld [vmem:[%s1475 + $0x34] sm:$0xf]
        %v1490 = vld [vmem:[%s1475 + $0x38] sm:$0xf]
        %v1491 = vld [vmem:[%s1475 + $0x3c] sm:$0xf]
        %v1492 = vunpack.c.l.b16 %v1422
        %v1493 = vunpack.c.l.b16 %v1425
        %v1494 = vunpack.c.l.b16 %v1429
        %v1495 = vunpack.c.l.b16 %v1432
        %v1496 = vunpack.c.l.b16 %v1436
        %v1497 = vunpack.c.l.b16 %v1439
        %v1498 = vunpack.c.l.b16 %v1443
        %v1499 = vunpack.c.l.b16 %v1446
        %v1500 = vunpack.c.l.b16 %v1450
        %v1501 = vunpack.c.l.b16 %v1453
        %v1502 = vunpack.c.l.b16 %v1457
        %v1503 = vunpack.c.l.b16 %v1460
        %v1504 = vunpack.c.l.b16 %v1464
        %v1505 = vunpack.c.l.b16 %v1467
        %v1506 = vunpack.c.l.b16 %v1471
        %v1507 = vunpack.c.l.b16 %v1474
        %v1508 = vpack.c.b16 %v1493, %v1492
        %v1509 = vpack.c.b16 %v1495, %v1494
        %v1510 = vpack.c.b16 %v1497, %v1496
        %v1511 = vpack.c.b16 %v1499, %v1498
        %v1512 = vpack.c.b16 %v1501, %v1500
        %v1513 = vpack.c.b16 %v1503, %v1502
        %v1514 = vpack.c.b16 %v1505, %v1504
        %v1515 = vpack.c.b16 %v1507, %v1506
        %v1540 = vunpack.c.l.b16 %v1476
        %v1541 = vunpack.c.l.b16 %v1477
        %v1542 = vunpack.c.l.b16 %v1478
        %v1543 = vunpack.c.l.b16 %v1479
        %v1544 = vunpack.c.l.b16 %v1480
        %v1545 = vunpack.c.l.b16 %v1481
        %v1546 = vunpack.c.l.b16 %v1482
        %v1547 = vunpack.c.l.b16 %v1483
        %v1548 = vunpack.c.l.b16 %v1484
        %v1549 = vunpack.c.l.b16 %v1485
        %v1550 = vunpack.c.l.b16 %v1486
        %v1551 = vunpack.c.l.b16 %v1487
        %v1552 = vunpack.c.l.b16 %v1488
        %v1553 = vunpack.c.l.b16 %v1489
        %v1554 = vunpack.c.l.b16 %v1490
        %v1555 = vunpack.c.l.b16 %v1491
        %v1556 = vpack.c.b16 %v1541, %v1540
        %v1557 = vpack.c.b16 %v1543, %v1542
        %v1558 = vpack.c.b16 %v1545, %v1544
        %v1559 = vpack.c.b16 %v1547, %v1546
        %v1560 = vpack.c.b16 %v1549, %v1548
        %v1561 = vpack.c.b16 %v1551, %v1550
        %v1562 = vpack.c.b16 %v1553, %v1552
        %v1563 = vpack.c.b16 %v1555, %v1554
        %1572 = vmatprep.subr.bf16.mxu0 0
        %1573 = vmatpush1.bf16.msra.mxu0 %v1563
        %1574 = vmatprep.subr.bf16.mxu0 0
        %1575 = vmatpush1.bf16.msra.mxu0 %v1562
        %1576 = vmatprep.subr.bf16.mxu0 0
        %1577 = vmatpush1.bf16.msra.mxu0 %v1561
        %1578 = vmatprep.subr.bf16.mxu0 0
        %1579 = vmatpush1.bf16.msra.mxu0 %v1560
        %1580 = vmatprep.subr.bf16.mxu0 0
        %1581 = vmatpush1.bf16.msra.mxu0 %v1559
        %1582 = vmatprep.subr.bf16.mxu0 0
        %1583 = vmatpush1.bf16.msra.mxu0 %v1558
        %1584 = vmatprep.subr.bf16.mxu0 0
        %1585 = vmatpush1.bf16.msra.mxu0 %v1557
        %1586 = vmatprep.subr.bf16.mxu0 0
        %1587 = vmatpush1.bf16.msra.mxu0 %v1556
        %1588 = vmatprep.subr.bf16.mxu0 0
        %1589 = vmatpush2.bf16.msra.mxu0 0
        %1590 = vmatprep.subr.bf16.mxu0 0
        %1591 = vmatpush2.bf16.msra.mxu0 0
        %1592 = vmatprep.subr.bf16.mxu0 0
        %1593 = vmatpush2.bf16.msra.mxu0 0
        %1594 = vmatprep.subr.bf16.mxu0 0
        %1595 = vmatpush2.bf16.msra.mxu0 0
        %1596 = vmatprep.subr.bf16.mxu0 0
        %1597 = vmatpush2.bf16.msra.mxu0 0
        %1598 = vmatprep.subr.bf16.mxu0 0
        %1599 = vmatpush2.bf16.msra.mxu0 0
        %1600 = vmatprep.subr.bf16.mxu0 0
        %1601 = vmatpush2.bf16.msra.mxu0 0
        %1602 = vmatprep.subr.bf16.mxu0 0
        %1603 = vmatpush2.bf16.msra.mxu0 0
        %1604 = vmatprep.mubr.bf16.mxu0 0
        %1605 = vmatmul.mubr.bf16.gmra.mxu0 %v1508
        %v1606 = vpop.f32.mrf.mxu0
        %v1607 = vadd.f32 0.0, %v1606
        %v1608 = vpop.f32.mrf.mxu0
        %v1609 = vpop.f32.mrf.mxu0
        %v1610 = vadd.f32 0.0, %v1609
        %v1611 = vpop.f32.mrf.mxu0
        %1612 = vmatprep.mubr.bf16.mxu0 0
        %1613 = vmatmul.mubr.bf16.gmra.mxu0 %v1509
        %v1614 = vpop.f32.mrf.mxu0
        %v1615 = vadd.f32 0.0, %v1614
        %v1616 = vpop.f32.mrf.mxu0
        %v1617 = vpop.f32.mrf.mxu0
        %v1618 = vadd.f32 0.0, %v1617
        %v1619 = vpop.f32.mrf.mxu0
        %1620 = vmatprep.mubr.bf16.mxu0 0
        %1621 = vmatmul.mubr.bf16.gmra.mxu0 %v1510
        %v1622 = vpop.f32.mrf.mxu0
        %v1623 = vadd.f32 0.0, %v1622
        %v1624 = vpop.f32.mrf.mxu0
        %v1625 = vpop.f32.mrf.mxu0
        %v1626 = vadd.f32 0.0, %v1625
        %v1627 = vpop.f32.mrf.mxu0
        %1628 = vmatprep.mubr.bf16.mxu0 0
        %1629 = vmatmul.mubr.bf16.gmra.mxu0 %v1511
        %v1630 = vpop.f32.mrf.mxu0
        %v1631 = vadd.f32 0.0, %v1630
        %v1632 = vpop.f32.mrf.mxu0
        %v1633 = vpop.f32.mrf.mxu0
        %v1634 = vadd.f32 0.0, %v1633
        %v1635 = vpop.f32.mrf.mxu0
        %1636 = vmatprep.mubr.bf16.mxu0 0
        %1637 = vmatmul.mubr.bf16.gmra.mxu0 %v1512
        %v1638 = vpop.f32.mrf.mxu0
        %v1639 = vadd.f32 0.0, %v1638
        %v1640 = vpop.f32.mrf.mxu0
        %v1641 = vpop.f32.mrf.mxu0
        %v1642 = vadd.f32 0.0, %v1641
        %v1643 = vpop.f32.mrf.mxu0
        %1644 = vmatprep.mubr.bf16.mxu0 0
        %1645 = vmatmul.mubr.bf16.gmra.mxu0 %v1513
        %v1646 = vpop.f32.mrf.mxu0
        %v1647 = vadd.f32 0.0, %v1646
        %v1648 = vpop.f32.mrf.mxu0
        %v1649 = vpop.f32.mrf.mxu0
        %v1650 = vadd.f32 0.0, %v1649
        %v1651 = vpop.f32.mrf.mxu0
        %1652 = vmatprep.mubr.bf16.mxu0 0
        %1653 = vmatmul.mubr.bf16.gmra.mxu0 %v1514
        %v1654 = vpop.f32.mrf.mxu0
        %v1655 = vadd.f32 0.0, %v1654
        %v1656 = vpop.f32.mrf.mxu0
        %v1657 = vpop.f32.mrf.mxu0
        %v1658 = vadd.f32 0.0, %v1657
        %v1659 = vpop.f32.mrf.mxu0
        %1660 = vmatprep.mubr.bf16.mxu0 0
        %1661 = vmatmul.mubr.bf16.gmra.mxu0 %v1515
        %v1662 = vpop.f32.mrf.mxu0
        %v1663 = vadd.f32 0.0, %v1662
        %v1664 = vpop.f32.mrf.mxu0
        %v1665 = vpop.f32.mrf.mxu0
        %v1666 = vadd.f32 0.0, %v1665
        %v1667 = vpop.f32.mrf.mxu0
        %1668 = vdwg.mxu0
        %v1677 = vunpack.c.l.b16 %v1344
        %v1678 = vunpack.c.l.b16 %v1345
        %v1679 = vunpack.c.l.b16 %v1346
        %v1680 = vunpack.c.l.b16 %v1347
        %v1681 = vunpack.c.l.b16 %v1348
        %v1682 = vunpack.c.l.b16 %v1349
        %v1683 = vunpack.c.l.b16 %v1350
        %v1684 = vunpack.c.l.b16 %v1351
        %v1685 = vunpack.c.l.b16 %v1352
        %v1686 = vunpack.c.l.b16 %v1353
        %v1687 = vunpack.c.l.b16 %v1354
        %v1688 = vunpack.c.l.b16 %v1355
        %v1689 = vunpack.c.l.b16 %v1356
        %v1690 = vunpack.c.l.b16 %v1357
        %v1691 = vunpack.c.l.b16 %v1358
        %v1692 = vunpack.c.l.b16 %v1359
        %v1693 = vpack.c.b16 %v1678, %v1677
        %v1694 = vpack.c.b16 %v1680, %v1679
        %v1695 = vpack.c.b16 %v1682, %v1681
        %v1696 = vpack.c.b16 %v1684, %v1683
        %v1697 = vpack.c.b16 %v1686, %v1685
        %v1698 = vpack.c.b16 %v1688, %v1687
        %v1699 = vpack.c.b16 %v1690, %v1689
        %v1700 = vpack.c.b16 %v1692, %v1691
        %v1725 = vunpack.c.l.b16 %v1360
        %v1726 = vunpack.c.l.b16 %v1361
        %v1727 = vunpack.c.l.b16 %v1362
        %v1728 = vunpack.c.l.b16 %v1363
        %v1729 = vunpack.c.l.b16 %v1364
        %v1730 = vunpack.c.l.b16 %v1365
        %v1731 = vunpack.c.l.b16 %v1366
        %v1732 = vunpack.c.l.b16 %v1367
        %v1733 = vunpack.c.l.b16 %v1368
        %v1734 = vunpack.c.l.b16 %v1369
        %v1735 = vunpack.c.l.b16 %v1370
        %v1736 = vunpack.c.l.b16 %v1371
        %v1737 = vunpack.c.l.b16 %v1372
        %v1738 = vunpack.c.l.b16 %v1373
        %v1739 = vunpack.c.l.b16 %v1374
        %v1740 = vunpack.c.l.b16 %v1375
        %v1741 = vpack.c.b16 %v1726, %v1725
        %v1742 = vpack.c.b16 %v1728, %v1727
        %v1743 = vpack.c.b16 %v1730, %v1729
        %v1744 = vpack.c.b16 %v1732, %v1731
        %v1745 = vpack.c.b16 %v1734, %v1733
        %v1746 = vpack.c.b16 %v1736, %v1735
        %v1747 = vpack.c.b16 %v1738, %v1737
        %v1748 = vpack.c.b16 %v1740, %v1739
        %1757 = vmatprep.subr.bf16.mxu0 0
        %1758 = vmatpush1.bf16.msra.mxu0 %v1748
        %1759 = vmatprep.subr.bf16.mxu0 0
        %1760 = vmatpush1.bf16.msra.mxu0 %v1747
        %1761 = vmatprep.subr.bf16.mxu0 0
        %1762 = vmatpush1.bf16.msra.mxu0 %v1746
        %1763 = vmatprep.subr.bf16.mxu0 0
        %1764 = vmatpush1.bf16.msra.mxu0 %v1745
        %1765 = vmatprep.subr.bf16.mxu0 0
        %1766 = vmatpush1.bf16.msra.mxu0 %v1744
        %1767 = vmatprep.subr.bf16.mxu0 0
        %1768 = vmatpush1.bf16.msra.mxu0 %v1743
        %1769 = vmatprep.subr.bf16.mxu0 0
        %1770 = vmatpush1.bf16.msra.mxu0 %v1742
        %1771 = vmatprep.subr.bf16.mxu0 0
        %1772 = vmatpush1.bf16.msra.mxu0 %v1741
        %1773 = vmatprep.subr.bf16.mxu0 0
        %1774 = vmatpush2.bf16.msra.mxu0 0
        %1775 = vmatprep.subr.bf16.mxu0 0
        %1776 = vmatpush2.bf16.msra.mxu0 0
        %1777 = vmatprep.subr.bf16.mxu0 0
        %1778 = vmatpush2.bf16.msra.mxu0 0
        %1779 = vmatprep.subr.bf16.mxu0 0
        %1780 = vmatpush2.bf16.msra.mxu0 0
        %1781 = vmatprep.subr.bf16.mxu0 0
        %1782 = vmatpush2.bf16.msra.mxu0 0
        %1783 = vmatprep.subr.bf16.mxu0 0
        %1784 = vmatpush2.bf16.msra.mxu0 0
        %1785 = vmatprep.subr.bf16.mxu0 0
        %1786 = vmatpush2.bf16.msra.mxu0 0
        %1787 = vmatprep.subr.bf16.mxu0 0
        %1788 = vmatpush2.bf16.msra.mxu0 0
        %1789 = vmatprep.mubr.bf16.mxu0 0
        %1790 = vmatmul.mubr.bf16.gmra.mxu0 %v1693
        %v1791 = vpop.f32.mrf.mxu0
        %v1792 = vadd.f32 %v1607, %v1791
        %v1793 = vpop.f32.mrf.mxu0
        %v1794 = vpop.f32.mrf.mxu0
        %v1795 = vadd.f32 %v1610, %v1794
        %v1796 = vpop.f32.mrf.mxu0
        %1797 = vmatprep.mubr.bf16.mxu0 0
        %1798 = vmatmul.mubr.bf16.gmra.mxu0 %v1694
        %v1799 = vpop.f32.mrf.mxu0
        %v1800 = vadd.f32 %v1615, %v1799
        %v1801 = vpop.f32.mrf.mxu0
        %v1802 = vpop.f32.mrf.mxu0
        %v1803 = vadd.f32 %v1618, %v1802
        %v1804 = vpop.f32.mrf.mxu0
        %1805 = vmatprep.mubr.bf16.mxu0 0
        %1806 = vmatmul.mubr.bf16.gmra.mxu0 %v1695
        %v1807 = vpop.f32.mrf.mxu0
        %v1808 = vadd.f32 %v1623, %v1807
        %v1809 = vpop.f32.mrf.mxu0
        %v1810 = vpop.f32.mrf.mxu0
        %v1811 = vadd.f32 %v1626, %v1810
        %v1812 = vpop.f32.mrf.mxu0
        %1813 = vmatprep.mubr.bf16.mxu0 0
        %1814 = vmatmul.mubr.bf16.gmra.mxu0 %v1696
        %v1815 = vpop.f32.mrf.mxu0
        %v1816 = vadd.f32 %v1631, %v1815
        %v1817 = vpop.f32.mrf.mxu0
        %v1818 = vpop.f32.mrf.mxu0
        %v1819 = vadd.f32 %v1634, %v1818
        %v1820 = vpop.f32.mrf.mxu0
        %1821 = vmatprep.mubr.bf16.mxu0 0
        %1822 = vmatmul.mubr.bf16.gmra.mxu0 %v1697
        %v1823 = vpop.f32.mrf.mxu0
        %v1824 = vadd.f32 %v1639, %v1823
        %v1825 = vpop.f32.mrf.mxu0
        %v1826 = vpop.f32.mrf.mxu0
        %v1827 = vadd.f32 %v1642, %v1826
        %v1828 = vpop.f32.mrf.mxu0
        %1829 = vmatprep.mubr.bf16.mxu0 0
        %1830 = vmatmul.mubr.bf16.gmra.mxu0 %v1698
        %v1831 = vpop.f32.mrf.mxu0
        %v1832 = vadd.f32 %v1647, %v1831
        %v1833 = vpop.f32.mrf.mxu0
        %v1834 = vpop.f32.mrf.mxu0
        %v1835 = vadd.f32 %v1650, %v1834
        %v1836 = vpop.f32.mrf.mxu0
        %1837 = vmatprep.mubr.bf16.mxu0 0
        %1838 = vmatmul.mubr.bf16.gmra.mxu0 %v1699
        %v1839 = vpop.f32.mrf.mxu0
        %v1840 = vadd.f32 %v1655, %v1839
        %v1841 = vpop.f32.mrf.mxu0
        %v1842 = vpop.f32.mrf.mxu0
        %v1843 = vadd.f32 %v1658, %v1842
        %v1844 = vpop.f32.mrf.mxu0
        %1845 = vmatprep.mubr.bf16.mxu0 0
        %1846 = vmatmul.mubr.bf16.gmra.mxu0 %v1700
        %v1847 = vpop.f32.mrf.mxu0
        %v1848 = vadd.f32 %v1663, %v1847
        %v1849 = vpop.f32.mrf.mxu0
        %v1850 = vpop.f32.mrf.mxu0
        %v1851 = vadd.f32 %v1666, %v1850
        %v1852 = vpop.f32.mrf.mxu0
        %1853 = vdwg.mxu0
        %v1854 = vld [vmem:[#allocation4] sm:$0xc]
        %v1855 = vld [vmem:[#allocation4 + $0x8] sm:$0x3]
        %v1856 = vld [vmem:[#allocation4 + $0xc] sm:$0xc]
        %v1857 = vld [vmem:[#allocation4 + $0x14] sm:$0x3]
        %v1858 = vld [vmem:[#allocation4 + $0x18] sm:$0xc]
        %v1859 = vld [vmem:[#allocation4 + $0x20] sm:$0x3]
        %v1860 = vld [vmem:[#allocation4 + $0x24] sm:$0xc]
        %v1861 = vld [vmem:[#allocation4 + $0x2c] sm:$0x3]
        %v1862 = vld [vmem:[#allocation4 + $0x30] sm:$0xc]
        %v1863 = vld [vmem:[#allocation4 + $0x38] sm:$0x3]
        %v1864 = vld [vmem:[#allocation4 + $0x3c] sm:$0xc]
        %v1865 = vld [vmem:[#allocation4 + $0x44] sm:$0x3]
        %v1866 = vld [vmem:[#allocation4 + $0x48] sm:$0xc]
        %v1867 = vld [vmem:[#allocation4 + $0x50] sm:$0x3]
        %v1868 = vld [vmem:[#allocation4 + $0x54] sm:$0xc]
        %v1869 = vld [vmem:[#allocation4 + $0x5c] sm:$0x3]
        %vm1886 = vcmask 1041408
        %vm1887 = vcmask 1045508
        %vm1888 = vmor %vm1886, %vm1887
        %v1889 = vrot.slane %v1854, 6
        %v1890 = vrot.slane %v1889, 4
        %v1891 = vrot.slane %v1345, 6
        %v1892 = vsel %vm1888, %v1890, %v1891
        %v1893 = vrot.slane %v1891, 4
        %v1894 = vrot.slane %v1855, 6
        %v1895 = vsel %vm1888, %v1893, %v1894
        %v1896 = vrot.slane %v1856, 6
        %v1897 = vrot.slane %v1896, 4
        %v1898 = vrot.slane %v1347, 6
        %v1899 = vsel %vm1888, %v1897, %v1898
        %v1900 = vrot.slane %v1898, 4
        %v1901 = vrot.slane %v1857, 6
        %v1902 = vsel %vm1888, %v1900, %v1901
        %v1903 = vrot.slane %v1858, 6
        %v1904 = vrot.slane %v1903, 4
        %v1905 = vrot.slane %v1349, 6
        %v1906 = vsel %vm1888, %v1904, %v1905
        %v1907 = vrot.slane %v1905, 4
        %v1908 = vrot.slane %v1859, 6
        %v1909 = vsel %vm1888, %v1907, %v1908
        %v1910 = vrot.slane %v1860, 6
        %v1911 = vrot.slane %v1910, 4
        %v1912 = vrot.slane %v1351, 6
        %v1913 = vsel %vm1888, %v1911, %v1912
        %v1914 = vrot.slane %v1912, 4
        %v1915 = vrot.slane %v1861, 6
        %v1916 = vsel %vm1888, %v1914, %v1915
        %v1917 = vrot.slane %v1862, 6
        %v1918 = vrot.slane %v1917, 4
        %v1919 = vrot.slane %v1353, 6
        %v1920 = vsel %vm1888, %v1918, %v1919
        %v1921 = vrot.slane %v1919, 4
        %v1922 = vrot.slane %v1863, 6
        %v1923 = vsel %vm1888, %v1921, %v1922
        %v1924 = vrot.slane %v1864, 6
        %v1925 = vrot.slane %v1924, 4
        %v1926 = vrot.slane %v1355, 6
        %v1927 = vsel %vm1888, %v1925, %v1926
        %v1928 = vrot.slane %v1926, 4
        %v1929 = vrot.slane %v1865, 6
        %v1930 = vsel %vm1888, %v1928, %v1929
        %v1931 = vrot.slane %v1866, 6
        %v1932 = vrot.slane %v1931, 4
        %v1933 = vrot.slane %v1357, 6
        %v1934 = vsel %vm1888, %v1932, %v1933
        %v1935 = vrot.slane %v1933, 4
        %v1936 = vrot.slane %v1867, 6
        %v1937 = vsel %vm1888, %v1935, %v1936
        %v1938 = vrot.slane %v1868, 6
        %v1939 = vrot.slane %v1938, 4
        %v1940 = vrot.slane %v1359, 6
        %v1941 = vsel %vm1888, %v1939, %v1940
        %v1942 = vrot.slane %v1940, 4
        %v1943 = vrot.slane %v1869, 6
        %v1944 = vsel %vm1888, %v1942, %v1943
        %s1945 = scalar_lea.vmem [#allocation8], 128
        %v1946 = vld [vmem:[%s1945] sm:$0xf]
        %v1947 = vld [vmem:[%s1945 + $0x4] sm:$0xf]
        %v1948 = vld [vmem:[%s1945 + $0x8] sm:$0xf]
        %v1949 = vld [vmem:[%s1945 + $0xc] sm:$0xf]
        %v1950 = vld [vmem:[%s1945 + $0x10] sm:$0xf]
        %v1951 = vld [vmem:[%s1945 + $0x14] sm:$0xf]
        %v1952 = vld [vmem:[%s1945 + $0x18] sm:$0xf]
        %v1953 = vld [vmem:[%s1945 + $0x1c] sm:$0xf]
        %v1954 = vld [vmem:[%s1945 + $0x20] sm:$0xf]
        %v1955 = vld [vmem:[%s1945 + $0x24] sm:$0xf]
        %v1956 = vld [vmem:[%s1945 + $0x28] sm:$0xf]
        %v1957 = vld [vmem:[%s1945 + $0x2c] sm:$0xf]
        %v1958 = vld [vmem:[%s1945 + $0x30] sm:$0xf]
        %v1959 = vld [vmem:[%s1945 + $0x34] sm:$0xf]
        %v1960 = vld [vmem:[%s1945 + $0x38] sm:$0xf]
        %v1961 = vld [vmem:[%s1945 + $0x3c] sm:$0xf]
        %v1962 = vunpack.c.l.b16 %v1892
        %v1963 = vunpack.c.l.b16 %v1895
        %v1964 = vunpack.c.l.b16 %v1899
        %v1965 = vunpack.c.l.b16 %v1902
        %v1966 = vunpack.c.l.b16 %v1906
        %v1967 = vunpack.c.l.b16 %v1909
        %v1968 = vunpack.c.l.b16 %v1913
        %v1969 = vunpack.c.l.b16 %v1916
        %v1970 = vunpack.c.l.b16 %v1920
        %v1971 = vunpack.c.l.b16 %v1923
        %v1972 = vunpack.c.l.b16 %v1927
        %v1973 = vunpack.c.l.b16 %v1930
        %v1974 = vunpack.c.l.b16 %v1934
        %v1975 = vunpack.c.l.b16 %v1937
        %v1976 = vunpack.c.l.b16 %v1941
        %v1977 = vunpack.c.l.b16 %v1944
        %v1978 = vpack.c.b16 %v1963, %v1962
        %v1979 = vpack.c.b16 %v1965, %v1964
        %v1980 = vpack.c.b16 %v1967, %v1966
        %v1981 = vpack.c.b16 %v1969, %v1968
        %v1982 = vpack.c.b16 %v1971, %v1970
        %v1983 = vpack.c.b16 %v1973, %v1972
        %v1984 = vpack.c.b16 %v1975, %v1974
        %v1985 = vpack.c.b16 %v1977, %v1976
        %v2010 = vunpack.c.l.b16 %v1946
        %v2011 = vunpack.c.l.b16 %v1947
        %v2012 = vunpack.c.l.b16 %v1948
        %v2013 = vunpack.c.l.b16 %v1949
        %v2014 = vunpack.c.l.b16 %v1950
        %v2015 = vunpack.c.l.b16 %v1951
        %v2016 = vunpack.c.l.b16 %v1952
        %v2017 = vunpack.c.l.b16 %v1953
        %v2018 = vunpack.c.l.b16 %v1954
        %v2019 = vunpack.c.l.b16 %v1955
        %v2020 = vunpack.c.l.b16 %v1956
        %v2021 = vunpack.c.l.b16 %v1957
        %v2022 = vunpack.c.l.b16 %v1958
        %v2023 = vunpack.c.l.b16 %v1959
        %v2024 = vunpack.c.l.b16 %v1960
        %v2025 = vunpack.c.l.b16 %v1961
        %v2026 = vpack.c.b16 %v2011, %v2010
        %v2027 = vpack.c.b16 %v2013, %v2012
        %v2028 = vpack.c.b16 %v2015, %v2014
        %v2029 = vpack.c.b16 %v2017, %v2016
        %v2030 = vpack.c.b16 %v2019, %v2018
        %v2031 = vpack.c.b16 %v2021, %v2020
        %v2032 = vpack.c.b16 %v2023, %v2022
        %v2033 = vpack.c.b16 %v2025, %v2024
        %2042 = vmatprep.subr.bf16.mxu0 0
        %2043 = vmatpush1.bf16.msra.mxu0 %v2033
        %2044 = vmatprep.subr.bf16.mxu0 0
        %2045 = vmatpush1.bf16.msra.mxu0 %v2032
        %2046 = vmatprep.subr.bf16.mxu0 0
        %2047 = vmatpush1.bf16.msra.mxu0 %v2031
        %2048 = vmatprep.subr.bf16.mxu0 0
        %2049 = vmatpush1.bf16.msra.mxu0 %v2030
        %2050 = vmatprep.subr.bf16.mxu0 0
        %2051 = vmatpush1.bf16.msra.mxu0 %v2029
        %2052 = vmatprep.subr.bf16.mxu0 0
        %2053 = vmatpush1.bf16.msra.mxu0 %v2028
        %2054 = vmatprep.subr.bf16.mxu0 0
        %2055 = vmatpush1.bf16.msra.mxu0 %v2027
        %2056 = vmatprep.subr.bf16.mxu0 0
        %2057 = vmatpush1.bf16.msra.mxu0 %v2026
        %2058 = vmatprep.subr.bf16.mxu0 0
        %2059 = vmatpush2.bf16.msra.mxu0 0
        %2060 = vmatprep.subr.bf16.mxu0 0
        %2061 = vmatpush2.bf16.msra.mxu0 0
        %2062 = vmatprep.subr.bf16.mxu0 0
        %2063 = vmatpush2.bf16.msra.mxu0 0
        %2064 = vmatprep.subr.bf16.mxu0 0
        %2065 = vmatpush2.bf16.msra.mxu0 0
        %2066 = vmatprep.subr.bf16.mxu0 0
        %2067 = vmatpush2.bf16.msra.mxu0 0
        %2068 = vmatprep.subr.bf16.mxu0 0
        %2069 = vmatpush2.bf16.msra.mxu0 0
        %2070 = vmatprep.subr.bf16.mxu0 0
        %2071 = vmatpush2.bf16.msra.mxu0 0
        %2072 = vmatprep.subr.bf16.mxu0 0
        %2073 = vmatpush2.bf16.msra.mxu0 0
        %2074 = vmatprep.mubr.bf16.mxu0 0
        %2075 = vmatmul.mubr.bf16.gmra.mxu0 %v1978
        %v2076 = vpop.f32.mrf.mxu0
        %v2077 = vadd.f32 0.0, %v2076
        %v2078 = vpop.f32.mrf.mxu0
        %v2079 = vpop.f32.mrf.mxu0
        %v2080 = vadd.f32 0.0, %v2079
        %v2081 = vpop.f32.mrf.mxu0
        %2082 = vmatprep.mubr.bf16.mxu0 0
        %2083 = vmatmul.mubr.bf16.gmra.mxu0 %v1979
        %v2084 = vpop.f32.mrf.mxu0
        %v2085 = vadd.f32 0.0, %v2084
        %v2086 = vpop.f32.mrf.mxu0
        %v2087 = vpop.f32.mrf.mxu0
        %v2088 = vadd.f32 0.0, %v2087
        %v2089 = vpop.f32.mrf.mxu0
        %2090 = vmatprep.mubr.bf16.mxu0 0
        %2091 = vmatmul.mubr.bf16.gmra.mxu0 %v1980
        %v2092 = vpop.f32.mrf.mxu0
        %v2093 = vadd.f32 0.0, %v2092
        %v2094 = vpop.f32.mrf.mxu0
        %v2095 = vpop.f32.mrf.mxu0
        %v2096 = vadd.f32 0.0, %v2095
        %v2097 = vpop.f32.mrf.mxu0
        %2098 = vmatprep.mubr.bf16.mxu0 0
        %2099 = vmatmul.mubr.bf16.gmra.mxu0 %v1981
        %v2100 = vpop.f32.mrf.mxu0
        %v2101 = vadd.f32 0.0, %v2100
        %v2102 = vpop.f32.mrf.mxu0
        %v2103 = vpop.f32.mrf.mxu0
        %v2104 = vadd.f32 0.0, %v2103
        %v2105 = vpop.f32.mrf.mxu0
        %2106 = vmatprep.mubr.bf16.mxu0 0
        %2107 = vmatmul.mubr.bf16.gmra.mxu0 %v1982
        %v2108 = vpop.f32.mrf.mxu0
        %v2109 = vadd.f32 0.0, %v2108
        %v2110 = vpop.f32.mrf.mxu0
        %v2111 = vpop.f32.mrf.mxu0
        %v2112 = vadd.f32 0.0, %v2111
        %v2113 = vpop.f32.mrf.mxu0
        %2114 = vmatprep.mubr.bf16.mxu0 0
        %2115 = vmatmul.mubr.bf16.gmra.mxu0 %v1983
        %v2116 = vpop.f32.mrf.mxu0
        %v2117 = vadd.f32 0.0, %v2116
        %v2118 = vpop.f32.mrf.mxu0
        %v2119 = vpop.f32.mrf.mxu0
        %v2120 = vadd.f32 0.0, %v2119
        %v2121 = vpop.f32.mrf.mxu0
        %2122 = vmatprep.mubr.bf16.mxu0 0
        %2123 = vmatmul.mubr.bf16.gmra.mxu0 %v1984
        %v2124 = vpop.f32.mrf.mxu0
        %v2125 = vadd.f32 0.0, %v2124
        %v2126 = vpop.f32.mrf.mxu0
        %v2127 = vpop.f32.mrf.mxu0
        %v2128 = vadd.f32 0.0, %v2127
        %v2129 = vpop.f32.mrf.mxu0
        %2130 = vmatprep.mubr.bf16.mxu0 0
        %2131 = vmatmul.mubr.bf16.gmra.mxu0 %v1985
        %v2132 = vpop.f32.mrf.mxu0
        %v2133 = vadd.f32 0.0, %v2132
        %v2134 = vpop.f32.mrf.mxu0
        %v2135 = vpop.f32.mrf.mxu0
        %v2136 = vadd.f32 0.0, %v2135
        %v2137 = vpop.f32.mrf.mxu0
        %2138 = vdwg.mxu0
        %v2139 = vadd.f32 %v1792, %v2077
        %v2140 = vadd.f32 %v1795, %v2080
        %v2141 = vadd.f32 %v1800, %v2085
        %v2142 = vadd.f32 %v1803, %v2088
        %v2143 = vadd.f32 %v1808, %v2093
        %v2144 = vadd.f32 %v1811, %v2096
        %v2145 = vadd.f32 %v1816, %v2101
        %v2146 = vadd.f32 %v1819, %v2104
        %v2147 = vadd.f32 %v1824, %v2109
        %v2148 = vadd.f32 %v1827, %v2112
        %v2149 = vadd.f32 %v1832, %v2117
        %v2150 = vadd.f32 %v1835, %v2120
        %v2151 = vadd.f32 %v1840, %v2125
        %v2152 = vadd.f32 %v1843, %v2128
        %v2153 = vadd.f32 %v1848, %v2133
        %v2154 = vadd.f32 %v1851, %v2136
        %s2155 = scalar_lea.vmem [#allocation4], 24
        %v2156 = vld [vmem:[%s2155] sm:$0xf]
        %v2157 = vld [vmem:[%s2155 + $0x4] sm:$0xf]
        %v2158 = vld [vmem:[%s2155 + $0xc] sm:$0xf]
        %v2159 = vld [vmem:[%s2155 + $0x10] sm:$0xf]
        %v2160 = vld [vmem:[%s2155 + $0x18] sm:$0xf]
        %v2161 = vld [vmem:[%s2155 + $0x1c] sm:$0xf]
        %v2162 = vld [vmem:[%s2155 + $0x24] sm:$0xf]
        %v2163 = vld [vmem:[%s2155 + $0x28] sm:$0xf]
        %v2164 = vld [vmem:[%s2155 + $0x30] sm:$0xf]
        %v2165 = vld [vmem:[%s2155 + $0x34] sm:$0xf]
        %v2166 = vld [vmem:[%s2155 + $0x3c] sm:$0xf]
        %v2167 = vld [vmem:[%s2155 + $0x40] sm:$0xf]
        %v2168 = vld [vmem:[%s2155 + $0x48] sm:$0xf]
        %v2169 = vld [vmem:[%s2155 + $0x4c] sm:$0xf]
        %v2170 = vld [vmem:[%s2155 + $0x54] sm:$0xf]
        %v2171 = vld [vmem:[%s2155 + $0x58] sm:$0xf]
        %s2172 = scalar_lea.vmem [#allocation8], 192
        %v2173 = vld [vmem:[%s2172] sm:$0xf]
        %v2174 = vld [vmem:[%s2172 + $0x4] sm:$0xf]
        %v2175 = vld [vmem:[%s2172 + $0x8] sm:$0xf]
        %v2176 = vld [vmem:[%s2172 + $0xc] sm:$0xf]
        %v2177 = vld [vmem:[%s2172 + $0x10] sm:$0xf]
        %v2178 = vld [vmem:[%s2172 + $0x14] sm:$0xf]
        %v2179 = vld [vmem:[%s2172 + $0x18] sm:$0xf]
        %v2180 = vld [vmem:[%s2172 + $0x1c] sm:$0xf]
        %v2181 = vld [vmem:[%s2172 + $0x20] sm:$0xf]
        %v2182 = vld [vmem:[%s2172 + $0x24] sm:$0xf]
        %v2183 = vld [vmem:[%s2172 + $0x28] sm:$0xf]
        %v2184 = vld [vmem:[%s2172 + $0x2c] sm:$0xf]
        %v2185 = vld [vmem:[%s2172 + $0x30] sm:$0xf]
        %v2186 = vld [vmem:[%s2172 + $0x34] sm:$0xf]
        %v2187 = vld [vmem:[%s2172 + $0x38] sm:$0xf]
        %v2188 = vld [vmem:[%s2172 + $0x3c] sm:$0xf]
        %v2205 = vunpack.c.l.b16 %v2156
        %v2206 = vunpack.c.l.b16 %v2157
        %v2207 = vunpack.c.l.b16 %v2158
        %v2208 = vunpack.c.l.b16 %v2159
        %v2209 = vunpack.c.l.b16 %v2160
        %v2210 = vunpack.c.l.b16 %v2161
        %v2211 = vunpack.c.l.b16 %v2162
        %v2212 = vunpack.c.l.b16 %v2163
        %v2213 = vunpack.c.l.b16 %v2164
        %v2214 = vunpack.c.l.b16 %v2165
        %v2215 = vunpack.c.l.b16 %v2166
        %v2216 = vunpack.c.l.b16 %v2167
        %v2217 = vunpack.c.l.b16 %v2168
        %v2218 = vunpack.c.l.b16 %v2169
        %v2219 = vunpack.c.l.b16 %v2170
        %v2220 = vunpack.c.l.b16 %v2171
        %v2221 = vpack.c.b16 %v2206, %v2205
        %v2222 = vpack.c.b16 %v2208, %v2207
        %v2223 = vpack.c.b16 %v2210, %v2209
        %v2224 = vpack.c.b16 %v2212, %v2211
        %v2225 = vpack.c.b16 %v2214, %v2213
        %v2226 = vpack.c.b16 %v2216, %v2215
        %v2227 = vpack.c.b16 %v2218, %v2217
        %v2228 = vpack.c.b16 %v2220, %v2219
        %v2253 = vunpack.c.l.b16 %v2173
        %v2254 = vunpack.c.l.b16 %v2174
        %v2255 = vunpack.c.l.b16 %v2175
        %v2256 = vunpack.c.l.b16 %v2176
        %v2257 = vunpack.c.l.b16 %v2177
        %v2258 = vunpack.c.l.b16 %v2178
        %v2259 = vunpack.c.l.b16 %v2179
        %v2260 = vunpack.c.l.b16 %v2180
        %v2261 = vunpack.c.l.b16 %v2181
        %v2262 = vunpack.c.l.b16 %v2182
        %v2263 = vunpack.c.l.b16 %v2183
        %v2264 = vunpack.c.l.b16 %v2184
        %v2265 = vunpack.c.l.b16 %v2185
        %v2266 = vunpack.c.l.b16 %v2186
        %v2267 = vunpack.c.l.b16 %v2187
        %v2268 = vunpack.c.l.b16 %v2188
        %v2269 = vpack.c.b16 %v2254, %v2253
        %v2270 = vpack.c.b16 %v2256, %v2255
        %v2271 = vpack.c.b16 %v2258, %v2257
        %v2272 = vpack.c.b16 %v2260, %v2259
        %v2273 = vpack.c.b16 %v2262, %v2261
        %v2274 = vpack.c.b16 %v2264, %v2263
        %v2275 = vpack.c.b16 %v2266, %v2265
        %v2276 = vpack.c.b16 %v2268, %v2267
        %2285 = vmatprep.subr.bf16.mxu0 0
        %2286 = vmatpush1.bf16.msra.mxu0 %v2276
        %2287 = vmatprep.subr.bf16.mxu0 0
        %2288 = vmatpush1.bf16.msra.mxu0 %v2275
        %2289 = vmatprep.subr.bf16.mxu0 0
        %2290 = vmatpush1.bf16.msra.mxu0 %v2274
        %2291 = vmatprep.subr.bf16.mxu0 0
        %2292 = vmatpush1.bf16.msra.mxu0 %v2273
        %2293 = vmatprep.subr.bf16.mxu0 0
        %2294 = vmatpush1.bf16.msra.mxu0 %v2272
        %2295 = vmatprep.subr.bf16.mxu0 0
        %2296 = vmatpush1.bf16.msra.mxu0 %v2271
        %2297 = vmatprep.subr.bf16.mxu0 0
        %2298 = vmatpush1.bf16.msra.mxu0 %v2270
        %2299 = vmatprep.subr.bf16.mxu0 0
        %2300 = vmatpush1.bf16.msra.mxu0 %v2269
        %2301 = vmatprep.subr.bf16.mxu0 0
        %2302 = vmatpush2.bf16.msra.mxu0 0
        %2303 = vmatprep.subr.bf16.mxu0 0
        %2304 = vmatpush2.bf16.msra.mxu0 0
        %2305 = vmatprep.subr.bf16.mxu0 0
        %2306 = vmatpush2.bf16.msra.mxu0 0
        %2307 = vmatprep.subr.bf16.mxu0 0
        %2308 = vmatpush2.bf16.msra.mxu0 0
        %2309 = vmatprep.subr.bf16.mxu0 0
        %2310 = vmatpush2.bf16.msra.mxu0 0
        %2311 = vmatprep.subr.bf16.mxu0 0
        %2312 = vmatpush2.bf16.msra.mxu0 0
        %2313 = vmatprep.subr.bf16.mxu0 0
        %2314 = vmatpush2.bf16.msra.mxu0 0
        %2315 = vmatprep.subr.bf16.mxu0 0
        %2316 = vmatpush2.bf16.msra.mxu0 0
        %2317 = vmatprep.mubr.bf16.mxu0 0
        %2318 = vmatmul.mubr.bf16.gmra.mxu0 %v2221
        %v2319 = vpop.f32.mrf.mxu0
        %v2320 = vadd.f32 0.0, %v2319
        %v2321 = vpop.f32.mrf.mxu0
        %v2322 = vpop.f32.mrf.mxu0
        %v2323 = vadd.f32 0.0, %v2322
        %v2324 = vpop.f32.mrf.mxu0
        %2325 = vmatprep.mubr.bf16.mxu0 0
        %2326 = vmatmul.mubr.bf16.gmra.mxu0 %v2222
        %v2327 = vpop.f32.mrf.mxu0
        %v2328 = vadd.f32 0.0, %v2327
        %v2329 = vpop.f32.mrf.mxu0
        %v2330 = vpop.f32.mrf.mxu0
        %v2331 = vadd.f32 0.0, %v2330
        %v2332 = vpop.f32.mrf.mxu0
        %2333 = vmatprep.mubr.bf16.mxu0 0
        %2334 = vmatmul.mubr.bf16.gmra.mxu0 %v2223
        %v2335 = vpop.f32.mrf.mxu0
        %v2336 = vadd.f32 0.0, %v2335
        %v2337 = vpop.f32.mrf.mxu0
        %v2338 = vpop.f32.mrf.mxu0
        %v2339 = vadd.f32 0.0, %v2338
        %v2340 = vpop.f32.mrf.mxu0
        %2341 = vmatprep.mubr.bf16.mxu0 0
        %2342 = vmatmul.mubr.bf16.gmra.mxu0 %v2224
        %v2343 = vpop.f32.mrf.mxu0
        %v2344 = vadd.f32 0.0, %v2343
        %v2345 = vpop.f32.mrf.mxu0
        %v2346 = vpop.f32.mrf.mxu0
        %v2347 = vadd.f32 0.0, %v2346
        %v2348 = vpop.f32.mrf.mxu0
        %2349 = vmatprep.mubr.bf16.mxu0 0
        %2350 = vmatmul.mubr.bf16.gmra.mxu0 %v2225
        %v2351 = vpop.f32.mrf.mxu0
        %v2352 = vadd.f32 0.0, %v2351
        %v2353 = vpop.f32.mrf.mxu0
        %v2354 = vpop.f32.mrf.mxu0
        %v2355 = vadd.f32 0.0, %v2354
        %v2356 = vpop.f32.mrf.mxu0
        %2357 = vmatprep.mubr.bf16.mxu0 0
        %2358 = vmatmul.mubr.bf16.gmra.mxu0 %v2226
        %v2359 = vpop.f32.mrf.mxu0
        %v2360 = vadd.f32 0.0, %v2359
        %v2361 = vpop.f32.mrf.mxu0
        %v2362 = vpop.f32.mrf.mxu0
        %v2363 = vadd.f32 0.0, %v2362
        %v2364 = vpop.f32.mrf.mxu0
        %2365 = vmatprep.mubr.bf16.mxu0 0
        %2366 = vmatmul.mubr.bf16.gmra.mxu0 %v2227
        %v2367 = vpop.f32.mrf.mxu0
        %v2368 = vadd.f32 0.0, %v2367
        %v2369 = vpop.f32.mrf.mxu0
        %v2370 = vpop.f32.mrf.mxu0
        %v2371 = vadd.f32 0.0, %v2370
        %v2372 = vpop.f32.mrf.mxu0
        %2373 = vmatprep.mubr.bf16.mxu0 0
        %2374 = vmatmul.mubr.bf16.gmra.mxu0 %v2228
        %v2375 = vpop.f32.mrf.mxu0
        %v2376 = vadd.f32 0.0, %v2375
        %v2377 = vpop.f32.mrf.mxu0
        %v2378 = vpop.f32.mrf.mxu0
        %v2379 = vadd.f32 0.0, %v2378
        %v2380 = vpop.f32.mrf.mxu0
        %2381 = vdwg.mxu0
        %v2382 = vadd.f32 %v2139, %v2320
        %v2383 = vadd.f32 %v2140, %v2323
        %v2384 = vadd.f32 %v2141, %v2328
        %v2385 = vadd.f32 %v2142, %v2331
        %v2386 = vadd.f32 %v2143, %v2336
        %v2387 = vadd.f32 %v2144, %v2339
        %v2388 = vadd.f32 %v2145, %v2344
        %v2389 = vadd.f32 %v2146, %v2347
        %v2390 = vadd.f32 %v2147, %v2352
        %v2391 = vadd.f32 %v2148, %v2355
        %v2392 = vadd.f32 %v2149, %v2360
        %v2393 = vadd.f32 %v2150, %v2363
        %v2394 = vadd.f32 %v2151, %v2368
        %v2395 = vadd.f32 %v2152, %v2371
        %v2396 = vadd.f32 %v2153, %v2376
        %v2397 = vadd.f32 %v2154, %v2379
        %v2398 = vld [vmem:[%s2155] sm:$0xe]
        %v2399 = vld [vmem:[%s2155 + $0x4] sm:$0xf]
        %v2400 = vld [vmem:[%s2155 + $0x8] sm:$0x1]
        %v2401 = vld [vmem:[%s2155 + $0xc] sm:$0xe]
        %v2402 = vld [vmem:[%s2155 + $0x10] sm:$0xf]
        %v2403 = vld [vmem:[%s2155 + $0x14] sm:$0x1]
        %v2404 = vld [vmem:[%s2155 + $0x18] sm:$0xe]
        %v2405 = vld [vmem:[%s2155 + $0x1c] sm:$0xf]
        %v2406 = vld [vmem:[%s2155 + $0x20] sm:$0x1]
        %v2407 = vld [vmem:[%s2155 + $0x24] sm:$0xe]
        %v2408 = vld [vmem:[%s2155 + $0x28] sm:$0xf]
        %v2409 = vld [vmem:[%s2155 + $0x2c] sm:$0x1]
        %v2410 = vld [vmem:[%s2155 + $0x30] sm:$0xe]
        %v2411 = vld [vmem:[%s2155 + $0x34] sm:$0xf]
        %v2412 = vld [vmem:[%s2155 + $0x38] sm:$0x1]
        %v2413 = vld [vmem:[%s2155 + $0x3c] sm:$0xe]
        %v2414 = vld [vmem:[%s2155 + $0x40] sm:$0xf]
        %v2415 = vld [vmem:[%s2155 + $0x44] sm:$0x1]
        %v2416 = vld [vmem:[%s2155 + $0x48] sm:$0xe]
        %v2417 = vld [vmem:[%s2155 + $0x4c] sm:$0xf]
        %v2418 = vld [vmem:[%s2155 + $0x50] sm:$0x1]
        %v2419 = vld [vmem:[%s2155 + $0x54] sm:$0xe]
        %v2420 = vld [vmem:[%s2155 + $0x58] sm:$0xf]
        %v2421 = vld [vmem:[%s2155 + $0x5c] sm:$0x1]
        %v2446 = vrot.slane %v2398, 5
        %v2447 = vrot.slane %v2446, 4
        %v2448 = vrot.slane %v2399, 5
        %v2449 = vsel %vm1418, %v2447, %v2448
        %v2450 = vrot.slane %v2448, 4
        %v2451 = vrot.slane %v2400, 5
        %v2452 = vsel %vm1418, %v2450, %v2451
        %v2453 = vrot.slane %v2401, 5
        %v2454 = vrot.slane %v2453, 4
        %v2455 = vrot.slane %v2402, 5
        %v2456 = vsel %vm1418, %v2454, %v2455
        %v2457 = vrot.slane %v2455, 4
        %v2458 = vrot.slane %v2403, 5
        %v2459 = vsel %vm1418, %v2457, %v2458
        %v2460 = vrot.slane %v2404, 5
        %v2461 = vrot.slane %v2460, 4
        %v2462 = vrot.slane %v2405, 5
        %v2463 = vsel %vm1418, %v2461, %v2462
        %v2464 = vrot.slane %v2462, 4
        %v2465 = vrot.slane %v2406, 5
        %v2466 = vsel %vm1418, %v2464, %v2465
        %v2467 = vrot.slane %v2407, 5
        %v2468 = vrot.slane %v2467, 4
        %v2469 = vrot.slane %v2408, 5
        %v2470 = vsel %vm1418, %v2468, %v2469
        %v2471 = vrot.slane %v2469, 4
        %v2472 = vrot.slane %v2409, 5
        %v2473 = vsel %vm1418, %v2471, %v2472
        %v2474 = vrot.slane %v2410, 5
        %v2475 = vrot.slane %v2474, 4
        %v2476 = vrot.slane %v2411, 5
        %v2477 = vsel %vm1418, %v2475, %v2476
        %v2478 = vrot.slane %v2476, 4
        %v2479 = vrot.slane %v2412, 5
        %v2480 = vsel %vm1418, %v2478, %v2479
        %v2481 = vrot.slane %v2413, 5
        %v2482 = vrot.slane %v2481, 4
        %v2483 = vrot.slane %v2414, 5
        %v2484 = vsel %vm1418, %v2482, %v2483
        %v2485 = vrot.slane %v2483, 4
        %v2486 = vrot.slane %v2415, 5
        %v2487 = vsel %vm1418, %v2485, %v2486
        %v2488 = vrot.slane %v2416, 5
        %v2489 = vrot.slane %v2488, 4
        %v2490 = vrot.slane %v2417, 5
        %v2491 = vsel %vm1418, %v2489, %v2490
        %v2492 = vrot.slane %v2490, 4
        %v2493 = vrot.slane %v2418, 5
        %v2494 = vsel %vm1418, %v2492, %v2493
        %v2495 = vrot.slane %v2419, 5
        %v2496 = vrot.slane %v2495, 4
        %v2497 = vrot.slane %v2420, 5
        %v2498 = vsel %vm1418, %v2496, %v2497
        %v2499 = vrot.slane %v2497, 4
        %v2500 = vrot.slane %v2421, 5
        %v2501 = vsel %vm1418, %v2499, %v2500
        %s2502 = scalar_lea.vmem [#allocation8], 256
        %v2503 = vld [vmem:[%s2502] sm:$0xf]
        %v2504 = vld [vmem:[%s2502 + $0x4] sm:$0xf]
        %v2505 = vld [vmem:[%s2502 + $0x8] sm:$0xf]
        %v2506 = vld [vmem:[%s2502 + $0xc] sm:$0xf]
        %v2507 = vld [vmem:[%s2502 + $0x10] sm:$0xf]
        %v2508 = vld [vmem:[%s2502 + $0x14] sm:$0xf]
        %v2509 = vld [vmem:[%s2502 + $0x18] sm:$0xf]
        %v2510 = vld [vmem:[%s2502 + $0x1c] sm:$0xf]
        %v2511 = vld [vmem:[%s2502 + $0x20] sm:$0xf]
        %v2512 = vld [vmem:[%s2502 + $0x24] sm:$0xf]
        %v2513 = vld [vmem:[%s2502 + $0x28] sm:$0xf]
        %v2514 = vld [vmem:[%s2502 + $0x2c] sm:$0xf]
        %v2515 = vld [vmem:[%s2502 + $0x30] sm:$0xf]
        %v2516 = vld [vmem:[%s2502 + $0x34] sm:$0xf]
        %v2517 = vld [vmem:[%s2502 + $0x38] sm:$0xf]
        %v2518 = vld [vmem:[%s2502 + $0x3c] sm:$0xf]
        %v2519 = vunpack.c.l.b16 %v2449
        %v2520 = vunpack.c.l.b16 %v2452
        %v2521 = vunpack.c.l.b16 %v2456
        %v2522 = vunpack.c.l.b16 %v2459
        %v2523 = vunpack.c.l.b16 %v2463
        %v2524 = vunpack.c.l.b16 %v2466
        %v2525 = vunpack.c.l.b16 %v2470
        %v2526 = vunpack.c.l.b16 %v2473
        %v2527 = vunpack.c.l.b16 %v2477
        %v2528 = vunpack.c.l.b16 %v2480
        %v2529 = vunpack.c.l.b16 %v2484
        %v2530 = vunpack.c.l.b16 %v2487
        %v2531 = vunpack.c.l.b16 %v2491
        %v2532 = vunpack.c.l.b16 %v2494
        %v2533 = vunpack.c.l.b16 %v2498
        %v2534 = vunpack.c.l.b16 %v2501
        %v2535 = vpack.c.b16 %v2520, %v2519
        %v2536 = vpack.c.b16 %v2522, %v2521
        %v2537 = vpack.c.b16 %v2524, %v2523
        %v2538 = vpack.c.b16 %v2526, %v2525
        %v2539 = vpack.c.b16 %v2528, %v2527
        %v2540 = vpack.c.b16 %v2530, %v2529
        %v2541 = vpack.c.b16 %v2532, %v2531
        %v2542 = vpack.c.b16 %v2534, %v2533
        %v2567 = vunpack.c.l.b16 %v2503
        %v2568 = vunpack.c.l.b16 %v2504
        %v2569 = vunpack.c.l.b16 %v2505
        %v2570 = vunpack.c.l.b16 %v2506
        %v2571 = vunpack.c.l.b16 %v2507
        %v2572 = vunpack.c.l.b16 %v2508
        %v2573 = vunpack.c.l.b16 %v2509
        %v2574 = vunpack.c.l.b16 %v2510
        %v2575 = vunpack.c.l.b16 %v2511
        %v2576 = vunpack.c.l.b16 %v2512
        %v2577 = vunpack.c.l.b16 %v2513
        %v2578 = vunpack.c.l.b16 %v2514
        %v2579 = vunpack.c.l.b16 %v2515
        %v2580 = vunpack.c.l.b16 %v2516
        %v2581 = vunpack.c.l.b16 %v2517
        %v2582 = vunpack.c.l.b16 %v2518
        %v2583 = vpack.c.b16 %v2568, %v2567
        %v2584 = vpack.c.b16 %v2570, %v2569
        %v2585 = vpack.c.b16 %v2572, %v2571
        %v2586 = vpack.c.b16 %v2574, %v2573
        %v2587 = vpack.c.b16 %v2576, %v2575
        %v2588 = vpack.c.b16 %v2578, %v2577
        %v2589 = vpack.c.b16 %v2580, %v2579
        %v2590 = vpack.c.b16 %v2582, %v2581
        %2599 = vmatprep.subr.bf16.mxu0 0
        %2600 = vmatpush1.bf16.msra.mxu0 %v2590
        %2601 = vmatprep.subr.bf16.mxu0 0
        %2602 = vmatpush1.bf16.msra.mxu0 %v2589
        %2603 = vmatprep.subr.bf16.mxu0 0
        %2604 = vmatpush1.bf16.msra.mxu0 %v2588
        %2605 = vmatprep.subr.bf16.mxu0 0
        %2606 = vmatpush1.bf16.msra.mxu0 %v2587
        %2607 = vmatprep.subr.bf16.mxu0 0
        %2608 = vmatpush1.bf16.msra.mxu0 %v2586
        %2609 = vmatprep.subr.bf16.mxu0 0
        %2610 = vmatpush1.bf16.msra.mxu0 %v2585
        %2611 = vmatprep.subr.bf16.mxu0 0
        %2612 = vmatpush1.bf16.msra.mxu0 %v2584
        %2613 = vmatprep.subr.bf16.mxu0 0
        %2614 = vmatpush1.bf16.msra.mxu0 %v2583
        %2615 = vmatprep.subr.bf16.mxu0 0
        %2616 = vmatpush2.bf16.msra.mxu0 0
        %2617 = vmatprep.subr.bf16.mxu0 0
        %2618 = vmatpush2.bf16.msra.mxu0 0
        %2619 = vmatprep.subr.bf16.mxu0 0
        %2620 = vmatpush2.bf16.msra.mxu0 0
        %2621 = vmatprep.subr.bf16.mxu0 0
        %2622 = vmatpush2.bf16.msra.mxu0 0
        %2623 = vmatprep.subr.bf16.mxu0 0
        %2624 = vmatpush2.bf16.msra.mxu0 0
        %2625 = vmatprep.subr.bf16.mxu0 0
        %2626 = vmatpush2.bf16.msra.mxu0 0
        %2627 = vmatprep.subr.bf16.mxu0 0
        %2628 = vmatpush2.bf16.msra.mxu0 0
        %2629 = vmatprep.subr.bf16.mxu0 0
        %2630 = vmatpush2.bf16.msra.mxu0 0
        %2631 = vmatprep.mubr.bf16.mxu0 0
        %2632 = vmatmul.mubr.bf16.gmra.mxu0 %v2535
        %v2633 = vpop.f32.mrf.mxu0
        %v2634 = vadd.f32 0.0, %v2633
        %v2635 = vpop.f32.mrf.mxu0
        %v2636 = vpop.f32.mrf.mxu0
        %v2637 = vadd.f32 0.0, %v2636
        %v2638 = vpop.f32.mrf.mxu0
        %2639 = vmatprep.mubr.bf16.mxu0 0
        %2640 = vmatmul.mubr.bf16.gmra.mxu0 %v2536
        %v2641 = vpop.f32.mrf.mxu0
        %v2642 = vadd.f32 0.0, %v2641
        %v2643 = vpop.f32.mrf.mxu0
        %v2644 = vpop.f32.mrf.mxu0
        %v2645 = vadd.f32 0.0, %v2644
        %v2646 = vpop.f32.mrf.mxu0
        %2647 = vmatprep.mubr.bf16.mxu0 0
        %2648 = vmatmul.mubr.bf16.gmra.mxu0 %v2537
        %v2649 = vpop.f32.mrf.mxu0
        %v2650 = vadd.f32 0.0, %v2649
        %v2651 = vpop.f32.mrf.mxu0
        %v2652 = vpop.f32.mrf.mxu0
        %v2653 = vadd.f32 0.0, %v2652
        %v2654 = vpop.f32.mrf.mxu0
        %2655 = vmatprep.mubr.bf16.mxu0 0
        %2656 = vmatmul.mubr.bf16.gmra.mxu0 %v2538
        %v2657 = vpop.f32.mrf.mxu0
        %v2658 = vadd.f32 0.0, %v2657
        %v2659 = vpop.f32.mrf.mxu0
        %v2660 = vpop.f32.mrf.mxu0
        %v2661 = vadd.f32 0.0, %v2660
        %v2662 = vpop.f32.mrf.mxu0
        %2663 = vmatprep.mubr.bf16.mxu0 0
        %2664 = vmatmul.mubr.bf16.gmra.mxu0 %v2539
        %v2665 = vpop.f32.mrf.mxu0
        %v2666 = vadd.f32 0.0, %v2665
        %v2667 = vpop.f32.mrf.mxu0
        %v2668 = vpop.f32.mrf.mxu0
        %v2669 = vadd.f32 0.0, %v2668
        %v2670 = vpop.f32.mrf.mxu0
        %2671 = vmatprep.mubr.bf16.mxu0 0
        %2672 = vmatmul.mubr.bf16.gmra.mxu0 %v2540
        %v2673 = vpop.f32.mrf.mxu0
        %v2674 = vadd.f32 0.0, %v2673
        %v2675 = vpop.f32.mrf.mxu0
        %v2676 = vpop.f32.mrf.mxu0
        %v2677 = vadd.f32 0.0, %v2676
        %v2678 = vpop.f32.mrf.mxu0
        %2679 = vmatprep.mubr.bf16.mxu0 0
        %2680 = vmatmul.mubr.bf16.gmra.mxu0 %v2541
        %v2681 = vpop.f32.mrf.mxu0
        %v2682 = vadd.f32 0.0, %v2681
        %v2683 = vpop.f32.mrf.mxu0
        %v2684 = vpop.f32.mrf.mxu0
        %v2685 = vadd.f32 0.0, %v2684
        %v2686 = vpop.f32.mrf.mxu0
        %2687 = vmatprep.mubr.bf16.mxu0 0
        %2688 = vmatmul.mubr.bf16.gmra.mxu0 %v2542
        %v2689 = vpop.f32.mrf.mxu0
        %v2690 = vadd.f32 0.0, %v2689
        %v2691 = vpop.f32.mrf.mxu0
        %v2692 = vpop.f32.mrf.mxu0
        %v2693 = vadd.f32 0.0, %v2692
        %v2694 = vpop.f32.mrf.mxu0
        %2695 = vdwg.mxu0
        %v2696 = vadd.f32 %v2382, %v2634
        %v2697 = vadd.f32 %v2383, %v2637
        %v2698 = vadd.f32 %v2384, %v2642
        %v2699 = vadd.f32 %v2385, %v2645
        %v2700 = vadd.f32 %v2386, %v2650
        %v2701 = vadd.f32 %v2387, %v2653
        %v2702 = vadd.f32 %v2388, %v2658
        %v2703 = vadd.f32 %v2389, %v2661
        %v2704 = vadd.f32 %v2390, %v2666
        %v2705 = vadd.f32 %v2391, %v2669
        %v2706 = vadd.f32 %v2392, %v2674
        %v2707 = vadd.f32 %v2393, %v2677
        %v2708 = vadd.f32 %v2394, %v2682
        %v2709 = vadd.f32 %v2395, %v2685
        %v2710 = vadd.f32 %v2396, %v2690
        %v2711 = vadd.f32 %v2397, %v2693
        %v2712 = vld [vmem:[%s2155] sm:$0xc]
        %v2713 = vld [vmem:[%s2155 + $0x8] sm:$0x3]
        %v2714 = vld [vmem:[%s2155 + $0xc] sm:$0xc]
        %v2715 = vld [vmem:[%s2155 + $0x14] sm:$0x3]
        %v2716 = vld [vmem:[%s2155 + $0x18] sm:$0xc]
        %v2717 = vld [vmem:[%s2155 + $0x20] sm:$0x3]
        %v2718 = vld [vmem:[%s2155 + $0x24] sm:$0xc]
        %v2719 = vld [vmem:[%s2155 + $0x2c] sm:$0x3]
        %v2720 = vld [vmem:[%s2155 + $0x30] sm:$0xc]
        %v2721 = vld [vmem:[%s2155 + $0x38] sm:$0x3]
        %v2722 = vld [vmem:[%s2155 + $0x3c] sm:$0xc]
        %v2723 = vld [vmem:[%s2155 + $0x44] sm:$0x3]
        %v2724 = vld [vmem:[%s2155 + $0x48] sm:$0xc]
        %v2725 = vld [vmem:[%s2155 + $0x50] sm:$0x3]
        %v2726 = vld [vmem:[%s2155 + $0x54] sm:$0xc]
        %v2727 = vld [vmem:[%s2155 + $0x5c] sm:$0x3]
        %v2744 = vrot.slane %v2712, 6
        %v2745 = vrot.slane %v2744, 4
        %v2746 = vrot.slane %v2399, 6
        %v2747 = vsel %vm1888, %v2745, %v2746
        %v2748 = vrot.slane %v2746, 4
        %v2749 = vrot.slane %v2713, 6
        %v2750 = vsel %vm1888, %v2748, %v2749
        %v2751 = vrot.slane %v2714, 6
        %v2752 = vrot.slane %v2751, 4
        %v2753 = vrot.slane %v2402, 6
        %v2754 = vsel %vm1888, %v2752, %v2753
        %v2755 = vrot.slane %v2753, 4
        %v2756 = vrot.slane %v2715, 6
        %v2757 = vsel %vm1888, %v2755, %v2756
        %v2758 = vrot.slane %v2716, 6
        %v2759 = vrot.slane %v2758, 4
        %v2760 = vrot.slane %v2405, 6
        %v2761 = vsel %vm1888, %v2759, %v2760
        %v2762 = vrot.slane %v2760, 4
        %v2763 = vrot.slane %v2717, 6
        %v2764 = vsel %vm1888, %v2762, %v2763
        %v2765 = vrot.slane %v2718, 6
        %v2766 = vrot.slane %v2765, 4
        %v2767 = vrot.slane %v2408, 6
        %v2768 = vsel %vm1888, %v2766, %v2767
        %v2769 = vrot.slane %v2767, 4
        %v2770 = vrot.slane %v2719, 6
        %v2771 = vsel %vm1888, %v2769, %v2770
        %v2772 = vrot.slane %v2720, 6
        %v2773 = vrot.slane %v2772, 4
        %v2774 = vrot.slane %v2411, 6
        %v2775 = vsel %vm1888, %v2773, %v2774
        %v2776 = vrot.slane %v2774, 4
        %v2777 = vrot.slane %v2721, 6
        %v2778 = vsel %vm1888, %v2776, %v2777
        %v2779 = vrot.slane %v2722, 6
        %v2780 = vrot.slane %v2779, 4
        %v2781 = vrot.slane %v2414, 6
        %v2782 = vsel %vm1888, %v2780, %v2781
        %v2783 = vrot.slane %v2781, 4
        %v2784 = vrot.slane %v2723, 6
        %v2785 = vsel %vm1888, %v2783, %v2784
        %v2786 = vrot.slane %v2724, 6
        %v2787 = vrot.slane %v2786, 4
        %v2788 = vrot.slane %v2417, 6
        %v2789 = vsel %vm1888, %v2787, %v2788
        %v2790 = vrot.slane %v2788, 4
        %v2791 = vrot.slane %v2725, 6
        %v2792 = vsel %vm1888, %v2790, %v2791
        %v2793 = vrot.slane %v2726, 6
        %v2794 = vrot.slane %v2793, 4
        %v2795 = vrot.slane %v2420, 6
        %v2796 = vsel %vm1888, %v2794, %v2795
        %v2797 = vrot.slane %v2795, 4
        %v2798 = vrot.slane %v2727, 6
        %v2799 = vsel %vm1888, %v2797, %v2798
        %s2800 = scalar_lea.vmem [#allocation8], 320
        %v2801 = vld [vmem:[%s2800] sm:$0xf]
        %v2802 = vld [vmem:[%s2800 + $0x4] sm:$0xf]
        %v2803 = vld [vmem:[%s2800 + $0x8] sm:$0xf]
        %v2804 = vld [vmem:[%s2800 + $0xc] sm:$0xf]
        %v2805 = vld [vmem:[%s2800 + $0x10] sm:$0xf]
        %v2806 = vld [vmem:[%s2800 + $0x14] sm:$0xf]
        %v2807 = vld [vmem:[%s2800 + $0x18] sm:$0xf]
        %v2808 = vld [vmem:[%s2800 + $0x1c] sm:$0xf]
        %v2809 = vld [vmem:[%s2800 + $0x20] sm:$0xf]
        %v2810 = vld [vmem:[%s2800 + $0x24] sm:$0xf]
        %v2811 = vld [vmem:[%s2800 + $0x28] sm:$0xf]
        %v2812 = vld [vmem:[%s2800 + $0x2c] sm:$0xf]
        %v2813 = vld [vmem:[%s2800 + $0x30] sm:$0xf]
        %v2814 = vld [vmem:[%s2800 + $0x34] sm:$0xf]
        %v2815 = vld [vmem:[%s2800 + $0x38] sm:$0xf]
        %v2816 = vld [vmem:[%s2800 + $0x3c] sm:$0xf]
        %v2817 = vunpack.c.l.b16 %v2747
        %v2818 = vunpack.c.l.b16 %v2750
        %v2819 = vunpack.c.l.b16 %v2754
        %v2820 = vunpack.c.l.b16 %v2757
        %v2821 = vunpack.c.l.b16 %v2761
        %v2822 = vunpack.c.l.b16 %v2764
        %v2823 = vunpack.c.l.b16 %v2768
        %v2824 = vunpack.c.l.b16 %v2771
        %v2825 = vunpack.c.l.b16 %v2775
        %v2826 = vunpack.c.l.b16 %v2778
        %v2827 = vunpack.c.l.b16 %v2782
        %v2828 = vunpack.c.l.b16 %v2785
        %v2829 = vunpack.c.l.b16 %v2789
        %v2830 = vunpack.c.l.b16 %v2792
        %v2831 = vunpack.c.l.b16 %v2796
        %v2832 = vunpack.c.l.b16 %v2799
        %v2833 = vpack.c.b16 %v2818, %v2817
        %v2834 = vpack.c.b16 %v2820, %v2819
        %v2835 = vpack.c.b16 %v2822, %v2821
        %v2836 = vpack.c.b16 %v2824, %v2823
        %v2837 = vpack.c.b16 %v2826, %v2825
        %v2838 = vpack.c.b16 %v2828, %v2827
        %v2839 = vpack.c.b16 %v2830, %v2829
        %v2840 = vpack.c.b16 %v2832, %v2831
        %v2865 = vunpack.c.l.b16 %v2801
        %v2866 = vunpack.c.l.b16 %v2802
        %v2867 = vunpack.c.l.b16 %v2803
        %v2868 = vunpack.c.l.b16 %v2804
        %v2869 = vunpack.c.l.b16 %v2805
        %v2870 = vunpack.c.l.b16 %v2806
        %v2871 = vunpack.c.l.b16 %v2807
        %v2872 = vunpack.c.l.b16 %v2808
        %v2873 = vunpack.c.l.b16 %v2809
        %v2874 = vunpack.c.l.b16 %v2810
        %v2875 = vunpack.c.l.b16 %v2811
        %v2876 = vunpack.c.l.b16 %v2812
        %v2877 = vunpack.c.l.b16 %v2813
        %v2878 = vunpack.c.l.b16 %v2814
        %v2879 = vunpack.c.l.b16 %v2815
        %v2880 = vunpack.c.l.b16 %v2816
        %v2881 = vpack.c.b16 %v2866, %v2865
        %v2882 = vpack.c.b16 %v2868, %v2867
        %v2883 = vpack.c.b16 %v2870, %v2869
        %v2884 = vpack.c.b16 %v2872, %v2871
        %v2885 = vpack.c.b16 %v2874, %v2873
        %v2886 = vpack.c.b16 %v2876, %v2875
        %v2887 = vpack.c.b16 %v2878, %v2877
        %v2888 = vpack.c.b16 %v2880, %v2879
        %2897 = vmatprep.subr.bf16.mxu0 0
        %2898 = vmatpush1.bf16.msra.mxu0 %v2888
        %2899 = vmatprep.subr.bf16.mxu0 0
        %2900 = vmatpush1.bf16.msra.mxu0 %v2887
        %2901 = vmatprep.subr.bf16.mxu0 0
        %2902 = vmatpush1.bf16.msra.mxu0 %v2886
        %2903 = vmatprep.subr.bf16.mxu0 0
        %2904 = vmatpush1.bf16.msra.mxu0 %v2885
        %2905 = vmatprep.subr.bf16.mxu0 0
        %2906 = vmatpush1.bf16.msra.mxu0 %v2884
        %2907 = vmatprep.subr.bf16.mxu0 0
        %2908 = vmatpush1.bf16.msra.mxu0 %v2883
        %2909 = vmatprep.subr.bf16.mxu0 0
        %2910 = vmatpush1.bf16.msra.mxu0 %v2882
        %2911 = vmatprep.subr.bf16.mxu0 0
        %2912 = vmatpush1.bf16.msra.mxu0 %v2881
        %2913 = vmatprep.subr.bf16.mxu0 0
        %2914 = vmatpush2.bf16.msra.mxu0 0
        %2915 = vmatprep.subr.bf16.mxu0 0
        %2916 = vmatpush2.bf16.msra.mxu0 0
        %2917 = vmatprep.subr.bf16.mxu0 0
        %2918 = vmatpush2.bf16.msra.mxu0 0
        %2919 = vmatprep.subr.bf16.mxu0 0
        %2920 = vmatpush2.bf16.msra.mxu0 0
        %2921 = vmatprep.subr.bf16.mxu0 0
        %2922 = vmatpush2.bf16.msra.mxu0 0
        %2923 = vmatprep.subr.bf16.mxu0 0
        %2924 = vmatpush2.bf16.msra.mxu0 0
        %2925 = vmatprep.subr.bf16.mxu0 0
        %2926 = vmatpush2.bf16.msra.mxu0 0
        %2927 = vmatprep.subr.bf16.mxu0 0
        %2928 = vmatpush2.bf16.msra.mxu0 0
        %2929 = vmatprep.mubr.bf16.mxu0 0
        %2930 = vmatmul.mubr.bf16.gmra.mxu0 %v2833
        %v2931 = vpop.f32.mrf.mxu0
        %v2932 = vadd.f32 0.0, %v2931
        %v2933 = vpop.f32.mrf.mxu0
        %v2934 = vpop.f32.mrf.mxu0
        %v2935 = vadd.f32 0.0, %v2934
        %v2936 = vpop.f32.mrf.mxu0
        %2937 = vmatprep.mubr.bf16.mxu0 0
        %2938 = vmatmul.mubr.bf16.gmra.mxu0 %v2834
        %v2939 = vpop.f32.mrf.mxu0
        %v2940 = vadd.f32 0.0, %v2939
        %v2941 = vpop.f32.mrf.mxu0
        %v2942 = vpop.f32.mrf.mxu0
        %v2943 = vadd.f32 0.0, %v2942
        %v2944 = vpop.f32.mrf.mxu0
        %2945 = vmatprep.mubr.bf16.mxu0 0
        %2946 = vmatmul.mubr.bf16.gmra.mxu0 %v2835
        %v2947 = vpop.f32.mrf.mxu0
        %v2948 = vadd.f32 0.0, %v2947
        %v2949 = vpop.f32.mrf.mxu0
        %v2950 = vpop.f32.mrf.mxu0
        %v2951 = vadd.f32 0.0, %v2950
        %v2952 = vpop.f32.mrf.mxu0
        %2953 = vmatprep.mubr.bf16.mxu0 0
        %2954 = vmatmul.mubr.bf16.gmra.mxu0 %v2836
        %v2955 = vpop.f32.mrf.mxu0
        %v2956 = vadd.f32 0.0, %v2955
        %v2957 = vpop.f32.mrf.mxu0
        %v2958 = vpop.f32.mrf.mxu0
        %v2959 = vadd.f32 0.0, %v2958
        %v2960 = vpop.f32.mrf.mxu0
        %2961 = vmatprep.mubr.bf16.mxu0 0
        %2962 = vmatmul.mubr.bf16.gmra.mxu0 %v2837
        %v2963 = vpop.f32.mrf.mxu0
        %v2964 = vadd.f32 0.0, %v2963
        %v2965 = vpop.f32.mrf.mxu0
        %v2966 = vpop.f32.mrf.mxu0
        %v2967 = vadd.f32 0.0, %v2966
        %v2968 = vpop.f32.mrf.mxu0
        %2969 = vmatprep.mubr.bf16.mxu0 0
        %2970 = vmatmul.mubr.bf16.gmra.mxu0 %v2838
        %v2971 = vpop.f32.mrf.mxu0
        %v2972 = vadd.f32 0.0, %v2971
        %v2973 = vpop.f32.mrf.mxu0
        %v2974 = vpop.f32.mrf.mxu0
        %v2975 = vadd.f32 0.0, %v2974
        %v2976 = vpop.f32.mrf.mxu0
        %2977 = vmatprep.mubr.bf16.mxu0 0
        %2978 = vmatmul.mubr.bf16.gmra.mxu0 %v2839
        %v2979 = vpop.f32.mrf.mxu0
        %v2980 = vadd.f32 0.0, %v2979
        %v2981 = vpop.f32.mrf.mxu0
        %v2982 = vpop.f32.mrf.mxu0
        %v2983 = vadd.f32 0.0, %v2982
        %v2984 = vpop.f32.mrf.mxu0
        %2985 = vmatprep.mubr.bf16.mxu0 0
        %2986 = vmatmul.mubr.bf16.gmra.mxu0 %v2840
        %v2987 = vpop.f32.mrf.mxu0
        %v2988 = vadd.f32 0.0, %v2987
        %v2989 = vpop.f32.mrf.mxu0
        %v2990 = vpop.f32.mrf.mxu0
        %v2991 = vadd.f32 0.0, %v2990
        %v2992 = vpop.f32.mrf.mxu0
        %2993 = vdwg.mxu0
        %v2994 = vadd.f32 %v2696, %v2932
        %v2995 = vadd.f32 %v2697, %v2935
        %v2996 = vadd.f32 %v2698, %v2940
        %v2997 = vadd.f32 %v2699, %v2943
        %v2998 = vadd.f32 %v2700, %v2948
        %v2999 = vadd.f32 %v2701, %v2951
        %v3000 = vadd.f32 %v2702, %v2956
        %v3001 = vadd.f32 %v2703, %v2959
        %v3002 = vadd.f32 %v2704, %v2964
        %v3003 = vadd.f32 %v2705, %v2967
        %v3004 = vadd.f32 %v2706, %v2972
        %v3005 = vadd.f32 %v2707, %v2975
        %v3006 = vadd.f32 %v2708, %v2980
        %v3007 = vadd.f32 %v2709, %v2983
        %v3008 = vadd.f32 %v2710, %v2988
        %v3009 = vadd.f32 %v2711, %v2991
        %s3010 = scalar_lea.vmem [#allocation4], 48
        %v3011 = vld [vmem:[%s3010] sm:$0xf]
        %v3012 = vld [vmem:[%s3010 + $0x4] sm:$0xf]
        %v3013 = vld [vmem:[%s3010 + $0xc] sm:$0xf]
        %v3014 = vld [vmem:[%s3010 + $0x10] sm:$0xf]
        %v3015 = vld [vmem:[%s3010 + $0x18] sm:$0xf]
        %v3016 = vld [vmem:[%s3010 + $0x1c] sm:$0xf]
        %v3017 = vld [vmem:[%s3010 + $0x24] sm:$0xf]
        %v3018 = vld [vmem:[%s3010 + $0x28] sm:$0xf]
        %v3019 = vld [vmem:[%s3010 + $0x30] sm:$0xf]
        %v3020 = vld [vmem:[%s3010 + $0x34] sm:$0xf]
        %v3021 = vld [vmem:[%s3010 + $0x3c] sm:$0xf]
        %v3022 = vld [vmem:[%s3010 + $0x40] sm:$0xf]
        %v3023 = vld [vmem:[%s3010 + $0x48] sm:$0xf]
        %v3024 = vld [vmem:[%s3010 + $0x4c] sm:$0xf]
        %v3025 = vld [vmem:[%s3010 + $0x54] sm:$0xf]
        %v3026 = vld [vmem:[%s3010 + $0x58] sm:$0xf]
        %s3027 = scalar_lea.vmem [#allocation8], 384
        %v3028 = vld [vmem:[%s3027] sm:$0xf]
        %v3029 = vld [vmem:[%s3027 + $0x4] sm:$0xf]
        %v3030 = vld [vmem:[%s3027 + $0x8] sm:$0xf]
        %v3031 = vld [vmem:[%s3027 + $0xc] sm:$0xf]
        %v3032 = vld [vmem:[%s3027 + $0x10] sm:$0xf]
        %v3033 = vld [vmem:[%s3027 + $0x14] sm:$0xf]
        %v3034 = vld [vmem:[%s3027 + $0x18] sm:$0xf]
        %v3035 = vld [vmem:[%s3027 + $0x1c] sm:$0xf]
        %v3036 = vld [vmem:[%s3027 + $0x20] sm:$0xf]
        %v3037 = vld [vmem:[%s3027 + $0x24] sm:$0xf]
        %v3038 = vld [vmem:[%s3027 + $0x28] sm:$0xf]
        %v3039 = vld [vmem:[%s3027 + $0x2c] sm:$0xf]
        %v3040 = vld [vmem:[%s3027 + $0x30] sm:$0xf]
        %v3041 = vld [vmem:[%s3027 + $0x34] sm:$0xf]
        %v3042 = vld [vmem:[%s3027 + $0x38] sm:$0xf]
        %v3043 = vld [vmem:[%s3027 + $0x3c] sm:$0xf]
        %v3060 = vunpack.c.l.b16 %v3011
        %v3061 = vunpack.c.l.b16 %v3012
        %v3062 = vunpack.c.l.b16 %v3013
        %v3063 = vunpack.c.l.b16 %v3014
        %v3064 = vunpack.c.l.b16 %v3015
        %v3065 = vunpack.c.l.b16 %v3016
        %v3066 = vunpack.c.l.b16 %v3017
        %v3067 = vunpack.c.l.b16 %v3018
        %v3068 = vunpack.c.l.b16 %v3019
        %v3069 = vunpack.c.l.b16 %v3020
        %v3070 = vunpack.c.l.b16 %v3021
        %v3071 = vunpack.c.l.b16 %v3022
        %v3072 = vunpack.c.l.b16 %v3023
        %v3073 = vunpack.c.l.b16 %v3024
        %v3074 = vunpack.c.l.b16 %v3025
        %v3075 = vunpack.c.l.b16 %v3026
        %v3076 = vpack.c.b16 %v3061, %v3060
        %v3077 = vpack.c.b16 %v3063, %v3062
        %v3078 = vpack.c.b16 %v3065, %v3064
        %v3079 = vpack.c.b16 %v3067, %v3066
        %v3080 = vpack.c.b16 %v3069, %v3068
        %v3081 = vpack.c.b16 %v3071, %v3070
        %v3082 = vpack.c.b16 %v3073, %v3072
        %v3083 = vpack.c.b16 %v3075, %v3074
        %v3108 = vunpack.c.l.b16 %v3028
        %v3109 = vunpack.c.l.b16 %v3029
        %v3110 = vunpack.c.l.b16 %v3030
        %v3111 = vunpack.c.l.b16 %v3031
        %v3112 = vunpack.c.l.b16 %v3032
        %v3113 = vunpack.c.l.b16 %v3033
        %v3114 = vunpack.c.l.b16 %v3034
        %v3115 = vunpack.c.l.b16 %v3035
        %v3116 = vunpack.c.l.b16 %v3036
        %v3117 = vunpack.c.l.b16 %v3037
        %v3118 = vunpack.c.l.b16 %v3038
        %v3119 = vunpack.c.l.b16 %v3039
        %v3120 = vunpack.c.l.b16 %v3040
        %v3121 = vunpack.c.l.b16 %v3041
        %v3122 = vunpack.c.l.b16 %v3042
        %v3123 = vunpack.c.l.b16 %v3043
        %v3124 = vpack.c.b16 %v3109, %v3108
        %v3125 = vpack.c.b16 %v3111, %v3110
        %v3126 = vpack.c.b16 %v3113, %v3112
        %v3127 = vpack.c.b16 %v3115, %v3114
        %v3128 = vpack.c.b16 %v3117, %v3116
        %v3129 = vpack.c.b16 %v3119, %v3118
        %v3130 = vpack.c.b16 %v3121, %v3120
        %v3131 = vpack.c.b16 %v3123, %v3122
        %3140 = vmatprep.subr.bf16.mxu0 0
        %3141 = vmatpush1.bf16.msra.mxu0 %v3131
        %3142 = vmatprep.subr.bf16.mxu0 0
        %3143 = vmatpush1.bf16.msra.mxu0 %v3130
        %3144 = vmatprep.subr.bf16.mxu0 0
        %3145 = vmatpush1.bf16.msra.mxu0 %v3129
        %3146 = vmatprep.subr.bf16.mxu0 0
        %3147 = vmatpush1.bf16.msra.mxu0 %v3128
        %3148 = vmatprep.subr.bf16.mxu0 0
        %3149 = vmatpush1.bf16.msra.mxu0 %v3127
        %3150 = vmatprep.subr.bf16.mxu0 0
        %3151 = vmatpush1.bf16.msra.mxu0 %v3126
        %3152 = vmatprep.subr.bf16.mxu0 0
        %3153 = vmatpush1.bf16.msra.mxu0 %v3125
        %3154 = vmatprep.subr.bf16.mxu0 0
        %3155 = vmatpush1.bf16.msra.mxu0 %v3124
        %3156 = vmatprep.subr.bf16.mxu0 0
        %3157 = vmatpush2.bf16.msra.mxu0 0
        %3158 = vmatprep.subr.bf16.mxu0 0
        %3159 = vmatpush2.bf16.msra.mxu0 0
        %3160 = vmatprep.subr.bf16.mxu0 0
        %3161 = vmatpush2.bf16.msra.mxu0 0
        %3162 = vmatprep.subr.bf16.mxu0 0
        %3163 = vmatpush2.bf16.msra.mxu0 0
        %3164 = vmatprep.subr.bf16.mxu0 0
        %3165 = vmatpush2.bf16.msra.mxu0 0
        %3166 = vmatprep.subr.bf16.mxu0 0
        %3167 = vmatpush2.bf16.msra.mxu0 0
        %3168 = vmatprep.subr.bf16.mxu0 0
        %3169 = vmatpush2.bf16.msra.mxu0 0
        %3170 = vmatprep.subr.bf16.mxu0 0
        %3171 = vmatpush2.bf16.msra.mxu0 0
        %3172 = vmatprep.mubr.bf16.mxu0 0
        %3173 = vmatmul.mubr.bf16.gmra.mxu0 %v3076
        %v3174 = vpop.f32.mrf.mxu0
        %v3175 = vadd.f32 0.0, %v3174
        %v3176 = vpop.f32.mrf.mxu0
        %v3177 = vpop.f32.mrf.mxu0
        %v3178 = vadd.f32 0.0, %v3177
        %v3179 = vpop.f32.mrf.mxu0
        %3180 = vmatprep.mubr.bf16.mxu0 0
        %3181 = vmatmul.mubr.bf16.gmra.mxu0 %v3077
        %v3182 = vpop.f32.mrf.mxu0
        %v3183 = vadd.f32 0.0, %v3182
        %v3184 = vpop.f32.mrf.mxu0
        %v3185 = vpop.f32.mrf.mxu0
        %v3186 = vadd.f32 0.0, %v3185
        %v3187 = vpop.f32.mrf.mxu0
        %3188 = vmatprep.mubr.bf16.mxu0 0
        %3189 = vmatmul.mubr.bf16.gmra.mxu0 %v3078
        %v3190 = vpop.f32.mrf.mxu0
        %v3191 = vadd.f32 0.0, %v3190
        %v3192 = vpop.f32.mrf.mxu0
        %v3193 = vpop.f32.mrf.mxu0
        %v3194 = vadd.f32 0.0, %v3193
        %v3195 = vpop.f32.mrf.mxu0
        %3196 = vmatprep.mubr.bf16.mxu0 0
        %3197 = vmatmul.mubr.bf16.gmra.mxu0 %v3079
        %v3198 = vpop.f32.mrf.mxu0
        %v3199 = vadd.f32 0.0, %v3198
        %v3200 = vpop.f32.mrf.mxu0
        %v3201 = vpop.f32.mrf.mxu0
        %v3202 = vadd.f32 0.0, %v3201
        %v3203 = vpop.f32.mrf.mxu0
        %3204 = vmatprep.mubr.bf16.mxu0 0
        %3205 = vmatmul.mubr.bf16.gmra.mxu0 %v3080
        %v3206 = vpop.f32.mrf.mxu0
        %v3207 = vadd.f32 0.0, %v3206
        %v3208 = vpop.f32.mrf.mxu0
        %v3209 = vpop.f32.mrf.mxu0
        %v3210 = vadd.f32 0.0, %v3209
        %v3211 = vpop.f32.mrf.mxu0
        %3212 = vmatprep.mubr.bf16.mxu0 0
        %3213 = vmatmul.mubr.bf16.gmra.mxu0 %v3081
        %v3214 = vpop.f32.mrf.mxu0
        %v3215 = vadd.f32 0.0, %v3214
        %v3216 = vpop.f32.mrf.mxu0
        %v3217 = vpop.f32.mrf.mxu0
        %v3218 = vadd.f32 0.0, %v3217
        %v3219 = vpop.f32.mrf.mxu0
        %3220 = vmatprep.mubr.bf16.mxu0 0
        %3221 = vmatmul.mubr.bf16.gmra.mxu0 %v3082
        %v3222 = vpop.f32.mrf.mxu0
        %v3223 = vadd.f32 0.0, %v3222
        %v3224 = vpop.f32.mrf.mxu0
        %v3225 = vpop.f32.mrf.mxu0
        %v3226 = vadd.f32 0.0, %v3225
        %v3227 = vpop.f32.mrf.mxu0
        %3228 = vmatprep.mubr.bf16.mxu0 0
        %3229 = vmatmul.mubr.bf16.gmra.mxu0 %v3083
        %v3230 = vpop.f32.mrf.mxu0
        %v3231 = vadd.f32 0.0, %v3230
        %v3232 = vpop.f32.mrf.mxu0
        %v3233 = vpop.f32.mrf.mxu0
        %v3234 = vadd.f32 0.0, %v3233
        %v3235 = vpop.f32.mrf.mxu0
        %3236 = vdwg.mxu0
        %v3237 = vadd.f32 %v2994, %v3175
        %v3238 = vadd.f32 %v2995, %v3178
        %v3239 = vadd.f32 %v2996, %v3183
        %v3240 = vadd.f32 %v2997, %v3186
        %v3241 = vadd.f32 %v2998, %v3191
        %v3242 = vadd.f32 %v2999, %v3194
        %v3243 = vadd.f32 %v3000, %v3199
        %v3244 = vadd.f32 %v3001, %v3202
        %v3245 = vadd.f32 %v3002, %v3207
        %v3246 = vadd.f32 %v3003, %v3210
        %v3247 = vadd.f32 %v3004, %v3215
        %v3248 = vadd.f32 %v3005, %v3218
        %v3249 = vadd.f32 %v3006, %v3223
        %v3250 = vadd.f32 %v3007, %v3226
        %v3251 = vadd.f32 %v3008, %v3231
        %v3252 = vadd.f32 %v3009, %v3234
        %v3253 = vld [vmem:[%s3010] sm:$0xe]
        %v3254 = vld [vmem:[%s3010 + $0x4] sm:$0xf]
        %v3255 = vld [vmem:[%s3010 + $0x8] sm:$0x1]
        %v3256 = vld [vmem:[%s3010 + $0xc] sm:$0xe]
        %v3257 = vld [vmem:[%s3010 + $0x10] sm:$0xf]
        %v3258 = vld [vmem:[%s3010 + $0x14] sm:$0x1]
        %v3259 = vld [vmem:[%s3010 + $0x18] sm:$0xe]
        %v3260 = vld [vmem:[%s3010 + $0x1c] sm:$0xf]
        %v3261 = vld [vmem:[%s3010 + $0x20] sm:$0x1]
        %v3262 = vld [vmem:[%s3010 + $0x24] sm:$0xe]
        %v3263 = vld [vmem:[%s3010 + $0x28] sm:$0xf]
        %v3264 = vld [vmem:[%s3010 + $0x2c] sm:$0x1]
        %v3265 = vld [vmem:[%s3010 + $0x30] sm:$0xe]
        %v3266 = vld [vmem:[%s3010 + $0x34] sm:$0xf]
        %v3267 = vld [vmem:[%s3010 + $0x38] sm:$0x1]
        %v3268 = vld [vmem:[%s3010 + $0x3c] sm:$0xe]
        %v3269 = vld [vmem:[%s3010 + $0x40] sm:$0xf]
        %v3270 = vld [vmem:[%s3010 + $0x44] sm:$0x1]
        %v3271 = vld [vmem:[%s3010 + $0x48] sm:$0xe]
        %v3272 = vld [vmem:[%s3010 + $0x4c] sm:$0xf]
        %v3273 = vld [vmem:[%s3010 + $0x50] sm:$0x1]
        %v3274 = vld [vmem:[%s3010 + $0x54] sm:$0xe]
        %v3275 = vld [vmem:[%s3010 + $0x58] sm:$0xf]
        %v3276 = vld [vmem:[%s3010 + $0x5c] sm:$0x1]
        %v3301 = vrot.slane %v3253, 5
        %v3302 = vrot.slane %v3301, 4
        %v3303 = vrot.slane %v3254, 5
        %v3304 = vsel %vm1418, %v3302, %v3303
        %v3305 = vrot.slane %v3303, 4
        %v3306 = vrot.slane %v3255, 5
        %v3307 = vsel %vm1418, %v3305, %v3306
        %v3308 = vrot.slane %v3256, 5
        %v3309 = vrot.slane %v3308, 4
        %v3310 = vrot.slane %v3257, 5
        %v3311 = vsel %vm1418, %v3309, %v3310
        %v3312 = vrot.slane %v3310, 4
        %v3313 = vrot.slane %v3258, 5
        %v3314 = vsel %vm1418, %v3312, %v3313
        %v3315 = vrot.slane %v3259, 5
        %v3316 = vrot.slane %v3315, 4
        %v3317 = vrot.slane %v3260, 5
        %v3318 = vsel %vm1418, %v3316, %v3317
        %v3319 = vrot.slane %v3317, 4
        %v3320 = vrot.slane %v3261, 5
        %v3321 = vsel %vm1418, %v3319, %v3320
        %v3322 = vrot.slane %v3262, 5
        %v3323 = vrot.slane %v3322, 4
        %v3324 = vrot.slane %v3263, 5
        %v3325 = vsel %vm1418, %v3323, %v3324
        %v3326 = vrot.slane %v3324, 4
        %v3327 = vrot.slane %v3264, 5
        %v3328 = vsel %vm1418, %v3326, %v3327
        %v3329 = vrot.slane %v3265, 5
        %v3330 = vrot.slane %v3329, 4
        %v3331 = vrot.slane %v3266, 5
        %v3332 = vsel %vm1418, %v3330, %v3331
        %v3333 = vrot.slane %v3331, 4
        %v3334 = vrot.slane %v3267, 5
        %v3335 = vsel %vm1418, %v3333, %v3334
        %v3336 = vrot.slane %v3268, 5
        %v3337 = vrot.slane %v3336, 4
        %v3338 = vrot.slane %v3269, 5
        %v3339 = vsel %vm1418, %v3337, %v3338
        %v3340 = vrot.slane %v3338, 4
        %v3341 = vrot.slane %v3270, 5
        %v3342 = vsel %vm1418, %v3340, %v3341
        %v3343 = vrot.slane %v3271, 5
        %v3344 = vrot.slane %v3343, 4
        %v3345 = vrot.slane %v3272, 5
        %v3346 = vsel %vm1418, %v3344, %v3345
        %v3347 = vrot.slane %v3345, 4
        %v3348 = vrot.slane %v3273, 5
        %v3349 = vsel %vm1418, %v3347, %v3348
        %v3350 = vrot.slane %v3274, 5
        %v3351 = vrot.slane %v3350, 4
        %v3352 = vrot.slane %v3275, 5
        %v3353 = vsel %vm1418, %v3351, %v3352
        %v3354 = vrot.slane %v3352, 4
        %v3355 = vrot.slane %v3276, 5
        %v3356 = vsel %vm1418, %v3354, %v3355
        %s3357 = scalar_lea.vmem [#allocation8], 448
        %v3358 = vld [vmem:[%s3357] sm:$0xf]
        %v3359 = vld [vmem:[%s3357 + $0x4] sm:$0xf]
        %v3360 = vld [vmem:[%s3357 + $0x8] sm:$0xf]
        %v3361 = vld [vmem:[%s3357 + $0xc] sm:$0xf]
        %v3362 = vld [vmem:[%s3357 + $0x10] sm:$0xf]
        %v3363 = vld [vmem:[%s3357 + $0x14] sm:$0xf]
        %v3364 = vld [vmem:[%s3357 + $0x18] sm:$0xf]
        %v3365 = vld [vmem:[%s3357 + $0x1c] sm:$0xf]
        %v3366 = vld [vmem:[%s3357 + $0x20] sm:$0xf]
        %v3367 = vld [vmem:[%s3357 + $0x24] sm:$0xf]
        %v3368 = vld [vmem:[%s3357 + $0x28] sm:$0xf]
        %v3369 = vld [vmem:[%s3357 + $0x2c] sm:$0xf]
        %v3370 = vld [vmem:[%s3357 + $0x30] sm:$0xf]
        %v3371 = vld [vmem:[%s3357 + $0x34] sm:$0xf]
        %v3372 = vld [vmem:[%s3357 + $0x38] sm:$0xf]
        %v3373 = vld [vmem:[%s3357 + $0x3c] sm:$0xf]
        %v3374 = vunpack.c.l.b16 %v3304
        %v3375 = vunpack.c.l.b16 %v3307
        %v3376 = vunpack.c.l.b16 %v3311
        %v3377 = vunpack.c.l.b16 %v3314
        %v3378 = vunpack.c.l.b16 %v3318
        %v3379 = vunpack.c.l.b16 %v3321
        %v3380 = vunpack.c.l.b16 %v3325
        %v3381 = vunpack.c.l.b16 %v3328
        %v3382 = vunpack.c.l.b16 %v3332
        %v3383 = vunpack.c.l.b16 %v3335
        %v3384 = vunpack.c.l.b16 %v3339
        %v3385 = vunpack.c.l.b16 %v3342
        %v3386 = vunpack.c.l.b16 %v3346
        %v3387 = vunpack.c.l.b16 %v3349
        %v3388 = vunpack.c.l.b16 %v3353
        %v3389 = vunpack.c.l.b16 %v3356
        %v3390 = vpack.c.b16 %v3375, %v3374
        %v3391 = vpack.c.b16 %v3377, %v3376
        %v3392 = vpack.c.b16 %v3379, %v3378
        %v3393 = vpack.c.b16 %v3381, %v3380
        %v3394 = vpack.c.b16 %v3383, %v3382
        %v3395 = vpack.c.b16 %v3385, %v3384
        %v3396 = vpack.c.b16 %v3387, %v3386
        %v3397 = vpack.c.b16 %v3389, %v3388
        %v3422 = vunpack.c.l.b16 %v3358
        %v3423 = vunpack.c.l.b16 %v3359
        %v3424 = vunpack.c.l.b16 %v3360
        %v3425 = vunpack.c.l.b16 %v3361
        %v3426 = vunpack.c.l.b16 %v3362
        %v3427 = vunpack.c.l.b16 %v3363
        %v3428 = vunpack.c.l.b16 %v3364
        %v3429 = vunpack.c.l.b16 %v3365
        %v3430 = vunpack.c.l.b16 %v3366
        %v3431 = vunpack.c.l.b16 %v3367
        %v3432 = vunpack.c.l.b16 %v3368
        %v3433 = vunpack.c.l.b16 %v3369
        %v3434 = vunpack.c.l.b16 %v3370
        %v3435 = vunpack.c.l.b16 %v3371
        %v3436 = vunpack.c.l.b16 %v3372
        %v3437 = vunpack.c.l.b16 %v3373
        %v3438 = vpack.c.b16 %v3423, %v3422
        %v3439 = vpack.c.b16 %v3425, %v3424
        %v3440 = vpack.c.b16 %v3427, %v3426
        %v3441 = vpack.c.b16 %v3429, %v3428
        %v3442 = vpack.c.b16 %v3431, %v3430
        %v3443 = vpack.c.b16 %v3433, %v3432
        %v3444 = vpack.c.b16 %v3435, %v3434
        %v3445 = vpack.c.b16 %v3437, %v3436
        %3454 = vmatprep.subr.bf16.mxu0 0
        %3455 = vmatpush1.bf16.msra.mxu0 %v3445
        %3456 = vmatprep.subr.bf16.mxu0 0
        %3457 = vmatpush1.bf16.msra.mxu0 %v3444
        %3458 = vmatprep.subr.bf16.mxu0 0
        %3459 = vmatpush1.bf16.msra.mxu0 %v3443
        %3460 = vmatprep.subr.bf16.mxu0 0
        %3461 = vmatpush1.bf16.msra.mxu0 %v3442
        %3462 = vmatprep.subr.bf16.mxu0 0
        %3463 = vmatpush1.bf16.msra.mxu0 %v3441
        %3464 = vmatprep.subr.bf16.mxu0 0
        %3465 = vmatpush1.bf16.msra.mxu0 %v3440
        %3466 = vmatprep.subr.bf16.mxu0 0
        %3467 = vmatpush1.bf16.msra.mxu0 %v3439
        %3468 = vmatprep.subr.bf16.mxu0 0
        %3469 = vmatpush1.bf16.msra.mxu0 %v3438
        %3470 = vmatprep.subr.bf16.mxu0 0
        %3471 = vmatpush2.bf16.msra.mxu0 0
        %3472 = vmatprep.subr.bf16.mxu0 0
        %3473 = vmatpush2.bf16.msra.mxu0 0
        %3474 = vmatprep.subr.bf16.mxu0 0
        %3475 = vmatpush2.bf16.msra.mxu0 0
        %3476 = vmatprep.subr.bf16.mxu0 0
        %3477 = vmatpush2.bf16.msra.mxu0 0
        %3478 = vmatprep.subr.bf16.mxu0 0
        %3479 = vmatpush2.bf16.msra.mxu0 0
        %3480 = vmatprep.subr.bf16.mxu0 0
        %3481 = vmatpush2.bf16.msra.mxu0 0
        %3482 = vmatprep.subr.bf16.mxu0 0
        %3483 = vmatpush2.bf16.msra.mxu0 0
        %3484 = vmatprep.subr.bf16.mxu0 0
        %3485 = vmatpush2.bf16.msra.mxu0 0
        %3486 = vmatprep.mubr.bf16.mxu0 0
        %3487 = vmatmul.mubr.bf16.gmra.mxu0 %v3390
        %v3488 = vpop.f32.mrf.mxu0
        %v3489 = vadd.f32 0.0, %v3488
        %v3490 = vpop.f32.mrf.mxu0
        %v3491 = vpop.f32.mrf.mxu0
        %v3492 = vadd.f32 0.0, %v3491
        %v3493 = vpop.f32.mrf.mxu0
        %3494 = vmatprep.mubr.bf16.mxu0 0
        %3495 = vmatmul.mubr.bf16.gmra.mxu0 %v3391
        %v3496 = vpop.f32.mrf.mxu0
        %v3497 = vadd.f32 0.0, %v3496
        %v3498 = vpop.f32.mrf.mxu0
        %v3499 = vpop.f32.mrf.mxu0
        %v3500 = vadd.f32 0.0, %v3499
        %v3501 = vpop.f32.mrf.mxu0
        %3502 = vmatprep.mubr.bf16.mxu0 0
        %3503 = vmatmul.mubr.bf16.gmra.mxu0 %v3392
        %v3504 = vpop.f32.mrf.mxu0
        %v3505 = vadd.f32 0.0, %v3504
        %v3506 = vpop.f32.mrf.mxu0
        %v3507 = vpop.f32.mrf.mxu0
        %v3508 = vadd.f32 0.0, %v3507
        %v3509 = vpop.f32.mrf.mxu0
        %3510 = vmatprep.mubr.bf16.mxu0 0
        %3511 = vmatmul.mubr.bf16.gmra.mxu0 %v3393
        %v3512 = vpop.f32.mrf.mxu0
        %v3513 = vadd.f32 0.0, %v3512
        %v3514 = vpop.f32.mrf.mxu0
        %v3515 = vpop.f32.mrf.mxu0
        %v3516 = vadd.f32 0.0, %v3515
        %v3517 = vpop.f32.mrf.mxu0
        %3518 = vmatprep.mubr.bf16.mxu0 0
        %3519 = vmatmul.mubr.bf16.gmra.mxu0 %v3394
        %v3520 = vpop.f32.mrf.mxu0
        %v3521 = vadd.f32 0.0, %v3520
        %v3522 = vpop.f32.mrf.mxu0
        %v3523 = vpop.f32.mrf.mxu0
        %v3524 = vadd.f32 0.0, %v3523
        %v3525 = vpop.f32.mrf.mxu0
        %3526 = vmatprep.mubr.bf16.mxu0 0
        %3527 = vmatmul.mubr.bf16.gmra.mxu0 %v3395
        %v3528 = vpop.f32.mrf.mxu0
        %v3529 = vadd.f32 0.0, %v3528
        %v3530 = vpop.f32.mrf.mxu0
        %v3531 = vpop.f32.mrf.mxu0
        %v3532 = vadd.f32 0.0, %v3531
        %v3533 = vpop.f32.mrf.mxu0
        %3534 = vmatprep.mubr.bf16.mxu0 0
        %3535 = vmatmul.mubr.bf16.gmra.mxu0 %v3396
        %v3536 = vpop.f32.mrf.mxu0
        %v3537 = vadd.f32 0.0, %v3536
        %v3538 = vpop.f32.mrf.mxu0
        %v3539 = vpop.f32.mrf.mxu0
        %v3540 = vadd.f32 0.0, %v3539
        %v3541 = vpop.f32.mrf.mxu0
        %3542 = vmatprep.mubr.bf16.mxu0 0
        %3543 = vmatmul.mubr.bf16.gmra.mxu0 %v3397
        %v3544 = vpop.f32.mrf.mxu0
        %v3545 = vadd.f32 0.0, %v3544
        %v3546 = vpop.f32.mrf.mxu0
        %v3547 = vpop.f32.mrf.mxu0
        %v3548 = vadd.f32 0.0, %v3547
        %v3549 = vpop.f32.mrf.mxu0
        %3550 = vdwg.mxu0
        %v3551 = vadd.f32 %v3237, %v3489
        %v3552 = vadd.f32 %v3238, %v3492
        %v3553 = vadd.f32 %v3239, %v3497
        %v3554 = vadd.f32 %v3240, %v3500
        %v3555 = vadd.f32 %v3241, %v3505
        %v3556 = vadd.f32 %v3242, %v3508
        %v3557 = vadd.f32 %v3243, %v3513
        %v3558 = vadd.f32 %v3244, %v3516
        %v3559 = vadd.f32 %v3245, %v3521
        %v3560 = vadd.f32 %v3246, %v3524
        %v3561 = vadd.f32 %v3247, %v3529
        %v3562 = vadd.f32 %v3248, %v3532
        %v3563 = vadd.f32 %v3249, %v3537
        %v3564 = vadd.f32 %v3250, %v3540
        %v3565 = vadd.f32 %v3251, %v3545
        %v3566 = vadd.f32 %v3252, %v3548
        %v3567 = vld [vmem:[%s3010] sm:$0xc]
        %v3568 = vld [vmem:[%s3010 + $0x8] sm:$0x3]
        %v3569 = vld [vmem:[%s3010 + $0xc] sm:$0xc]
        %v3570 = vld [vmem:[%s3010 + $0x14] sm:$0x3]
        %v3571 = vld [vmem:[%s3010 + $0x18] sm:$0xc]
        %v3572 = vld [vmem:[%s3010 + $0x20] sm:$0x3]
        %v3573 = vld [vmem:[%s3010 + $0x24] sm:$0xc]
        %v3574 = vld [vmem:[%s3010 + $0x2c] sm:$0x3]
        %v3575 = vld [vmem:[%s3010 + $0x30] sm:$0xc]
        %v3576 = vld [vmem:[%s3010 + $0x38] sm:$0x3]
        %v3577 = vld [vmem:[%s3010 + $0x3c] sm:$0xc]
        %v3578 = vld [vmem:[%s3010 + $0x44] sm:$0x3]
        %v3579 = vld [vmem:[%s3010 + $0x48] sm:$0xc]
        %v3580 = vld [vmem:[%s3010 + $0x50] sm:$0x3]
        %v3581 = vld [vmem:[%s3010 + $0x54] sm:$0xc]
        %v3582 = vld [vmem:[%s3010 + $0x5c] sm:$0x3]
        %v3599 = vrot.slane %v3567, 6
        %v3600 = vrot.slane %v3599, 4
        %v3601 = vrot.slane %v3254, 6
        %v3602 = vsel %vm1888, %v3600, %v3601
        %v3603 = vrot.slane %v3601, 4
        %v3604 = vrot.slane %v3568, 6
        %v3605 = vsel %vm1888, %v3603, %v3604
        %v3606 = vrot.slane %v3569, 6
        %v3607 = vrot.slane %v3606, 4
        %v3608 = vrot.slane %v3257, 6
        %v3609 = vsel %vm1888, %v3607, %v3608
        %v3610 = vrot.slane %v3608, 4
        %v3611 = vrot.slane %v3570, 6
        %v3612 = vsel %vm1888, %v3610, %v3611
        %v3613 = vrot.slane %v3571, 6
        %v3614 = vrot.slane %v3613, 4
        %v3615 = vrot.slane %v3260, 6
        %v3616 = vsel %vm1888, %v3614, %v3615
        %v3617 = vrot.slane %v3615, 4
        %v3618 = vrot.slane %v3572, 6
        %v3619 = vsel %vm1888, %v3617, %v3618
        %v3620 = vrot.slane %v3573, 6
        %v3621 = vrot.slane %v3620, 4
        %v3622 = vrot.slane %v3263, 6
        %v3623 = vsel %vm1888, %v3621, %v3622
        %v3624 = vrot.slane %v3622, 4
        %v3625 = vrot.slane %v3574, 6
        %v3626 = vsel %vm1888, %v3624, %v3625
        %v3627 = vrot.slane %v3575, 6
        %v3628 = vrot.slane %v3627, 4
        %v3629 = vrot.slane %v3266, 6
        %v3630 = vsel %vm1888, %v3628, %v3629
        %v3631 = vrot.slane %v3629, 4
        %v3632 = vrot.slane %v3576, 6
        %v3633 = vsel %vm1888, %v3631, %v3632
        %v3634 = vrot.slane %v3577, 6
        %v3635 = vrot.slane %v3634, 4
        %v3636 = vrot.slane %v3269, 6
        %v3637 = vsel %vm1888, %v3635, %v3636
        %v3638 = vrot.slane %v3636, 4
        %v3639 = vrot.slane %v3578, 6
        %v3640 = vsel %vm1888, %v3638, %v3639
        %v3641 = vrot.slane %v3579, 6
        %v3642 = vrot.slane %v3641, 4
        %v3643 = vrot.slane %v3272, 6
        %v3644 = vsel %vm1888, %v3642, %v3643
        %v3645 = vrot.slane %v3643, 4
        %v3646 = vrot.slane %v3580, 6
        %v3647 = vsel %vm1888, %v3645, %v3646
        %v3648 = vrot.slane %v3581, 6
        %v3649 = vrot.slane %v3648, 4
        %v3650 = vrot.slane %v3275, 6
        %v3651 = vsel %vm1888, %v3649, %v3650
        %v3652 = vrot.slane %v3650, 4
        %v3653 = vrot.slane %v3582, 6
        %v3654 = vsel %vm1888, %v3652, %v3653
        %s3655 = scalar_lea.vmem [#allocation8], 512
        %v3656 = vld [vmem:[%s3655] sm:$0xf]
        %v3657 = vld [vmem:[%s3655 + $0x4] sm:$0xf]
        %v3658 = vld [vmem:[%s3655 + $0x8] sm:$0xf]
        %v3659 = vld [vmem:[%s3655 + $0xc] sm:$0xf]
        %v3660 = vld [vmem:[%s3655 + $0x10] sm:$0xf]
        %v3661 = vld [vmem:[%s3655 + $0x14] sm:$0xf]
        %v3662 = vld [vmem:[%s3655 + $0x18] sm:$0xf]
        %v3663 = vld [vmem:[%s3655 + $0x1c] sm:$0xf]
        %v3664 = vld [vmem:[%s3655 + $0x20] sm:$0xf]
        %v3665 = vld [vmem:[%s3655 + $0x24] sm:$0xf]
        %v3666 = vld [vmem:[%s3655 + $0x28] sm:$0xf]
        %v3667 = vld [vmem:[%s3655 + $0x2c] sm:$0xf]
        %v3668 = vld [vmem:[%s3655 + $0x30] sm:$0xf]
        %v3669 = vld [vmem:[%s3655 + $0x34] sm:$0xf]
        %v3670 = vld [vmem:[%s3655 + $0x38] sm:$0xf]
        %v3671 = vld [vmem:[%s3655 + $0x3c] sm:$0xf]
        %v3672 = vunpack.c.l.b16 %v3602
        %v3673 = vunpack.c.l.b16 %v3605
        %v3674 = vunpack.c.l.b16 %v3609
        %v3675 = vunpack.c.l.b16 %v3612
        %v3676 = vunpack.c.l.b16 %v3616
        %v3677 = vunpack.c.l.b16 %v3619
        %v3678 = vunpack.c.l.b16 %v3623
        %v3679 = vunpack.c.l.b16 %v3626
        %v3680 = vunpack.c.l.b16 %v3630
        %v3681 = vunpack.c.l.b16 %v3633
        %v3682 = vunpack.c.l.b16 %v3637
        %v3683 = vunpack.c.l.b16 %v3640
        %v3684 = vunpack.c.l.b16 %v3644
        %v3685 = vunpack.c.l.b16 %v3647
        %v3686 = vunpack.c.l.b16 %v3651
        %v3687 = vunpack.c.l.b16 %v3654
        %v3688 = vpack.c.b16 %v3673, %v3672
        %v3689 = vpack.c.b16 %v3675, %v3674
        %v3690 = vpack.c.b16 %v3677, %v3676
        %v3691 = vpack.c.b16 %v3679, %v3678
        %v3692 = vpack.c.b16 %v3681, %v3680
        %v3693 = vpack.c.b16 %v3683, %v3682
        %v3694 = vpack.c.b16 %v3685, %v3684
        %v3695 = vpack.c.b16 %v3687, %v3686
        %v3720 = vunpack.c.l.b16 %v3656
        %v3721 = vunpack.c.l.b16 %v3657
        %v3722 = vunpack.c.l.b16 %v3658
        %v3723 = vunpack.c.l.b16 %v3659
        %v3724 = vunpack.c.l.b16 %v3660
        %v3725 = vunpack.c.l.b16 %v3661
        %v3726 = vunpack.c.l.b16 %v3662
        %v3727 = vunpack.c.l.b16 %v3663
        %v3728 = vunpack.c.l.b16 %v3664
        %v3729 = vunpack.c.l.b16 %v3665
        %v3730 = vunpack.c.l.b16 %v3666
        %v3731 = vunpack.c.l.b16 %v3667
        %v3732 = vunpack.c.l.b16 %v3668
        %v3733 = vunpack.c.l.b16 %v3669
        %v3734 = vunpack.c.l.b16 %v3670
        %v3735 = vunpack.c.l.b16 %v3671
        %v3736 = vpack.c.b16 %v3721, %v3720
        %v3737 = vpack.c.b16 %v3723, %v3722
        %v3738 = vpack.c.b16 %v3725, %v3724
        %v3739 = vpack.c.b16 %v3727, %v3726
        %v3740 = vpack.c.b16 %v3729, %v3728
        %v3741 = vpack.c.b16 %v3731, %v3730
        %v3742 = vpack.c.b16 %v3733, %v3732
        %v3743 = vpack.c.b16 %v3735, %v3734
        %3752 = vmatprep.subr.bf16.mxu0 0
        %3753 = vmatpush1.bf16.msra.mxu0 %v3743
        %3754 = vmatprep.subr.bf16.mxu0 0
        %3755 = vmatpush1.bf16.msra.mxu0 %v3742
        %3756 = vmatprep.subr.bf16.mxu0 0
        %3757 = vmatpush1.bf16.msra.mxu0 %v3741
        %3758 = vmatprep.subr.bf16.mxu0 0
        %3759 = vmatpush1.bf16.msra.mxu0 %v3740
        %3760 = vmatprep.subr.bf16.mxu0 0
        %3761 = vmatpush1.bf16.msra.mxu0 %v3739
        %3762 = vmatprep.subr.bf16.mxu0 0
        %3763 = vmatpush1.bf16.msra.mxu0 %v3738
        %3764 = vmatprep.subr.bf16.mxu0 0
        %3765 = vmatpush1.bf16.msra.mxu0 %v3737
        %3766 = vmatprep.subr.bf16.mxu0 0
        %3767 = vmatpush1.bf16.msra.mxu0 %v3736
        %3768 = vmatprep.subr.bf16.mxu0 0
        %3769 = vmatpush2.bf16.msra.mxu0 0
        %3770 = vmatprep.subr.bf16.mxu0 0
        %3771 = vmatpush2.bf16.msra.mxu0 0
        %3772 = vmatprep.subr.bf16.mxu0 0
        %3773 = vmatpush2.bf16.msra.mxu0 0
        %3774 = vmatprep.subr.bf16.mxu0 0
        %3775 = vmatpush2.bf16.msra.mxu0 0
        %3776 = vmatprep.subr.bf16.mxu0 0
        %3777 = vmatpush2.bf16.msra.mxu0 0
        %3778 = vmatprep.subr.bf16.mxu0 0
        %3779 = vmatpush2.bf16.msra.mxu0 0
        %3780 = vmatprep.subr.bf16.mxu0 0
        %3781 = vmatpush2.bf16.msra.mxu0 0
        %3782 = vmatprep.subr.bf16.mxu0 0
        %3783 = vmatpush2.bf16.msra.mxu0 0
        %3784 = vmatprep.mubr.bf16.mxu0 0
        %3785 = vmatmul.mubr.bf16.gmra.mxu0 %v3688
        %v3786 = vpop.f32.mrf.mxu0
        %v3787 = vadd.f32 0.0, %v3786
        %v3788 = vpop.f32.mrf.mxu0
        %v3789 = vpop.f32.mrf.mxu0
        %v3790 = vadd.f32 0.0, %v3789
        %v3791 = vpop.f32.mrf.mxu0
        %3792 = vmatprep.mubr.bf16.mxu0 0
        %3793 = vmatmul.mubr.bf16.gmra.mxu0 %v3689
        %v3794 = vpop.f32.mrf.mxu0
        %v3795 = vadd.f32 0.0, %v3794
        %v3796 = vpop.f32.mrf.mxu0
        %v3797 = vpop.f32.mrf.mxu0
        %v3798 = vadd.f32 0.0, %v3797
        %v3799 = vpop.f32.mrf.mxu0
        %3800 = vmatprep.mubr.bf16.mxu0 0
        %3801 = vmatmul.mubr.bf16.gmra.mxu0 %v3690
        %v3802 = vpop.f32.mrf.mxu0
        %v3803 = vadd.f32 0.0, %v3802
        %v3804 = vpop.f32.mrf.mxu0
        %v3805 = vpop.f32.mrf.mxu0
        %v3806 = vadd.f32 0.0, %v3805
        %v3807 = vpop.f32.mrf.mxu0
        %3808 = vmatprep.mubr.bf16.mxu0 0
        %3809 = vmatmul.mubr.bf16.gmra.mxu0 %v3691
        %v3810 = vpop.f32.mrf.mxu0
        %v3811 = vadd.f32 0.0, %v3810
        %v3812 = vpop.f32.mrf.mxu0
        %v3813 = vpop.f32.mrf.mxu0
        %v3814 = vadd.f32 0.0, %v3813
        %v3815 = vpop.f32.mrf.mxu0
        %3816 = vmatprep.mubr.bf16.mxu0 0
        %3817 = vmatmul.mubr.bf16.gmra.mxu0 %v3692
        %v3818 = vpop.f32.mrf.mxu0
        %v3819 = vadd.f32 0.0, %v3818
        %v3820 = vpop.f32.mrf.mxu0
        %v3821 = vpop.f32.mrf.mxu0
        %v3822 = vadd.f32 0.0, %v3821
        %v3823 = vpop.f32.mrf.mxu0
        %3824 = vmatprep.mubr.bf16.mxu0 0
        %3825 = vmatmul.mubr.bf16.gmra.mxu0 %v3693
        %v3826 = vpop.f32.mrf.mxu0
        %v3827 = vadd.f32 0.0, %v3826
        %v3828 = vpop.f32.mrf.mxu0
        %v3829 = vpop.f32.mrf.mxu0
        %v3830 = vadd.f32 0.0, %v3829
        %v3831 = vpop.f32.mrf.mxu0
        %3832 = vmatprep.mubr.bf16.mxu0 0
        %3833 = vmatmul.mubr.bf16.gmra.mxu0 %v3694
        %v3834 = vpop.f32.mrf.mxu0
        %v3835 = vadd.f32 0.0, %v3834
        %v3836 = vpop.f32.mrf.mxu0
        %v3837 = vpop.f32.mrf.mxu0
        %v3838 = vadd.f32 0.0, %v3837
        %v3839 = vpop.f32.mrf.mxu0
        %3840 = vmatprep.mubr.bf16.mxu0 0
        %3841 = vmatmul.mubr.bf16.gmra.mxu0 %v3695
        %v3842 = vpop.f32.mrf.mxu0
        %v3843 = vadd.f32 0.0, %v3842
        %v3844 = vpop.f32.mrf.mxu0
        %v3845 = vpop.f32.mrf.mxu0
        %v3846 = vadd.f32 0.0, %v3845
        %v3847 = vpop.f32.mrf.mxu0
        %3848 = vdwg.mxu0
        %v3849 = vadd.f32 %v3551, %v3787
        %v3850 = vadd.f32 %v3552, %v3790
        %v3851 = vadd.f32 %v3553, %v3795
        %v3852 = vadd.f32 %v3554, %v3798
        %v3853 = vadd.f32 %v3555, %v3803
        %v3854 = vadd.f32 %v3556, %v3806
        %v3855 = vadd.f32 %v3557, %v3811
        %v3856 = vadd.f32 %v3558, %v3814
        %v3857 = vadd.f32 %v3559, %v3819
        %v3858 = vadd.f32 %v3560, %v3822
        %v3859 = vadd.f32 %v3561, %v3827
        %v3860 = vadd.f32 %v3562, %v3830
        %v3861 = vadd.f32 %v3563, %v3835
        %v3862 = vadd.f32 %v3564, %v3838
        %v3863 = vadd.f32 %v3565, %v3843
        %v3864 = vadd.f32 %v3566, %v3846
        %v3865 = vld [vmem:[%s7] sm:$0x1]
        %v3867 = vlaneseq
        %v3868 = vshrl.u32 %v3867, 7
        %v3869 = vsub.s32 0, %v3868
        %v3870 = vrot.slane %v3865, %v3869
        %v3872 = vmul.f32 %v3849, %v3870
        %v3873 = vmul.f32 %v3850, %v3870
        %v3874 = vmul.f32 %v3851, %v3870
        %v3875 = vmul.f32 %v3852, %v3870
        %v3876 = vmul.f32 %v3853, %v3870
        %v3877 = vmul.f32 %v3854, %v3870
        %v3878 = vmul.f32 %v3855, %v3870
        %v3879 = vmul.f32 %v3856, %v3870
        %v3880 = vmul.f32 %v3857, %v3870
        %v3881 = vmul.f32 %v3858, %v3870
        %v3882 = vmul.f32 %v3859, %v3870
        %v3883 = vmul.f32 %v3860, %v3870
        %v3884 = vmul.f32 %v3861, %v3870
        %v3885 = vmul.f32 %v3862, %v3870
        %v3886 = vmul.f32 %v3863, %v3870
        %v3887 = vmul.f32 %v3864, %v3870
        %v3888 = vld [vmem:[%s8] sm:$0x1]
        %v3890 = vlaneseq
        %v3891 = vshrl.u32 %v3890, 7
        %v3892 = vsub.s32 0, %v3891
        %v3893 = vrot.slane %v3888, %v3892
        %v3895 = vadd.f32 %v3872, %v3893
        %v3896 = vadd.f32 %v3873, %v3893
        %v3897 = vadd.f32 %v3874, %v3893
        %v3898 = vadd.f32 %v3875, %v3893
        %v3899 = vadd.f32 %v3876, %v3893
        %v3900 = vadd.f32 %v3877, %v3893
        %v3901 = vadd.f32 %v3878, %v3893
        %v3902 = vadd.f32 %v3879, %v3893
        %v3903 = vadd.f32 %v3880, %v3893
        %v3904 = vadd.f32 %v3881, %v3893
        %v3905 = vadd.f32 %v3882, %v3893
        %v3906 = vadd.f32 %v3883, %v3893
        %v3907 = vadd.f32 %v3884, %v3893
        %v3908 = vadd.f32 %v3885, %v3893
        %v3909 = vadd.f32 %v3886, %v3893
        %v3910 = vadd.f32 %v3887, %v3893
        %v3911 = vmax.f32 %v3895, 0.0
        %v3912 = vmax.f32 %v3896, 0.0
        %v3913 = vmax.f32 %v3897, 0.0
        %v3914 = vmax.f32 %v3898, 0.0
        %v3915 = vmax.f32 %v3899, 0.0
        %v3916 = vmax.f32 %v3900, 0.0
        %v3917 = vmax.f32 %v3901, 0.0
        %v3918 = vmax.f32 %v3902, 0.0
        %v3919 = vmax.f32 %v3903, 0.0
        %v3920 = vmax.f32 %v3904, 0.0
        %v3921 = vmax.f32 %v3905, 0.0
        %v3922 = vmax.f32 %v3906, 0.0
        %v3923 = vmax.f32 %v3907, 0.0
        %v3924 = vmax.f32 %v3908, 0.0
        %v3925 = vmax.f32 %v3909, 0.0
        %v3926 = vmax.f32 %v3910, 0.0
        %v3927 = vpack.c.bf16 %v3912, %v3911
        %v3928 = vpack.c.bf16 %v3914, %v3913
        %v3929 = vpack.c.bf16 %v3916, %v3915
        %v3930 = vpack.c.bf16 %v3918, %v3917
        %v3931 = vpack.c.bf16 %v3920, %v3919
        %v3932 = vpack.c.bf16 %v3922, %v3921
        %v3933 = vpack.c.bf16 %v3924, %v3923
        %v3934 = vpack.c.bf16 %v3926, %v3925
        %v3935 = vld [vmem:[#allocation10] sm:$0xf]
        %v3936 = vld [vmem:[#allocation10 + $0x4] sm:$0xf]
        %v3937 = vld [vmem:[#allocation10 + $0x8] sm:$0xf]
        %v3938 = vld [vmem:[#allocation10 + $0xc] sm:$0xf]
        %v3939 = vld [vmem:[#allocation10 + $0x10] sm:$0xf]
        %v3940 = vld [vmem:[#allocation10 + $0x14] sm:$0xf]
        %v3941 = vld [vmem:[#allocation10 + $0x18] sm:$0xf]
        %v3942 = vld [vmem:[#allocation10 + $0x1c] sm:$0xf]
        %v3943 = vld [vmem:[#allocation10 + $0x20] sm:$0xf]
        %v3944 = vld [vmem:[#allocation10 + $0x24] sm:$0xf]
        %v3945 = vld [vmem:[#allocation10 + $0x28] sm:$0xf]
        %v3946 = vld [vmem:[#allocation10 + $0x2c] sm:$0xf]
        %v3947 = vld [vmem:[#allocation10 + $0x30] sm:$0xf]
        %v3948 = vld [vmem:[#allocation10 + $0x34] sm:$0xf]
        %v3949 = vld [vmem:[#allocation10 + $0x38] sm:$0xf]
        %v3950 = vld [vmem:[#allocation10 + $0x3c] sm:$0xf]
        %v3967 = vunpack.c.l.b16 %v3935
        %v3968 = vunpack.c.l.b16 %v3936
        %v3969 = vunpack.c.l.b16 %v3937
        %v3970 = vunpack.c.l.b16 %v3938
        %v3971 = vunpack.c.l.b16 %v3939
        %v3972 = vunpack.c.l.b16 %v3940
        %v3973 = vunpack.c.l.b16 %v3941
        %v3974 = vunpack.c.l.b16 %v3942
        %v3975 = vunpack.c.l.b16 %v3943
        %v3976 = vunpack.c.l.b16 %v3944
        %v3977 = vunpack.c.l.b16 %v3945
        %v3978 = vunpack.c.l.b16 %v3946
        %v3979 = vunpack.c.l.b16 %v3947
        %v3980 = vunpack.c.l.b16 %v3948
        %v3981 = vunpack.c.l.b16 %v3949
        %v3982 = vunpack.c.l.b16 %v3950
        %v3983 = vpack.c.b16 %v3968, %v3967
        %v3984 = vpack.c.b16 %v3970, %v3969
        %v3985 = vpack.c.b16 %v3972, %v3971
        %v3986 = vpack.c.b16 %v3974, %v3973
        %v3987 = vpack.c.b16 %v3976, %v3975
        %v3988 = vpack.c.b16 %v3978, %v3977
        %v3989 = vpack.c.b16 %v3980, %v3979
        %v3990 = vpack.c.b16 %v3982, %v3981
        %3999 = vmatprep.subr.bf16.mxu0 0
        %4000 = vmatpush1.bf16.msra.mxu0 %v3990
        %4001 = vmatprep.subr.bf16.mxu0 0
        %4002 = vmatpush1.bf16.msra.mxu0 %v3989
        %4003 = vmatprep.subr.bf16.mxu0 0
        %4004 = vmatpush1.bf16.msra.mxu0 %v3988
        %4005 = vmatprep.subr.bf16.mxu0 0
        %4006 = vmatpush1.bf16.msra.mxu0 %v3987
        %4007 = vmatprep.subr.bf16.mxu0 0
        %4008 = vmatpush1.bf16.msra.mxu0 %v3986
        %4009 = vmatprep.subr.bf16.mxu0 0
        %4010 = vmatpush1.bf16.msra.mxu0 %v3985
        %4011 = vmatprep.subr.bf16.mxu0 0
        %4012 = vmatpush1.bf16.msra.mxu0 %v3984
        %4013 = vmatprep.subr.bf16.mxu0 0
        %4014 = vmatpush1.bf16.msra.mxu0 %v3983
        %4015 = vmatprep.subr.bf16.mxu0 0
        %4016 = vmatpush2.bf16.msra.mxu0 0
        %4017 = vmatprep.subr.bf16.mxu0 0
        %4018 = vmatpush2.bf16.msra.mxu0 0
        %4019 = vmatprep.subr.bf16.mxu0 0
        %4020 = vmatpush2.bf16.msra.mxu0 0
        %4021 = vmatprep.subr.bf16.mxu0 0
        %4022 = vmatpush2.bf16.msra.mxu0 0
        %4023 = vmatprep.subr.bf16.mxu0 0
        %4024 = vmatpush2.bf16.msra.mxu0 0
        %4025 = vmatprep.subr.bf16.mxu0 0
        %4026 = vmatpush2.bf16.msra.mxu0 0
        %4027 = vmatprep.subr.bf16.mxu0 0
        %4028 = vmatpush2.bf16.msra.mxu0 0
        %4029 = vmatprep.subr.bf16.mxu0 0
        %4030 = vmatpush2.bf16.msra.mxu0 0
        %4031 = vmatprep.mubr.bf16.mxu0 0
        %4032 = vmatmul.mubr.bf16.gmra.mxu0 %v3927
        %v4033 = vpop.f32.mrf.mxu0
        %v4034 = vadd.f32 %v752, %v4033
        %v4035 = vpop.f32.mrf.mxu0
        %v4036 = vpop.f32.mrf.mxu0
        %v4037 = vadd.f32 %v755, %v4036
        %v4038 = vpop.f32.mrf.mxu0
        %4039 = vmatprep.mubr.bf16.mxu0 0
        %4040 = vmatmul.mubr.bf16.gmra.mxu0 %v3928
        %v4041 = vpop.f32.mrf.mxu0
        %v4042 = vadd.f32 %v760, %v4041
        %v4043 = vpop.f32.mrf.mxu0
        %v4044 = vpop.f32.mrf.mxu0
        %v4045 = vadd.f32 %v763, %v4044
        %v4046 = vpop.f32.mrf.mxu0
        %4047 = vmatprep.mubr.bf16.mxu0 0
        %4048 = vmatmul.mubr.bf16.gmra.mxu0 %v3929
        %v4049 = vpop.f32.mrf.mxu0
        %v4050 = vadd.f32 %v768, %v4049
        %v4051 = vpop.f32.mrf.mxu0
        %v4052 = vpop.f32.mrf.mxu0
        %v4053 = vadd.f32 %v771, %v4052
        %v4054 = vpop.f32.mrf.mxu0
        %4055 = vmatprep.mubr.bf16.mxu0 0
        %4056 = vmatmul.mubr.bf16.gmra.mxu0 %v3930
        %v4057 = vpop.f32.mrf.mxu0
        %v4058 = vadd.f32 %v776, %v4057
        %v4059 = vpop.f32.mrf.mxu0
        %v4060 = vpop.f32.mrf.mxu0
        %v4061 = vadd.f32 %v779, %v4060
        %v4062 = vpop.f32.mrf.mxu0
        %4063 = vmatprep.mubr.bf16.mxu0 0
        %4064 = vmatmul.mubr.bf16.gmra.mxu0 %v3931
        %v4065 = vpop.f32.mrf.mxu0
        %v4066 = vadd.f32 %v784, %v4065
        %v4067 = vpop.f32.mrf.mxu0
        %v4068 = vpop.f32.mrf.mxu0
        %v4069 = vadd.f32 %v787, %v4068
        %v4070 = vpop.f32.mrf.mxu0
        %4071 = vmatprep.mubr.bf16.mxu0 0
        %4072 = vmatmul.mubr.bf16.gmra.mxu0 %v3932
        %v4073 = vpop.f32.mrf.mxu0
        %v4074 = vadd.f32 %v792, %v4073
        %v4075 = vpop.f32.mrf.mxu0
        %v4076 = vpop.f32.mrf.mxu0
        %v4077 = vadd.f32 %v795, %v4076
        %v4078 = vpop.f32.mrf.mxu0
        %4079 = vmatprep.mubr.bf16.mxu0 0
        %4080 = vmatmul.mubr.bf16.gmra.mxu0 %v3933
        %v4081 = vpop.f32.mrf.mxu0
        %v4082 = vadd.f32 %v800, %v4081
        %v4083 = vpop.f32.mrf.mxu0
        %v4084 = vpop.f32.mrf.mxu0
        %v4085 = vadd.f32 %v803, %v4084
        %v4086 = vpop.f32.mrf.mxu0
        %4087 = vmatprep.mubr.bf16.mxu0 0
        %4088 = vmatmul.mubr.bf16.gmra.mxu0 %v3934
        %v4089 = vpop.f32.mrf.mxu0
        %v4090 = vadd.f32 %v808, %v4089
        %v4091 = vpop.f32.mrf.mxu0
        %v4092 = vpop.f32.mrf.mxu0
        %v4093 = vadd.f32 %v811, %v4092
        %v4094 = vpop.f32.mrf.mxu0
        %4095 = vdwg.mxu0
        %4096 = vst [vmem:[%s444] sm:$0xff] %v4034
        %4097 = vst [vmem:[%s444 + $0x8] sm:$0xff] %v4037
        %4098 = vst [vmem:[%s444 + $0x10] sm:$0xff] %v4042
        %4099 = vst [vmem:[%s444 + $0x18] sm:$0xff] %v4045
        %4100 = vst [vmem:[%s444 + $0x20] sm:$0xff] %v4050
        %4101 = vst [vmem:[%s444 + $0x28] sm:$0xff] %v4053
        %4102 = vst [vmem:[%s444 + $0x30] sm:$0xff] %v4058
        %4103 = vst [vmem:[%s444 + $0x38] sm:$0xff] %v4061
        %4104 = vst [vmem:[%s444 + $0x40] sm:$0xff] %v4066
        %4105 = vst [vmem:[%s444 + $0x48] sm:$0xff] %v4069
        %4106 = vst [vmem:[%s444 + $0x50] sm:$0xff] %v4074
        %4107 = vst [vmem:[%s444 + $0x58] sm:$0xff] %v4077
        %4108 = vst [vmem:[%s444 + $0x60] sm:$0xff] %v4082
        %4109 = vst [vmem:[%s444 + $0x68] sm:$0xff] %v4085
        %4110 = vst [vmem:[%s444 + $0x70] sm:$0xff] %v4090
        %4111 = vst [vmem:[%s444 + $0x78] sm:$0xff] %v4093
        %s4112 = sand.u32 %s265, 1
        %s4113 = scalar_lea.sflag [#allocation7], %s4112
        %s4114 = sand.u32 %s265, 1
        %s4115 = smul.addr %s4114, 128
        %s4116 = scalar_lea.vmem [#allocation13], %s4115
        %s4117 = sand.u32 %s293, 1
        %s4118 = scalar_lea.sflag [#allocation15], %s4117
        %s4119 = sand.u32 %s293, 1
        %s4120 = smul.addr %s4119, 128
        %s4121 = scalar_lea.vmem [#allocation14], %s4120
        // Predicated region
        $region101: #{tpu_custom_call.1} parent=59 // pred_check
          %p4122 = pneg %p275
        $region102: #{tpu_custom_call.1} parent=59 // pred_check_branch
          %4124 = sbr.rel (%p4122) target = $region104
        $region103: #{tpu_custom_call.1} parent=59 // pred_region
          %s4125 = smul.u32 8, %s38
          %s4127 = ssub.s32 2048, 2048
          %4128 = vsyncadd %s4113, %s4127
          %s4129 = smul.addr %s4125, 2
          %s4130 = smul.addr %s37, 32
          %s4131 = sadd.s32 %s4129, %s4130
          %s4132 = smul.addr %s4131, 128
          %s4133 = scalar_lea.hbm %s11, %s4132
          %s4134 = sshll.u32 %s4116, 4
          %s4135 = int_to_ptr.vmem [resolvable:$true] %s4134
          %4140 = dma.vmem_to_hbm [thread:$0]  %s4135, 2048, %s4133, %s4113, 128, 128, 8
        $region104: #{tpu_custom_call.1} parent=59 // pred_fallthru
          _
        // Predicated region
        $region105: #{tpu_custom_call.1} parent=59 // pred_check
          %p4141 = pneg %p303
        $region106: #{tpu_custom_call.1} parent=59 // pred_check_branch
          %4143 = sbr.rel (%p4141) target = $region108
        $region107: #{tpu_custom_call.1} parent=59 // pred_region
          %s4144 = smul.u32 8, %s38
          %s4146 = ssub.s32 2048, 2048
          %4147 = vsyncadd %s4118, %s4146
          %s4148 = smul.addr %s4144, 2
          %s4149 = smul.addr %s37, 32
          %s4150 = sadd.s32 %s4148, %s4149
          %s4151 = smul.addr %s4150, 128
          %s4152 = scalar_lea.hbm %s12, %s4151
          %s4153 = sshll.u32 %s4121, 4
          %s4154 = int_to_ptr.vmem [resolvable:$true] %s4153
          %4159 = dma.vmem_to_hbm [thread:$0]  %s4154, 2048, %s4152, %s4118, 128, 128, 8
        $region108: #{tpu_custom_call.1} parent=59 // pred_fallthru
          _
      $region60: #{tpu_custom_call.1} parent=5 // pred_fallthru
        _
      %p4160 = scmp.le.s32.totalorder 2, %s28
      // Predicated region
      $region109: #{tpu_custom_call.1} parent=5 // pred_check
        %p4161 = pneg %p4160
      $region110: #{tpu_custom_call.1} parent=5 // pred_check_branch
        %4163 = sbr.rel (%p4161) target = $region112
      $region111: #{tpu_custom_call.1} parent=5 // pred_region
        %s4164 = ssub.s32 %s28, 2
        // Predicated region
        $region113: #{tpu_custom_call.1} parent=111 // pred_check
          %p4165 = pneg %p281
        $region114: #{tpu_custom_call.1} parent=111 // pred_check_branch
          %4167 = sbr.rel (%p4165) target = $region116
        $region115: #{tpu_custom_call.1} parent=111 // pred_region
          %s4168 = sand.u32 %s266, 1
          %s4169 = scalar_lea.sflag [#allocation7], %s4168
          %s4170 = sand.u32 %s266, 1
          %s4171 = smul.addr %s4170, 128
          %s4172 = scalar_lea.vmem [#allocation13], %s4171
          %4173 = dma.done %s4169, 2048
        $region116: #{tpu_custom_call.1} parent=111 // pred_fallthru
          _
        // Predicated region
        $region117: #{tpu_custom_call.1} parent=111 // pred_check
          %p4174 = pneg %p309
        $region118: #{tpu_custom_call.1} parent=111 // pred_check_branch
          %4176 = sbr.rel (%p4174) target = $region120
        $region119: #{tpu_custom_call.1} parent=111 // pred_region
          %s4177 = sand.u32 %s294, 1
          %s4178 = scalar_lea.sflag [#allocation15], %s4177
          %s4179 = sand.u32 %s294, 1
          %s4180 = smul.addr %s4179, 128
          %s4181 = scalar_lea.vmem [#allocation14], %s4180
          %4182 = dma.done %s4178, 2048
        $region120: #{tpu_custom_call.1} parent=111 // pred_fallthru
          _
      $region112: #{tpu_custom_call.1} parent=5 // pred_fallthru
        _
    $region6: #{tpu_custom_call.1} parent=1 // loop_footer
      %s32 = sadd.s32 1, %s28
    $region7: #{tpu_custom_call.1} parent=1 // loop_footer_branch
      %27 = sbr.rel target = $region3
    $region8: #{tpu_custom_call.1} parent=1 // loop_exit
      _
    %4183 = vsyncpa [#allocation6], 1
    %s4184 = scalar_lea.sflag [#allocation6], 1
    %4185 = vsyncpa %s4184, 1
    %4186 = vsyncpa [#allocation9], 1
    %4187 = vsyncpa [#allocation12], 1
    %4188 = vsyncpa [#allocation7], 1
    %s4189 = scalar_lea.sflag [#allocation7], 1
    %4190 = vsyncpa %s4189, 1
    %4191 = vsyncpa [#allocation15], 1
    %s4192 = scalar_lea.sflag [#allocation15], 1
    %4193 = vsyncpa %s4192, 1
  %4194 = vsyncmov [#allocation3]
  %s4195 = vpop.sfrf %4194
  %p4196 = scmp.eq.s32.totalorder %s4195, 0
  %p4197 = pneg %p4196
  %4199 = shalt.err (%p4197)
  %s4200 = scalar_lea.sflag [#allocation3], 1
  %4201 = vsyncmov %s4200
  %s4202 = vpop.sfrf %4201
  %p4203 = scmp.eq.s32.totalorder %s4202, 0
  %p4204 = pneg %p4203
  %4206 = shalt.err (%p4204)

// kernel: tpu_custom_call.1
$region0: #{tpu_custom_call.1}
  #allocation0 [shape = 'u32[]', space=smem, size = 0x4, offset = 0x4, fixed_abs, tag = 'smem constant byte address 0x4 - core index']
  #allocation1 [shape = 'u32[144,128]{1,0:T(1,128)}', space=vmem, size = 0x12000, scoped, tag = 'internal scratch']
  #allocation2 [shape = 'f32[2,12,16,128]{3,2,1,0:T(8,128)}', space=vmem, size = 0x30000, scoped, tag = 'scratch operand']
  #allocation3 [shape = 's32[2]{0}', space=sflag, size = 0x8, scoped, tag = 'scratch operand']
  #allocation4 [shape = 'bf16[12,20,128]{2,1,0:T(8,128)(2,1)}', space=vmem, size = 0x12000, scoped, tag = 'scratch operand']
  #allocation16 [shape = 's32[]', space=sflag, size = 0x4, offset = 0, fixed_abs, tag = 'sflag constant byte address 0x0 - dummy sync flag']
  #allocation17 [shape = 's32[]', space=sflag, size = 0x4, offset = 0, fixed_abs, tag = 'sflag constant byte address 0x0 - dummy sync flag']
  #allocation18 [shape = 'u32[]', space=smem, size = 0x4, offset = 0x44, fixed_abs, tag = 'smem constant byte address 0x44 - assertion arg 0']
  #allocation19 [shape = 'u32[]', space=smem, size = 0x4, offset = 0x48, fixed_abs, tag = 'smem constant byte address 0x48 - assertion arg 1']
  #allocation20 [shape = 's32[]', space=sflag, size = 0x4, offset = 0, fixed_abs, tag = 'sflag constant byte address 0x0 - dummy sync flag']
  #allocation21 [shape = 's32[]', space=sflag, size = 0x4, offset = 0, fixed_abs, tag = 'sflag constant byte address 0x0 - dummy sync flag']
  %s0 = inlined_call_operand.hbm [shape: f32[2,20,16,128], index: 0, kind: input, shape index: {}]
  %s1 = inlined_call_operand.vmem [shape: f32[1,128], index: 1, kind: input, shape index: {}]
  %s2 = inlined_call_operand.vmem [shape: f32[1,128], index: 2, kind: input, shape index: {}]
  %s3 = inlined_call_operand.hbm [shape: bf16[128,128], index: 3, kind: input, shape index: {}]
  %s4 = inlined_call_operand.vmem [shape: f32[1,128], index: 4, kind: input, shape index: {}]
  %s5 = inlined_call_operand.vmem [shape: f32[1,128], index: 5, kind: input, shape index: {}]
  %s6 = inlined_call_operand.hbm [shape: bf16[9,128,128], index: 6, kind: input, shape index: {}]
  %s7 = inlined_call_operand.vmem [shape: f32[1,128], index: 7, kind: input, shape index: {}]
  %s8 = inlined_call_operand.vmem [shape: f32[1,128], index: 8, kind: input, shape index: {}]
  %s9 = inlined_call_operand.hbm [shape: bf16[128,128], index: 9, kind: input, shape index: {}]
  %s10 = inlined_call_operand.hbm [shape: bf16[128,128], index: 10, kind: input, shape index: {}]
  %s11 = inlined_call_operand.hbm [shape: f32[2,16,16,128], index: 11, kind: output, shape index: {0}]
  %s12 = inlined_call_operand.hbm [shape: f32[2,16,16,128], index: 12, kind: output, shape index: {1}]
  %13 = xla_tuple %s11, %s12
  %s14 = sld [smem:[#allocation0]]
  $region121: #{tpu_custom_call.1} parent=0
    _
  %s16 = ssub.s32 1, %s14
  %s17 = scalar_select 0, %s16, %s14
  $region1: #{tpu_custom_call.1} parent=0
    #allocation5 [shape = 'u8[32768]{0}', space=vmem, size = 0x8000, scoped, tag = 'input window, operand 3, single buffered']
    #allocation6 [shape = 's32[2]{0}', space=sflag, size = 0x8, scoped, tag = 'scoped memory for tpu_custom_call.1']
    #allocation7 [shape = 's32[2]{0}', space=sflag, size = 0x8, scoped, tag = 'scoped memory for tpu_custom_call.1']
    #allocation8 [shape = 'u8[294912]{0}', space=vmem, size = 0x48000, scoped, tag = 'input window, operand 6, single buffered']
    #allocation9 [shape = 's32[1]{0}', space=sflag, size = 0x4, scoped, tag = 'scoped memory for tpu_custom_call.1']
    #allocation10 [shape = 'u8[32768]{0}', space=vmem, size = 0x8000, scoped, tag = 'input window, operand 9, single buffered']
    #allocation11 [shape = 'u8[32768]{0}', space=vmem, size = 0x8000, scoped, tag = 'input window, operand 10, single buffered']
    #allocation12 [shape = 's32[1]{0}', space=sflag, size = 0x4, scoped, tag = 'scoped memory for tpu_custom_call.1']
    #allocation13 [shape = 'u8[131072]{0}', space=vmem, size = 0x20000, scoped, tag = 'output window, operand 0']
    #allocation14 [shape = 'u8[131072]{0}', space=vmem, size = 0x20000, scoped, tag = 'output window, operand 1']
    #allocation15 [shape = 's32[2]{0}', space=sflag, size = 0x8, scoped, tag = 'scoped memory for tpu_custom_call.1']
    %18 = vsyncpa [#allocation6], 0
    %19 = vsyncpa [#allocation9], 0
    %20 = vsyncpa [#allocation12], 0
    %21 = vsyncpa [#allocation7], 0
    %s22 = scalar_lea.sflag [#allocation7], 1
    %23 = vsyncpa %s22, 0
    %24 = vsyncpa [#allocation15], 0
    %s25 = scalar_lea.sflag [#allocation15], 1
    %26 = vsyncpa %s25, 0
    loop: start=0, step=1, limit=6
    $region2: #{tpu_custom_call.1} parent=1 // loop_pre_header
      _
    $region3: #{tpu_custom_call.1} parent=1 // loop_header
      %s28 = sphi 0, %s32
      %p29 = scmp.ge.s32.totalorder %s28, 6
      %s35 = sphi 0, %s47
      %s36 = sphi 0, %s43
      %s37 = sphi 0, %s35
      %s38 = sphi 0, %s36
      %s39 = sphi 0, %s37
      %s40 = sphi 0, %s38
      %s48 = sphi 0, %s48
      %s50 = sphi 0, %s48
      %s51 = sphi 0, %s50
      %s65 = sphi 0, %s51
      %s69 = sphi 0, %s69
      %s71 = sphi 0, %s69
      %s72 = sphi 0, %s71
      %s86 = sphi 0, %s72
      %s90 = sphi 0, %s90
      %s92 = sphi 0, %s90
      %s93 = sphi 0, %s92
      %s107 = sphi 0, %s93
      %s111 = sphi 0, %s111
      %s113 = sphi 0, %s111
      %s114 = sphi 0, %s113
      %s128 = sphi 0, %s114
      %s132 = sphi 0, %s132
      %s134 = sphi 0, %s132
      %s135 = sphi 0, %s134
      %s149 = sphi 0, %s135
      %s153 = sphi 0, %s153
      %s155 = sphi 0, %s153
      %s156 = sphi 0, %s155
      %s170 = sphi 0, %s156
      %s174 = sphi 0, %s174
      %s176 = sphi 0, %s174
      %s177 = sphi 0, %s176
      %s191 = sphi 0, %s177
      %s195 = sphi 0, %s195
      %s197 = sphi 0, %s195
      %s198 = sphi 0, %s197
      %s212 = sphi 0, %s198
      %s216 = sphi 0, %s216
      %s218 = sphi 0, %s216
      %s219 = sphi 0, %s218
      %s233 = sphi 0, %s219
      %s237 = sphi 0, %s237
      %s239 = sphi 0, %s237
      %s240 = sphi 0, %s239
      %s254 = sphi 0, %s240
      %s262 = sphi 0, %s264
      %s265 = sphi 0, %s262
      %s266 = sphi 0, %s265
      %s282 = sphi 0, %s266
      %s290 = sphi 0, %s292
      %s293 = sphi 0, %s290
      %s294 = sphi 0, %s293
      %s310 = sphi 0, %s294
    $region4: #{tpu_custom_call.1} parent=1 // loop_header_branch
      %31 = sbr.rel (%p29) target = $region8
    $region5: #{tpu_custom_call.1} parent=1 // loop_body
      %s33 = ssub.s32 %s28, 1
      %s34 = ssub.s32 %s28, 2
      %s41 = sadd.s32 1, %s36
      %p42 = scmp.ge.s32.totalorder %s41, 2
      %s43 = scalar_select %p42, 0, %s41
      %s44 = sadd.s32 1, %s35
      %s45 = scalar_select %p42, %s44, %s35
      %p46 = scmp.ge.s32.totalorder %s45, 2
      %s47 = scalar_select %p46, 0, %s45
      %s49 = sadd.s32 %s48, 1
      %p52 = scmp.eq.s32.totalorder %s28, 3
      %p53 = scmp.ne.s32.totalorder %s48, %s50
      %p54 = scmp.eq.s32.totalorder %s28, 0
      %p55 = por %p53, %p54
      %p56 = scmp.ne.s32.totalorder %s48, %s50
      %p57 = scmp.eq.s32.totalorder %s33, 3
      %p58 = por %p56, %p57
      %p59 = scmp.ne.s32.totalorder %s50, %s51
      %p60 = scmp.eq.s32.totalorder %s33, 0
      %p61 = por %p59, %p60
      %p62 = scmp.ne.s32.totalorder %s50, %s51
      %p63 = scmp.eq.s32.totalorder %s34, 3
      %p64 = por %p62, %p63
      %p66 = scmp.ne.s32.totalorder %s51, %s65
      %p67 = scmp.eq.s32.totalorder %s34, 0
      %p68 = por %p66, %p67
      %s70 = sadd.s32 %s69, 1
      %p73 = scmp.eq.s32.totalorder %s28, 3
      %p74 = scmp.ne.s32.totalorder %s69, %s71
      %p75 = scmp.eq.s32.totalorder %s28, 0
      %p76 = por %p74, %p75
      %p77 = scmp.ne.s32.totalorder %s69, %s71
      %p78 = scmp.eq.s32.totalorder %s33, 3
      %p79 = por %p77, %p78
      %p80 = scmp.ne.s32.totalorder %s71, %s72
      %p81 = scmp.eq.s32.totalorder %s33, 0
      %p82 = por %p80, %p81
      %p83 = scmp.ne.s32.totalorder %s71, %s72
      %p84 = scmp.eq.s32.totalorder %s34, 3
      %p85 = por %p83, %p84
      %p87 = scmp.ne.s32.totalorder %s72, %s86
      %p88 = scmp.eq.s32.totalorder %s34, 0
      %p89 = por %p87, %p88
      %s91 = sadd.s32 %s90, 1
      %p94 = scmp.eq.s32.totalorder %s28, 3
      %p95 = scmp.ne.s32.totalorder %s90, %s92
      %p96 = scmp.eq.s32.totalorder %s28, 0
      %p97 = por %p95, %p96
      %p98 = scmp.ne.s32.totalorder %s90, %s92
      %p99 = scmp.eq.s32.totalorder %s33, 3
      %p100 = por %p98, %p99
      %p101 = scmp.ne.s32.totalorder %s92, %s93
      %p102 = scmp.eq.s32.totalorder %s33, 0
      %p103 = por %p101, %p102
      %p104 = scmp.ne.s32.totalorder %s92, %s93
      %p105 = scmp.eq.s32.totalorder %s34, 3
      %p106 = por %p104, %p105
      %p108 = scmp.ne.s32.totalorder %s93, %s107
      %p109 = scmp.eq.s32.totalorder %s34, 0
      %p110 = por %p108, %p109
      %s112 = sadd.s32 %s111, 1
      %p115 = scmp.eq.s32.totalorder %s28, 3
      %p116 = scmp.ne.s32.totalorder %s111, %s113
      %p117 = scmp.eq.s32.totalorder %s28, 0
      %p118 = por %p116, %p117
      %p119 = scmp.ne.s32.totalorder %s111, %s113
      %p120 = scmp.eq.s32.totalorder %s33, 3
      %p121 = por %p119, %p120
      %p122 = scmp.ne.s32.totalorder %s113, %s114
      %p123 = scmp.eq.s32.totalorder %s33, 0
      %p124 = por %p122, %p123
      %p125 = scmp.ne.s32.totalorder %s113, %s114
      %p126 = scmp.eq.s32.totalorder %s34, 3
      %p127 = por %p125, %p126
      %p129 = scmp.ne.s32.totalorder %s114, %s128
      %p130 = scmp.eq.s32.totalorder %s34, 0
      %p131 = por %p129, %p130
      %s133 = sadd.s32 %s132, 1
      %p136 = scmp.eq.s32.totalorder %s28, 3
      %p137 = scmp.ne.s32.totalorder %s132, %s134
      %p138 = scmp.eq.s32.totalorder %s28, 0
      %p139 = por %p137, %p138
      %p140 = scmp.ne.s32.totalorder %s132, %s134
      %p141 = scmp.eq.s32.totalorder %s33, 3
      %p142 = por %p140, %p141
      %p143 = scmp.ne.s32.totalorder %s134, %s135
      %p144 = scmp.eq.s32.totalorder %s33, 0
      %p145 = por %p143, %p144
      %p146 = scmp.ne.s32.totalorder %s134, %s135
      %p147 = scmp.eq.s32.totalorder %s34, 3
      %p148 = por %p146, %p147
      %p150 = scmp.ne.s32.totalorder %s135, %s149
      %p151 = scmp.eq.s32.totalorder %s34, 0
      %p152 = por %p150, %p151
      %s154 = sadd.s32 %s153, 1
      %p157 = scmp.eq.s32.totalorder %s28, 3
      %p158 = scmp.ne.s32.totalorder %s153, %s155
      %p159 = scmp.eq.s32.totalorder %s28, 0
      %p160 = por %p158, %p159
      %p161 = scmp.ne.s32.totalorder %s153, %s155
      %p162 = scmp.eq.s32.totalorder %s33, 3
      %p163 = por %p161, %p162
      %p164 = scmp.ne.s32.totalorder %s155, %s156
      %p165 = scmp.eq.s32.totalorder %s33, 0
      %p166 = por %p164, %p165
      %p167 = scmp.ne.s32.totalorder %s155, %s156
      %p168 = scmp.eq.s32.totalorder %s34, 3
      %p169 = por %p167, %p168
      %p171 = scmp.ne.s32.totalorder %s156, %s170
      %p172 = scmp.eq.s32.totalorder %s34, 0
      %p173 = por %p171, %p172
      %s175 = sadd.s32 %s174, 1
      %p178 = scmp.eq.s32.totalorder %s28, 3
      %p179 = scmp.ne.s32.totalorder %s174, %s176
      %p180 = scmp.eq.s32.totalorder %s28, 0
      %p181 = por %p179, %p180
      %p182 = scmp.ne.s32.totalorder %s174, %s176
      %p183 = scmp.eq.s32.totalorder %s33, 3
      %p184 = por %p182, %p183
      %p185 = scmp.ne.s32.totalorder %s176, %s177
      %p186 = scmp.eq.s32.totalorder %s33, 0
      %p187 = por %p185, %p186
      %p188 = scmp.ne.s32.totalorder %s176, %s177
      %p189 = scmp.eq.s32.totalorder %s34, 3
      %p190 = por %p188, %p189
      %p192 = scmp.ne.s32.totalorder %s177, %s191
      %p193 = scmp.eq.s32.totalorder %s34, 0
      %p194 = por %p192, %p193
      %s196 = sadd.s32 %s195, 1
      %p199 = scmp.eq.s32.totalorder %s28, 3
      %p200 = scmp.ne.s32.totalorder %s195, %s197
      %p201 = scmp.eq.s32.totalorder %s28, 0
      %p202 = por %p200, %p201
      %p203 = scmp.ne.s32.totalorder %s195, %s197
      %p204 = scmp.eq.s32.totalorder %s33, 3
      %p205 = por %p203, %p204
      %p206 = scmp.ne.s32.totalorder %s197, %s198
      %p207 = scmp.eq.s32.totalorder %s33, 0
      %p208 = por %p206, %p207
      %p209 = scmp.ne.s32.totalorder %s197, %s198
      %p210 = scmp.eq.s32.totalorder %s34, 3
      %p211 = por %p209, %p210
      %p213 = scmp.ne.s32.totalorder %s198, %s212
      %p214 = scmp.eq.s32.totalorder %s34, 0
      %p215 = por %p213, %p214
      %s217 = sadd.s32 %s216, 1
      %p220 = scmp.eq.s32.totalorder %s28, 3
      %p221 = scmp.ne.s32.totalorder %s216, %s218
      %p222 = scmp.eq.s32.totalorder %s28, 0
      %p223 = por %p221, %p222
      %p224 = scmp.ne.s32.totalorder %s216, %s218
      %p225 = scmp.eq.s32.totalorder %s33, 3
      %p226 = por %p224, %p225
      %p227 = scmp.ne.s32.totalorder %s218, %s219
      %p228 = scmp.eq.s32.totalorder %s33, 0
      %p229 = por %p227, %p228
      %p230 = scmp.ne.s32.totalorder %s218, %s219
      %p231 = scmp.eq.s32.totalorder %s34, 3
      %p232 = por %p230, %p231
      %p234 = scmp.ne.s32.totalorder %s219, %s233
      %p235 = scmp.eq.s32.totalorder %s34, 0
      %p236 = por %p234, %p235
      %s238 = sadd.s32 %s237, 1
      %p241 = scmp.eq.s32.totalorder %s28, 3
      %p242 = scmp.ne.s32.totalorder %s237, %s239
      %p243 = scmp.eq.s32.totalorder %s28, 0
      %p244 = por %p242, %p243
      %p245 = scmp.ne.s32.totalorder %s237, %s239
      %p246 = scmp.eq.s32.totalorder %s33, 3
      %p247 = por %p245, %p246
      %p248 = scmp.ne.s32.totalorder %s239, %s240
      %p249 = scmp.eq.s32.totalorder %s33, 0
      %p250 = por %p248, %p249
      %p251 = scmp.ne.s32.totalorder %s239, %s240
      %p252 = scmp.eq.s32.totalorder %s34, 3
      %p253 = por %p251, %p252
      %p255 = scmp.ne.s32.totalorder %s240, %s254
      %p256 = scmp.eq.s32.totalorder %s34, 0
      %p257 = por %p255, %p256
      %s258 = ssub.s32 %s35, %s47
      %s259 = ssub.s32 %s36, %s43
      %s260 = sor.u32 %s258, %s259
      %p261 = scmp.eq.s32.totalorder %s260, 0
      %s263 = sadd.s32 %s262, 1
      %s264 = scalar_select %p261, %s262, %s263
      %p267 = pneg %p261
      %p268 = scmp.eq.s32.totalorder %s28, 3
      %p269 = por %p267, %p268
      %p270 = scmp.ne.s32.totalorder %s262, %s265
      %p271 = scmp.eq.s32.totalorder %s28, 0
      %p272 = por %p270, %p271
      %p273 = scmp.ne.s32.totalorder %s262, %s265
      %p274 = scmp.eq.s32.totalorder %s33, 3
      %p275 = por %p273, %p274
      %p276 = scmp.ne.s32.totalorder %s265, %s266
      %p277 = scmp.eq.s32.totalorder %s33, 0
      %p278 = por %p276, %p277
      %p279 = scmp.ne.s32.totalorder %s265, %s266
      %p280 = scmp.eq.s32.totalorder %s34, 3
      %p281 = por %p279, %p280
      %p283 = scmp.ne.s32.totalorder %s266, %s282
      %p284 = scmp.eq.s32.totalorder %s34, 0
      %p285 = por %p283, %p284
      %s286 = ssub.s32 %s35, %s47
      %s287 = ssub.s32 %s36, %s43
      %s288 = sor.u32 %s286, %s287
      %p289 = scmp.eq.s32.totalorder %s288, 0
      %s291 = sadd.s32 %s290, 1
      %s292 = scalar_select %p289, %s290, %s291
      %p295 = pneg %p289
      %p296 = scmp.eq.s32.totalorder %s28, 3
      %p297 = por %p295, %p296
      %p298 = scmp.ne.s32.totalorder %s290, %s293
      %p299 = scmp.eq.s32.totalorder %s28, 0
      %p300 = por %p298, %p299
      %p301 = scmp.ne.s32.totalorder %s290, %s293
      %p302 = scmp.eq.s32.totalorder %s33, 3
      %p303 = por %p301, %p302
      %p304 = scmp.ne.s32.totalorder %s293, %s294
      %p305 = scmp.eq.s32.totalorder %s33, 0
      %p306 = por %p304, %p305
      %p307 = scmp.ne.s32.totalorder %s293, %s294
      %p308 = scmp.eq.s32.totalorder %s34, 3
      %p309 = por %p307, %p308
      %p311 = scmp.ne.s32.totalorder %s294, %s310
      %p312 = scmp.eq.s32.totalorder %s34, 0
      %p313 = por %p311, %p312
      %p314 = scmp.le.s32.totalorder 1, %s28
      %p315 = scmp.lt.s32.totalorder %s28, 5
      %p316 = pnand %p314, %p315
      %p317 = pneg %p316
      // Predicated region
      $region9: #{tpu_custom_call.1} parent=5 // pred_check
        _
      $region10: #{tpu_custom_call.1} parent=5 // pred_check_branch
        %319 = sbr.rel (%p316) target = $region12
      $region11: #{tpu_custom_call.1} parent=5 // pred_region
        %s320 = ssub.s32 %s28, 1
        // Predicated region
        $region13: #{tpu_custom_call.1} parent=11 // pred_check
          %p321 = pneg %p61
        $region14: #{tpu_custom_call.1} parent=11 // pred_check_branch
          %323 = sbr.rel (%p321) target = $region16
        $region15: #{tpu_custom_call.1} parent=11 // pred_region
          _
        $region16: #{tpu_custom_call.1} parent=11 // pred_fallthru
          _
        // Predicated region
        $region17: #{tpu_custom_call.1} parent=11 // pred_check
          %p324 = pneg %p82
        $region18: #{tpu_custom_call.1} parent=11 // pred_check_branch
          %326 = sbr.rel (%p324) target = $region20
        $region19: #{tpu_custom_call.1} parent=11 // pred_region
          _
        $region20: #{tpu_custom_call.1} parent=11 // pred_fallthru
          _
        // Predicated region
        $region21: #{tpu_custom_call.1} parent=11 // pred_check
          %p327 = pneg %p103
        $region22: #{tpu_custom_call.1} parent=11 // pred_check_branch
          %329 = sbr.rel (%p327) target = $region24
        $region23: #{tpu_custom_call.1} parent=11 // pred_region
          %s331 = ssub.s32 1024, 1024
          %332 = vsyncadd [#allocation6], %s331
          %s333 = sshll.u32 [#allocation5], 4
          %s334 = int_to_ptr.vmem [resolvable:$true] %s333
          %339 = dma.hbm_to_vmem [thread:$0]  %s3, 1024, %s334, [#allocation6], 64, 64, 4
        $region24: #{tpu_custom_call.1} parent=11 // pred_fallthru
          _
        // Predicated region
        $region25: #{tpu_custom_call.1} parent=11 // pred_check
          %p340 = pneg %p124
        $region26: #{tpu_custom_call.1} parent=11 // pred_check_branch
          %342 = sbr.rel (%p340) target = $region28
        $region27: #{tpu_custom_call.1} parent=11 // pred_region
          _
        $region28: #{tpu_custom_call.1} parent=11 // pred_fallthru
          _
        // Predicated region
        $region29: #{tpu_custom_call.1} parent=11 // pred_check
          %p343 = pneg %p145
        $region30: #{tpu_custom_call.1} parent=11 // pred_check_branch
          %345 = sbr.rel (%p343) target = $region32
        $region31: #{tpu_custom_call.1} parent=11 // pred_region
          _
        $region32: #{tpu_custom_call.1} parent=11 // pred_fallthru
          _
        // Predicated region
        $region33: #{tpu_custom_call.1} parent=11 // pred_check
          %p346 = pneg %p166
        $region34: #{tpu_custom_call.1} parent=11 // pred_check_branch
          %348 = sbr.rel (%p346) target = $region36
        $region35: #{tpu_custom_call.1} parent=11 // pred_region
          %s350 = ssub.s32 9216, 9216
          %351 = vsyncadd [#allocation9], %s350
          %s352 = sshll.u32 [#allocation8], 4
          %s353 = int_to_ptr.vmem [resolvable:$true] %s352
          %358 = dma.hbm_to_vmem [thread:$0]  %s6, 9216, %s353, [#allocation9], 64, 64, 4
        $region36: #{tpu_custom_call.1} parent=11 // pred_fallthru
          _
        // Predicated region
        $region37: #{tpu_custom_call.1} parent=11 // pred_check
          %p359 = pneg %p187
        $region38: #{tpu_custom_call.1} parent=11 // pred_check_branch
          %361 = sbr.rel (%p359) target = $region40
        $region39: #{tpu_custom_call.1} parent=11 // pred_region
          _
        $region40: #{tpu_custom_call.1} parent=11 // pred_fallthru
          _
        // Predicated region
        $region41: #{tpu_custom_call.1} parent=11 // pred_check
          %p362 = pneg %p208
        $region42: #{tpu_custom_call.1} parent=11 // pred_check_branch
          %364 = sbr.rel (%p362) target = $region44
        $region43: #{tpu_custom_call.1} parent=11 // pred_region
          _
        $region44: #{tpu_custom_call.1} parent=11 // pred_fallthru
          _
        // Predicated region
        $region45: #{tpu_custom_call.1} parent=11 // pred_check
          %p365 = pneg %p229
        $region46: #{tpu_custom_call.1} parent=11 // pred_check_branch
          %367 = sbr.rel (%p365) target = $region48
        $region47: #{tpu_custom_call.1} parent=11 // pred_region
          %s369 = ssub.s32 1024, 1024
          %370 = vsyncadd [#allocation9], %s369
          %s371 = sshll.u32 [#allocation10], 4
          %s372 = int_to_ptr.vmem [resolvable:$true] %s371
          %377 = dma.hbm_to_vmem [thread:$0]  %s9, 1024, %s372, [#allocation9], 64, 64, 4
        $region48: #{tpu_custom_call.1} parent=11 // pred_fallthru
          _
        // Predicated region
        $region49: #{tpu_custom_call.1} parent=11 // pred_check
          %p378 = pneg %p250
        $region50: #{tpu_custom_call.1} parent=11 // pred_check_branch
          %380 = sbr.rel (%p378) target = $region52
        $region51: #{tpu_custom_call.1} parent=11 // pred_region
          %s382 = ssub.s32 1024, 1024
          %383 = vsyncadd [#allocation12], %s382
          %s384 = sshll.u32 [#allocation11], 4
          %s385 = int_to_ptr.vmem [resolvable:$true] %s384
          %390 = dma.hbm_to_vmem [thread:$0]  %s10, 1024, %s385, [#allocation12], 64, 64, 4
        $region52: #{tpu_custom_call.1} parent=11 // pred_fallthru
          _
      $region12: #{tpu_custom_call.1} parent=5 // pred_fallthru
        _
      %p391 = scmp.lt.s32.totalorder %s28, 4
      // Predicated region
      $region53: #{tpu_custom_call.1} parent=5 // pred_check
        %p392 = pneg %p391
      $region54: #{tpu_custom_call.1} parent=5 // pred_check_branch
        %394 = sbr.rel (%p392) target = $region56
      $region55: #{tpu_custom_call.1} parent=5 // pred_region
        _
      $region56: #{tpu_custom_call.1} parent=5 // pred_fallthru
        _
      %p395 = scmp.le.s32.totalorder 1, %s28
      %p396 = scmp.lt.s32.totalorder %s28, 5
      %p397 = pnand %p395, %p396
      %p398 = pneg %p397
      // Predicated region
      $region57: #{tpu_custom_call.1} parent=5 // pred_check
        _
      $region58: #{tpu_custom_call.1} parent=5 // pred_check_branch
        %400 = sbr.rel (%p397) target = $region60
      $region59: #{tpu_custom_call.1} parent=5 // pred_region
        %s401 = ssub.s32 %s28, 1
        // Predicated region
        $region61: #{tpu_custom_call.1} parent=59 // pred_check
          %p402 = pneg %p103
        $region62: #{tpu_custom_call.1} parent=59 // pred_check_branch
          %404 = sbr.rel (%p402) target = $region64
        $region63: #{tpu_custom_call.1} parent=59 // pred_region
          %405 = dma.done [#allocation6], 1024
        $region64: #{tpu_custom_call.1} parent=59 // pred_fallthru
          _
        // Predicated region
        $region65: #{tpu_custom_call.1} parent=59 // pred_check
          %p406 = pneg %p166
        $region66: #{tpu_custom_call.1} parent=59 // pred_check_branch
          %408 = sbr.rel (%p406) target = $region68
        $region67: #{tpu_custom_call.1} parent=59 // pred_region
          %409 = dma.done [#allocation9], 9216
        $region68: #{tpu_custom_call.1} parent=59 // pred_fallthru
          _
        // Predicated region
        $region69: #{tpu_custom_call.1} parent=59 // pred_check
          %p410 = pneg %p229
        $region70: #{tpu_custom_call.1} parent=59 // pred_check_branch
          %412 = sbr.rel (%p410) target = $region72
        $region71: #{tpu_custom_call.1} parent=59 // pred_region
          %413 = dma.done [#allocation9], 1024
        $region72: #{tpu_custom_call.1} parent=59 // pred_fallthru
          _
        // Predicated region
        $region73: #{tpu_custom_call.1} parent=59 // pred_check
          %p414 = pneg %p250
        $region74: #{tpu_custom_call.1} parent=59 // pred_check_branch
          %416 = sbr.rel (%p414) target = $region76
        $region75: #{tpu_custom_call.1} parent=59 // pred_region
          %417 = dma.done [#allocation12], 1024
        $region76: #{tpu_custom_call.1} parent=59 // pred_fallthru
          _
        %p418 = pneg %p61
        %p419 = pneg %p58
        %p420 = pneg %p82
        %p421 = pneg %p79
        %p422 = pneg %p103
        %p423 = pneg %p100
        %p424 = pneg %p124
        %p425 = pneg %p121
        %p426 = pneg %p145
        %p427 = pneg %p142
        %p428 = pneg %p166
        %p429 = pneg %p163
        %p430 = pneg %p187
        %p431 = pneg %p184
        %p432 = pneg %p208
        %p433 = pneg %p205
        %p434 = pneg %p229
        %p435 = pneg %p226
        %p436 = pneg %p250
        %p437 = pneg %p247
        %p438 = pneg %p278
        %p439 = pneg %p275
        %s440 = sand.u32 %s265, 1
        %s441 = scalar_lea.sflag [#allocation7], %s440
        %s442 = sand.u32 %s265, 1
        %s443 = smul.addr %s442, 128
        %s444 = scalar_lea.vmem [#allocation13], %s443
        %p445 = pneg %p306
        %p446 = pneg %p303
        %s447 = sand.u32 %s293, 1
        %s448 = scalar_lea.sflag [#allocation15], %s447
        %s449 = sand.u32 %s293, 1
        %s450 = smul.addr %s449, 128
        %s451 = scalar_lea.vmem [#allocation14], %s450
        %s452 = smul.u32 8, %s38
        %s453 = smul.u32 8, %s38
        %p455 = scmp.lt.s32.totalorder %s38, 0
        %s456 = ssub.s32 0, %s38
        %s457 = scalar_select %p455, %s456, %s38
        %s458 = sand.u32 %s457, 1
        %s459 = ssub.s32 0, %s458
        %s460 = scalar_select %p455, %s459, %s458
        %p461 = scmp.eq.s32.totalorder %s38, 0
        // Predicated region
        $region77: #{tpu_custom_call.1} parent=59 // pred_check
          %p462 = pneg %p461
        $region78: #{tpu_custom_call.1} parent=59 // pred_check_branch
          %464 = sbr.rel (%p462) target = $region80
        $region79: #{tpu_custom_call.1} parent=59 // pred_region
          %s465 = smul.u32 0, 16
          %s466 = smul.u32 %s37, 320
          %s467 = sadd.s32 %s465, %s466
          %s468 = smul.addr %s467, 16
          %s469 = scalar_lea.hbm %s0, %s468
          // Predicated region
          $region81: #{tpu_custom_call.1} parent=79 // pred_check
            _
          $region82: #{tpu_custom_call.1} parent=79 // pred_check_branch
            %471 = sbr.rel target = $region84
          $region83: #{tpu_custom_call.1} parent=79 // pred_region
            %472 = sst [smem:[#allocation18]] [#allocation17]
            %473 = sst [smem:[#allocation19]] [#allocation16]
          $region84: #{tpu_custom_call.1} parent=79 // pred_fallthru
            _
          %475 = shalt.err (0)
          %s477 = sshll.u32 [#allocation2], 4
          %s478 = int_to_ptr.vmem [resolvable:$true] %s477
          %480 = dma.hbm_to_vmem [thread:$0]  %s469, 3072, %s478, [#allocation3]
        $region80: #{tpu_custom_call.1} parent=59 // pred_fallthru
          _
        %s481 = sadd.s32 %s38, 1
        %p482 = scmp.lt.s32.totalorder %s481, 2
        // Predicated region
        $region85: #{tpu_custom_call.1} parent=59 // pred_check
          %p483 = pneg %p482
        $region86: #{tpu_custom_call.1} parent=59 // pred_check_branch
          %485 = sbr.rel (%p483) target = $region88
        $region87: #{tpu_custom_call.1} parent=59 // pred_region
          %s486 = ssub.s32 1, %s460
          %s487 = smul.u32 %s481, 8
          %s488 = smul.u32 %s487, 16
          %s489 = smul.u32 %s37, 320
          %s490 = sadd.s32 %s488, %s489
          %s491 = smul.addr %s490, 16
          %s492 = scalar_lea.hbm %s0, %s491
          %s493 = smul.u32 %s486, 192
          %s494 = scalar_lea.vmem [#allocation2], %s493
          %s495 = scalar_lea.sflag [#allocation3], %s486
          // Predicated region
          $region89: #{tpu_custom_call.1} parent=87 // pred_check
            _
          $region90: #{tpu_custom_call.1} parent=87 // pred_check_branch
            %497 = sbr.rel target = $region92
          $region91: #{tpu_custom_call.1} parent=87 // pred_region
            %498 = sst [smem:[#allocation18]] [#allocation21]
            %499 = sst [smem:[#allocation19]] [#allocation20]
          $region92: #{tpu_custom_call.1} parent=87 // pred_fallthru
            _
          %501 = shalt.err (0)
          %s503 = sshll.u32 %s494, 4
          %s504 = int_to_ptr.vmem [resolvable:$true] %s503
          %506 = dma.hbm_to_vmem [thread:$0]  %s492, 3072, %s504, %s495
        $region88: #{tpu_custom_call.1} parent=59 // pred_fallthru
          _
        %s507 = smul.u32 %s38, 8
        %s508 = smul.u32 %s460, 192
        %s509 = scalar_lea.vmem [#allocation2], %s508
        %s510 = scalar_lea.sflag [#allocation3], %s460
        %s511 = smul.u32 12, 16
        %s512 = smul.u32 %s511, 1
        %s513 = sshll.u32 %s512, 4
        %514 = dma.done %s510, %s513
        %v515 = vld [vmem:[%s509] sm:$0xff]
        %v516 = vld [vmem:[%s509 + $0x8] sm:$0xff]
        %v517 = vld [vmem:[%s509 + $0x10] sm:$0xff]
        %v518 = vld [vmem:[%s509 + $0x18] sm:$0xff]
        %v519 = vld [vmem:[%s509 + $0x20] sm:$0xff]
        %v520 = vld [vmem:[%s509 + $0x28] sm:$0xff]
        %v521 = vld [vmem:[%s509 + $0x30] sm:$0xff]
        %v522 = vld [vmem:[%s509 + $0x38] sm:$0xff]
        %v523 = vld [vmem:[%s509 + $0x40] sm:$0xff]
        %v524 = vld [vmem:[%s509 + $0x48] sm:$0xff]
        %v525 = vld [vmem:[%s509 + $0x50] sm:$0xff]
        %v526 = vld [vmem:[%s509 + $0x58] sm:$0xff]
        %v527 = vld [vmem:[%s509 + $0x60] sm:$0xff]
        %v528 = vld [vmem:[%s509 + $0x68] sm:$0xff]
        %v529 = vld [vmem:[%s509 + $0x70] sm:$0xff]
        %v530 = vld [vmem:[%s509 + $0x78] sm:$0xff]
        %v531 = vld [vmem:[%s509 + $0x80] sm:$0xff]
        %v532 = vld [vmem:[%s509 + $0x88] sm:$0xff]
        %v533 = vld [vmem:[%s509 + $0x90] sm:$0xff]
        %v534 = vld [vmem:[%s509 + $0x98] sm:$0xff]
        %v535 = vld [vmem:[%s509 + $0xa0] sm:$0xff]
        %v536 = vld [vmem:[%s509 + $0xa8] sm:$0xff]
        %v537 = vld [vmem:[%s509 + $0xb0] sm:$0xff]
        %v538 = vld [vmem:[%s509 + $0xb8] sm:$0xff]
        %v539 = vld [vmem:[%s1] sm:$0x1]
        %v541 = vlaneseq
        %v542 = vshrl.u32 %v541, 7
        %v543 = vsub.s32 0, %v542
        %v544 = vrot.slane %v539, %v543
        %v546 = vmul.f32 %v515, %v544
        %v547 = vmul.f32 %v516, %v544
        %v548 = vmul.f32 %v517, %v544
        %v549 = vmul.f32 %v518, %v544
        %v550 = vmul.f32 %v519, %v544
        %v551 = vmul.f32 %v520, %v544
        %v552 = vmul.f32 %v521, %v544
        %v553 = vmul.f32 %v522, %v544
        %v554 = vmul.f32 %v523, %v544
        %v555 = vmul.f32 %v524, %v544
        %v556 = vmul.f32 %v525, %v544
        %v557 = vmul.f32 %v526, %v544
        %v558 = vmul.f32 %v527, %v544
        %v559 = vmul.f32 %v528, %v544
        %v560 = vmul.f32 %v529, %v544
        %v561 = vmul.f32 %v530, %v544
        %v562 = vmul.f32 %v531, %v544
        %v563 = vmul.f32 %v532, %v544
        %v564 = vmul.f32 %v533, %v544
        %v565 = vmul.f32 %v534, %v544
        %v566 = vmul.f32 %v535, %v544
        %v567 = vmul.f32 %v536, %v544
        %v568 = vmul.f32 %v537, %v544
        %v569 = vmul.f32 %v538, %v544
        %v570 = vld [vmem:[%s2] sm:$0x1]
        %v572 = vlaneseq
        %v573 = vshrl.u32 %v572, 7
        %v574 = vsub.s32 0, %v573
        %v575 = vrot.slane %v570, %v574
        %v577 = vadd.f32 %v546, %v575
        %v578 = vadd.f32 %v547, %v575
        %v579 = vadd.f32 %v548, %v575
        %v580 = vadd.f32 %v549, %v575
        %v581 = vadd.f32 %v550, %v575
        %v582 = vadd.f32 %v551, %v575
        %v583 = vadd.f32 %v552, %v575
        %v584 = vadd.f32 %v553, %v575
        %v585 = vadd.f32 %v554, %v575
        %v586 = vadd.f32 %v555, %v575
        %v587 = vadd.f32 %v556, %v575
        %v588 = vadd.f32 %v557, %v575
        %v589 = vadd.f32 %v558, %v575
        %v590 = vadd.f32 %v559, %v575
        %v591 = vadd.f32 %v560, %v575
        %v592 = vadd.f32 %v561, %v575
        %v593 = vadd.f32 %v562, %v575
        %v594 = vadd.f32 %v563, %v575
        %v595 = vadd.f32 %v564, %v575
        %v596 = vadd.f32 %v565, %v575
        %v597 = vadd.f32 %v566, %v575
        %v598 = vadd.f32 %v567, %v575
        %v599 = vadd.f32 %v568, %v575
        %v600 = vadd.f32 %v569, %v575
        %v601 = vmax.f32 %v577, 0.0
        %v602 = vmax.f32 %v578, 0.0
        %v603 = vmax.f32 %v579, 0.0
        %v604 = vmax.f32 %v580, 0.0
        %v605 = vmax.f32 %v581, 0.0
        %v606 = vmax.f32 %v582, 0.0
        %v607 = vmax.f32 %v583, 0.0
        %v608 = vmax.f32 %v584, 0.0
        %v609 = vmax.f32 %v585, 0.0
        %v610 = vmax.f32 %v586, 0.0
        %v611 = vmax.f32 %v587, 0.0
        %v612 = vmax.f32 %v588, 0.0
        %v613 = vmax.f32 %v589, 0.0
        %v614 = vmax.f32 %v590, 0.0
        %v615 = vmax.f32 %v591, 0.0
        %v616 = vmax.f32 %v592, 0.0
        %v617 = vmax.f32 %v593, 0.0
        %v618 = vmax.f32 %v594, 0.0
        %v619 = vmax.f32 %v595, 0.0
        %v620 = vmax.f32 %v596, 0.0
        %v621 = vmax.f32 %v597, 0.0
        %v622 = vmax.f32 %v598, 0.0
        %v623 = vmax.f32 %v599, 0.0
        %v624 = vmax.f32 %v600, 0.0
        %625 = vst [vmem:[%s451] sm:$0xff] %v605
        %626 = vst [vmem:[%s451 + $0x8] sm:$0xff] %v606
        %627 = vst [vmem:[%s451 + $0x10] sm:$0xff] %v607
        %628 = vst [vmem:[%s451 + $0x18] sm:$0xff] %v608
        %629 = vst [vmem:[%s451 + $0x20] sm:$0xff] %v609
        %630 = vst [vmem:[%s451 + $0x28] sm:$0xff] %v610
        %631 = vst [vmem:[%s451 + $0x30] sm:$0xff] %v611
        %632 = vst [vmem:[%s451 + $0x38] sm:$0xff] %v612
        %633 = vst [vmem:[%s451 + $0x40] sm:$0xff] %v613
        %634 = vst [vmem:[%s451 + $0x48] sm:$0xff] %v614
        %635 = vst [vmem:[%s451 + $0x50] sm:$0xff] %v615
        %636 = vst [vmem:[%s451 + $0x58] sm:$0xff] %v616
        %637 = vst [vmem:[%s451 + $0x60] sm:$0xff] %v617
        %638 = vst [vmem:[%s451 + $0x68] sm:$0xff] %v618
        %639 = vst [vmem:[%s451 + $0x70] sm:$0xff] %v619
        %640 = vst [vmem:[%s451 + $0x78] sm:$0xff] %v620
        %v641 = vpack.c.bf16 %v602, %v601
        %v642 = vpack.c.bf16 %v604, %v603
        %v643 = vpack.c.bf16 %v606, %v605
        %v644 = vpack.c.bf16 %v608, %v607
        %v645 = vpack.c.bf16 %v610, %v609
        %v646 = vpack.c.bf16 %v612, %v611
        %v647 = vpack.c.bf16 %v614, %v613
        %v648 = vpack.c.bf16 %v616, %v615
        %v649 = vpack.c.bf16 %v618, %v617
        %v650 = vpack.c.bf16 %v620, %v619
        %v651 = vpack.c.bf16 %v622, %v621
        %v652 = vpack.c.bf16 %v624, %v623
        %v653 = vld [vmem:[#allocation11] sm:$0xf]
        %v654 = vld [vmem:[#allocation11 + $0x4] sm:$0xf]
        %v655 = vld [vmem:[#allocation11 + $0x8] sm:$0xf]
        %v656 = vld [vmem:[#allocation11 + $0xc] sm:$0xf]
        %v657 = vld [vmem:[#allocation11 + $0x10] sm:$0xf]
        %v658 = vld [vmem:[#allocation11 + $0x14] sm:$0xf]
        %v659 = vld [vmem:[#allocation11 + $0x18] sm:$0xf]
        %v660 = vld [vmem:[#allocation11 + $0x1c] sm:$0xf]
        %v661 = vld [vmem:[#allocation11 + $0x20] sm:$0xf]
        %v662 = vld [vmem:[#allocation11 + $0x24] sm:$0xf]
        %v663 = vld [vmem:[#allocation11 + $0x28] sm:$0xf]
        %v664 = vld [vmem:[#allocation11 + $0x2c] sm:$0xf]
        %v665 = vld [vmem:[#allocation11 + $0x30] sm:$0xf]
        %v666 = vld [vmem:[#allocation11 + $0x34] sm:$0xf]
        %v667 = vld [vmem:[#allocation11 + $0x38] sm:$0xf]
        %v668 = vld [vmem:[#allocation11 + $0x3c] sm:$0xf]
        %v685 = vunpack.c.l.b16 %v653
        %v686 = vunpack.c.l.b16 %v654
        %v687 = vunpack.c.l.b16 %v655
        %v688 = vunpack.c.l.b16 %v656
        %v689 = vunpack.c.l.b16 %v657
        %v690 = vunpack.c.l.b16 %v658
        %v691 = vunpack.c.l.b16 %v659
        %v692 = vunpack.c.l.b16 %v660
        %v693 = vunpack.c.l.b16 %v661
        %v694 = vunpack.c.l.b16 %v662
        %v695 = vunpack.c.l.b16 %v663
        %v696 = vunpack.c.l.b16 %v664
        %v697 = vunpack.c.l.b16 %v665
        %v698 = vunpack.c.l.b16 %v666
        %v699 = vunpack.c.l.b16 %v667
        %v700 = vunpack.c.l.b16 %v668
        %v701 = vpack.c.b16 %v686, %v685
        %v702 = vpack.c.b16 %v688, %v687
        %v703 = vpack.c.b16 %v690, %v689
        %v704 = vpack.c.b16 %v692, %v691
        %v705 = vpack.c.b16 %v694, %v693
        %v706 = vpack.c.b16 %v696, %v695
        %v707 = vpack.c.b16 %v698, %v697
        %v708 = vpack.c.b16 %v700, %v699
        %717 = vmatprep.subr.bf16.mxu0 0
        %718 = vmatpush1.bf16.msra.mxu0 %v708
        %719 = vmatprep.subr.bf16.mxu0 0
        %720 = vmatpush1.bf16.msra.mxu0 %v707
        %721 = vmatprep.subr.bf16.mxu0 0
        %722 = vmatpush1.bf16.msra.mxu0 %v706
        %723 = vmatprep.subr.bf16.mxu0 0
        %724 = vmatpush1.bf16.msra.mxu0 %v705
        %725 = vmatprep.subr.bf16.mxu0 0
        %726 = vmatpush1.bf16.msra.mxu0 %v704
        %727 = vmatprep.subr.bf16.mxu0 0
        %728 = vmatpush1.bf16.msra.mxu0 %v703
        %729 = vmatprep.subr.bf16.mxu0 0
        %730 = vmatpush1.bf16.msra.mxu0 %v702
        %731 = vmatprep.subr.bf16.mxu0 0
        %732 = vmatpush1.bf16.msra.mxu0 %v701
        %733 = vmatprep.subr.bf16.mxu0 0
        %734 = vmatpush2.bf16.msra.mxu0 0
        %735 = vmatprep.subr.bf16.mxu0 0
        %736 = vmatpush2.bf16.msra.mxu0 0
        %737 = vmatprep.subr.bf16.mxu0 0
        %738 = vmatpush2.bf16.msra.mxu0 0
        %739 = vmatprep.subr.bf16.mxu0 0
        %740 = vmatpush2.bf16.msra.mxu0 0
        %741 = vmatprep.subr.bf16.mxu0 0
        %742 = vmatpush2.bf16.msra.mxu0 0
        %743 = vmatprep.subr.bf16.mxu0 0
        %744 = vmatpush2.bf16.msra.mxu0 0
        %745 = vmatprep.subr.bf16.mxu0 0
        %746 = vmatpush2.bf16.msra.mxu0 0
        %747 = vmatprep.subr.bf16.mxu0 0
        %748 = vmatpush2.bf16.msra.mxu0 0
        %749 = vmatprep.mubr.bf16.mxu0 0
        %750 = vmatmul.mubr.bf16.gmra.mxu0 %v643
        %v751 = vpop.f32.mrf.mxu0
        %v752 = vadd.f32 0.0, %v751
        %v753 = vpop.f32.mrf.mxu0
        %v754 = vpop.f32.mrf.mxu0
        %v755 = vadd.f32 0.0, %v754
        %v756 = vpop.f32.mrf.mxu0
        %757 = vmatprep.mubr.bf16.mxu0 0
        %758 = vmatmul.mubr.bf16.gmra.mxu0 %v644
        %v759 = vpop.f32.mrf.mxu0
        %v760 = vadd.f32 0.0, %v759
        %v761 = vpop.f32.mrf.mxu0
        %v762 = vpop.f32.mrf.mxu0
        %v763 = vadd.f32 0.0, %v762
        %v764 = vpop.f32.mrf.mxu0
        %765 = vmatprep.mubr.bf16.mxu0 0
        %766 = vmatmul.mubr.bf16.gmra.mxu0 %v645
        %v767 = vpop.f32.mrf.mxu0
        %v768 = vadd.f32 0.0, %v767
        %v769 = vpop.f32.mrf.mxu0
        %v770 = vpop.f32.mrf.mxu0
        %v771 = vadd.f32 0.0, %v770
        %v772 = vpop.f32.mrf.mxu0
        %773 = vmatprep.mubr.bf16.mxu0 0
        %774 = vmatmul.mubr.bf16.gmra.mxu0 %v646
        %v775 = vpop.f32.mrf.mxu0
        %v776 = vadd.f32 0.0, %v775
        %v777 = vpop.f32.mrf.mxu0
        %v778 = vpop.f32.mrf.mxu0
        %v779 = vadd.f32 0.0, %v778
        %v780 = vpop.f32.mrf.mxu0
        %781 = vmatprep.mubr.bf16.mxu0 0
        %782 = vmatmul.mubr.bf16.gmra.mxu0 %v647
        %v783 = vpop.f32.mrf.mxu0
        %v784 = vadd.f32 0.0, %v783
        %v785 = vpop.f32.mrf.mxu0
        %v786 = vpop.f32.mrf.mxu0
        %v787 = vadd.f32 0.0, %v786
        %v788 = vpop.f32.mrf.mxu0
        %789 = vmatprep.mubr.bf16.mxu0 0
        %790 = vmatmul.mubr.bf16.gmra.mxu0 %v648
        %v791 = vpop.f32.mrf.mxu0
        %v792 = vadd.f32 0.0, %v791
        %v793 = vpop.f32.mrf.mxu0
        %v794 = vpop.f32.mrf.mxu0
        %v795 = vadd.f32 0.0, %v794
        %v796 = vpop.f32.mrf.mxu0
        %797 = vmatprep.mubr.bf16.mxu0 0
        %798 = vmatmul.mubr.bf16.gmra.mxu0 %v649
        %v799 = vpop.f32.mrf.mxu0
        %v800 = vadd.f32 0.0, %v799
        %v801 = vpop.f32.mrf.mxu0
        %v802 = vpop.f32.mrf.mxu0
        %v803 = vadd.f32 0.0, %v802
        %v804 = vpop.f32.mrf.mxu0
        %805 = vmatprep.mubr.bf16.mxu0 0
        %806 = vmatmul.mubr.bf16.gmra.mxu0 %v650
        %v807 = vpop.f32.mrf.mxu0
        %v808 = vadd.f32 0.0, %v807
        %v809 = vpop.f32.mrf.mxu0
        %v810 = vpop.f32.mrf.mxu0
        %v811 = vadd.f32 0.0, %v810
        %v812 = vpop.f32.mrf.mxu0
        %813 = vdwg.mxu0
        %v814 = vld [vmem:[#allocation5] sm:$0xf]
        %v815 = vld [vmem:[#allocation5 + $0x4] sm:$0xf]
        %v816 = vld [vmem:[#allocation5 + $0x8] sm:$0xf]
        %v817 = vld [vmem:[#allocation5 + $0xc] sm:$0xf]
        %v818 = vld [vmem:[#allocation5 + $0x10] sm:$0xf]
        %v819 = vld [vmem:[#allocation5 + $0x14] sm:$0xf]
        %v820 = vld [vmem:[#allocation5 + $0x18] sm:$0xf]
        %v821 = vld [vmem:[#allocation5 + $0x1c] sm:$0xf]
        %v822 = vld [vmem:[#allocation5 + $0x20] sm:$0xf]
        %v823 = vld [vmem:[#allocation5 + $0x24] sm:$0xf]
        %v824 = vld [vmem:[#allocation5 + $0x28] sm:$0xf]
        %v825 = vld [vmem:[#allocation5 + $0x2c] sm:$0xf]
        %v826 = vld [vmem:[#allocation5 + $0x30] sm:$0xf]
        %v827 = vld [vmem:[#allocation5 + $0x34] sm:$0xf]
        %v828 = vld [vmem:[#allocation5 + $0x38] sm:$0xf]
        %v829 = vld [vmem:[#allocation5 + $0x3c] sm:$0xf]
        %v846 = vunpack.c.l.b16 %v814
        %v847 = vunpack.c.l.b16 %v815
        %v848 = vunpack.c.l.b16 %v816
        %v849 = vunpack.c.l.b16 %v817
        %v850 = vunpack.c.l.b16 %v818
        %v851 = vunpack.c.l.b16 %v819
        %v852 = vunpack.c.l.b16 %v820
        %v853 = vunpack.c.l.b16 %v821
        %v854 = vunpack.c.l.b16 %v822
        %v855 = vunpack.c.l.b16 %v823
        %v856 = vunpack.c.l.b16 %v824
        %v857 = vunpack.c.l.b16 %v825
        %v858 = vunpack.c.l.b16 %v826
        %v859 = vunpack.c.l.b16 %v827
        %v860 = vunpack.c.l.b16 %v828
        %v861 = vunpack.c.l.b16 %v829
        %v862 = vpack.c.b16 %v847, %v846
        %v863 = vpack.c.b16 %v849, %v848
        %v864 = vpack.c.b16 %v851, %v850
        %v865 = vpack.c.b16 %v853, %v852
        %v866 = vpack.c.b16 %v855, %v854
        %v867 = vpack.c.b16 %v857, %v856
        %v868 = vpack.c.b16 %v859, %v858
        %v869 = vpack.c.b16 %v861, %v860
        %878 = vmatprep.subr.bf16.mxu0 0
        %879 = vmatpush1.bf16.msra.mxu0 %v869
        %880 = vmatprep.subr.bf16.mxu0 0
        %881 = vmatpush1.bf16.msra.mxu0 %v868
        %882 = vmatprep.subr.bf16.mxu0 0
        %883 = vmatpush1.bf16.msra.mxu0 %v867
        %884 = vmatprep.subr.bf16.mxu0 0
        %885 = vmatpush1.bf16.msra.mxu0 %v866
        %886 = vmatprep.subr.bf16.mxu0 0
        %887 = vmatpush1.bf16.msra.mxu0 %v865
        %888 = vmatprep.subr.bf16.mxu0 0
        %889 = vmatpush1.bf16.msra.mxu0 %v864
        %890 = vmatprep.subr.bf16.mxu0 0
        %891 = vmatpush1.bf16.msra.mxu0 %v863
        %892 = vmatprep.subr.bf16.mxu0 0
        %893 = vmatpush1.bf16.msra.mxu0 %v862
        %894 = vmatprep.subr.bf16.mxu0 0
        %895 = vmatpush2.bf16.msra.mxu0 0
        %896 = vmatprep.subr.bf16.mxu0 0
        %897 = vmatpush2.bf16.msra.mxu0 0
        %898 = vmatprep.subr.bf16.mxu0 0
        %899 = vmatpush2.bf16.msra.mxu0 0
        %900 = vmatprep.subr.bf16.mxu0 0
        %901 = vmatpush2.bf16.msra.mxu0 0
        %902 = vmatprep.subr.bf16.mxu0 0
        %903 = vmatpush2.bf16.msra.mxu0 0
        %904 = vmatprep.subr.bf16.mxu0 0
        %905 = vmatpush2.bf16.msra.mxu0 0
        %906 = vmatprep.subr.bf16.mxu0 0
        %907 = vmatpush2.bf16.msra.mxu0 0
        %908 = vmatprep.subr.bf16.mxu0 0
        %909 = vmatpush2.bf16.msra.mxu0 0
        %910 = vmatprep.mubr.bf16.mxu0 0
        %911 = vmatmul.mubr.bf16.gmra.mxu0 %v641
        %v912 = vpop.f32.mrf.mxu0
        %v913 = vadd.f32 0.0, %v912
        %v914 = vpop.f32.mrf.mxu0
        %v915 = vpop.f32.mrf.mxu0
        %v916 = vadd.f32 0.0, %v915
        %v917 = vpop.f32.mrf.mxu0
        %918 = vmatprep.mubr.bf16.mxu0 0
        %919 = vmatmul.mubr.bf16.gmra.mxu0 %v642
        %v920 = vpop.f32.mrf.mxu0
        %v921 = vadd.f32 0.0, %v920
        %v922 = vpop.f32.mrf.mxu0
        %v923 = vpop.f32.mrf.mxu0
        %v924 = vadd.f32 0.0, %v923
        %v925 = vpop.f32.mrf.mxu0
        %926 = vmatprep.mubr.bf16.mxu0 0
        %927 = vmatmul.mubr.bf16.gmra.mxu0 %v643
        %v928 = vpop.f32.mrf.mxu0
        %v929 = vadd.f32 0.0, %v928
        %v930 = vpop.f32.mrf.mxu0
        %v931 = vpop.f32.mrf.mxu0
        %v932 = vadd.f32 0.0, %v931
        %v933 = vpop.f32.mrf.mxu0
        %934 = vmatprep.mubr.bf16.mxu0 0
        %935 = vmatmul.mubr.bf16.gmra.mxu0 %v644
        %v936 = vpop.f32.mrf.mxu0
        %v937 = vadd.f32 0.0, %v936
        %v938 = vpop.f32.mrf.mxu0
        %v939 = vpop.f32.mrf.mxu0
        %v940 = vadd.f32 0.0, %v939
        %v941 = vpop.f32.mrf.mxu0
        %942 = vmatprep.mubr.bf16.mxu0 0
        %943 = vmatmul.mubr.bf16.gmra.mxu0 %v645
        %v944 = vpop.f32.mrf.mxu0
        %v945 = vadd.f32 0.0, %v944
        %v946 = vpop.f32.mrf.mxu0
        %v947 = vpop.f32.mrf.mxu0
        %v948 = vadd.f32 0.0, %v947
        %v949 = vpop.f32.mrf.mxu0
        %950 = vmatprep.mubr.bf16.mxu0 0
        %951 = vmatmul.mubr.bf16.gmra.mxu0 %v646
        %v952 = vpop.f32.mrf.mxu0
        %v953 = vadd.f32 0.0, %v952
        %v954 = vpop.f32.mrf.mxu0
        %v955 = vpop.f32.mrf.mxu0
        %v956 = vadd.f32 0.0, %v955
        %v957 = vpop.f32.mrf.mxu0
        %958 = vmatprep.mubr.bf16.mxu0 0
        %959 = vmatmul.mubr.bf16.gmra.mxu0 %v647
        %v960 = vpop.f32.mrf.mxu0
        %v961 = vadd.f32 0.0, %v960
        %v962 = vpop.f32.mrf.mxu0
        %v963 = vpop.f32.mrf.mxu0
        %v964 = vadd.f32 0.0, %v963
        %v965 = vpop.f32.mrf.mxu0
        %966 = vmatprep.mubr.bf16.mxu0 0
        %967 = vmatmul.mubr.bf16.gmra.mxu0 %v648
        %v968 = vpop.f32.mrf.mxu0
        %v969 = vadd.f32 0.0, %v968
        %v970 = vpop.f32.mrf.mxu0
        %v971 = vpop.f32.mrf.mxu0
        %v972 = vadd.f32 0.0, %v971
        %v973 = vpop.f32.mrf.mxu0
        %974 = vmatprep.mubr.bf16.mxu0 0
        %975 = vmatmul.mubr.bf16.gmra.mxu0 %v649
        %v976 = vpop.f32.mrf.mxu0
        %v977 = vadd.f32 0.0, %v976
        %v978 = vpop.f32.mrf.mxu0
        %v979 = vpop.f32.mrf.mxu0
        %v980 = vadd.f32 0.0, %v979
        %v981 = vpop.f32.mrf.mxu0
        %982 = vmatprep.mubr.bf16.mxu0 0
        %983 = vmatmul.mubr.bf16.gmra.mxu0 %v650
        %v984 = vpop.f32.mrf.mxu0
        %v985 = vadd.f32 0.0, %v984
        %v986 = vpop.f32.mrf.mxu0
        %v987 = vpop.f32.mrf.mxu0
        %v988 = vadd.f32 0.0, %v987
        %v989 = vpop.f32.mrf.mxu0
        %990 = vmatprep.mubr.bf16.mxu0 0
        %991 = vmatmul.mubr.bf16.gmra.mxu0 %v651
        %v992 = vpop.f32.mrf.mxu0
        %v993 = vadd.f32 0.0, %v992
        %v994 = vpop.f32.mrf.mxu0
        %v995 = vpop.f32.mrf.mxu0
        %v996 = vadd.f32 0.0, %v995
        %v997 = vpop.f32.mrf.mxu0
        %998 = vmatprep.mubr.bf16.mxu0 0
        %999 = vmatmul.mubr.bf16.gmra.mxu0 %v652
        %v1000 = vpop.f32.mrf.mxu0
        %v1001 = vadd.f32 0.0, %v1000
        %v1002 = vpop.f32.mrf.mxu0
        %v1003 = vpop.f32.mrf.mxu0
        %v1004 = vadd.f32 0.0, %v1003
        %v1005 = vpop.f32.mrf.mxu0
        %1006 = vdwg.mxu0
        %v1007 = vld [vmem:[%s4] sm:$0x1]
        %v1009 = vlaneseq
        %v1010 = vshrl.u32 %v1009, 7
        %v1011 = vsub.s32 0, %v1010
        %v1012 = vrot.slane %v1007, %v1011
        %v1014 = vmul.f32 %v913, %v1012
        %v1015 = vmul.f32 %v916, %v1012
        %v1016 = vmul.f32 %v921, %v1012
        %v1017 = vmul.f32 %v924, %v1012
        %v1018 = vmul.f32 %v929, %v1012
        %v1019 = vmul.f32 %v932, %v1012
        %v1020 = vmul.f32 %v937, %v1012
        %v1021 = vmul.f32 %v940, %v1012
        %v1022 = vmul.f32 %v945, %v1012
        %v1023 = vmul.f32 %v948, %v1012
        %v1024 = vmul.f32 %v953, %v1012
        %v1025 = vmul.f32 %v956, %v1012
        %v1026 = vmul.f32 %v961, %v1012
        %v1027 = vmul.f32 %v964, %v1012
        %v1028 = vmul.f32 %v969, %v1012
        %v1029 = vmul.f32 %v972, %v1012
        %v1030 = vmul.f32 %v977, %v1012
        %v1031 = vmul.f32 %v980, %v1012
        %v1032 = vmul.f32 %v985, %v1012
        %v1033 = vmul.f32 %v988, %v1012
        %v1034 = vmul.f32 %v993, %v1012
        %v1035 = vmul.f32 %v996, %v1012
        %v1036 = vmul.f32 %v1001, %v1012
        %v1037 = vmul.f32 %v1004, %v1012
        %v1038 = vld [vmem:[%s5] sm:$0x1]
        %v1040 = vlaneseq
        %v1041 = vshrl.u32 %v1040, 7
        %v1042 = vsub.s32 0, %v1041
        %v1043 = vrot.slane %v1038, %v1042
        %v1045 = vadd.f32 %v1014, %v1043
        %v1046 = vadd.f32 %v1015, %v1043
        %v1047 = vadd.f32 %v1016, %v1043
        %v1048 = vadd.f32 %v1017, %v1043
        %v1049 = vadd.f32 %v1018, %v1043
        %v1050 = vadd.f32 %v1019, %v1043
        %v1051 = vadd.f32 %v1020, %v1043
        %v1052 = vadd.f32 %v1021, %v1043
        %v1053 = vadd.f32 %v1022, %v1043
        %v1054 = vadd.f32 %v1023, %v1043
        %v1055 = vadd.f32 %v1024, %v1043
        %v1056 = vadd.f32 %v1025, %v1043
        %v1057 = vadd.f32 %v1026, %v1043
        %v1058 = vadd.f32 %v1027, %v1043
        %v1059 = vadd.f32 %v1028, %v1043
        %v1060 = vadd.f32 %v1029, %v1043
        %v1061 = vadd.f32 %v1030, %v1043
        %v1062 = vadd.f32 %v1031, %v1043
        %v1063 = vadd.f32 %v1032, %v1043
        %v1064 = vadd.f32 %v1033, %v1043
        %v1065 = vadd.f32 %v1034, %v1043
        %v1066 = vadd.f32 %v1035, %v1043
        %v1067 = vadd.f32 %v1036, %v1043
        %v1068 = vadd.f32 %v1037, %v1043
        %v1069 = vmax.f32 %v1045, 0.0
        %v1070 = vmax.f32 %v1046, 0.0
        %v1071 = vmax.f32 %v1047, 0.0
        %v1072 = vmax.f32 %v1048, 0.0
        %v1073 = vmax.f32 %v1049, 0.0
        %v1074 = vmax.f32 %v1050, 0.0
        %v1075 = vmax.f32 %v1051, 0.0
        %v1076 = vmax.f32 %v1052, 0.0
        %v1077 = vmax.f32 %v1053, 0.0
        %v1078 = vmax.f32 %v1054, 0.0
        %v1079 = vmax.f32 %v1055, 0.0
        %v1080 = vmax.f32 %v1056, 0.0
        %v1081 = vmax.f32 %v1057, 0.0
        %v1082 = vmax.f32 %v1058, 0.0
        %v1083 = vmax.f32 %v1059, 0.0
        %v1084 = vmax.f32 %v1060, 0.0
        %v1085 = vmax.f32 %v1061, 0.0
        %v1086 = vmax.f32 %v1062, 0.0
        %v1087 = vmax.f32 %v1063, 0.0
        %v1088 = vmax.f32 %v1064, 0.0
        %v1089 = vmax.f32 %v1065, 0.0
        %v1090 = vmax.f32 %v1066, 0.0
        %v1091 = vmax.f32 %v1067, 0.0
        %v1092 = vmax.f32 %v1068, 0.0
        %v1093 = vpack.c.bf16 %v1070, %v1069
        %v1094 = vpack.c.bf16 %v1072, %v1071
        %v1095 = vpack.c.bf16 %v1074, %v1073
        %v1096 = vpack.c.bf16 %v1076, %v1075
        %v1097 = vpack.c.bf16 %v1078, %v1077
        %v1098 = vpack.c.bf16 %v1080, %v1079
        %v1099 = vpack.c.bf16 %v1082, %v1081
        %v1100 = vpack.c.bf16 %v1084, %v1083
        %v1101 = vpack.c.bf16 %v1086, %v1085
        %v1102 = vpack.c.bf16 %v1088, %v1087
        %v1103 = vpack.c.bf16 %v1090, %v1089
        %v1104 = vpack.c.bf16 %v1092, %v1091
        %v1117 = vunpack.c.l.b16 %v1093
        %v1118 = vunpack.c.h.b16 %v1093
        %v1119 = vunpack.c.l.b16 %v1094
        %v1120 = vunpack.c.h.b16 %v1094
        %v1121 = vunpack.c.l.b16 %v1095
        %v1122 = vunpack.c.h.b16 %v1095
        %v1123 = vunpack.c.l.b16 %v1096
        %v1124 = vunpack.c.h.b16 %v1096
        %v1125 = vunpack.c.l.b16 %v1097
        %v1126 = vunpack.c.h.b16 %v1097
        %v1127 = vunpack.c.l.b16 %v1098
        %v1128 = vunpack.c.h.b16 %v1098
        %v1129 = vunpack.c.l.b16 %v1099
        %v1130 = vunpack.c.h.b16 %v1099
        %v1131 = vunpack.c.l.b16 %v1100
        %v1132 = vunpack.c.h.b16 %v1100
        %v1133 = vunpack.c.l.b16 %v1101
        %v1134 = vunpack.c.h.b16 %v1101
        %v1135 = vunpack.c.l.b16 %v1102
        %v1136 = vunpack.c.h.b16 %v1102
        %v1137 = vunpack.c.l.b16 %v1103
        %v1138 = vunpack.c.h.b16 %v1103
        %v1139 = vunpack.c.l.b16 %v1104
        %v1140 = vunpack.c.h.b16 %v1104
        %v1141 = vpack.c.b16 %v1117, %v1117
        %v1142 = vpack.c.b16 %v1118, %v1118
        %v1143 = vpack.c.b16 %v1119, %v1119
        %v1144 = vpack.c.b16 %v1120, %v1120
        %v1145 = vpack.c.b16 %v1121, %v1121
        %v1146 = vpack.c.b16 %v1122, %v1122
        %v1147 = vpack.c.b16 %v1123, %v1123
        %v1148 = vpack.c.b16 %v1124, %v1124
        %v1149 = vpack.c.b16 %v1125, %v1125
        %v1150 = vpack.c.b16 %v1126, %v1126
        %v1151 = vpack.c.b16 %v1127, %v1127
        %v1152 = vpack.c.b16 %v1128, %v1128
        %v1153 = vpack.c.b16 %v1129, %v1129
        %v1154 = vpack.c.b16 %v1130, %v1130
        %v1155 = vpack.c.b16 %v1131, %v1131
        %v1156 = vpack.c.b16 %v1132, %v1132
        %v1157 = vpack.c.b16 %v1133, %v1133
        %v1158 = vpack.c.b16 %v1134, %v1134
        %v1159 = vpack.c.b16 %v1135, %v1135
        %v1160 = vpack.c.b16 %v1136, %v1136
        %v1161 = vpack.c.b16 %v1137, %v1137
        %v1162 = vpack.c.b16 %v1138, %v1138
        %v1163 = vpack.c.b16 %v1139, %v1139
        %v1164 = vpack.c.b16 %v1140, %v1140
        %vm1165 = vcmask 1040384
        %vm1166 = vcmask 1044484
        %vm1167 = vmor %vm1165, %vm1166
        %v1168 = vrot.slane %v1141, 7
        %v1169 = vrot.slane %v1168, 4
        %v1170 = vrot.slane %v1142, 7
        %v1171 = vsel %vm1167, %v1169, %v1170
        %v1172 = vrot.slane %v1170, 4
        %v1173 = vrot.slane %v1143, 7
        %v1174 = vrot.slane %v1173, 4
        %v1175 = vrot.slane %v1144, 7
        %v1176 = vsel %vm1167, %v1174, %v1175
        %v1177 = vrot.slane %v1175, 4
        %v1178 = vrot.slane %v1145, 7
        %v1179 = vrot.slane %v1178, 4
        %v1180 = vrot.slane %v1146, 7
        %v1181 = vsel %vm1167, %v1179, %v1180
        %v1182 = vrot.slane %v1180, 4
        %v1183 = vrot.slane %v1147, 7
        %v1184 = vrot.slane %v1183, 4
        %v1185 = vrot.slane %v1148, 7
        %v1186 = vsel %vm1167, %v1184, %v1185
        %v1187 = vrot.slane %v1185, 4
        %v1188 = vrot.slane %v1149, 7
        %v1189 = vrot.slane %v1188, 4
        %v1190 = vrot.slane %v1150, 7
        %v1191 = vsel %vm1167, %v1189, %v1190
        %v1192 = vrot.slane %v1190, 4
        %v1193 = vrot.slane %v1151, 7
        %v1194 = vrot.slane %v1193, 4
        %v1195 = vrot.slane %v1152, 7
        %v1196 = vsel %vm1167, %v1194, %v1195
        %v1197 = vrot.slane %v1195, 4
        %v1198 = vrot.slane %v1153, 7
        %v1199 = vrot.slane %v1198, 4
        %v1200 = vrot.slane %v1154, 7
        %v1201 = vsel %vm1167, %v1199, %v1200
        %v1202 = vrot.slane %v1200, 4
        %v1203 = vrot.slane %v1155, 7
        %v1204 = vrot.slane %v1203, 4
        %v1205 = vrot.slane %v1156, 7
        %v1206 = vsel %vm1167, %v1204, %v1205
        %v1207 = vrot.slane %v1205, 4
        %v1208 = vrot.slane %v1157, 7
        %v1209 = vrot.slane %v1208, 4
        %v1210 = vrot.slane %v1158, 7
        %v1211 = vsel %vm1167, %v1209, %v1210
        %v1212 = vrot.slane %v1210, 4
        %v1213 = vrot.slane %v1159, 7
        %v1214 = vrot.slane %v1213, 4
        %v1215 = vrot.slane %v1160, 7
        %v1216 = vsel %vm1167, %v1214, %v1215
        %v1217 = vrot.slane %v1215, 4
        %v1218 = vrot.slane %v1161, 7
        %v1219 = vrot.slane %v1218, 4
        %v1220 = vrot.slane %v1162, 7
        %v1221 = vsel %vm1167, %v1219, %v1220
        %v1222 = vrot.slane %v1220, 4
        %v1223 = vrot.slane %v1163, 7
        %v1224 = vrot.slane %v1223, 4
        %v1225 = vrot.slane %v1164, 7
        %v1226 = vsel %vm1167, %v1224, %v1225
        %v1227 = vrot.slane %v1225, 4
        %1264 = vst [vmem:[#allocation4] sm:$0xe] %v1168
        %1265 = vst [vmem:[#allocation4 + $0x4] sm:$0xf] %v1171
        %1266 = vst [vmem:[#allocation4 + $0x8] sm:$0x1] %v1172
        %1267 = vst [vmem:[#allocation4 + $0xc] sm:$0xe] %v1173
        %1268 = vst [vmem:[#allocation4 + $0x10] sm:$0xf] %v1176
        %1269 = vst [vmem:[#allocation4 + $0x14] sm:$0x1] %v1177
        %1270 = vst [vmem:[#allocation4 + $0x18] sm:$0xe] %v1178
        %1271 = vst [vmem:[#allocation4 + $0x1c] sm:$0xf] %v1181
        %1272 = vst [vmem:[#allocation4 + $0x20] sm:$0x1] %v1182
        %1273 = vst [vmem:[#allocation4 + $0x24] sm:$0xe] %v1183
        %1274 = vst [vmem:[#allocation4 + $0x28] sm:$0xf] %v1186
        %1275 = vst [vmem:[#allocation4 + $0x2c] sm:$0x1] %v1187
        %1276 = vst [vmem:[#allocation4 + $0x30] sm:$0xe] %v1188
        %1277 = vst [vmem:[#allocation4 + $0x34] sm:$0xf] %v1191
        %1278 = vst [vmem:[#allocation4 + $0x38] sm:$0x1] %v1192
        %1279 = vst [vmem:[#allocation4 + $0x3c] sm:$0xe] %v1193
        %1280 = vst [vmem:[#allocation4 + $0x40] sm:$0xf] %v1196
        %1281 = vst [vmem:[#allocation4 + $0x44] sm:$0x1] %v1197
        %1282 = vst [vmem:[#allocation4 + $0x48] sm:$0xe] %v1198
        %1283 = vst [vmem:[#allocation4 + $0x4c] sm:$0xf] %v1201
        %1284 = vst [vmem:[#allocation4 + $0x50] sm:$0x1] %v1202
        %1285 = vst [vmem:[#allocation4 + $0x54] sm:$0xe] %v1203
        %1286 = vst [vmem:[#allocation4 + $0x58] sm:$0xf] %v1206
        %1287 = vst [vmem:[#allocation4 + $0x5c] sm:$0x1] %v1207
        %1288 = vst [vmem:[#allocation4 + $0x60] sm:$0xe] %v1208
        %1289 = vst [vmem:[#allocation4 + $0x64] sm:$0xf] %v1211
        %1290 = vst [vmem:[#allocation4 + $0x68] sm:$0x1] %v1212
        %1291 = vst [vmem:[#allocation4 + $0x6c] sm:$0xe] %v1213
        %1292 = vst [vmem:[#allocation4 + $0x70] sm:$0xf] %v1216
        %1293 = vst [vmem:[#allocation4 + $0x74] sm:$0x1] %v1217
        %1294 = vst [vmem:[#allocation4 + $0x78] sm:$0xe] %v1218
        %1295 = vst [vmem:[#allocation4 + $0x7c] sm:$0xf] %v1221
        %1296 = vst [vmem:[#allocation4 + $0x80] sm:$0x1] %v1222
        %1297 = vst [vmem:[#allocation4 + $0x84] sm:$0xe] %v1223
        %1298 = vst [vmem:[#allocation4 + $0x88] sm:$0xf] %v1226
        %1299 = vst [vmem:[#allocation4 + $0x8c] sm:$0x1] %v1227
        %1300 = vst [vmem:[#allocation4] sm:$0x1] 0
        %1301 = vst [vmem:[#allocation4 + $0xc] sm:$0x1] 0
        %1302 = vst [vmem:[#allocation4 + $0x18] sm:$0x1] 0
        %1303 = vst [vmem:[#allocation4 + $0x24] sm:$0x1] 0
        %1304 = vst [vmem:[#allocation4 + $0x30] sm:$0x1] 0
        %1305 = vst [vmem:[#allocation4 + $0x3c] sm:$0x1] 0
        %1306 = vst [vmem:[#allocation4 + $0x48] sm:$0x1] 0
        %1307 = vst [vmem:[#allocation4 + $0x54] sm:$0x1] 0
        %1308 = vst [vmem:[#allocation4 + $0x60] sm:$0x1] 0
        %1309 = vst [vmem:[#allocation4 + $0x6c] sm:$0x1] 0
        %1310 = vst [vmem:[#allocation4 + $0x78] sm:$0x1] 0
        %1311 = vst [vmem:[#allocation4 + $0x84] sm:$0x1] 0
        %1312 = vst [vmem:[#allocation4 + $0x8] sm:$0x2] 0
        %1313 = vst [vmem:[#allocation4 + $0x14] sm:$0x2] 0
        %1314 = vst [vmem:[#allocation4 + $0x20] sm:$0x2] 0
        %1315 = vst [vmem:[#allocation4 + $0x2c] sm:$0x2] 0
        %1316 = vst [vmem:[#allocation4 + $0x38] sm:$0x2] 0
        %1317 = vst [vmem:[#allocation4 + $0x44] sm:$0x2] 0
        %1318 = vst [vmem:[#allocation4 + $0x50] sm:$0x2] 0
        %1319 = vst [vmem:[#allocation4 + $0x5c] sm:$0x2] 0
        %1320 = vst [vmem:[#allocation4 + $0x68] sm:$0x2] 0
        %1321 = vst [vmem:[#allocation4 + $0x74] sm:$0x2] 0
        %1322 = vst [vmem:[#allocation4 + $0x80] sm:$0x2] 0
        %1323 = vst [vmem:[#allocation4 + $0x8c] sm:$0x2] 0
        // Predicated region
        $region93: #{tpu_custom_call.1} parent=59 // pred_check
          %p1324 = pneg %p461
        $region94: #{tpu_custom_call.1} parent=59 // pred_check_branch
          %1326 = sbr.rel (%p1324) target = $region96
        $region95: #{tpu_custom_call.1} parent=59 // pred_region
          %1327 = vst [vmem:[#allocation4] sm:$0xe] 0
          %1328 = vst [vmem:[#allocation4 + $0x4] sm:$0xf] 0
          %1329 = vst [vmem:[#allocation4 + $0x8] sm:$0x1] 0
          %1330 = vst [vmem:[#allocation4 + $0xc] sm:$0xe] 0
          %1331 = vst [vmem:[#allocation4 + $0x10] sm:$0xf] 0
          %1332 = vst [vmem:[#allocation4 + $0x14] sm:$0x1] 0
        $region96: #{tpu_custom_call.1} parent=59 // pred_fallthru
          _
        %p1333 = scmp.eq.s32.totalorder %s38, 1
        // Predicated region
        $region97: #{tpu_custom_call.1} parent=59 // pred_check
          %p1334 = pneg %p1333
        $region98: #{tpu_custom_call.1} parent=59 // pred_check_branch
          %1336 = sbr.rel (%p1334) target = $region100
        $region99: #{tpu_custom_call.1} parent=59 // pred_region
          %s1337 = scalar_lea.vmem [#allocation4], 120
          %1338 = vst [vmem:[%s1337] sm:$0xe] 0
          %1339 = vst [vmem:[%s1337 + $0x4] sm:$0xf] 0
          %1340 = vst [vmem:[%s1337 + $0x8] sm:$0x1] 0
          %1341 = vst [vmem:[%s1337 + $0xc] sm:$0xe] 0
          %1342 = vst [vmem:[%s1337 + $0x10] sm:$0xf] 0
          %1343 = vst [vmem:[%s1337 + $0x14] sm:$0x1] 0
        $region100: #{tpu_custom_call.1} parent=59 // pred_fallthru
          _
        %v1344 = vld [vmem:[#allocation4] sm:$0xf]
        %v1345 = vld [vmem:[#allocation4 + $0x4] sm:$0xf]
        %v1346 = vld [vmem:[#allocation4 + $0xc] sm:$0xf]
        %v1347 = vld [vmem:[#allocation4 + $0x10] sm:$0xf]
        %v1348 = vld [vmem:[#allocation4 + $0x18] sm:$0xf]
        %v1349 = vld [vmem:[#allocation4 + $0x1c] sm:$0xf]
        %v1350 = vld [vmem:[#allocation4 + $0x24] sm:$0xf]
        %v1351 = vld [vmem:[#allocation4 + $0x28] sm:$0xf]
        %v1352 = vld [vmem:[#allocation4 + $0x30] sm:$0xf]
        %v1353 = vld [vmem:[#allocation4 + $0x34] sm:$0xf]
        %v1354 = vld [vmem:[#allocation4 + $0x3c] sm:$0xf]
        %v1355 = vld [vmem:[#allocation4 + $0x40] sm:$0xf]
        %v1356 = vld [vmem:[#allocation4 + $0x48] sm:$0xf]
        %v1357 = vld [vmem:[#allocation4 + $0x4c] sm:$0xf]
        %v1358 = vld [vmem:[#allocation4 + $0x54] sm:$0xf]
        %v1359 = vld [vmem:[#allocation4 + $0x58] sm:$0xf]
        %v1360 = vld [vmem:[#allocation8] sm:$0xf]
        %v1361 = vld [vmem:[#allocation8 + $0x4] sm:$0xf]
        %v1362 = vld [vmem:[#allocation8 + $0x8] sm:$0xf]
        %v1363 = vld [vmem:[#allocation8 + $0xc] sm:$0xf]
        %v1364 = vld [vmem:[#allocation8 + $0x10] sm:$0xf]
        %v1365 = vld [vmem:[#allocation8 + $0x14] sm:$0xf]
        %v1366 = vld [vmem:[#allocation8 + $0x18] sm:$0xf]
        %v1367 = vld [vmem:[#allocation8 + $0x1c] sm:$0xf]
        %v1368 = vld [vmem:[#allocation8 + $0x20] sm:$0xf]
        %v1369 = vld [vmem:[#allocation8 + $0x24] sm:$0xf]
        %v1370 = vld [vmem:[#allocation8 + $0x28] sm:$0xf]
        %v1371 = vld [vmem:[#allocation8 + $0x2c] sm:$0xf]
        %v1372 = vld [vmem:[#allocation8 + $0x30] sm:$0xf]
        %v1373 = vld [vmem:[#allocation8 + $0x34] sm:$0xf]
        %v1374 = vld [vmem:[#allocation8 + $0x38] sm:$0xf]
        %v1375 = vld [vmem:[#allocation8 + $0x3c] sm:$0xf]
        %v1376 = vld [vmem:[#allocation4] sm:$0xe]
        %v1377 = vld [vmem:[#allocation4 + $0x8] sm:$0x1]
        %v1378 = vld [vmem:[#allocation4 + $0xc] sm:$0xe]
        %v1379 = vld [vmem:[#allocation4 + $0x14] sm:$0x1]
        %v1380 = vld [vmem:[#allocation4 + $0x18] sm:$0xe]
        %v1381 = vld [vmem:[#allocation4 + $0x20] sm:$0x1]
        %v1382 = vld [vmem:[#allocation4 + $0x24] sm:$0xe]
        %v1383 = vld [vmem:[#allocation4 + $0x2c] sm:$0x1]
        %v1384 = vld [vmem:[#allocation4 + $0x30] sm:$0xe]
        %v1385 = vld [vmem:[#allocation4 + $0x38] sm:$0x1]
        %v1386 = vld [vmem:[#allocation4 + $0x3c] sm:$0xe]
        %v1387 = vld [vmem:[#allocation4 + $0x44] sm:$0x1]
        %v1388 = vld [vmem:[#allocation4 + $0x48] sm:$0xe]
        %v1389 = vld [vmem:[#allocation4 + $0x50] sm:$0x1]
        %v1390 = vld [vmem:[#allocation4 + $0x54] sm:$0xe]
        %v1391 = vld [vmem:[#allocation4 + $0x5c] sm:$0x1]
        %vm1416 = vcmask 1042432
        %vm1417 = vcmask 1046532
        %vm1418 = vmor %vm1416, %vm1417
        %v1419 = vrot.slane %v1376, 5
        %v1420 = vrot.slane %v1419, 4
        %v1421 = vrot.slane %v1345, 5
        %v1422 = vsel %vm1418, %v1420, %v1421
        %v1423 = vrot.slane %v1421, 4
        %v1424 = vrot.slane %v1377, 5
        %v1425 = vsel %vm1418, %v1423, %v1424
        %v1426 = vrot.slane %v1378, 5
        %v1427 = vrot.slane %v1426, 4
        %v1428 = vrot.slane %v1347, 5
        %v1429 = vsel %vm1418, %v1427, %v1428
        %v1430 = vrot.slane %v1428, 4
        %v1431 = vrot.slane %v1379, 5
        %v1432 = vsel %vm1418, %v1430, %v1431
        %v1433 = vrot.slane %v1380, 5
        %v1434 = vrot.slane %v1433, 4
        %v1435 = vrot.slane %v1349, 5
        %v1436 = vsel %vm1418, %v1434, %v1435
        %v1437 = vrot.slane %v1435, 4
        %v1438 = vrot.slane %v1381, 5
        %v1439 = vsel %vm1418, %v1437, %v1438
        %v1440 = vrot.slane %v1382, 5
        %v1441 = vrot.slane %v1440, 4
        %v1442 = vrot.slane %v1351, 5
        %v1443 = vsel %vm1418, %v1441, %v1442
        %v1444 = vrot.slane %v1442, 4
        %v1445 = vrot.slane %v1383, 5
        %v1446 = vsel %vm1418, %v1444, %v1445
        %v1447 = vrot.slane %v1384, 5
        %v1448 = vrot.slane %v1447, 4
        %v1449 = vrot.slane %v1353, 5
        %v1450 = vsel %vm1418, %v1448, %v1449
        %v1451 = vrot.slane %v1449, 4
        %v1452 = vrot.slane %v1385, 5
        %v1453 = vsel %vm1418, %v1451, %v1452
        %v1454 = vrot.slane %v1386, 5
        %v1455 = vrot.slane %v1454, 4
        %v1456 = vrot.slane %v1355, 5
        %v1457 = vsel %vm1418, %v1455, %v1456
        %v1458 = vrot.slane %v1456, 4
        %v1459 = vrot.slane %v1387, 5
        %v1460 = vsel %vm1418, %v1458, %v1459
        %v1461 = vrot.slane %v1388, 5
        %v1462 = vrot.slane %v1461, 4
        %v1463 = vrot.slane %v1357, 5
        %v1464 = vsel %vm1418, %v1462, %v1463
        %v1465 = vrot.slane %v1463, 4
        %v1466 = vrot.slane %v1389, 5
        %v1467 = vsel %vm1418, %v1465, %v1466
        %v1468 = vrot.slane %v1390, 5
        %v1469 = vrot.slane %v1468, 4
        %v1470 = vrot.slane %v1359, 5
        %v1471 = vsel %vm1418, %v1469, %v1470
        %v1472 = vrot.slane %v1470, 4
        %v1473 = vrot.slane %v1391, 5
        %v1474 = vsel %vm1418, %v1472, %v1473
        %s1475 = scalar_lea.vmem [#allocation8], 64
        %v1476 = vld [vmem:[%s1475] sm:$0xf]
        %v1477 = vld [vmem:[%s1475 + $0x4] sm:$0xf]
        %v1478 = vld [vmem:[%s1475 + $0x8] sm:$0xf]
        %v1479 = vld [vmem:[%s1475 + $0xc] sm:$0xf]
        %v1480 = vld [vmem:[%s1475 + $0x10] sm:$0xf]
        %v1481 = vld [vmem:[%s1475 + $0x14] sm:$0xf]
        %v1482 = vld [vmem:[%s1475 + $0x18] sm:$0xf]
        %v1483 = vld [vmem:[%s1475 + $0x1c] sm:$0xf]
        %v1484 = vld [vmem:[%s1475 + $0x20] sm:$0xf]
        %v1485 = vld [vmem:[%s1475 + $0x24] sm:$0xf]
        %v1486 = vld [vmem:[%s1475 + $0x28] sm:$0xf]
        %v1487 = vld [vmem:[%s1475 + $0x2c] sm:$0xf]
        %v1488 = vld [vmem:[%s1475 + $0x30] sm:$0xf]
        %v1489 = vld [vmem:[%s1475 + $0x34] sm:$0xf]
        %v1490 = vld [vmem:[%s1475 + $0x38] sm:$0xf]
        %v1491 = vld [vmem:[%s1475 + $0x3c] sm:$0xf]
        %v1492 = vunpack.c.l.b16 %v1422
        %v1493 = vunpack.c.l.b16 %v1425
        %v1494 = vunpack.c.l.b16 %v1429
        %v1495 = vunpack.c.l.b16 %v1432
        %v1496 = vunpack.c.l.b16 %v1436
        %v1497 = vunpack.c.l.b16 %v1439
        %v1498 = vunpack.c.l.b16 %v1443
        %v1499 = vunpack.c.l.b16 %v1446
        %v1500 = vunpack.c.l.b16 %v1450
        %v1501 = vunpack.c.l.b16 %v1453
        %v1502 = vunpack.c.l.b16 %v1457
        %v1503 = vunpack.c.l.b16 %v1460
        %v1504 = vunpack.c.l.b16 %v1464
        %v1505 = vunpack.c.l.b16 %v1467
        %v1506 = vunpack.c.l.b16 %v1471
        %v1507 = vunpack.c.l.b16 %v1474
        %v1508 = vpack.c.b16 %v1493, %v1492
        %v1509 = vpack.c.b16 %v1495, %v1494
        %v1510 = vpack.c.b16 %v1497, %v1496
        %v1511 = vpack.c.b16 %v1499, %v1498
        %v1512 = vpack.c.b16 %v1501, %v1500
        %v1513 = vpack.c.b16 %v1503, %v1502
        %v1514 = vpack.c.b16 %v1505, %v1504
        %v1515 = vpack.c.b16 %v1507, %v1506
        %v1540 = vunpack.c.l.b16 %v1476
        %v1541 = vunpack.c.l.b16 %v1477
        %v1542 = vunpack.c.l.b16 %v1478
        %v1543 = vunpack.c.l.b16 %v1479
        %v1544 = vunpack.c.l.b16 %v1480
        %v1545 = vunpack.c.l.b16 %v1481
        %v1546 = vunpack.c.l.b16 %v1482
        %v1547 = vunpack.c.l.b16 %v1483
        %v1548 = vunpack.c.l.b16 %v1484
        %v1549 = vunpack.c.l.b16 %v1485
        %v1550 = vunpack.c.l.b16 %v1486
        %v1551 = vunpack.c.l.b16 %v1487
        %v1552 = vunpack.c.l.b16 %v1488
        %v1553 = vunpack.c.l.b16 %v1489
        %v1554 = vunpack.c.l.b16 %v1490
        %v1555 = vunpack.c.l.b16 %v1491
        %v1556 = vpack.c.b16 %v1541, %v1540
        %v1557 = vpack.c.b16 %v1543, %v1542
        %v1558 = vpack.c.b16 %v1545, %v1544
        %v1559 = vpack.c.b16 %v1547, %v1546
        %v1560 = vpack.c.b16 %v1549, %v1548
        %v1561 = vpack.c.b16 %v1551, %v1550
        %v1562 = vpack.c.b16 %v1553, %v1552
        %v1563 = vpack.c.b16 %v1555, %v1554
        %1572 = vmatprep.subr.bf16.mxu0 0
        %1573 = vmatpush1.bf16.msra.mxu0 %v1563
        %1574 = vmatprep.subr.bf16.mxu0 0
        %1575 = vmatpush1.bf16.msra.mxu0 %v1562
        %1576 = vmatprep.subr.bf16.mxu0 0
        %1577 = vmatpush1.bf16.msra.mxu0 %v1561
        %1578 = vmatprep.subr.bf16.mxu0 0
        %1579 = vmatpush1.bf16.msra.mxu0 %v1560
        %1580 = vmatprep.subr.bf16.mxu0 0
        %1581 = vmatpush1.bf16.msra.mxu0 %v1559
        %1582 = vmatprep.subr.bf16.mxu0 0
        %1583 = vmatpush1.bf16.msra.mxu0 %v1558
        %1584 = vmatprep.subr.bf16.mxu0 0
        %1585 = vmatpush1.bf16.msra.mxu0 %v1557
        %1586 = vmatprep.subr.bf16.mxu0 0
        %1587 = vmatpush1.bf16.msra.mxu0 %v1556
        %1588 = vmatprep.subr.bf16.mxu0 0
        %1589 = vmatpush2.bf16.msra.mxu0 0
        %1590 = vmatprep.subr.bf16.mxu0 0
        %1591 = vmatpush2.bf16.msra.mxu0 0
        %1592 = vmatprep.subr.bf16.mxu0 0
        %1593 = vmatpush2.bf16.msra.mxu0 0
        %1594 = vmatprep.subr.bf16.mxu0 0
        %1595 = vmatpush2.bf16.msra.mxu0 0
        %1596 = vmatprep.subr.bf16.mxu0 0
        %1597 = vmatpush2.bf16.msra.mxu0 0
        %1598 = vmatprep.subr.bf16.mxu0 0
        %1599 = vmatpush2.bf16.msra.mxu0 0
        %1600 = vmatprep.subr.bf16.mxu0 0
        %1601 = vmatpush2.bf16.msra.mxu0 0
        %1602 = vmatprep.subr.bf16.mxu0 0
        %1603 = vmatpush2.bf16.msra.mxu0 0
        %1604 = vmatprep.mubr.bf16.mxu0 0
        %1605 = vmatmul.mubr.bf16.gmra.mxu0 %v1508
        %v1606 = vpop.f32.mrf.mxu0
        %v1607 = vadd.f32 0.0, %v1606
        %v1608 = vpop.f32.mrf.mxu0
        %v1609 = vpop.f32.mrf.mxu0
        %v1610 = vadd.f32 0.0, %v1609
        %v1611 = vpop.f32.mrf.mxu0
        %1612 = vmatprep.mubr.bf16.mxu0 0
        %1613 = vmatmul.mubr.bf16.gmra.mxu0 %v1509
        %v1614 = vpop.f32.mrf.mxu0
        %v1615 = vadd.f32 0.0, %v1614
        %v1616 = vpop.f32.mrf.mxu0
        %v1617 = vpop.f32.mrf.mxu0
        %v1618 = vadd.f32 0.0, %v1617
        %v1619 = vpop.f32.mrf.mxu0
        %1620 = vmatprep.mubr.bf16.mxu0 0
        %1621 = vmatmul.mubr.bf16.gmra.mxu0 %v1510
        %v1622 = vpop.f32.mrf.mxu0
        %v1623 = vadd.f32 0.0, %v1622
        %v1624 = vpop.f32.mrf.mxu0
        %v1625 = vpop.f32.mrf.mxu0
        %v1626 = vadd.f32 0.0, %v1625
        %v1627 = vpop.f32.mrf.mxu0
        %1628 = vmatprep.mubr.bf16.mxu0 0
        %1629 = vmatmul.mubr.bf16.gmra.mxu0 %v1511
        %v1630 = vpop.f32.mrf.mxu0
        %v1631 = vadd.f32 0.0, %v1630
        %v1632 = vpop.f32.mrf.mxu0
        %v1633 = vpop.f32.mrf.mxu0
        %v1634 = vadd.f32 0.0, %v1633
        %v1635 = vpop.f32.mrf.mxu0
        %1636 = vmatprep.mubr.bf16.mxu0 0
        %1637 = vmatmul.mubr.bf16.gmra.mxu0 %v1512
        %v1638 = vpop.f32.mrf.mxu0
        %v1639 = vadd.f32 0.0, %v1638
        %v1640 = vpop.f32.mrf.mxu0
        %v1641 = vpop.f32.mrf.mxu0
        %v1642 = vadd.f32 0.0, %v1641
        %v1643 = vpop.f32.mrf.mxu0
        %1644 = vmatprep.mubr.bf16.mxu0 0
        %1645 = vmatmul.mubr.bf16.gmra.mxu0 %v1513
        %v1646 = vpop.f32.mrf.mxu0
        %v1647 = vadd.f32 0.0, %v1646
        %v1648 = vpop.f32.mrf.mxu0
        %v1649 = vpop.f32.mrf.mxu0
        %v1650 = vadd.f32 0.0, %v1649
        %v1651 = vpop.f32.mrf.mxu0
        %1652 = vmatprep.mubr.bf16.mxu0 0
        %1653 = vmatmul.mubr.bf16.gmra.mxu0 %v1514
        %v1654 = vpop.f32.mrf.mxu0
        %v1655 = vadd.f32 0.0, %v1654
        %v1656 = vpop.f32.mrf.mxu0
        %v1657 = vpop.f32.mrf.mxu0
        %v1658 = vadd.f32 0.0, %v1657
        %v1659 = vpop.f32.mrf.mxu0
        %1660 = vmatprep.mubr.bf16.mxu0 0
        %1661 = vmatmul.mubr.bf16.gmra.mxu0 %v1515
        %v1662 = vpop.f32.mrf.mxu0
        %v1663 = vadd.f32 0.0, %v1662
        %v1664 = vpop.f32.mrf.mxu0
        %v1665 = vpop.f32.mrf.mxu0
        %v1666 = vadd.f32 0.0, %v1665
        %v1667 = vpop.f32.mrf.mxu0
        %1668 = vdwg.mxu0
        %v1677 = vunpack.c.l.b16 %v1344
        %v1678 = vunpack.c.l.b16 %v1345
        %v1679 = vunpack.c.l.b16 %v1346
        %v1680 = vunpack.c.l.b16 %v1347
        %v1681 = vunpack.c.l.b16 %v1348
        %v1682 = vunpack.c.l.b16 %v1349
        %v1683 = vunpack.c.l.b16 %v1350
        %v1684 = vunpack.c.l.b16 %v1351
        %v1685 = vunpack.c.l.b16 %v1352
        %v1686 = vunpack.c.l.b16 %v1353
        %v1687 = vunpack.c.l.b16 %v1354
        %v1688 = vunpack.c.l.b16 %v1355
        %v1689 = vunpack.c.l.b16 %v1356
        %v1690 = vunpack.c.l.b16 %v1357
        %v1691 = vunpack.c.l.b16 %v1358
        %v1692 = vunpack.c.l.b16 %v1359
        %v1693 = vpack.c.b16 %v1678, %v1677
        %v1694 = vpack.c.b16 %v1680, %v1679
        %v1695 = vpack.c.b16 %v1682, %v1681
        %v1696 = vpack.c.b16 %v1684, %v1683
        %v1697 = vpack.c.b16 %v1686, %v1685
        %v1698 = vpack.c.b16 %v1688, %v1687
        %v1699 = vpack.c.b16 %v1690, %v1689
        %v1700 = vpack.c.b16 %v1692, %v1691
        %v1725 = vunpack.c.l.b16 %v1360
        %v1726 = vunpack.c.l.b16 %v1361
        %v1727 = vunpack.c.l.b16 %v1362
        %v1728 = vunpack.c.l.b16 %v1363
        %v1729 = vunpack.c.l.b16 %v1364
        %v1730 = vunpack.c.l.b16 %v1365
        %v1731 = vunpack.c.l.b16 %v1366
        %v1732 = vunpack.c.l.b16 %v1367
        %v1733 = vunpack.c.l.b16 %v1368
        %v1734 = vunpack.c.l.b16 %v1369
        %v1735 = vunpack.c.l.b16 %v1370
        %v1736 = vunpack.c.l.b16 %v1371
        %v1737 = vunpack.c.l.b16 %v1372
        %v1738 = vunpack.c.l.b16 %v1373
        %v1739 = vunpack.c.l.b16 %v1374
        %v1740 = vunpack.c.l.b16 %v1375
        %v1741 = vpack.c.b16 %v1726, %v1725
        %v1742 = vpack.c.b16 %v1728, %v1727
        %v1743 = vpack.c.b16 %v1730, %v1729
        %v1744 = vpack.c.b16 %v1732, %v1731
        %v1745 = vpack.c.b16 %v1734, %v1733
        %v1746 = vpack.c.b16 %v1736, %v1735
        %v1747 = vpack.c.b16 %v1738, %v1737
        %v1748 = vpack.c.b16 %v1740, %v1739
        %1757 = vmatprep.subr.bf16.mxu0 0
        %1758 = vmatpush1.bf16.msra.mxu0 %v1748
        %1759 = vmatprep.subr.bf16.mxu0 0
        %1760 = vmatpush1.bf16.msra.mxu0 %v1747
        %1761 = vmatprep.subr.bf16.mxu0 0
        %1762 = vmatpush1.bf16.msra.mxu0 %v1746
        %1763 = vmatprep.subr.bf16.mxu0 0
        %1764 = vmatpush1.bf16.msra.mxu0 %v1745
        %1765 = vmatprep.subr.bf16.mxu0 0
        %1766 = vmatpush1.bf16.msra.mxu0 %v1744
        %1767 = vmatprep.subr.bf16.mxu0 0
        %1768 = vmatpush1.bf16.msra.mxu0 %v1743
        %1769 = vmatprep.subr.bf16.mxu0 0
        %1770 = vmatpush1.bf16.msra.mxu0 %v1742
        %1771 = vmatprep.subr.bf16.mxu0 0
        %1772 = vmatpush1.bf16.msra.mxu0 %v1741
        %1773 = vmatprep.subr.bf16.mxu0 0
        %1774 = vmatpush2.bf16.msra.mxu0 0
        %1775 = vmatprep.subr.bf16.mxu0 0
        %1776 = vmatpush2.bf16.msra.mxu0 0
        %1777 = vmatprep.subr.bf16.mxu0 0
        %1778 = vmatpush2.bf16.msra.mxu0 0
        %1779 = vmatprep.subr.bf16.mxu0 0
        %1780 = vmatpush2.bf16.msra.mxu0 0
        %1781 = vmatprep.subr.bf16.mxu0 0
        %1782 = vmatpush2.bf16.msra.mxu0 0
        %1783 = vmatprep.subr.bf16.mxu0 0
        %1784 = vmatpush2.bf16.msra.mxu0 0
        %1785 = vmatprep.subr.bf16.mxu0 0
        %1786 = vmatpush2.bf16.msra.mxu0 0
        %1787 = vmatprep.subr.bf16.mxu0 0
        %1788 = vmatpush2.bf16.msra.mxu0 0
        %1789 = vmatprep.mubr.bf16.mxu0 0
        %1790 = vmatmul.mubr.bf16.gmra.mxu0 %v1693
        %v1791 = vpop.f32.mrf.mxu0
        %v1792 = vadd.f32 %v1607, %v1791
        %v1793 = vpop.f32.mrf.mxu0
        %v1794 = vpop.f32.mrf.mxu0
        %v1795 = vadd.f32 %v1610, %v1794
        %v1796 = vpop.f32.mrf.mxu0
        %1797 = vmatprep.mubr.bf16.mxu0 0
        %1798 = vmatmul.mubr.bf16.gmra.mxu0 %v1694
        %v1799 = vpop.f32.mrf.mxu0
        %v1800 = vadd.f32 %v1615, %v1799
        %v1801 = vpop.f32.mrf.mxu0
        %v1802 = vpop.f32.mrf.mxu0
        %v1803 = vadd.f32 %v1618, %v1802
        %v1804 = vpop.f32.mrf.mxu0
        %1805 = vmatprep.mubr.bf16.mxu0 0
        %1806 = vmatmul.mubr.bf16.gmra.mxu0 %v1695
        %v1807 = vpop.f32.mrf.mxu0
        %v1808 = vadd.f32 %v1623, %v1807
        %v1809 = vpop.f32.mrf.mxu0
        %v1810 = vpop.f32.mrf.mxu0
        %v1811 = vadd.f32 %v1626, %v1810
        %v1812 = vpop.f32.mrf.mxu0
        %1813 = vmatprep.mubr.bf16.mxu0 0
        %1814 = vmatmul.mubr.bf16.gmra.mxu0 %v1696
        %v1815 = vpop.f32.mrf.mxu0
        %v1816 = vadd.f32 %v1631, %v1815
        %v1817 = vpop.f32.mrf.mxu0
        %v1818 = vpop.f32.mrf.mxu0
        %v1819 = vadd.f32 %v1634, %v1818
        %v1820 = vpop.f32.mrf.mxu0
        %1821 = vmatprep.mubr.bf16.mxu0 0
        %1822 = vmatmul.mubr.bf16.gmra.mxu0 %v1697
        %v1823 = vpop.f32.mrf.mxu0
        %v1824 = vadd.f32 %v1639, %v1823
        %v1825 = vpop.f32.mrf.mxu0
        %v1826 = vpop.f32.mrf.mxu0
        %v1827 = vadd.f32 %v1642, %v1826
        %v1828 = vpop.f32.mrf.mxu0
        %1829 = vmatprep.mubr.bf16.mxu0 0
        %1830 = vmatmul.mubr.bf16.gmra.mxu0 %v1698
        %v1831 = vpop.f32.mrf.mxu0
        %v1832 = vadd.f32 %v1647, %v1831
        %v1833 = vpop.f32.mrf.mxu0
        %v1834 = vpop.f32.mrf.mxu0
        %v1835 = vadd.f32 %v1650, %v1834
        %v1836 = vpop.f32.mrf.mxu0
        %1837 = vmatprep.mubr.bf16.mxu0 0
        %1838 = vmatmul.mubr.bf16.gmra.mxu0 %v1699
        %v1839 = vpop.f32.mrf.mxu0
        %v1840 = vadd.f32 %v1655, %v1839
        %v1841 = vpop.f32.mrf.mxu0
        %v1842 = vpop.f32.mrf.mxu0
        %v1843 = vadd.f32 %v1658, %v1842
        %v1844 = vpop.f32.mrf.mxu0
        %1845 = vmatprep.mubr.bf16.mxu0 0
        %1846 = vmatmul.mubr.bf16.gmra.mxu0 %v1700
        %v1847 = vpop.f32.mrf.mxu0
        %v1848 = vadd.f32 %v1663, %v1847
        %v1849 = vpop.f32.mrf.mxu0
        %v1850 = vpop.f32.mrf.mxu0
        %v1851 = vadd.f32 %v1666, %v1850
        %v1852 = vpop.f32.mrf.mxu0
        %1853 = vdwg.mxu0
        %v1854 = vld [vmem:[#allocation4] sm:$0xc]
        %v1855 = vld [vmem:[#allocation4 + $0x8] sm:$0x3]
        %v1856 = vld [vmem:[#allocation4 + $0xc] sm:$0xc]
        %v1857 = vld [vmem:[#allocation4 + $0x14] sm:$0x3]
        %v1858 = vld [vmem:[#allocation4 + $0x18] sm:$0xc]
        %v1859 = vld [vmem:[#allocation4 + $0x20] sm:$0x3]
        %v1860 = vld [vmem:[#allocation4 + $0x24] sm:$0xc]
        %v1861 = vld [vmem:[#allocation4 + $0x2c] sm:$0x3]
        %v1862 = vld [vmem:[#allocation4 + $0x30] sm:$0xc]
        %v1863 = vld [vmem:[#allocation4 + $0x38] sm:$0x3]
        %v1864 = vld [vmem:[#allocation4 + $0x3c] sm:$0xc]
        %v1865 = vld [vmem:[#allocation4 + $0x44] sm:$0x3]
        %v1866 = vld [vmem:[#allocation4 + $0x48] sm:$0xc]
        %v1867 = vld [vmem:[#allocation4 + $0x50] sm:$0x3]
        %v1868 = vld [vmem:[#allocation4 + $0x54] sm:$0xc]
        %v1869 = vld [vmem:[#allocation4 + $0x5c] sm:$0x3]
        %vm1886 = vcmask 1041408
        %vm1887 = vcmask 1045508
        %vm1888 = vmor %vm1886, %vm1887
        %v1889 = vrot.slane %v1854, 6
        %v1890 = vrot.slane %v1889, 4
        %v1891 = vrot.slane %v1345, 6
        %v1892 = vsel %vm1888, %v1890, %v1891
        %v1893 = vrot.slane %v1891, 4
        %v1894 = vrot.slane %v1855, 6
        %v1895 = vsel %vm1888, %v1893, %v1894
        %v1896 = vrot.slane %v1856, 6
        %v1897 = vrot.slane %v1896, 4
        %v1898 = vrot.slane %v1347, 6
        %v1899 = vsel %vm1888, %v1897, %v1898
        %v1900 = vrot.slane %v1898, 4
        %v1901 = vrot.slane %v1857, 6
        %v1902 = vsel %vm1888, %v1900, %v1901
        %v1903 = vrot.slane %v1858, 6
        %v1904 = vrot.slane %v1903, 4
        %v1905 = vrot.slane %v1349, 6
        %v1906 = vsel %vm1888, %v1904, %v1905
        %v1907 = vrot.slane %v1905, 4
        %v1908 = vrot.slane %v1859, 6
        %v1909 = vsel %vm1888, %v1907, %v1908
        %v1910 = vrot.slane %v1860, 6
        %v1911 = vrot.slane %v1910, 4
        %v1912 = vrot.slane %v1351, 6
        %v1913 = vsel %vm1888, %v1911, %v1912
        %v1914 = vrot.slane %v1912, 4
        %v1915 = vrot.slane %v1861, 6
        %v1916 = vsel %vm1888, %v1914, %v1915
        %v1917 = vrot.slane %v1862, 6
        %v1918 = vrot.slane %v1917, 4
        %v1919 = vrot.slane %v1353, 6
        %v1920 = vsel %vm1888, %v1918, %v1919
        %v1921 = vrot.slane %v1919, 4
        %v1922 = vrot.slane %v1863, 6
        %v1923 = vsel %vm1888, %v1921, %v1922
        %v1924 = vrot.slane %v1864, 6
        %v1925 = vrot.slane %v1924, 4
        %v1926 = vrot.slane %v1355, 6
        %v1927 = vsel %vm1888, %v1925, %v1926
        %v1928 = vrot.slane %v1926, 4
        %v1929 = vrot.slane %v1865, 6
        %v1930 = vsel %vm1888, %v1928, %v1929
        %v1931 = vrot.slane %v1866, 6
        %v1932 = vrot.slane %v1931, 4
        %v1933 = vrot.slane %v1357, 6
        %v1934 = vsel %vm1888, %v1932, %v1933
        %v1935 = vrot.slane %v1933, 4
        %v1936 = vrot.slane %v1867, 6
        %v1937 = vsel %vm1888, %v1935, %v1936
        %v1938 = vrot.slane %v1868, 6
        %v1939 = vrot.slane %v1938, 4
        %v1940 = vrot.slane %v1359, 6
        %v1941 = vsel %vm1888, %v1939, %v1940
        %v1942 = vrot.slane %v1940, 4
        %v1943 = vrot.slane %v1869, 6
        %v1944 = vsel %vm1888, %v1942, %v1943
        %s1945 = scalar_lea.vmem [#allocation8], 128
        %v1946 = vld [vmem:[%s1945] sm:$0xf]
        %v1947 = vld [vmem:[%s1945 + $0x4] sm:$0xf]
        %v1948 = vld [vmem:[%s1945 + $0x8] sm:$0xf]
        %v1949 = vld [vmem:[%s1945 + $0xc] sm:$0xf]
        %v1950 = vld [vmem:[%s1945 + $0x10] sm:$0xf]
        %v1951 = vld [vmem:[%s1945 + $0x14] sm:$0xf]
        %v1952 = vld [vmem:[%s1945 + $0x18] sm:$0xf]
        %v1953 = vld [vmem:[%s1945 + $0x1c] sm:$0xf]
        %v1954 = vld [vmem:[%s1945 + $0x20] sm:$0xf]
        %v1955 = vld [vmem:[%s1945 + $0x24] sm:$0xf]
        %v1956 = vld [vmem:[%s1945 + $0x28] sm:$0xf]
        %v1957 = vld [vmem:[%s1945 + $0x2c] sm:$0xf]
        %v1958 = vld [vmem:[%s1945 + $0x30] sm:$0xf]
        %v1959 = vld [vmem:[%s1945 + $0x34] sm:$0xf]
        %v1960 = vld [vmem:[%s1945 + $0x38] sm:$0xf]
        %v1961 = vld [vmem:[%s1945 + $0x3c] sm:$0xf]
        %v1962 = vunpack.c.l.b16 %v1892
        %v1963 = vunpack.c.l.b16 %v1895
        %v1964 = vunpack.c.l.b16 %v1899
        %v1965 = vunpack.c.l.b16 %v1902
        %v1966 = vunpack.c.l.b16 %v1906
        %v1967 = vunpack.c.l.b16 %v1909
        %v1968 = vunpack.c.l.b16 %v1913
        %v1969 = vunpack.c.l.b16 %v1916
        %v1970 = vunpack.c.l.b16 %v1920
        %v1971 = vunpack.c.l.b16 %v1923
        %v1972 = vunpack.c.l.b16 %v1927
        %v1973 = vunpack.c.l.b16 %v1930
        %v1974 = vunpack.c.l.b16 %v1934
        %v1975 = vunpack.c.l.b16 %v1937
        %v1976 = vunpack.c.l.b16 %v1941
        %v1977 = vunpack.c.l.b16 %v1944
        %v1978 = vpack.c.b16 %v1963, %v1962
        %v1979 = vpack.c.b16 %v1965, %v1964
        %v1980 = vpack.c.b16 %v1967, %v1966
        %v1981 = vpack.c.b16 %v1969, %v1968
        %v1982 = vpack.c.b16 %v1971, %v1970
        %v1983 = vpack.c.b16 %v1973, %v1972
        %v1984 = vpack.c.b16 %v1975, %v1974
        %v1985 = vpack.c.b16 %v1977, %v1976
        %v2010 = vunpack.c.l.b16 %v1946
        %v2011 = vunpack.c.l.b16 %v1947
        %v2012 = vunpack.c.l.b16 %v1948
        %v2013 = vunpack.c.l.b16 %v1949
        %v2014 = vunpack.c.l.b16 %v1950
        %v2015 = vunpack.c.l.b16 %v1951
        %v2016 = vunpack.c.l.b16 %v1952
        %v2017 = vunpack.c.l.b16 %v1953
        %v2018 = vunpack.c.l.b16 %v1954
        %v2019 = vunpack.c.l.b16 %v1955
        %v2020 = vunpack.c.l.b16 %v1956
        %v2021 = vunpack.c.l.b16 %v1957
        %v2022 = vunpack.c.l.b16 %v1958
        %v2023 = vunpack.c.l.b16 %v1959
        %v2024 = vunpack.c.l.b16 %v1960
        %v2025 = vunpack.c.l.b16 %v1961
        %v2026 = vpack.c.b16 %v2011, %v2010
        %v2027 = vpack.c.b16 %v2013, %v2012
        %v2028 = vpack.c.b16 %v2015, %v2014
        %v2029 = vpack.c.b16 %v2017, %v2016
        %v2030 = vpack.c.b16 %v2019, %v2018
        %v2031 = vpack.c.b16 %v2021, %v2020
        %v2032 = vpack.c.b16 %v2023, %v2022
        %v2033 = vpack.c.b16 %v2025, %v2024
        %2042 = vmatprep.subr.bf16.mxu0 0
        %2043 = vmatpush1.bf16.msra.mxu0 %v2033
        %2044 = vmatprep.subr.bf16.mxu0 0
        %2045 = vmatpush1.bf16.msra.mxu0 %v2032
        %2046 = vmatprep.subr.bf16.mxu0 0
        %2047 = vmatpush1.bf16.msra.mxu0 %v2031
        %2048 = vmatprep.subr.bf16.mxu0 0
        %2049 = vmatpush1.bf16.msra.mxu0 %v2030
        %2050 = vmatprep.subr.bf16.mxu0 0
        %2051 = vmatpush1.bf16.msra.mxu0 %v2029
        %2052 = vmatprep.subr.bf16.mxu0 0
        %2053 = vmatpush1.bf16.msra.mxu0 %v2028
        %2054 = vmatprep.subr.bf16.mxu0 0
        %2055 = vmatpush1.bf16.msra.mxu0 %v2027
        %2056 = vmatprep.subr.bf16.mxu0 0
        %2057 = vmatpush1.bf16.msra.mxu0 %v2026
        %2058 = vmatprep.subr.bf16.mxu0 0
        %2059 = vmatpush2.bf16.msra.mxu0 0
        %2060 = vmatprep.subr.bf16.mxu0 0
        %2061 = vmatpush2.bf16.msra.mxu0 0
        %2062 = vmatprep.subr.bf16.mxu0 0
        %2063 = vmatpush2.bf16.msra.mxu0 0
        %2064 = vmatprep.subr.bf16.mxu0 0
        %2065 = vmatpush2.bf16.msra.mxu0 0
        %2066 = vmatprep.subr.bf16.mxu0 0
        %2067 = vmatpush2.bf16.msra.mxu0 0
        %2068 = vmatprep.subr.bf16.mxu0 0
        %2069 = vmatpush2.bf16.msra.mxu0 0
        %2070 = vmatprep.subr.bf16.mxu0 0
        %2071 = vmatpush2.bf16.msra.mxu0 0
        %2072 = vmatprep.subr.bf16.mxu0 0
        %2073 = vmatpush2.bf16.msra.mxu0 0
        %2074 = vmatprep.mubr.bf16.mxu0 0
        %2075 = vmatmul.mubr.bf16.gmra.mxu0 %v1978
        %v2076 = vpop.f32.mrf.mxu0
        %v2077 = vadd.f32 0.0, %v2076
        %v2078 = vpop.f32.mrf.mxu0
        %v2079 = vpop.f32.mrf.mxu0
        %v2080 = vadd.f32 0.0, %v2079
        %v2081 = vpop.f32.mrf.mxu0
        %2082 = vmatprep.mubr.bf16.mxu0 0
        %2083 = vmatmul.mubr.bf16.gmra.mxu0 %v1979
        %v2084 = vpop.f32.mrf.mxu0
        %v2085 = vadd.f32 0.0, %v2084
        %v2086 = vpop.f32.mrf.mxu0
        %v2087 = vpop.f32.mrf.mxu0
        %v2088 = vadd.f32 0.0, %v2087
        %v2089 = vpop.f32.mrf.mxu0
        %2090 = vmatprep.mubr.bf16.mxu0 0
        %2091 = vmatmul.mubr.bf16.gmra.mxu0 %v1980
        %v2092 = vpop.f32.mrf.mxu0
        %v2093 = vadd.f32 0.0, %v2092
        %v2094 = vpop.f32.mrf.mxu0
        %v2095 = vpop.f32.mrf.mxu0
        %v2096 = vadd.f32 0.0, %v2095
        %v2097 = vpop.f32.mrf.mxu0
        %2098 = vmatprep.mubr.bf16.mxu0 0
        %2099 = vmatmul.mubr.bf16.gmra.mxu0 %v1981
        %v2100 = vpop.f32.mrf.mxu0
        %v2101 = vadd.f32 0.0, %v2100
        %v2102 = vpop.f32.mrf.mxu0
        %v2103 = vpop.f32.mrf.mxu0
        %v2104 = vadd.f32 0.0, %v2103
        %v2105 = vpop.f32.mrf.mxu0
        %2106 = vmatprep.mubr.bf16.mxu0 0
        %2107 = vmatmul.mubr.bf16.gmra.mxu0 %v1982
        %v2108 = vpop.f32.mrf.mxu0
        %v2109 = vadd.f32 0.0, %v2108
        %v2110 = vpop.f32.mrf.mxu0
        %v2111 = vpop.f32.mrf.mxu0
        %v2112 = vadd.f32 0.0, %v2111
        %v2113 = vpop.f32.mrf.mxu0
        %2114 = vmatprep.mubr.bf16.mxu0 0
        %2115 = vmatmul.mubr.bf16.gmra.mxu0 %v1983
        %v2116 = vpop.f32.mrf.mxu0
        %v2117 = vadd.f32 0.0, %v2116
        %v2118 = vpop.f32.mrf.mxu0
        %v2119 = vpop.f32.mrf.mxu0
        %v2120 = vadd.f32 0.0, %v2119
        %v2121 = vpop.f32.mrf.mxu0
        %2122 = vmatprep.mubr.bf16.mxu0 0
        %2123 = vmatmul.mubr.bf16.gmra.mxu0 %v1984
        %v2124 = vpop.f32.mrf.mxu0
        %v2125 = vadd.f32 0.0, %v2124
        %v2126 = vpop.f32.mrf.mxu0
        %v2127 = vpop.f32.mrf.mxu0
        %v2128 = vadd.f32 0.0, %v2127
        %v2129 = vpop.f32.mrf.mxu0
        %2130 = vmatprep.mubr.bf16.mxu0 0
        %2131 = vmatmul.mubr.bf16.gmra.mxu0 %v1985
        %v2132 = vpop.f32.mrf.mxu0
        %v2133 = vadd.f32 0.0, %v2132
        %v2134 = vpop.f32.mrf.mxu0
        %v2135 = vpop.f32.mrf.mxu0
        %v2136 = vadd.f32 0.0, %v2135
        %v2137 = vpop.f32.mrf.mxu0
        %2138 = vdwg.mxu0
        %v2139 = vadd.f32 %v1792, %v2077
        %v2140 = vadd.f32 %v1795, %v2080
        %v2141 = vadd.f32 %v1800, %v2085
        %v2142 = vadd.f32 %v1803, %v2088
        %v2143 = vadd.f32 %v1808, %v2093
        %v2144 = vadd.f32 %v1811, %v2096
        %v2145 = vadd.f32 %v1816, %v2101
        %v2146 = vadd.f32 %v1819, %v2104
        %v2147 = vadd.f32 %v1824, %v2109
        %v2148 = vadd.f32 %v1827, %v2112
        %v2149 = vadd.f32 %v1832, %v2117
        %v2150 = vadd.f32 %v1835, %v2120
        %v2151 = vadd.f32 %v1840, %v2125
        %v2152 = vadd.f32 %v1843, %v2128
        %v2153 = vadd.f32 %v1848, %v2133
        %v2154 = vadd.f32 %v1851, %v2136
        %s2155 = scalar_lea.vmem [#allocation4], 24
        %v2156 = vld [vmem:[%s2155] sm:$0xf]
        %v2157 = vld [vmem:[%s2155 + $0x4] sm:$0xf]
        %v2158 = vld [vmem:[%s2155 + $0xc] sm:$0xf]
        %v2159 = vld [vmem:[%s2155 + $0x10] sm:$0xf]
        %v2160 = vld [vmem:[%s2155 + $0x18] sm:$0xf]
        %v2161 = vld [vmem:[%s2155 + $0x1c] sm:$0xf]
        %v2162 = vld [vmem:[%s2155 + $0x24] sm:$0xf]
        %v2163 = vld [vmem:[%s2155 + $0x28] sm:$0xf]
        %v2164 = vld [vmem:[%s2155 + $0x30] sm:$0xf]
        %v2165 = vld [vmem:[%s2155 + $0x34] sm:$0xf]
        %v2166 = vld [vmem:[%s2155 + $0x3c] sm:$0xf]
        %v2167 = vld [vmem:[%s2155 + $0x40] sm:$0xf]
        %v2168 = vld [vmem:[%s2155 + $0x48] sm:$0xf]
        %v2169 = vld [vmem:[%s2155 + $0x4c] sm:$0xf]
        %v2170 = vld [vmem:[%s2155 + $0x54] sm:$0xf]
        %v2171 = vld [vmem:[%s2155 + $0x58] sm:$0xf]
        %s2172 = scalar_lea.vmem [#allocation8], 192
        %v2173 = vld [vmem:[%s2172] sm:$0xf]
        %v2174 = vld [vmem:[%s2172 + $0x4] sm:$0xf]
        %v2175 = vld [vmem:[%s2172 + $0x8] sm:$0xf]
        %v2176 = vld [vmem:[%s2172 + $0xc] sm:$0xf]
        %v2177 = vld [vmem:[%s2172 + $0x10] sm:$0xf]
        %v2178 = vld [vmem:[%s2172 + $0x14] sm:$0xf]
        %v2179 = vld [vmem:[%s2172 + $0x18] sm:$0xf]
        %v2180 = vld [vmem:[%s2172 + $0x1c] sm:$0xf]
        %v2181 = vld [vmem:[%s2172 + $0x20] sm:$0xf]
        %v2182 = vld [vmem:[%s2172 + $0x24] sm:$0xf]
        %v2183 = vld [vmem:[%s2172 + $0x28] sm:$0xf]
        %v2184 = vld [vmem:[%s2172 + $0x2c] sm:$0xf]
        %v2185 = vld [vmem:[%s2172 + $0x30] sm:$0xf]
        %v2186 = vld [vmem:[%s2172 + $0x34] sm:$0xf]
        %v2187 = vld [vmem:[%s2172 + $0x38] sm:$0xf]
        %v2188 = vld [vmem:[%s2172 + $0x3c] sm:$0xf]
        %v2205 = vunpack.c.l.b16 %v2156
        %v2206 = vunpack.c.l.b16 %v2157
        %v2207 = vunpack.c.l.b16 %v2158
        %v2208 = vunpack.c.l.b16 %v2159
        %v2209 = vunpack.c.l.b16 %v2160
        %v2210 = vunpack.c.l.b16 %v2161
        %v2211 = vunpack.c.l.b16 %v2162
        %v2212 = vunpack.c.l.b16 %v2163
        %v2213 = vunpack.c.l.b16 %v2164
        %v2214 = vunpack.c.l.b16 %v2165
        %v2215 = vunpack.c.l.b16 %v2166
        %v2216 = vunpack.c.l.b16 %v2167
        %v2217 = vunpack.c.l.b16 %v2168
        %v2218 = vunpack.c.l.b16 %v2169
        %v2219 = vunpack.c.l.b16 %v2170
        %v2220 = vunpack.c.l.b16 %v2171
        %v2221 = vpack.c.b16 %v2206, %v2205
        %v2222 = vpack.c.b16 %v2208, %v2207
        %v2223 = vpack.c.b16 %v2210, %v2209
        %v2224 = vpack.c.b16 %v2212, %v2211
        %v2225 = vpack.c.b16 %v2214, %v2213
        %v2226 = vpack.c.b16 %v2216, %v2215
        %v2227 = vpack.c.b16 %v2218, %v2217
        %v2228 = vpack.c.b16 %v2220, %v2219
        %v2253 = vunpack.c.l.b16 %v2173
        %v2254 = vunpack.c.l.b16 %v2174
        %v2255 = vunpack.c.l.b16 %v2175
        %v2256 = vunpack.c.l.b16 %v2176
        %v2257 = vunpack.c.l.b16 %v2177
        %v2258 = vunpack.c.l.b16 %v2178
        %v2259 = vunpack.c.l.b16 %v2179
        %v2260 = vunpack.c.l.b16 %v2180
        %v2261 = vunpack.c.l.b16 %v2181
        %v2262 = vunpack.c.l.b16 %v2182
        %v2263 = vunpack.c.l.b16 %v2183
        %v2264 = vunpack.c.l.b16 %v2184
        %v2265 = vunpack.c.l.b16 %v2185
        %v2266 = vunpack.c.l.b16 %v2186
        %v2267 = vunpack.c.l.b16 %v2187
        %v2268 = vunpack.c.l.b16 %v2188
        %v2269 = vpack.c.b16 %v2254, %v2253
        %v2270 = vpack.c.b16 %v2256, %v2255
        %v2271 = vpack.c.b16 %v2258, %v2257
        %v2272 = vpack.c.b16 %v2260, %v2259
        %v2273 = vpack.c.b16 %v2262, %v2261
        %v2274 = vpack.c.b16 %v2264, %v2263
        %v2275 = vpack.c.b16 %v2266, %v2265
        %v2276 = vpack.c.b16 %v2268, %v2267
        %2285 = vmatprep.subr.bf16.mxu0 0
        %2286 = vmatpush1.bf16.msra.mxu0 %v2276
        %2287 = vmatprep.subr.bf16.mxu0 0
        %2288 = vmatpush1.bf16.msra.mxu0 %v2275
        %2289 = vmatprep.subr.bf16.mxu0 0
        %2290 = vmatpush1.bf16.msra.mxu0 %v2274
        %2291 = vmatprep.subr.bf16.mxu0 0
        %2292 = vmatpush1.bf16.msra.mxu0 %v2273
        %2293 = vmatprep.subr.bf16.mxu0 0
        %2294 = vmatpush1.bf16.msra.mxu0 %v2272
        %2295 = vmatprep.subr.bf16.mxu0 0
        %2296 = vmatpush1.bf16.msra.mxu0 %v2271
        %2297 = vmatprep.subr.bf16.mxu0 0
        %2298 = vmatpush1.bf16.msra.mxu0 %v2270
        %2299 = vmatprep.subr.bf16.mxu0 0
        %2300 = vmatpush1.bf16.msra.mxu0 %v2269
        %2301 = vmatprep.subr.bf16.mxu0 0
        %2302 = vmatpush2.bf16.msra.mxu0 0
        %2303 = vmatprep.subr.bf16.mxu0 0
        %2304 = vmatpush2.bf16.msra.mxu0 0
        %2305 = vmatprep.subr.bf16.mxu0 0
        %2306 = vmatpush2.bf16.msra.mxu0 0
        %2307 = vmatprep.subr.bf16.mxu0 0
        %2308 = vmatpush2.bf16.msra.mxu0 0
        %2309 = vmatprep.subr.bf16.mxu0 0
        %2310 = vmatpush2.bf16.msra.mxu0 0
        %2311 = vmatprep.subr.bf16.mxu0 0
        %2312 = vmatpush2.bf16.msra.mxu0 0
        %2313 = vmatprep.subr.bf16.mxu0 0
        %2314 = vmatpush2.bf16.msra.mxu0 0
        %2315 = vmatprep.subr.bf16.mxu0 0
        %2316 = vmatpush2.bf16.msra.mxu0 0
        %2317 = vmatprep.mubr.bf16.mxu0 0
        %2318 = vmatmul.mubr.bf16.gmra.mxu0 %v2221
        %v2319 = vpop.f32.mrf.mxu0
        %v2320 = vadd.f32 0.0, %v2319
        %v2321 = vpop.f32.mrf.mxu0
        %v2322 = vpop.f32.mrf.mxu0
        %v2323 = vadd.f32 0.0, %v2322
        %v2324 = vpop.f32.mrf.mxu0
        %2325 = vmatprep.mubr.bf16.mxu0 0
        %2326 = vmatmul.mubr.bf16.gmra.mxu0 %v2222
        %v2327 = vpop.f32.mrf.mxu0
        %v2328 = vadd.f32 0.0, %v2327
        %v2329 = vpop.f32.mrf.mxu0
        %v2330 = vpop.f32.mrf.mxu0
        %v2331 = vadd.f32 0.0, %v2330
        %v2332 = vpop.f32.mrf.mxu0
        %2333 = vmatprep.mubr.bf16.mxu0 0
        %2334 = vmatmul.mubr.bf16.gmra.mxu0 %v2223
        %v2335 = vpop.f32.mrf.mxu0
        %v2336 = vadd.f32 0.0, %v2335
        %v2337 = vpop.f32.mrf.mxu0
        %v2338 = vpop.f32.mrf.mxu0
        %v2339 = vadd.f32 0.0, %v2338
        %v2340 = vpop.f32.mrf.mxu0
        %2341 = vmatprep.mubr.bf16.mxu0 0
        %2342 = vmatmul.mubr.bf16.gmra.mxu0 %v2224
        %v2343 = vpop.f32.mrf.mxu0
        %v2344 = vadd.f32 0.0, %v2343
        %v2345 = vpop.f32.mrf.mxu0
        %v2346 = vpop.f32.mrf.mxu0
        %v2347 = vadd.f32 0.0, %v2346
        %v2348 = vpop.f32.mrf.mxu0
        %2349 = vmatprep.mubr.bf16.mxu0 0
        %2350 = vmatmul.mubr.bf16.gmra.mxu0 %v2225
        %v2351 = vpop.f32.mrf.mxu0
        %v2352 = vadd.f32 0.0, %v2351
        %v2353 = vpop.f32.mrf.mxu0
        %v2354 = vpop.f32.mrf.mxu0
        %v2355 = vadd.f32 0.0, %v2354
        %v2356 = vpop.f32.mrf.mxu0
        %2357 = vmatprep.mubr.bf16.mxu0 0
        %2358 = vmatmul.mubr.bf16.gmra.mxu0 %v2226
        %v2359 = vpop.f32.mrf.mxu0
        %v2360 = vadd.f32 0.0, %v2359
        %v2361 = vpop.f32.mrf.mxu0
        %v2362 = vpop.f32.mrf.mxu0
        %v2363 = vadd.f32 0.0, %v2362
        %v2364 = vpop.f32.mrf.mxu0
        %2365 = vmatprep.mubr.bf16.mxu0 0
        %2366 = vmatmul.mubr.bf16.gmra.mxu0 %v2227
        %v2367 = vpop.f32.mrf.mxu0
        %v2368 = vadd.f32 0.0, %v2367
        %v2369 = vpop.f32.mrf.mxu0
        %v2370 = vpop.f32.mrf.mxu0
        %v2371 = vadd.f32 0.0, %v2370
        %v2372 = vpop.f32.mrf.mxu0
        %2373 = vmatprep.mubr.bf16.mxu0 0
        %2374 = vmatmul.mubr.bf16.gmra.mxu0 %v2228
        %v2375 = vpop.f32.mrf.mxu0
        %v2376 = vadd.f32 0.0, %v2375
        %v2377 = vpop.f32.mrf.mxu0
        %v2378 = vpop.f32.mrf.mxu0
        %v2379 = vadd.f32 0.0, %v2378
        %v2380 = vpop.f32.mrf.mxu0
        %2381 = vdwg.mxu0
        %v2382 = vadd.f32 %v2139, %v2320
        %v2383 = vadd.f32 %v2140, %v2323
        %v2384 = vadd.f32 %v2141, %v2328
        %v2385 = vadd.f32 %v2142, %v2331
        %v2386 = vadd.f32 %v2143, %v2336
        %v2387 = vadd.f32 %v2144, %v2339
        %v2388 = vadd.f32 %v2145, %v2344
        %v2389 = vadd.f32 %v2146, %v2347
        %v2390 = vadd.f32 %v2147, %v2352
        %v2391 = vadd.f32 %v2148, %v2355
        %v2392 = vadd.f32 %v2149, %v2360
        %v2393 = vadd.f32 %v2150, %v2363
        %v2394 = vadd.f32 %v2151, %v2368
        %v2395 = vadd.f32 %v2152, %v2371
        %v2396 = vadd.f32 %v2153, %v2376
        %v2397 = vadd.f32 %v2154, %v2379
        %v2398 = vld [vmem:[%s2155] sm:$0xe]
        %v2399 = vld [vmem:[%s2155 + $0x4] sm:$0xf]
        %v2400 = vld [vmem:[%s2155 + $0x8] sm:$0x1]
        %v2401 = vld [vmem:[%s2155 + $0xc] sm:$0xe]
        %v2402 = vld [vmem:[%s2155 + $0x10] sm:$0xf]
        %v2403 = vld [vmem:[%s2155 + $0x14] sm:$0x1]
        %v2404 = vld [vmem:[%s2155 + $0x18] sm:$0xe]
        %v2405 = vld [vmem:[%s2155 + $0x1c] sm:$0xf]
        %v2406 = vld [vmem:[%s2155 + $0x20] sm:$0x1]
        %v2407 = vld [vmem:[%s2155 + $0x24] sm:$0xe]
        %v2408 = vld [vmem:[%s2155 + $0x28] sm:$0xf]
        %v2409 = vld [vmem:[%s2155 + $0x2c] sm:$0x1]
        %v2410 = vld [vmem:[%s2155 + $0x30] sm:$0xe]
        %v2411 = vld [vmem:[%s2155 + $0x34] sm:$0xf]
        %v2412 = vld [vmem:[%s2155 + $0x38] sm:$0x1]
        %v2413 = vld [vmem:[%s2155 + $0x3c] sm:$0xe]
        %v2414 = vld [vmem:[%s2155 + $0x40] sm:$0xf]
        %v2415 = vld [vmem:[%s2155 + $0x44] sm:$0x1]
        %v2416 = vld [vmem:[%s2155 + $0x48] sm:$0xe]
        %v2417 = vld [vmem:[%s2155 + $0x4c] sm:$0xf]
        %v2418 = vld [vmem:[%s2155 + $0x50] sm:$0x1]
        %v2419 = vld [vmem:[%s2155 + $0x54] sm:$0xe]
        %v2420 = vld [vmem:[%s2155 + $0x58] sm:$0xf]
        %v2421 = vld [vmem:[%s2155 + $0x5c] sm:$0x1]
        %v2446 = vrot.slane %v2398, 5
        %v2447 = vrot.slane %v2446, 4
        %v2448 = vrot.slane %v2399, 5
        %v2449 = vsel %vm1418, %v2447, %v2448
        %v2450 = vrot.slane %v2448, 4
        %v2451 = vrot.slane %v2400, 5
        %v2452 = vsel %vm1418, %v2450, %v2451
        %v2453 = vrot.slane %v2401, 5
        %v2454 = vrot.slane %v2453, 4
        %v2455 = vrot.slane %v2402, 5
        %v2456 = vsel %vm1418, %v2454, %v2455
        %v2457 = vrot.slane %v2455, 4
        %v2458 = vrot.slane %v2403, 5
        %v2459 = vsel %vm1418, %v2457, %v2458
        %v2460 = vrot.slane %v2404, 5
        %v2461 = vrot.slane %v2460, 4
        %v2462 = vrot.slane %v2405, 5
        %v2463 = vsel %vm1418, %v2461, %v2462
        %v2464 = vrot.slane %v2462, 4
        %v2465 = vrot.slane %v2406, 5
        %v2466 = vsel %vm1418, %v2464, %v2465
        %v2467 = vrot.slane %v2407, 5
        %v2468 = vrot.slane %v2467, 4
        %v2469 = vrot.slane %v2408, 5
        %v2470 = vsel %vm1418, %v2468, %v2469
        %v2471 = vrot.slane %v2469, 4
        %v2472 = vrot.slane %v2409, 5
        %v2473 = vsel %vm1418, %v2471, %v2472
        %v2474 = vrot.slane %v2410, 5
        %v2475 = vrot.slane %v2474, 4
        %v2476 = vrot.slane %v2411, 5
        %v2477 = vsel %vm1418, %v2475, %v2476
        %v2478 = vrot.slane %v2476, 4
        %v2479 = vrot.slane %v2412, 5
        %v2480 = vsel %vm1418, %v2478, %v2479
        %v2481 = vrot.slane %v2413, 5
        %v2482 = vrot.slane %v2481, 4
        %v2483 = vrot.slane %v2414, 5
        %v2484 = vsel %vm1418, %v2482, %v2483
        %v2485 = vrot.slane %v2483, 4
        %v2486 = vrot.slane %v2415, 5
        %v2487 = vsel %vm1418, %v2485, %v2486
        %v2488 = vrot.slane %v2416, 5
        %v2489 = vrot.slane %v2488, 4
        %v2490 = vrot.slane %v2417, 5
        %v2491 = vsel %vm1418, %v2489, %v2490
        %v2492 = vrot.slane %v2490, 4
        %v2493 = vrot.slane %v2418, 5
        %v2494 = vsel %vm1418, %v2492, %v2493
        %v2495 = vrot.slane %v2419, 5
        %v2496 = vrot.slane %v2495, 4
        %v2497 = vrot.slane %v2420, 5
        %v2498 = vsel %vm1418, %v2496, %v2497
        %v2499 = vrot.slane %v2497, 4
        %v2500 = vrot.slane %v2421, 5
        %v2501 = vsel %vm1418, %v2499, %v2500
        %s2502 = scalar_lea.vmem [#allocation8], 256
        %v2503 = vld [vmem:[%s2502] sm:$0xf]
        %v2504 = vld [vmem:[%s2502 + $0x4] sm:$0xf]
        %v2505 = vld [vmem:[%s2502 + $0x8] sm:$0xf]
        %v2506 = vld [vmem:[%s2502 + $0xc] sm:$0xf]
        %v2507 = vld [vmem:[%s2502 + $0x10] sm:$0xf]
        %v2508 = vld [vmem:[%s2502 + $0x14] sm:$0xf]
        %v2509 = vld [vmem:[%s2502 + $0x18] sm:$0xf]
        %v2510 = vld [vmem:[%s2502 + $0x1c] sm:$0xf]
        %v2511 = vld [vmem:[%s2502 + $0x20] sm:$0xf]
        %v2512 = vld [vmem:[%s2502 + $0x24] sm:$0xf]
        %v2513 = vld [vmem:[%s2502 + $0x28] sm:$0xf]
        %v2514 = vld [vmem:[%s2502 + $0x2c] sm:$0xf]
        %v2515 = vld [vmem:[%s2502 + $0x30] sm:$0xf]
        %v2516 = vld [vmem:[%s2502 + $0x34] sm:$0xf]
        %v2517 = vld [vmem:[%s2502 + $0x38] sm:$0xf]
        %v2518 = vld [vmem:[%s2502 + $0x3c] sm:$0xf]
        %v2519 = vunpack.c.l.b16 %v2449
        %v2520 = vunpack.c.l.b16 %v2452
        %v2521 = vunpack.c.l.b16 %v2456
        %v2522 = vunpack.c.l.b16 %v2459
        %v2523 = vunpack.c.l.b16 %v2463
        %v2524 = vunpack.c.l.b16 %v2466
        %v2525 = vunpack.c.l.b16 %v2470
        %v2526 = vunpack.c.l.b16 %v2473
        %v2527 = vunpack.c.l.b16 %v2477
        %v2528 = vunpack.c.l.b16 %v2480
        %v2529 = vunpack.c.l.b16 %v2484
        %v2530 = vunpack.c.l.b16 %v2487
        %v2531 = vunpack.c.l.b16 %v2491
        %v2532 = vunpack.c.l.b16 %v2494
        %v2533 = vunpack.c.l.b16 %v2498
        %v2534 = vunpack.c.l.b16 %v2501
        %v2535 = vpack.c.b16 %v2520, %v2519
        %v2536 = vpack.c.b16 %v2522, %v2521
        %v2537 = vpack.c.b16 %v2524, %v2523
        %v2538 = vpack.c.b16 %v2526, %v2525
        %v2539 = vpack.c.b16 %v2528, %v2527
        %v2540 = vpack.c.b16 %v2530, %v2529
        %v2541 = vpack.c.b16 %v2532, %v2531
        %v2542 = vpack.c.b16 %v2534, %v2533
        %v2567 = vunpack.c.l.b16 %v2503
        %v2568 = vunpack.c.l.b16 %v2504
        %v2569 = vunpack.c.l.b16 %v2505
        %v2570 = vunpack.c.l.b16 %v2506
        %v2571 = vunpack.c.l.b16 %v2507
        %v2572 = vunpack.c.l.b16 %v2508
        %v2573 = vunpack.c.l.b16 %v2509
        %v2574 = vunpack.c.l.b16 %v2510
        %v2575 = vunpack.c.l.b16 %v2511
        %v2576 = vunpack.c.l.b16 %v2512
        %v2577 = vunpack.c.l.b16 %v2513
        %v2578 = vunpack.c.l.b16 %v2514
        %v2579 = vunpack.c.l.b16 %v2515
        %v2580 = vunpack.c.l.b16 %v2516
        %v2581 = vunpack.c.l.b16 %v2517
        %v2582 = vunpack.c.l.b16 %v2518
        %v2583 = vpack.c.b16 %v2568, %v2567
        %v2584 = vpack.c.b16 %v2570, %v2569
        %v2585 = vpack.c.b16 %v2572, %v2571
        %v2586 = vpack.c.b16 %v2574, %v2573
        %v2587 = vpack.c.b16 %v2576, %v2575
        %v2588 = vpack.c.b16 %v2578, %v2577
        %v2589 = vpack.c.b16 %v2580, %v2579
        %v2590 = vpack.c.b16 %v2582, %v2581
        %2599 = vmatprep.subr.bf16.mxu0 0
        %2600 = vmatpush1.bf16.msra.mxu0 %v2590
        %2601 = vmatprep.subr.bf16.mxu0 0
        %2602 = vmatpush1.bf16.msra.mxu0 %v2589
        %2603 = vmatprep.subr.bf16.mxu0 0
        %2604 = vmatpush1.bf16.msra.mxu0 %v2588
        %2605 = vmatprep.subr.bf16.mxu0 0
        %2606 = vmatpush1.bf16.msra.mxu0 %v2587
        %2607 = vmatprep.subr.bf16.mxu0 0
        %2608 = vmatpush1.bf16.msra.mxu0 %v2586
        %2609 = vmatprep.subr.bf16.mxu0 0
        %2610 = vmatpush1.bf16.msra.mxu0 %v2585
        %2611 = vmatprep.subr.bf16.mxu0 0
        %2612 = vmatpush1.bf16.msra.mxu0 %v2584
        %2613 = vmatprep.subr.bf16.mxu0 0
        %2614 = vmatpush1.bf16.msra.mxu0 %v2583
        %2615 = vmatprep.subr.bf16.mxu0 0
        %2616 = vmatpush2.bf16.msra.mxu0 0
        %2617 = vmatprep.subr.bf16.mxu0 0
        %2618 = vmatpush2.bf16.msra.mxu0 0
        %2619 = vmatprep.subr.bf16.mxu0 0
        %2620 = vmatpush2.bf16.msra.mxu0 0
        %2621 = vmatprep.subr.bf16.mxu0 0
        %2622 = vmatpush2.bf16.msra.mxu0 0
        %2623 = vmatprep.subr.bf16.mxu0 0
        %2624 = vmatpush2.bf16.msra.mxu0 0
        %2625 = vmatprep.subr.bf16.mxu0 0
        %2626 = vmatpush2.bf16.msra.mxu0 0
        %2627 = vmatprep.subr.bf16.mxu0 0
        %2628 = vmatpush2.bf16.msra.mxu0 0
        %2629 = vmatprep.subr.bf16.mxu0 0
        %2630 = vmatpush2.bf16.msra.mxu0 0
        %2631 = vmatprep.mubr.bf16.mxu0 0
        %2632 = vmatmul.mubr.bf16.gmra.mxu0 %v2535
        %v2633 = vpop.f32.mrf.mxu0
        %v2634 = vadd.f32 0.0, %v2633
        %v2635 = vpop.f32.mrf.mxu0
        %v2636 = vpop.f32.mrf.mxu0
        %v2637 = vadd.f32 0.0, %v2636
        %v2638 = vpop.f32.mrf.mxu0
        %2639 = vmatprep.mubr.bf16.mxu0 0
        %2640 = vmatmul.mubr.bf16.gmra.mxu0 %v2536
        %v2641 = vpop.f32.mrf.mxu0
        %v2642 = vadd.f32 0.0, %v2641
        %v2643 = vpop.f32.mrf.mxu0
        %v2644 = vpop.f32.mrf.mxu0
        %v2645 = vadd.f32 0.0, %v2644
        %v2646 = vpop.f32.mrf.mxu0
        %2647 = vmatprep.mubr.bf16.mxu0 0
        %2648 = vmatmul.mubr.bf16.gmra.mxu0 %v2537
        %v2649 = vpop.f32.mrf.mxu0
        %v2650 = vadd.f32 0.0, %v2649
        %v2651 = vpop.f32.mrf.mxu0
        %v2652 = vpop.f32.mrf.mxu0
        %v2653 = vadd.f32 0.0, %v2652
        %v2654 = vpop.f32.mrf.mxu0
        %2655 = vmatprep.mubr.bf16.mxu0 0
        %2656 = vmatmul.mubr.bf16.gmra.mxu0 %v2538
        %v2657 = vpop.f32.mrf.mxu0
        %v2658 = vadd.f32 0.0, %v2657
        %v2659 = vpop.f32.mrf.mxu0
        %v2660 = vpop.f32.mrf.mxu0
        %v2661 = vadd.f32 0.0, %v2660
        %v2662 = vpop.f32.mrf.mxu0
        %2663 = vmatprep.mubr.bf16.mxu0 0
        %2664 = vmatmul.mubr.bf16.gmra.mxu0 %v2539
        %v2665 = vpop.f32.mrf.mxu0
        %v2666 = vadd.f32 0.0, %v2665
        %v2667 = vpop.f32.mrf.mxu0
        %v2668 = vpop.f32.mrf.mxu0
        %v2669 = vadd.f32 0.0, %v2668
        %v2670 = vpop.f32.mrf.mxu0
        %2671 = vmatprep.mubr.bf16.mxu0 0
        %2672 = vmatmul.mubr.bf16.gmra.mxu0 %v2540
        %v2673 = vpop.f32.mrf.mxu0
        %v2674 = vadd.f32 0.0, %v2673
        %v2675 = vpop.f32.mrf.mxu0
        %v2676 = vpop.f32.mrf.mxu0
        %v2677 = vadd.f32 0.0, %v2676
        %v2678 = vpop.f32.mrf.mxu0
        %2679 = vmatprep.mubr.bf16.mxu0 0
        %2680 = vmatmul.mubr.bf16.gmra.mxu0 %v2541
        %v2681 = vpop.f32.mrf.mxu0
        %v2682 = vadd.f32 0.0, %v2681
        %v2683 = vpop.f32.mrf.mxu0
        %v2684 = vpop.f32.mrf.mxu0
        %v2685 = vadd.f32 0.0, %v2684
        %v2686 = vpop.f32.mrf.mxu0
        %2687 = vmatprep.mubr.bf16.mxu0 0
        %2688 = vmatmul.mubr.bf16.gmra.mxu0 %v2542
        %v2689 = vpop.f32.mrf.mxu0
        %v2690 = vadd.f32 0.0, %v2689
        %v2691 = vpop.f32.mrf.mxu0
        %v2692 = vpop.f32.mrf.mxu0
        %v2693 = vadd.f32 0.0, %v2692
        %v2694 = vpop.f32.mrf.mxu0
        %2695 = vdwg.mxu0
        %v2696 = vadd.f32 %v2382, %v2634
        %v2697 = vadd.f32 %v2383, %v2637
        %v2698 = vadd.f32 %v2384, %v2642
        %v2699 = vadd.f32 %v2385, %v2645
        %v2700 = vadd.f32 %v2386, %v2650
        %v2701 = vadd.f32 %v2387, %v2653
        %v2702 = vadd.f32 %v2388, %v2658
        %v2703 = vadd.f32 %v2389, %v2661
        %v2704 = vadd.f32 %v2390, %v2666
        %v2705 = vadd.f32 %v2391, %v2669
        %v2706 = vadd.f32 %v2392, %v2674
        %v2707 = vadd.f32 %v2393, %v2677
        %v2708 = vadd.f32 %v2394, %v2682
        %v2709 = vadd.f32 %v2395, %v2685
        %v2710 = vadd.f32 %v2396, %v2690
        %v2711 = vadd.f32 %v2397, %v2693
        %v2712 = vld [vmem:[%s2155] sm:$0xc]
        %v2713 = vld [vmem:[%s2155 + $0x8] sm:$0x3]
        %v2714 = vld [vmem:[%s2155 + $0xc] sm:$0xc]
        %v2715 = vld [vmem:[%s2155 + $0x14] sm:$0x3]
        %v2716 = vld [vmem:[%s2155 + $0x18] sm:$0xc]
        %v2717 = vld [vmem:[%s2155 + $0x20] sm:$0x3]
        %v2718 = vld [vmem:[%s2155 + $0x24] sm:$0xc]
        %v2719 = vld [vmem:[%s2155 + $0x2c] sm:$0x3]
        %v2720 = vld [vmem:[%s2155 + $0x30] sm:$0xc]
        %v2721 = vld [vmem:[%s2155 + $0x38] sm:$0x3]
        %v2722 = vld [vmem:[%s2155 + $0x3c] sm:$0xc]
        %v2723 = vld [vmem:[%s2155 + $0x44] sm:$0x3]
        %v2724 = vld [vmem:[%s2155 + $0x48] sm:$0xc]
        %v2725 = vld [vmem:[%s2155 + $0x50] sm:$0x3]
        %v2726 = vld [vmem:[%s2155 + $0x54] sm:$0xc]
        %v2727 = vld [vmem:[%s2155 + $0x5c] sm:$0x3]
        %v2744 = vrot.slane %v2712, 6
        %v2745 = vrot.slane %v2744, 4
        %v2746 = vrot.slane %v2399, 6
        %v2747 = vsel %vm1888, %v2745, %v2746
        %v2748 = vrot.slane %v2746, 4
        %v2749 = vrot.slane %v2713, 6
        %v2750 = vsel %vm1888, %v2748, %v2749
        %v2751 = vrot.slane %v2714, 6
        %v2752 = vrot.slane %v2751, 4
        %v2753 = vrot.slane %v2402, 6
        %v2754 = vsel %vm1888, %v2752, %v2753
        %v2755 = vrot.slane %v2753, 4
        %v2756 = vrot.slane %v2715, 6
        %v2757 = vsel %vm1888, %v2755, %v2756
        %v2758 = vrot.slane %v2716, 6
        %v2759 = vrot.slane %v2758, 4
        %v2760 = vrot.slane %v2405, 6
        %v2761 = vsel %vm1888, %v2759, %v2760
        %v2762 = vrot.slane %v2760, 4
        %v2763 = vrot.slane %v2717, 6
        %v2764 = vsel %vm1888, %v2762, %v2763
        %v2765 = vrot.slane %v2718, 6
        %v2766 = vrot.slane %v2765, 4
        %v2767 = vrot.slane %v2408, 6
        %v2768 = vsel %vm1888, %v2766, %v2767
        %v2769 = vrot.slane %v2767, 4
        %v2770 = vrot.slane %v2719, 6
        %v2771 = vsel %vm1888, %v2769, %v2770
        %v2772 = vrot.slane %v2720, 6
        %v2773 = vrot.slane %v2772, 4
        %v2774 = vrot.slane %v2411, 6
        %v2775 = vsel %vm1888, %v2773, %v2774
        %v2776 = vrot.slane %v2774, 4
        %v2777 = vrot.slane %v2721, 6
        %v2778 = vsel %vm1888, %v2776, %v2777
        %v2779 = vrot.slane %v2722, 6
        %v2780 = vrot.slane %v2779, 4
        %v2781 = vrot.slane %v2414, 6
        %v2782 = vsel %vm1888, %v2780, %v2781
        %v2783 = vrot.slane %v2781, 4
        %v2784 = vrot.slane %v2723, 6
        %v2785 = vsel %vm1888, %v2783, %v2784
        %v2786 = vrot.slane %v2724, 6
        %v2787 = vrot.slane %v2786, 4
        %v2788 = vrot.slane %v2417, 6
        %v2789 = vsel %vm1888, %v2787, %v2788
        %v2790 = vrot.slane %v2788, 4
        %v2791 = vrot.slane %v2725, 6
        %v2792 = vsel %vm1888, %v2790, %v2791
        %v2793 = vrot.slane %v2726, 6
        %v2794 = vrot.slane %v2793, 4
        %v2795 = vrot.slane %v2420, 6
        %v2796 = vsel %vm1888, %v2794, %v2795
        %v2797 = vrot.slane %v2795, 4
        %v2798 = vrot.slane %v2727, 6
        %v2799 = vsel %vm1888, %v2797, %v2798
        %s2800 = scalar_lea.vmem [#allocation8], 320
        %v2801 = vld [vmem:[%s2800] sm:$0xf]
        %v2802 = vld [vmem:[%s2800 + $0x4] sm:$0xf]
        %v2803 = vld [vmem:[%s2800 + $0x8] sm:$0xf]
        %v2804 = vld [vmem:[%s2800 + $0xc] sm:$0xf]
        %v2805 = vld [vmem:[%s2800 + $0x10] sm:$0xf]
        %v2806 = vld [vmem:[%s2800 + $0x14] sm:$0xf]
        %v2807 = vld [vmem:[%s2800 + $0x18] sm:$0xf]
        %v2808 = vld [vmem:[%s2800 + $0x1c] sm:$0xf]
        %v2809 = vld [vmem:[%s2800 + $0x20] sm:$0xf]
        %v2810 = vld [vmem:[%s2800 + $0x24] sm:$0xf]
        %v2811 = vld [vmem:[%s2800 + $0x28] sm:$0xf]
        %v2812 = vld [vmem:[%s2800 + $0x2c] sm:$0xf]
        %v2813 = vld [vmem:[%s2800 + $0x30] sm:$0xf]
        %v2814 = vld [vmem:[%s2800 + $0x34] sm:$0xf]
        %v2815 = vld [vmem:[%s2800 + $0x38] sm:$0xf]
        %v2816 = vld [vmem:[%s2800 + $0x3c] sm:$0xf]
        %v2817 = vunpack.c.l.b16 %v2747
        %v2818 = vunpack.c.l.b16 %v2750
        %v2819 = vunpack.c.l.b16 %v2754
        %v2820 = vunpack.c.l.b16 %v2757
        %v2821 = vunpack.c.l.b16 %v2761
        %v2822 = vunpack.c.l.b16 %v2764
        %v2823 = vunpack.c.l.b16 %v2768
        %v2824 = vunpack.c.l.b16 %v2771
        %v2825 = vunpack.c.l.b16 %v2775
        %v2826 = vunpack.c.l.b16 %v2778
        %v2827 = vunpack.c.l.b16 %v2782
        %v2828 = vunpack.c.l.b16 %v2785
        %v2829 = vunpack.c.l.b16 %v2789
        %v2830 = vunpack.c.l.b16 %v2792
        %v2831 = vunpack.c.l.b16 %v2796
        %v2832 = vunpack.c.l.b16 %v2799
        %v2833 = vpack.c.b16 %v2818, %v2817
        %v2834 = vpack.c.b16 %v2820, %v2819
        %v2835 = vpack.c.b16 %v2822, %v2821
        %v2836 = vpack.c.b16 %v2824, %v2823
        %v2837 = vpack.c.b16 %v2826, %v2825
        %v2838 = vpack.c.b16 %v2828, %v2827
        %v2839 = vpack.c.b16 %v2830, %v2829
        %v2840 = vpack.c.b16 %v2832, %v2831
        %v2865 = vunpack.c.l.b16 %v2801
        %v2866 = vunpack.c.l.b16 %v2802
        %v2867 = vunpack.c.l.b16 %v2803
        %v2868 = vunpack.c.l.b16 %v2804
        %v2869 = vunpack.c.l.b16 %v2805
        %v2870 = vunpack.c.l.b16 %v2806
        %v2871 = vunpack.c.l.b16 %v2807
        %v2872 = vunpack.c.l.b16 %v2808
        %v2873 = vunpack.c.l.b16 %v2809
        %v2874 = vunpack.c.l.b16 %v2810
        %v2875 = vunpack.c.l.b16 %v2811
        %v2876 = vunpack.c.l.b16 %v2812
        %v2877 = vunpack.c.l.b16 %v2813
        %v2878 = vunpack.c.l.b16 %v2814
        %v2879 = vunpack.c.l.b16 %v2815
        %v2880 = vunpack.c.l.b16 %v2816
        %v2881 = vpack.c.b16 %v2866, %v2865
        %v2882 = vpack.c.b16 %v2868, %v2867
        %v2883 = vpack.c.b16 %v2870, %v2869
        %v2884 = vpack.c.b16 %v2872, %v2871
        %v2885 = vpack.c.b16 %v2874, %v2873
        %v2886 = vpack.c.b16 %v2876, %v2875
        %v2887 = vpack.c.b16 %v2878, %v2877
        %v2888 = vpack.c.b16 %v2880, %v2879
        %2897 = vmatprep.subr.bf16.mxu0 0
        %2898 = vmatpush1.bf16.msra.mxu0 %v2888
        %2899 = vmatprep.subr.bf16.mxu0 0
        %2900 = vmatpush1.bf16.msra.mxu0 %v2887
        %2901 = vmatprep.subr.bf16.mxu0 0
        %2902 = vmatpush1.bf16.msra.mxu0 %v2886
        %2903 = vmatprep.subr.bf16.mxu0 0
        %2904 = vmatpush1.bf16.msra.mxu0 %v2885
        %2905 = vmatprep.subr.bf16.mxu0 0
        %2906 = vmatpush1.bf16.msra.mxu0 %v2884
        %2907 = vmatprep.subr.bf16.mxu0 0
        %2908 = vmatpush1.bf16.msra.mxu0 %v2883
        %2909 = vmatprep.subr.bf16.mxu0 0
        %2910 = vmatpush1.bf16.msra.mxu0 %v2882
        %2911 = vmatprep.subr.bf16.mxu0 0
        %2912 = vmatpush1.bf16.msra.mxu0 %v2881
        %2913 = vmatprep.subr.bf16.mxu0 0
        %2914 = vmatpush2.bf16.msra.mxu0 0
        %2915 = vmatprep.subr.bf16.mxu0 0
        %2916 = vmatpush2.bf16.msra.mxu0 0
        %2917 = vmatprep.subr.bf16.mxu0 0
        %2918 = vmatpush2.bf16.msra.mxu0 0
        %2919 = vmatprep.subr.bf16.mxu0 0
        %2920 = vmatpush2.bf16.msra.mxu0 0
        %2921 = vmatprep.subr.bf16.mxu0 0
        %2922 = vmatpush2.bf16.msra.mxu0 0
        %2923 = vmatprep.subr.bf16.mxu0 0
        %2924 = vmatpush2.bf16.msra.mxu0 0
        %2925 = vmatprep.subr.bf16.mxu0 0
        %2926 = vmatpush2.bf16.msra.mxu0 0
        %2927 = vmatprep.subr.bf16.mxu0 0
        %2928 = vmatpush2.bf16.msra.mxu0 0
        %2929 = vmatprep.mubr.bf16.mxu0 0
        %2930 = vmatmul.mubr.bf16.gmra.mxu0 %v2833
        %v2931 = vpop.f32.mrf.mxu0
        %v2932 = vadd.f32 0.0, %v2931
        %v2933 = vpop.f32.mrf.mxu0
        %v2934 = vpop.f32.mrf.mxu0
        %v2935 = vadd.f32 0.0, %v2934
        %v2936 = vpop.f32.mrf.mxu0
        %2937 = vmatprep.mubr.bf16.mxu0 0
        %2938 = vmatmul.mubr.bf16.gmra.mxu0 %v2834
        %v2939 = vpop.f32.mrf.mxu0
        %v2940 = vadd.f32 0.0, %v2939
        %v2941 = vpop.f32.mrf.mxu0
        %v2942 = vpop.f32.mrf.mxu0
        %v2943 = vadd.f32 0.0, %v2942
        %v2944 = vpop.f32.mrf.mxu0
        %2945 = vmatprep.mubr.bf16.mxu0 0
        %2946 = vmatmul.mubr.bf16.gmra.mxu0 %v2835
        %v2947 = vpop.f32.mrf.mxu0
        %v2948 = vadd.f32 0.0, %v2947
        %v2949 = vpop.f32.mrf.mxu0
        %v2950 = vpop.f32.mrf.mxu0
        %v2951 = vadd.f32 0.0, %v2950
        %v2952 = vpop.f32.mrf.mxu0
        %2953 = vmatprep.mubr.bf16.mxu0 0
        %2954 = vmatmul.mubr.bf16.gmra.mxu0 %v2836
        %v2955 = vpop.f32.mrf.mxu0
        %v2956 = vadd.f32 0.0, %v2955
        %v2957 = vpop.f32.mrf.mxu0
        %v2958 = vpop.f32.mrf.mxu0
        %v2959 = vadd.f32 0.0, %v2958
        %v2960 = vpop.f32.mrf.mxu0
        %2961 = vmatprep.mubr.bf16.mxu0 0
        %2962 = vmatmul.mubr.bf16.gmra.mxu0 %v2837
        %v2963 = vpop.f32.mrf.mxu0
        %v2964 = vadd.f32 0.0, %v2963
        %v2965 = vpop.f32.mrf.mxu0
        %v2966 = vpop.f32.mrf.mxu0
        %v2967 = vadd.f32 0.0, %v2966
        %v2968 = vpop.f32.mrf.mxu0
        %2969 = vmatprep.mubr.bf16.mxu0 0
        %2970 = vmatmul.mubr.bf16.gmra.mxu0 %v2838
        %v2971 = vpop.f32.mrf.mxu0
        %v2972 = vadd.f32 0.0, %v2971
        %v2973 = vpop.f32.mrf.mxu0
        %v2974 = vpop.f32.mrf.mxu0
        %v2975 = vadd.f32 0.0, %v2974
        %v2976 = vpop.f32.mrf.mxu0
        %2977 = vmatprep.mubr.bf16.mxu0 0
        %2978 = vmatmul.mubr.bf16.gmra.mxu0 %v2839
        %v2979 = vpop.f32.mrf.mxu0
        %v2980 = vadd.f32 0.0, %v2979
        %v2981 = vpop.f32.mrf.mxu0
        %v2982 = vpop.f32.mrf.mxu0
        %v2983 = vadd.f32 0.0, %v2982
        %v2984 = vpop.f32.mrf.mxu0
        %2985 = vmatprep.mubr.bf16.mxu0 0
        %2986 = vmatmul.mubr.bf16.gmra.mxu0 %v2840
        %v2987 = vpop.f32.mrf.mxu0
        %v2988 = vadd.f32 0.0, %v2987
        %v2989 = vpop.f32.mrf.mxu0
        %v2990 = vpop.f32.mrf.mxu0
        %v2991 = vadd.f32 0.0, %v2990
        %v2992 = vpop.f32.mrf.mxu0
        %2993 = vdwg.mxu0
        %v2994 = vadd.f32 %v2696, %v2932
        %v2995 = vadd.f32 %v2697, %v2935
        %v2996 = vadd.f32 %v2698, %v2940
        %v2997 = vadd.f32 %v2699, %v2943
        %v2998 = vadd.f32 %v2700, %v2948
        %v2999 = vadd.f32 %v2701, %v2951
        %v3000 = vadd.f32 %v2702, %v2956
        %v3001 = vadd.f32 %v2703, %v2959
        %v3002 = vadd.f32 %v2704, %v2964
        %v3003 = vadd.f32 %v2705, %v2967
        %v3004 = vadd.f32 %v2706, %v2972
        %v3005 = vadd.f32 %v2707, %v2975
        %v3006 = vadd.f32 %v2708, %v2980
        %v3007 = vadd.f32 %v2709, %v2983
        %v3008 = vadd.f32 %v2710, %v2988
        %v3009 = vadd.f32 %v2711, %v2991
        %s3010 = scalar_lea.vmem [#allocation4], 48
        %v3011 = vld [vmem:[%s3010] sm:$0xf]
        %v3012 = vld [vmem:[%s3010 + $0x4] sm:$0xf]
        %v3013 = vld [vmem:[%s3010 + $0xc] sm:$0xf]
        %v3014 = vld [vmem:[%s3010 + $0x10] sm:$0xf]
        %v3015 = vld [vmem:[%s3010 + $0x18] sm:$0xf]
        %v3016 = vld [vmem:[%s3010 + $0x1c] sm:$0xf]
        %v3017 = vld [vmem:[%s3010 + $0x24] sm:$0xf]
        %v3018 = vld [vmem:[%s3010 + $0x28] sm:$0xf]
        %v3019 = vld [vmem:[%s3010 + $0x30] sm:$0xf]
        %v3020 = vld [vmem:[%s3010 + $0x34] sm:$0xf]
        %v3021 = vld [vmem:[%s3010 + $0x3c] sm:$0xf]
        %v3022 = vld [vmem:[%s3010 + $0x40] sm:$0xf]
        %v3023 = vld [vmem:[%s3010 + $0x48] sm:$0xf]
        %v3024 = vld [vmem:[%s3010 + $0x4c] sm:$0xf]
        %v3025 = vld [vmem:[%s3010 + $0x54] sm:$0xf]
        %v3026 = vld [vmem:[%s3010 + $0x58] sm:$0xf]
        %s3027 = scalar_lea.vmem [#allocation8], 384
        %v3028 = vld [vmem:[%s3027] sm:$0xf]
        %v3029 = vld [vmem:[%s3027 + $0x4] sm:$0xf]
        %v3030 = vld [vmem:[%s3027 + $0x8] sm:$0xf]
        %v3031 = vld [vmem:[%s3027 + $0xc] sm:$0xf]
        %v3032 = vld [vmem:[%s3027 + $0x10] sm:$0xf]
        %v3033 = vld [vmem:[%s3027 + $0x14] sm:$0xf]
        %v3034 = vld [vmem:[%s3027 + $0x18] sm:$0xf]
        %v3035 = vld [vmem:[%s3027 + $0x1c] sm:$0xf]
        %v3036 = vld [vmem:[%s3027 + $0x20] sm:$0xf]
        %v3037 = vld [vmem:[%s3027 + $0x24] sm:$0xf]
        %v3038 = vld [vmem:[%s3027 + $0x28] sm:$0xf]
        %v3039 = vld [vmem:[%s3027 + $0x2c] sm:$0xf]
        %v3040 = vld [vmem:[%s3027 + $0x30] sm:$0xf]
        %v3041 = vld [vmem:[%s3027 + $0x34] sm:$0xf]
        %v3042 = vld [vmem:[%s3027 + $0x38] sm:$0xf]
        %v3043 = vld [vmem:[%s3027 + $0x3c] sm:$0xf]
        %v3060 = vunpack.c.l.b16 %v3011
        %v3061 = vunpack.c.l.b16 %v3012
        %v3062 = vunpack.c.l.b16 %v3013
        %v3063 = vunpack.c.l.b16 %v3014
        %v3064 = vunpack.c.l.b16 %v3015
        %v3065 = vunpack.c.l.b16 %v3016
        %v3066 = vunpack.c.l.b16 %v3017
        %v3067 = vunpack.c.l.b16 %v3018
        %v3068 = vunpack.c.l.b16 %v3019
        %v3069 = vunpack.c.l.b16 %v3020
        %v3070 = vunpack.c.l.b16 %v3021
        %v3071 = vunpack.c.l.b16 %v3022
        %v3072 = vunpack.c.l.b16 %v3023
        %v3073 = vunpack.c.l.b16 %v3024
        %v3074 = vunpack.c.l.b16 %v3025
        %v3075 = vunpack.c.l.b16 %v3026
        %v3076 = vpack.c.b16 %v3061, %v3060
        %v3077 = vpack.c.b16 %v3063, %v3062
        %v3078 = vpack.c.b16 %v3065, %v3064
        %v3079 = vpack.c.b16 %v3067, %v3066
        %v3080 = vpack.c.b16 %v3069, %v3068
        %v3081 = vpack.c.b16 %v3071, %v3070
        %v3082 = vpack.c.b16 %v3073, %v3072
        %v3083 = vpack.c.b16 %v3075, %v3074
        %v3108 = vunpack.c.l.b16 %v3028
        %v3109 = vunpack.c.l.b16 %v3029
        %v3110 = vunpack.c.l.b16 %v3030
        %v3111 = vunpack.c.l.b16 %v3031
        %v3112 = vunpack.c.l.b16 %v3032
        %v3113 = vunpack.c.l.b16 %v3033
        %v3114 = vunpack.c.l.b16 %v3034
        %v3115 = vunpack.c.l.b16 %v3035
        %v3116 = vunpack.c.l.b16 %v3036
        %v3117 = vunpack.c.l.b16 %v3037
        %v3118 = vunpack.c.l.b16 %v3038
        %v3119 = vunpack.c.l.b16 %v3039
        %v3120 = vunpack.c.l.b16 %v3040
        %v3121 = vunpack.c.l.b16 %v3041
        %v3122 = vunpack.c.l.b16 %v3042
        %v3123 = vunpack.c.l.b16 %v3043
        %v3124 = vpack.c.b16 %v3109, %v3108
        %v3125 = vpack.c.b16 %v3111, %v3110
        %v3126 = vpack.c.b16 %v3113, %v3112
        %v3127 = vpack.c.b16 %v3115, %v3114
        %v3128 = vpack.c.b16 %v3117, %v3116
        %v3129 = vpack.c.b16 %v3119, %v3118
        %v3130 = vpack.c.b16 %v3121, %v3120
        %v3131 = vpack.c.b16 %v3123, %v3122
        %3140 = vmatprep.subr.bf16.mxu0 0
        %3141 = vmatpush1.bf16.msra.mxu0 %v3131
        %3142 = vmatprep.subr.bf16.mxu0 0
        %3143 = vmatpush1.bf16.msra.mxu0 %v3130
        %3144 = vmatprep.subr.bf16.mxu0 0
        %3145 = vmatpush1.bf16.msra.mxu0 %v3129
        %3146 = vmatprep.subr.bf16.mxu0 0
        %3147 = vmatpush1.bf16.msra.mxu0 %v3128
        %3148 = vmatprep.subr.bf16.mxu0 0
        %3149 = vmatpush1.bf16.msra.mxu0 %v3127
        %3150 = vmatprep.subr.bf16.mxu0 0
        %3151 = vmatpush1.bf16.msra.mxu0 %v3126
        %3152 = vmatprep.subr.bf16.mxu0 0
        %3153 = vmatpush1.bf16.msra.mxu0 %v3125
        %3154 = vmatprep.subr.bf16.mxu0 0
        %3155 = vmatpush1.bf16.msra.mxu0 %v3124
        %3156 = vmatprep.subr.bf16.mxu0 0
        %3157 = vmatpush2.bf16.msra.mxu0 0
        %3158 = vmatprep.subr.bf16.mxu0 0
        %3159 = vmatpush2.bf16.msra.mxu0 0
        %3160 = vmatprep.subr.bf16.mxu0 0
        %3161 = vmatpush2.bf16.msra.mxu0 0
        %3162 = vmatprep.subr.bf16.mxu0 0
        %3163 = vmatpush2.bf16.msra.mxu0 0
        %3164 = vmatprep.subr.bf16.mxu0 0
        %3165 = vmatpush2.bf16.msra.mxu0 0
        %3166 = vmatprep.subr.bf16.mxu0 0
        %3167 = vmatpush2.bf16.msra.mxu0 0
        %3168 = vmatprep.subr.bf16.mxu0 0
        %3169 = vmatpush2.bf16.msra.mxu0 0
        %3170 = vmatprep.subr.bf16.mxu0 0
        %3171 = vmatpush2.bf16.msra.mxu0 0
        %3172 = vmatprep.mubr.bf16.mxu0 0
        %3173 = vmatmul.mubr.bf16.gmra.mxu0 %v3076
        %v3174 = vpop.f32.mrf.mxu0
        %v3175 = vadd.f32 0.0, %v3174
        %v3176 = vpop.f32.mrf.mxu0
        %v3177 = vpop.f32.mrf.mxu0
        %v3178 = vadd.f32 0.0, %v3177
        %v3179 = vpop.f32.mrf.mxu0
        %3180 = vmatprep.mubr.bf16.mxu0 0
        %3181 = vmatmul.mubr.bf16.gmra.mxu0 %v3077
        %v3182 = vpop.f32.mrf.mxu0
        %v3183 = vadd.f32 0.0, %v3182
        %v3184 = vpop.f32.mrf.mxu0
        %v3185 = vpop.f32.mrf.mxu0
        %v3186 = vadd.f32 0.0, %v3185
        %v3187 = vpop.f32.mrf.mxu0
        %3188 = vmatprep.mubr.bf16.mxu0 0
        %3189 = vmatmul.mubr.bf16.gmra.mxu0 %v3078
        %v3190 = vpop.f32.mrf.mxu0
        %v3191 = vadd.f32 0.0, %v3190
        %v3192 = vpop.f32.mrf.mxu0
        %v3193 = vpop.f32.mrf.mxu0
        %v3194 = vadd.f32 0.0, %v3193
        %v3195 = vpop.f32.mrf.mxu0
        %3196 = vmatprep.mubr.bf16.mxu0 0
        %3197 = vmatmul.mubr.bf16.gmra.mxu0 %v3079
        %v3198 = vpop.f32.mrf.mxu0
        %v3199 = vadd.f32 0.0, %v3198
        %v3200 = vpop.f32.mrf.mxu0
        %v3201 = vpop.f32.mrf.mxu0
        %v3202 = vadd.f32 0.0, %v3201
        %v3203 = vpop.f32.mrf.mxu0
        %3204 = vmatprep.mubr.bf16.mxu0 0
        %3205 = vmatmul.mubr.bf16.gmra.mxu0 %v3080
        %v3206 = vpop.f32.mrf.mxu0
        %v3207 = vadd.f32 0.0, %v3206
        %v3208 = vpop.f32.mrf.mxu0
        %v3209 = vpop.f32.mrf.mxu0
        %v3210 = vadd.f32 0.0, %v3209
        %v3211 = vpop.f32.mrf.mxu0
        %3212 = vmatprep.mubr.bf16.mxu0 0
        %3213 = vmatmul.mubr.bf16.gmra.mxu0 %v3081
        %v3214 = vpop.f32.mrf.mxu0
        %v3215 = vadd.f32 0.0, %v3214
        %v3216 = vpop.f32.mrf.mxu0
        %v3217 = vpop.f32.mrf.mxu0
        %v3218 = vadd.f32 0.0, %v3217
        %v3219 = vpop.f32.mrf.mxu0
        %3220 = vmatprep.mubr.bf16.mxu0 0
        %3221 = vmatmul.mubr.bf16.gmra.mxu0 %v3082
        %v3222 = vpop.f32.mrf.mxu0
        %v3223 = vadd.f32 0.0, %v3222
        %v3224 = vpop.f32.mrf.mxu0
        %v3225 = vpop.f32.mrf.mxu0
        %v3226 = vadd.f32 0.0, %v3225
        %v3227 = vpop.f32.mrf.mxu0
        %3228 = vmatprep.mubr.bf16.mxu0 0
        %3229 = vmatmul.mubr.bf16.gmra.mxu0 %v3083
        %v3230 = vpop.f32.mrf.mxu0
        %v3231 = vadd.f32 0.0, %v3230
        %v3232 = vpop.f32.mrf.mxu0
        %v3233 = vpop.f32.mrf.mxu0
        %v3234 = vadd.f32 0.0, %v3233
        %v3235 = vpop.f32.mrf.mxu0
        %3236 = vdwg.mxu0
        %v3237 = vadd.f32 %v2994, %v3175
        %v3238 = vadd.f32 %v2995, %v3178
        %v3239 = vadd.f32 %v2996, %v3183
        %v3240 = vadd.f32 %v2997, %v3186
        %v3241 = vadd.f32 %v2998, %v3191
        %v3242 = vadd.f32 %v2999, %v3194
        %v3243 = vadd.f32 %v3000, %v3199
        %v3244 = vadd.f32 %v3001, %v3202
        %v3245 = vadd.f32 %v3002, %v3207
        %v3246 = vadd.f32 %v3003, %v3210
        %v3247 = vadd.f32 %v3004, %v3215
        %v3248 = vadd.f32 %v3005, %v3218
        %v3249 = vadd.f32 %v3006, %v3223
        %v3250 = vadd.f32 %v3007, %v3226
        %v3251 = vadd.f32 %v3008, %v3231
        %v3252 = vadd.f32 %v3009, %v3234
        %v3253 = vld [vmem:[%s3010] sm:$0xe]
        %v3254 = vld [vmem:[%s3010 + $0x4] sm:$0xf]
        %v3255 = vld [vmem:[%s3010 + $0x8] sm:$0x1]
        %v3256 = vld [vmem:[%s3010 + $0xc] sm:$0xe]
        %v3257 = vld [vmem:[%s3010 + $0x10] sm:$0xf]
        %v3258 = vld [vmem:[%s3010 + $0x14] sm:$0x1]
        %v3259 = vld [vmem:[%s3010 + $0x18] sm:$0xe]
        %v3260 = vld [vmem:[%s3010 + $0x1c] sm:$0xf]
        %v3261 = vld [vmem:[%s3010 + $0x20] sm:$0x1]
        %v3262 = vld [vmem:[%s3010 + $0x24] sm:$0xe]
        %v3263 = vld [vmem:[%s3010 + $0x28] sm:$0xf]
        %v3264 = vld [vmem:[%s3010 + $0x2c] sm:$0x1]
        %v3265 = vld [vmem:[%s3010 + $0x30] sm:$0xe]
        %v3266 = vld [vmem:[%s3010 + $0x34] sm:$0xf]
        %v3267 = vld [vmem:[%s3010 + $0x38] sm:$0x1]
        %v3268 = vld [vmem:[%s3010 + $0x3c] sm:$0xe]
        %v3269 = vld [vmem:[%s3010 + $0x40] sm:$0xf]
        %v3270 = vld [vmem:[%s3010 + $0x44] sm:$0x1]
        %v3271 = vld [vmem:[%s3010 + $0x48] sm:$0xe]
        %v3272 = vld [vmem:[%s3010 + $0x4c] sm:$0xf]
        %v3273 = vld [vmem:[%s3010 + $0x50] sm:$0x1]
        %v3274 = vld [vmem:[%s3010 + $0x54] sm:$0xe]
        %v3275 = vld [vmem:[%s3010 + $0x58] sm:$0xf]
        %v3276 = vld [vmem:[%s3010 + $0x5c] sm:$0x1]
        %v3301 = vrot.slane %v3253, 5
        %v3302 = vrot.slane %v3301, 4
        %v3303 = vrot.slane %v3254, 5
        %v3304 = vsel %vm1418, %v3302, %v3303
        %v3305 = vrot.slane %v3303, 4
        %v3306 = vrot.slane %v3255, 5
        %v3307 = vsel %vm1418, %v3305, %v3306
        %v3308 = vrot.slane %v3256, 5
        %v3309 = vrot.slane %v3308, 4
        %v3310 = vrot.slane %v3257, 5
        %v3311 = vsel %vm1418, %v3309, %v3310
        %v3312 = vrot.slane %v3310, 4
        %v3313 = vrot.slane %v3258, 5
        %v3314 = vsel %vm1418, %v3312, %v3313
        %v3315 = vrot.slane %v3259, 5
        %v3316 = vrot.slane %v3315, 4
        %v3317 = vrot.slane %v3260, 5
        %v3318 = vsel %vm1418, %v3316, %v3317
        %v3319 = vrot.slane %v3317, 4
        %v3320 = vrot.slane %v3261, 5
        %v3321 = vsel %vm1418, %v3319, %v3320
        %v3322 = vrot.slane %v3262, 5
        %v3323 = vrot.slane %v3322, 4
        %v3324 = vrot.slane %v3263, 5
        %v3325 = vsel %vm1418, %v3323, %v3324
        %v3326 = vrot.slane %v3324, 4
        %v3327 = vrot.slane %v3264, 5
        %v3328 = vsel %vm1418, %v3326, %v3327
        %v3329 = vrot.slane %v3265, 5
        %v3330 = vrot.slane %v3329, 4
        %v3331 = vrot.slane %v3266, 5
        %v3332 = vsel %vm1418, %v3330, %v3331
        %v3333 = vrot.slane %v3331, 4
        %v3334 = vrot.slane %v3267, 5
        %v3335 = vsel %vm1418, %v3333, %v3334
        %v3336 = vrot.slane %v3268, 5
        %v3337 = vrot.slane %v3336, 4
        %v3338 = vrot.slane %v3269, 5
        %v3339 = vsel %vm1418, %v3337, %v3338
        %v3340 = vrot.slane %v3338, 4
        %v3341 = vrot.slane %v3270, 5
        %v3342 = vsel %vm1418, %v3340, %v3341
        %v3343 = vrot.slane %v3271, 5
        %v3344 = vrot.slane %v3343, 4
        %v3345 = vrot.slane %v3272, 5
        %v3346 = vsel %vm1418, %v3344, %v3345
        %v3347 = vrot.slane %v3345, 4
        %v3348 = vrot.slane %v3273, 5
        %v3349 = vsel %vm1418, %v3347, %v3348
        %v3350 = vrot.slane %v3274, 5
        %v3351 = vrot.slane %v3350, 4
        %v3352 = vrot.slane %v3275, 5
        %v3353 = vsel %vm1418, %v3351, %v3352
        %v3354 = vrot.slane %v3352, 4
        %v3355 = vrot.slane %v3276, 5
        %v3356 = vsel %vm1418, %v3354, %v3355
        %s3357 = scalar_lea.vmem [#allocation8], 448
        %v3358 = vld [vmem:[%s3357] sm:$0xf]
        %v3359 = vld [vmem:[%s3357 + $0x4] sm:$0xf]
        %v3360 = vld [vmem:[%s3357 + $0x8] sm:$0xf]
        %v3361 = vld [vmem:[%s3357 + $0xc] sm:$0xf]
        %v3362 = vld [vmem:[%s3357 + $0x10] sm:$0xf]
        %v3363 = vld [vmem:[%s3357 + $0x14] sm:$0xf]
        %v3364 = vld [vmem:[%s3357 + $0x18] sm:$0xf]
        %v3365 = vld [vmem:[%s3357 + $0x1c] sm:$0xf]
        %v3366 = vld [vmem:[%s3357 + $0x20] sm:$0xf]
        %v3367 = vld [vmem:[%s3357 + $0x24] sm:$0xf]
        %v3368 = vld [vmem:[%s3357 + $0x28] sm:$0xf]
        %v3369 = vld [vmem:[%s3357 + $0x2c] sm:$0xf]
        %v3370 = vld [vmem:[%s3357 + $0x30] sm:$0xf]
        %v3371 = vld [vmem:[%s3357 + $0x34] sm:$0xf]
        %v3372 = vld [vmem:[%s3357 + $0x38] sm:$0xf]
        %v3373 = vld [vmem:[%s3357 + $0x3c] sm:$0xf]
        %v3374 = vunpack.c.l.b16 %v3304
        %v3375 = vunpack.c.l.b16 %v3307
        %v3376 = vunpack.c.l.b16 %v3311
        %v3377 = vunpack.c.l.b16 %v3314
        %v3378 = vunpack.c.l.b16 %v3318
        %v3379 = vunpack.c.l.b16 %v3321
        %v3380 = vunpack.c.l.b16 %v3325
        %v3381 = vunpack.c.l.b16 %v3328
        %v3382 = vunpack.c.l.b16 %v3332
        %v3383 = vunpack.c.l.b16 %v3335
        %v3384 = vunpack.c.l.b16 %v3339
        %v3385 = vunpack.c.l.b16 %v3342
        %v3386 = vunpack.c.l.b16 %v3346
        %v3387 = vunpack.c.l.b16 %v3349
        %v3388 = vunpack.c.l.b16 %v3353
        %v3389 = vunpack.c.l.b16 %v3356
        %v3390 = vpack.c.b16 %v3375, %v3374
        %v3391 = vpack.c.b16 %v3377, %v3376
        %v3392 = vpack.c.b16 %v3379, %v3378
        %v3393 = vpack.c.b16 %v3381, %v3380
        %v3394 = vpack.c.b16 %v3383, %v3382
        %v3395 = vpack.c.b16 %v3385, %v3384
        %v3396 = vpack.c.b16 %v3387, %v3386
        %v3397 = vpack.c.b16 %v3389, %v3388
        %v3422 = vunpack.c.l.b16 %v3358
        %v3423 = vunpack.c.l.b16 %v3359
        %v3424 = vunpack.c.l.b16 %v3360
        %v3425 = vunpack.c.l.b16 %v3361
        %v3426 = vunpack.c.l.b16 %v3362
        %v3427 = vunpack.c.l.b16 %v3363
        %v3428 = vunpack.c.l.b16 %v3364
        %v3429 = vunpack.c.l.b16 %v3365
        %v3430 = vunpack.c.l.b16 %v3366
        %v3431 = vunpack.c.l.b16 %v3367
        %v3432 = vunpack.c.l.b16 %v3368
        %v3433 = vunpack.c.l.b16 %v3369
        %v3434 = vunpack.c.l.b16 %v3370
        %v3435 = vunpack.c.l.b16 %v3371
        %v3436 = vunpack.c.l.b16 %v3372
        %v3437 = vunpack.c.l.b16 %v3373
        %v3438 = vpack.c.b16 %v3423, %v3422
        %v3439 = vpack.c.b16 %v3425, %v3424
        %v3440 = vpack.c.b16 %v3427, %v3426
        %v3441 = vpack.c.b16 %v3429, %v3428
        %v3442 = vpack.c.b16 %v3431, %v3430
        %v3443 = vpack.c.b16 %v3433, %v3432
        %v3444 = vpack.c.b16 %v3435, %v3434
        %v3445 = vpack.c.b16 %v3437, %v3436
        %3454 = vmatprep.subr.bf16.mxu0 0
        %3455 = vmatpush1.bf16.msra.mxu0 %v3445
        %3456 = vmatprep.subr.bf16.mxu0 0
        %3457 = vmatpush1.bf16.msra.mxu0 %v3444
        %3458 = vmatprep.subr.bf16.mxu0 0
        %3459 = vmatpush1.bf16.msra.mxu0 %v3443
        %3460 = vmatprep.subr.bf16.mxu0 0
        %3461 = vmatpush1.bf16.msra.mxu0 %v3442
        %3462 = vmatprep.subr.bf16.mxu0 0
        %3463 = vmatpush1.bf16.msra.mxu0 %v3441
        %3464 = vmatprep.subr.bf16.mxu0 0
        %3465 = vmatpush1.bf16.msra.mxu0 %v3440
        %3466 = vmatprep.subr.bf16.mxu0 0
        %3467 = vmatpush1.bf16.msra.mxu0 %v3439
        %3468 = vmatprep.subr.bf16.mxu0 0
        %3469 = vmatpush1.bf16.msra.mxu0 %v3438
        %3470 = vmatprep.subr.bf16.mxu0 0
        %3471 = vmatpush2.bf16.msra.mxu0 0
        %3472 = vmatprep.subr.bf16.mxu0 0
        %3473 = vmatpush2.bf16.msra.mxu0 0
        %3474 = vmatprep.subr.bf16.mxu0 0
        %3475 = vmatpush2.bf16.msra.mxu0 0
        %3476 = vmatprep.subr.bf16.mxu0 0
        %3477 = vmatpush2.bf16.msra.mxu0 0
        %3478 = vmatprep.subr.bf16.mxu0 0
        %3479 = vmatpush2.bf16.msra.mxu0 0
        %3480 = vmatprep.subr.bf16.mxu0 0
        %3481 = vmatpush2.bf16.msra.mxu0 0
        %3482 = vmatprep.subr.bf16.mxu0 0
        %3483 = vmatpush2.bf16.msra.mxu0 0
        %3484 = vmatprep.subr.bf16.mxu0 0
        %3485 = vmatpush2.bf16.msra.mxu0 0
        %3486 = vmatprep.mubr.bf16.mxu0 0
        %3487 = vmatmul.mubr.bf16.gmra.mxu0 %v3390
        %v3488 = vpop.f32.mrf.mxu0
        %v3489 = vadd.f32 0.0, %v3488
        %v3490 = vpop.f32.mrf.mxu0
        %v3491 = vpop.f32.mrf.mxu0
        %v3492 = vadd.f32 0.0, %v3491
        %v3493 = vpop.f32.mrf.mxu0
        %3494 = vmatprep.mubr.bf16.mxu0 0
        %3495 = vmatmul.mubr.bf16.gmra.mxu0 %v3391
        %v3496 = vpop.f32.mrf.mxu0
        %v3497 = vadd.f32 0.0, %v3496
        %v3498 = vpop.f32.mrf.mxu0
        %v3499 = vpop.f32.mrf.mxu0
        %v3500 = vadd.f32 0.0, %v3499
        %v3501 = vpop.f32.mrf.mxu0
        %3502 = vmatprep.mubr.bf16.mxu0 0
        %3503 = vmatmul.mubr.bf16.gmra.mxu0 %v3392
        %v3504 = vpop.f32.mrf.mxu0
        %v3505 = vadd.f32 0.0, %v3504
        %v3506 = vpop.f32.mrf.mxu0
        %v3507 = vpop.f32.mrf.mxu0
        %v3508 = vadd.f32 0.0, %v3507
        %v3509 = vpop.f32.mrf.mxu0
        %3510 = vmatprep.mubr.bf16.mxu0 0
        %3511 = vmatmul.mubr.bf16.gmra.mxu0 %v3393
        %v3512 = vpop.f32.mrf.mxu0
        %v3513 = vadd.f32 0.0, %v3512
        %v3514 = vpop.f32.mrf.mxu0
        %v3515 = vpop.f32.mrf.mxu0
        %v3516 = vadd.f32 0.0, %v3515
        %v3517 = vpop.f32.mrf.mxu0
        %3518 = vmatprep.mubr.bf16.mxu0 0
        %3519 = vmatmul.mubr.bf16.gmra.mxu0 %v3394
        %v3520 = vpop.f32.mrf.mxu0
        %v3521 = vadd.f32 0.0, %v3520
        %v3522 = vpop.f32.mrf.mxu0
        %v3523 = vpop.f32.mrf.mxu0
        %v3524 = vadd.f32 0.0, %v3523
        %v3525 = vpop.f32.mrf.mxu0
        %3526 = vmatprep.mubr.bf16.mxu0 0
        %3527 = vmatmul.mubr.bf16.gmra.mxu0 %v3395
        %v3528 = vpop.f32.mrf.mxu0
        %v3529 = vadd.f32 0.0, %v3528
        %v3530 = vpop.f32.mrf.mxu0
        %v3531 = vpop.f32.mrf.mxu0
        %v3532 = vadd.f32 0.0, %v3531
        %v3533 = vpop.f32.mrf.mxu0
        %3534 = vmatprep.mubr.bf16.mxu0 0
        %3535 = vmatmul.mubr.bf16.gmra.mxu0 %v3396
        %v3536 = vpop.f32.mrf.mxu0
        %v3537 = vadd.f32 0.0, %v3536
        %v3538 = vpop.f32.mrf.mxu0
        %v3539 = vpop.f32.mrf.mxu0
        %v3540 = vadd.f32 0.0, %v3539
        %v3541 = vpop.f32.mrf.mxu0
        %3542 = vmatprep.mubr.bf16.mxu0 0
        %3543 = vmatmul.mubr.bf16.gmra.mxu0 %v3397
        %v3544 = vpop.f32.mrf.mxu0
        %v3545 = vadd.f32 0.0, %v3544
        %v3546 = vpop.f32.mrf.mxu0
        %v3547 = vpop.f32.mrf.mxu0
        %v3548 = vadd.f32 0.0, %v3547
        %v3549 = vpop.f32.mrf.mxu0
        %3550 = vdwg.mxu0
        %v3551 = vadd.f32 %v3237, %v3489
        %v3552 = vadd.f32 %v3238, %v3492
        %v3553 = vadd.f32 %v3239, %v3497
        %v3554 = vadd.f32 %v3240, %v3500
        %v3555 = vadd.f32 %v3241, %v3505
        %v3556 = vadd.f32 %v3242, %v3508
        %v3557 = vadd.f32 %v3243, %v3513
        %v3558 = vadd.f32 %v3244, %v3516
        %v3559 = vadd.f32 %v3245, %v3521
        %v3560 = vadd.f32 %v3246, %v3524
        %v3561 = vadd.f32 %v3247, %v3529
        %v3562 = vadd.f32 %v3248, %v3532
        %v3563 = vadd.f32 %v3249, %v3537
        %v3564 = vadd.f32 %v3250, %v3540
        %v3565 = vadd.f32 %v3251, %v3545
        %v3566 = vadd.f32 %v3252, %v3548
        %v3567 = vld [vmem:[%s3010] sm:$0xc]
        %v3568 = vld [vmem:[%s3010 + $0x8] sm:$0x3]
        %v3569 = vld [vmem:[%s3010 + $0xc] sm:$0xc]
        %v3570 = vld [vmem:[%s3010 + $0x14] sm:$0x3]
        %v3571 = vld [vmem:[%s3010 + $0x18] sm:$0xc]
        %v3572 = vld [vmem:[%s3010 + $0x20] sm:$0x3]
        %v3573 = vld [vmem:[%s3010 + $0x24] sm:$0xc]
        %v3574 = vld [vmem:[%s3010 + $0x2c] sm:$0x3]
        %v3575 = vld [vmem:[%s3010 + $0x30] sm:$0xc]
        %v3576 = vld [vmem:[%s3010 + $0x38] sm:$0x3]
        %v3577 = vld [vmem:[%s3010 + $0x3c] sm:$0xc]
        %v3578 = vld [vmem:[%s3010 + $0x44] sm:$0x3]
        %v3579 = vld [vmem:[%s3010 + $0x48] sm:$0xc]
        %v3580 = vld [vmem:[%s3010 + $0x50] sm:$0x3]
        %v3581 = vld [vmem:[%s3010 + $0x54] sm:$0xc]
        %v3582 = vld [vmem:[%s3010 + $0x5c] sm:$0x3]
        %v3599 = vrot.slane %v3567, 6
        %v3600 = vrot.slane %v3599, 4
        %v3601 = vrot.slane %v3254, 6
        %v3602 = vsel %vm1888, %v3600, %v3601
        %v3603 = vrot.slane %v3601, 4
        %v3604 = vrot.slane %v3568, 6
        %v3605 = vsel %vm1888, %v3603, %v3604
        %v3606 = vrot.slane %v3569, 6
        %v3607 = vrot.slane %v3606, 4
        %v3608 = vrot.slane %v3257, 6
        %v3609 = vsel %vm1888, %v3607, %v3608
        %v3610 = vrot.slane %v3608, 4
        %v3611 = vrot.slane %v3570, 6
        %v3612 = vsel %vm1888, %v3610, %v3611
        %v3613 = vrot.slane %v3571, 6
        %v3614 = vrot.slane %v3613, 4
        %v3615 = vrot.slane %v3260, 6
        %v3616 = vsel %vm1888, %v3614, %v3615
        %v3617 = vrot.slane %v3615, 4
        %v3618 = vrot.slane %v3572, 6
        %v3619 = vsel %vm1888, %v3617, %v3618
        %v3620 = vrot.slane %v3573, 6
        %v3621 = vrot.slane %v3620, 4
        %v3622 = vrot.slane %v3263, 6
        %v3623 = vsel %vm1888, %v3621, %v3622
        %v3624 = vrot.slane %v3622, 4
        %v3625 = vrot.slane %v3574, 6
        %v3626 = vsel %vm1888, %v3624, %v3625
        %v3627 = vrot.slane %v3575, 6
        %v3628 = vrot.slane %v3627, 4
        %v3629 = vrot.slane %v3266, 6
        %v3630 = vsel %vm1888, %v3628, %v3629
        %v3631 = vrot.slane %v3629, 4
        %v3632 = vrot.slane %v3576, 6
        %v3633 = vsel %vm1888, %v3631, %v3632
        %v3634 = vrot.slane %v3577, 6
        %v3635 = vrot.slane %v3634, 4
        %v3636 = vrot.slane %v3269, 6
        %v3637 = vsel %vm1888, %v3635, %v3636
        %v3638 = vrot.slane %v3636, 4
        %v3639 = vrot.slane %v3578, 6
        %v3640 = vsel %vm1888, %v3638, %v3639
        %v3641 = vrot.slane %v3579, 6
        %v3642 = vrot.slane %v3641, 4
        %v3643 = vrot.slane %v3272, 6
        %v3644 = vsel %vm1888, %v3642, %v3643
        %v3645 = vrot.slane %v3643, 4
        %v3646 = vrot.slane %v3580, 6
        %v3647 = vsel %vm1888, %v3645, %v3646
        %v3648 = vrot.slane %v3581, 6
        %v3649 = vrot.slane %v3648, 4
        %v3650 = vrot.slane %v3275, 6
        %v3651 = vsel %vm1888, %v3649, %v3650
        %v3652 = vrot.slane %v3650, 4
        %v3653 = vrot.slane %v3582, 6
        %v3654 = vsel %vm1888, %v3652, %v3653
        %s3655 = scalar_lea.vmem [#allocation8], 512
        %v3656 = vld [vmem:[%s3655] sm:$0xf]
        %v3657 = vld [vmem:[%s3655 + $0x4] sm:$0xf]
        %v3658 = vld [vmem:[%s3655 + $0x8] sm:$0xf]
        %v3659 = vld [vmem:[%s3655 + $0xc] sm:$0xf]
        %v3660 = vld [vmem:[%s3655 + $0x10] sm:$0xf]
        %v3661 = vld [vmem:[%s3655 + $0x14] sm:$0xf]
        %v3662 = vld [vmem:[%s3655 + $0x18] sm:$0xf]
        %v3663 = vld [vmem:[%s3655 + $0x1c] sm:$0xf]
        %v3664 = vld [vmem:[%s3655 + $0x20] sm:$0xf]
        %v3665 = vld [vmem:[%s3655 + $0x24] sm:$0xf]
        %v3666 = vld [vmem:[%s3655 + $0x28] sm:$0xf]
        %v3667 = vld [vmem:[%s3655 + $0x2c] sm:$0xf]
        %v3668 = vld [vmem:[%s3655 + $0x30] sm:$0xf]
        %v3669 = vld [vmem:[%s3655 + $0x34] sm:$0xf]
        %v3670 = vld [vmem:[%s3655 + $0x38] sm:$0xf]
        %v3671 = vld [vmem:[%s3655 + $0x3c] sm:$0xf]
        %v3672 = vunpack.c.l.b16 %v3602
        %v3673 = vunpack.c.l.b16 %v3605
        %v3674 = vunpack.c.l.b16 %v3609
        %v3675 = vunpack.c.l.b16 %v3612
        %v3676 = vunpack.c.l.b16 %v3616
        %v3677 = vunpack.c.l.b16 %v3619
        %v3678 = vunpack.c.l.b16 %v3623
        %v3679 = vunpack.c.l.b16 %v3626
        %v3680 = vunpack.c.l.b16 %v3630
        %v3681 = vunpack.c.l.b16 %v3633
        %v3682 = vunpack.c.l.b16 %v3637
        %v3683 = vunpack.c.l.b16 %v3640
        %v3684 = vunpack.c.l.b16 %v3644
        %v3685 = vunpack.c.l.b16 %v3647
        %v3686 = vunpack.c.l.b16 %v3651
        %v3687 = vunpack.c.l.b16 %v3654
        %v3688 = vpack.c.b16 %v3673, %v3672
        %v3689 = vpack.c.b16 %v3675, %v3674
        %v3690 = vpack.c.b16 %v3677, %v3676
        %v3691 = vpack.c.b16 %v3679, %v3678
        %v3692 = vpack.c.b16 %v3681, %v3680
        %v3693 = vpack.c.b16 %v3683, %v3682
        %v3694 = vpack.c.b16 %v3685, %v3684
        %v3695 = vpack.c.b16 %v3687, %v3686
        %v3720 = vunpack.c.l.b16 %v3656
        %v3721 = vunpack.c.l.b16 %v3657
        %v3722 = vunpack.c.l.b16 %v3658
        %v3723 = vunpack.c.l.b16 %v3659
        %v3724 = vunpack.c.l.b16 %v3660
        %v3725 = vunpack.c.l.b16 %v3661
        %v3726 = vunpack.c.l.b16 %v3662
        %v3727 = vunpack.c.l.b16 %v3663
        %v3728 = vunpack.c.l.b16 %v3664
        %v3729 = vunpack.c.l.b16 %v3665
        %v3730 = vunpack.c.l.b16 %v3666
        %v3731 = vunpack.c.l.b16 %v3667
        %v3732 = vunpack.c.l.b16 %v3668
        %v3733 = vunpack.c.l.b16 %v3669
        %v3734 = vunpack.c.l.b16 %v3670
        %v3735 = vunpack.c.l.b16 %v3671
        %v3736 = vpack.c.b16 %v3721, %v3720
        %v3737 = vpack.c.b16 %v3723, %v3722
        %v3738 = vpack.c.b16 %v3725, %v3724
        %v3739 = vpack.c.b16 %v3727, %v3726
        %v3740 = vpack.c.b16 %v3729, %v3728
        %v3741 = vpack.c.b16 %v3731, %v3730
        %v3742 = vpack.c.b16 %v3733, %v3732
        %v3743 = vpack.c.b16 %v3735, %v3734
        %3752 = vmatprep.subr.bf16.mxu0 0
        %3753 = vmatpush1.bf16.msra.mxu0 %v3743
        %3754 = vmatprep.subr.bf16.mxu0 0
        %3755 = vmatpush1.bf16.msra.mxu0 %v3742
        %3756 = vmatprep.subr.bf16.mxu0 0
        %3757 = vmatpush1.bf16.msra.mxu0 %v3741
        %3758 = vmatprep.subr.bf16.mxu0 0
        %3759 = vmatpush1.bf16.msra.mxu0 %v3740
        %3760 = vmatprep.subr.bf16.mxu0 0
        %3761 = vmatpush1.bf16.msra.mxu0 %v3739
        %3762 = vmatprep.subr.bf16.mxu0 0
        %3763 = vmatpush1.bf16.msra.mxu0 %v3738
        %3764 = vmatprep.subr.bf16.mxu0 0
        %3765 = vmatpush1.bf16.msra.mxu0 %v3737
        %3766 = vmatprep.subr.bf16.mxu0 0
        %3767 = vmatpush1.bf16.msra.mxu0 %v3736
        %3768 = vmatprep.subr.bf16.mxu0 0
        %3769 = vmatpush2.bf16.msra.mxu0 0
        %3770 = vmatprep.subr.bf16.mxu0 0
        %3771 = vmatpush2.bf16.msra.mxu0 0
        %3772 = vmatprep.subr.bf16.mxu0 0
        %3773 = vmatpush2.bf16.msra.mxu0 0
        %3774 = vmatprep.subr.bf16.mxu0 0
        %3775 = vmatpush2.bf16.msra.mxu0 0
        %3776 = vmatprep.subr.bf16.mxu0 0
        %3777 = vmatpush2.bf16.msra.mxu0 0
        %3778 = vmatprep.subr.bf16.mxu0 0
        %3779 = vmatpush2.bf16.msra.mxu0 0
        %3780 = vmatprep.subr.bf16.mxu0 0
        %3781 = vmatpush2.bf16.msra.mxu0 0
        %3782 = vmatprep.subr.bf16.mxu0 0
        %3783 = vmatpush2.bf16.msra.mxu0 0
        %3784 = vmatprep.mubr.bf16.mxu0 0
        %3785 = vmatmul.mubr.bf16.gmra.mxu0 %v3688
        %v3786 = vpop.f32.mrf.mxu0
        %v3787 = vadd.f32 0.0, %v3786
        %v3788 = vpop.f32.mrf.mxu0
        %v3789 = vpop.f32.mrf.mxu0
        %v3790 = vadd.f32 0.0, %v3789
        %v3791 = vpop.f32.mrf.mxu0
        %3792 = vmatprep.mubr.bf16.mxu0 0
        %3793 = vmatmul.mubr.bf16.gmra.mxu0 %v3689
        %v3794 = vpop.f32.mrf.mxu0
        %v3795 = vadd.f32 0.0, %v3794
        %v3796 = vpop.f32.mrf.mxu0
        %v3797 = vpop.f32.mrf.mxu0
        %v3798 = vadd.f32 0.0, %v3797
        %v3799 = vpop.f32.mrf.mxu0
        %3800 = vmatprep.mubr.bf16.mxu0 0
        %3801 = vmatmul.mubr.bf16.gmra.mxu0 %v3690
        %v3802 = vpop.f32.mrf.mxu0
        %v3803 = vadd.f32 0.0, %v3802
        %v3804 = vpop.f32.mrf.mxu0
        %v3805 = vpop.f32.mrf.mxu0
        %v3806 = vadd.f32 0.0, %v3805
        %v3807 = vpop.f32.mrf.mxu0
        %3808 = vmatprep.mubr.bf16.mxu0 0
        %3809 = vmatmul.mubr.bf16.gmra.mxu0 %v3691
        %v3810 = vpop.f32.mrf.mxu0
        %v3811 = vadd.f32 0.0, %v3810
        %v3812 = vpop.f32.mrf.mxu0
        %v3813 = vpop.f32.mrf.mxu0
        %v3814 = vadd.f32 0.0, %v3813
        %v3815 = vpop.f32.mrf.mxu0
        %3816 = vmatprep.mubr.bf16.mxu0 0
        %3817 = vmatmul.mubr.bf16.gmra.mxu0 %v3692
        %v3818 = vpop.f32.mrf.mxu0
        %v3819 = vadd.f32 0.0, %v3818
        %v3820 = vpop.f32.mrf.mxu0
        %v3821 = vpop.f32.mrf.mxu0
        %v3822 = vadd.f32 0.0, %v3821
        %v3823 = vpop.f32.mrf.mxu0
        %3824 = vmatprep.mubr.bf16.mxu0 0
        %3825 = vmatmul.mubr.bf16.gmra.mxu0 %v3693
        %v3826 = vpop.f32.mrf.mxu0
        %v3827 = vadd.f32 0.0, %v3826
        %v3828 = vpop.f32.mrf.mxu0
        %v3829 = vpop.f32.mrf.mxu0
        %v3830 = vadd.f32 0.0, %v3829
        %v3831 = vpop.f32.mrf.mxu0
        %3832 = vmatprep.mubr.bf16.mxu0 0
        %3833 = vmatmul.mubr.bf16.gmra.mxu0 %v3694
        %v3834 = vpop.f32.mrf.mxu0
        %v3835 = vadd.f32 0.0, %v3834
        %v3836 = vpop.f32.mrf.mxu0
        %v3837 = vpop.f32.mrf.mxu0
        %v3838 = vadd.f32 0.0, %v3837
        %v3839 = vpop.f32.mrf.mxu0
        %3840 = vmatprep.mubr.bf16.mxu0 0
        %3841 = vmatmul.mubr.bf16.gmra.mxu0 %v3695
        %v3842 = vpop.f32.mrf.mxu0
        %v3843 = vadd.f32 0.0, %v3842
        %v3844 = vpop.f32.mrf.mxu0
        %v3845 = vpop.f32.mrf.mxu0
        %v3846 = vadd.f32 0.0, %v3845
        %v3847 = vpop.f32.mrf.mxu0
        %3848 = vdwg.mxu0
        %v3849 = vadd.f32 %v3551, %v3787
        %v3850 = vadd.f32 %v3552, %v3790
        %v3851 = vadd.f32 %v3553, %v3795
        %v3852 = vadd.f32 %v3554, %v3798
        %v3853 = vadd.f32 %v3555, %v3803
        %v3854 = vadd.f32 %v3556, %v3806
        %v3855 = vadd.f32 %v3557, %v3811
        %v3856 = vadd.f32 %v3558, %v3814
        %v3857 = vadd.f32 %v3559, %v3819
        %v3858 = vadd.f32 %v3560, %v3822
        %v3859 = vadd.f32 %v3561, %v3827
        %v3860 = vadd.f32 %v3562, %v3830
        %v3861 = vadd.f32 %v3563, %v3835
        %v3862 = vadd.f32 %v3564, %v3838
        %v3863 = vadd.f32 %v3565, %v3843
        %v3864 = vadd.f32 %v3566, %v3846
        %v3865 = vld [vmem:[%s7] sm:$0x1]
        %v3867 = vlaneseq
        %v3868 = vshrl.u32 %v3867, 7
        %v3869 = vsub.s32 0, %v3868
        %v3870 = vrot.slane %v3865, %v3869
        %v3872 = vmul.f32 %v3849, %v3870
        %v3873 = vmul.f32 %v3850, %v3870
        %v3874 = vmul.f32 %v3851, %v3870
        %v3875 = vmul.f32 %v3852, %v3870
        %v3876 = vmul.f32 %v3853, %v3870
        %v3877 = vmul.f32 %v3854, %v3870
        %v3878 = vmul.f32 %v3855, %v3870
        %v3879 = vmul.f32 %v3856, %v3870
        %v3880 = vmul.f32 %v3857, %v3870
        %v3881 = vmul.f32 %v3858, %v3870
        %v3882 = vmul.f32 %v3859, %v3870
        %v3883 = vmul.f32 %v3860, %v3870
        %v3884 = vmul.f32 %v3861, %v3870
        %v3885 = vmul.f32 %v3862, %v3870
        %v3886 = vmul.f32 %v3863, %v3870
        %v3887 = vmul.f32 %v3864, %v3870
        %v3888 = vld [vmem:[%s8] sm:$0x1]
        %v3890 = vlaneseq
        %v3891 = vshrl.u32 %v3890, 7
        %v3892 = vsub.s32 0, %v3891
        %v3893 = vrot.slane %v3888, %v3892
        %v3895 = vadd.f32 %v3872, %v3893
        %v3896 = vadd.f32 %v3873, %v3893
        %v3897 = vadd.f32 %v3874, %v3893
        %v3898 = vadd.f32 %v3875, %v3893
        %v3899 = vadd.f32 %v3876, %v3893
        %v3900 = vadd.f32 %v3877, %v3893
        %v3901 = vadd.f32 %v3878, %v3893
        %v3902 = vadd.f32 %v3879, %v3893
        %v3903 = vadd.f32 %v3880, %v3893
        %v3904 = vadd.f32 %v3881, %v3893
        %v3905 = vadd.f32 %v3882, %v3893
        %v3906 = vadd.f32 %v3883, %v3893
        %v3907 = vadd.f32 %v3884, %v3893
        %v3908 = vadd.f32 %v3885, %v3893
        %v3909 = vadd.f32 %v3886, %v3893
        %v3910 = vadd.f32 %v3887, %v3893
        %v3911 = vmax.f32 %v3895, 0.0
        %v3912 = vmax.f32 %v3896, 0.0
        %v3913 = vmax.f32 %v3897, 0.0
        %v3914 = vmax.f32 %v3898, 0.0
        %v3915 = vmax.f32 %v3899, 0.0
        %v3916 = vmax.f32 %v3900, 0.0
        %v3917 = vmax.f32 %v3901, 0.0
        %v3918 = vmax.f32 %v3902, 0.0
        %v3919 = vmax.f32 %v3903, 0.0
        %v3920 = vmax.f32 %v3904, 0.0
        %v3921 = vmax.f32 %v3905, 0.0
        %v3922 = vmax.f32 %v3906, 0.0
        %v3923 = vmax.f32 %v3907, 0.0
        %v3924 = vmax.f32 %v3908, 0.0
        %v3925 = vmax.f32 %v3909, 0.0
        %v3926 = vmax.f32 %v3910, 0.0
        %v3927 = vpack.c.bf16 %v3912, %v3911
        %v3928 = vpack.c.bf16 %v3914, %v3913
        %v3929 = vpack.c.bf16 %v3916, %v3915
        %v3930 = vpack.c.bf16 %v3918, %v3917
        %v3931 = vpack.c.bf16 %v3920, %v3919
        %v3932 = vpack.c.bf16 %v3922, %v3921
        %v3933 = vpack.c.bf16 %v3924, %v3923
        %v3934 = vpack.c.bf16 %v3926, %v3925
        %v3935 = vld [vmem:[#allocation10] sm:$0xf]
        %v3936 = vld [vmem:[#allocation10 + $0x4] sm:$0xf]
        %v3937 = vld [vmem:[#allocation10 + $0x8] sm:$0xf]
        %v3938 = vld [vmem:[#allocation10 + $0xc] sm:$0xf]
        %v3939 = vld [vmem:[#allocation10 + $0x10] sm:$0xf]
        %v3940 = vld [vmem:[#allocation10 + $0x14] sm:$0xf]
        %v3941 = vld [vmem:[#allocation10 + $0x18] sm:$0xf]
        %v3942 = vld [vmem:[#allocation10 + $0x1c] sm:$0xf]
        %v3943 = vld [vmem:[#allocation10 + $0x20] sm:$0xf]
        %v3944 = vld [vmem:[#allocation10 + $0x24] sm:$0xf]
        %v3945 = vld [vmem:[#allocation10 + $0x28] sm:$0xf]
        %v3946 = vld [vmem:[#allocation10 + $0x2c] sm:$0xf]
        %v3947 = vld [vmem:[#allocation10 + $0x30] sm:$0xf]
        %v3948 = vld [vmem:[#allocation10 + $0x34] sm:$0xf]
        %v3949 = vld [vmem:[#allocation10 + $0x38] sm:$0xf]
        %v3950 = vld [vmem:[#allocation10 + $0x3c] sm:$0xf]
        %v3967 = vunpack.c.l.b16 %v3935
        %v3968 = vunpack.c.l.b16 %v3936
        %v3969 = vunpack.c.l.b16 %v3937
        %v3970 = vunpack.c.l.b16 %v3938
        %v3971 = vunpack.c.l.b16 %v3939
        %v3972 = vunpack.c.l.b16 %v3940
        %v3973 = vunpack.c.l.b16 %v3941
        %v3974 = vunpack.c.l.b16 %v3942
        %v3975 = vunpack.c.l.b16 %v3943
        %v3976 = vunpack.c.l.b16 %v3944
        %v3977 = vunpack.c.l.b16 %v3945
        %v3978 = vunpack.c.l.b16 %v3946
        %v3979 = vunpack.c.l.b16 %v3947
        %v3980 = vunpack.c.l.b16 %v3948
        %v3981 = vunpack.c.l.b16 %v3949
        %v3982 = vunpack.c.l.b16 %v3950
        %v3983 = vpack.c.b16 %v3968, %v3967
        %v3984 = vpack.c.b16 %v3970, %v3969
        %v3985 = vpack.c.b16 %v3972, %v3971
        %v3986 = vpack.c.b16 %v3974, %v3973
        %v3987 = vpack.c.b16 %v3976, %v3975
        %v3988 = vpack.c.b16 %v3978, %v3977
        %v3989 = vpack.c.b16 %v3980, %v3979
        %v3990 = vpack.c.b16 %v3982, %v3981
        %3999 = vmatprep.subr.bf16.mxu0 0
        %4000 = vmatpush1.bf16.msra.mxu0 %v3990
        %4001 = vmatprep.subr.bf16.mxu0 0
        %4002 = vmatpush1.bf16.msra.mxu0 %v3989
        %4003 = vmatprep.subr.bf16.mxu0 0
        %4004 = vmatpush1.bf16.msra.mxu0 %v3988
        %4005 = vmatprep.subr.bf16.mxu0 0
        %4006 = vmatpush1.bf16.msra.mxu0 %v3987
        %4007 = vmatprep.subr.bf16.mxu0 0
        %4008 = vmatpush1.bf16.msra.mxu0 %v3986
        %4009 = vmatprep.subr.bf16.mxu0 0
        %4010 = vmatpush1.bf16.msra.mxu0 %v3985
        %4011 = vmatprep.subr.bf16.mxu0 0
        %4012 = vmatpush1.bf16.msra.mxu0 %v3984
        %4013 = vmatprep.subr.bf16.mxu0 0
        %4014 = vmatpush1.bf16.msra.mxu0 %v3983
        %4015 = vmatprep.subr.bf16.mxu0 0
        %4016 = vmatpush2.bf16.msra.mxu0 0
        %4017 = vmatprep.subr.bf16.mxu0 0
        %4018 = vmatpush2.bf16.msra.mxu0 0
        %4019 = vmatprep.subr.bf16.mxu0 0
        %4020 = vmatpush2.bf16.msra.mxu0 0
        %4021 = vmatprep.subr.bf16.mxu0 0
        %4022 = vmatpush2.bf16.msra.mxu0 0
        %4023 = vmatprep.subr.bf16.mxu0 0
        %4024 = vmatpush2.bf16.msra.mxu0 0
        %4025 = vmatprep.subr.bf16.mxu0 0
        %4026 = vmatpush2.bf16.msra.mxu0 0
        %4027 = vmatprep.subr.bf16.mxu0 0
        %4028 = vmatpush2.bf16.msra.mxu0 0
        %4029 = vmatprep.subr.bf16.mxu0 0
        %4030 = vmatpush2.bf16.msra.mxu0 0
        %4031 = vmatprep.mubr.bf16.mxu0 0
        %4032 = vmatmul.mubr.bf16.gmra.mxu0 %v3927
        %v4033 = vpop.f32.mrf.mxu0
        %v4034 = vadd.f32 %v752, %v4033
        %v4035 = vpop.f32.mrf.mxu0
        %v4036 = vpop.f32.mrf.mxu0
        %v4037 = vadd.f32 %v755, %v4036
        %v4038 = vpop.f32.mrf.mxu0
        %4039 = vmatprep.mubr.bf16.mxu0 0
        %4040 = vmatmul.mubr.bf16.gmra.mxu0 %v3928
        %v4041 = vpop.f32.mrf.mxu0
        %v4042 = vadd.f32 %v760, %v4041
        %v4043 = vpop.f32.mrf.mxu0
        %v4044 = vpop.f32.mrf.mxu0
        %v4045 = vadd.f32 %v763, %v4044
        %v4046 = vpop.f32.mrf.mxu0
        %4047 = vmatprep.mubr.bf16.mxu0 0
        %4048 = vmatmul.mubr.bf16.gmra.mxu0 %v3929
        %v4049 = vpop.f32.mrf.mxu0
        %v4050 = vadd.f32 %v768, %v4049
        %v4051 = vpop.f32.mrf.mxu0
        %v4052 = vpop.f32.mrf.mxu0
        %v4053 = vadd.f32 %v771, %v4052
        %v4054 = vpop.f32.mrf.mxu0
        %4055 = vmatprep.mubr.bf16.mxu0 0
        %4056 = vmatmul.mubr.bf16.gmra.mxu0 %v3930
        %v4057 = vpop.f32.mrf.mxu0
        %v4058 = vadd.f32 %v776, %v4057
        %v4059 = vpop.f32.mrf.mxu0
        %v4060 = vpop.f32.mrf.mxu0
        %v4061 = vadd.f32 %v779, %v4060
        %v4062 = vpop.f32.mrf.mxu0
        %4063 = vmatprep.mubr.bf16.mxu0 0
        %4064 = vmatmul.mubr.bf16.gmra.mxu0 %v3931
        %v4065 = vpop.f32.mrf.mxu0
        %v4066 = vadd.f32 %v784, %v4065
        %v4067 = vpop.f32.mrf.mxu0
        %v4068 = vpop.f32.mrf.mxu0
        %v4069 = vadd.f32 %v787, %v4068
        %v4070 = vpop.f32.mrf.mxu0
        %4071 = vmatprep.mubr.bf16.mxu0 0
        %4072 = vmatmul.mubr.bf16.gmra.mxu0 %v3932
        %v4073 = vpop.f32.mrf.mxu0
        %v4074 = vadd.f32 %v792, %v4073
        %v4075 = vpop.f32.mrf.mxu0
        %v4076 = vpop.f32.mrf.mxu0
        %v4077 = vadd.f32 %v795, %v4076
        %v4078 = vpop.f32.mrf.mxu0
        %4079 = vmatprep.mubr.bf16.mxu0 0
        %4080 = vmatmul.mubr.bf16.gmra.mxu0 %v3933
        %v4081 = vpop.f32.mrf.mxu0
        %v4082 = vadd.f32 %v800, %v4081
        %v4083 = vpop.f32.mrf.mxu0
        %v4084 = vpop.f32.mrf.mxu0
        %v4085 = vadd.f32 %v803, %v4084
        %v4086 = vpop.f32.mrf.mxu0
        %4087 = vmatprep.mubr.bf16.mxu0 0
        %4088 = vmatmul.mubr.bf16.gmra.mxu0 %v3934
        %v4089 = vpop.f32.mrf.mxu0
        %v4090 = vadd.f32 %v808, %v4089
        %v4091 = vpop.f32.mrf.mxu0
        %v4092 = vpop.f32.mrf.mxu0
        %v4093 = vadd.f32 %v811, %v4092
        %v4094 = vpop.f32.mrf.mxu0
        %4095 = vdwg.mxu0
        %4096 = vst [vmem:[%s444] sm:$0xff] %v4034
        %4097 = vst [vmem:[%s444 + $0x8] sm:$0xff] %v4037
        %4098 = vst [vmem:[%s444 + $0x10] sm:$0xff] %v4042
        %4099 = vst [vmem:[%s444 + $0x18] sm:$0xff] %v4045
        %4100 = vst [vmem:[%s444 + $0x20] sm:$0xff] %v4050
        %4101 = vst [vmem:[%s444 + $0x28] sm:$0xff] %v4053
        %4102 = vst [vmem:[%s444 + $0x30] sm:$0xff] %v4058
        %4103 = vst [vmem:[%s444 + $0x38] sm:$0xff] %v4061
        %4104 = vst [vmem:[%s444 + $0x40] sm:$0xff] %v4066
        %4105 = vst [vmem:[%s444 + $0x48] sm:$0xff] %v4069
        %4106 = vst [vmem:[%s444 + $0x50] sm:$0xff] %v4074
        %4107 = vst [vmem:[%s444 + $0x58] sm:$0xff] %v4077
        %4108 = vst [vmem:[%s444 + $0x60] sm:$0xff] %v4082
        %4109 = vst [vmem:[%s444 + $0x68] sm:$0xff] %v4085
        %4110 = vst [vmem:[%s444 + $0x70] sm:$0xff] %v4090
        %4111 = vst [vmem:[%s444 + $0x78] sm:$0xff] %v4093
        %s4112 = sand.u32 %s265, 1
        %s4113 = scalar_lea.sflag [#allocation7], %s4112
        %s4114 = sand.u32 %s265, 1
        %s4115 = smul.addr %s4114, 128
        %s4116 = scalar_lea.vmem [#allocation13], %s4115
        %s4117 = sand.u32 %s293, 1
        %s4118 = scalar_lea.sflag [#allocation15], %s4117
        %s4119 = sand.u32 %s293, 1
        %s4120 = smul.addr %s4119, 128
        %s4121 = scalar_lea.vmem [#allocation14], %s4120
        // Predicated region
        $region101: #{tpu_custom_call.1} parent=59 // pred_check
          %p4122 = pneg %p275
        $region102: #{tpu_custom_call.1} parent=59 // pred_check_branch
          %4124 = sbr.rel (%p4122) target = $region104
        $region103: #{tpu_custom_call.1} parent=59 // pred_region
          %s4125 = smul.u32 8, %s38
          %s4127 = ssub.s32 2048, 2048
          %4128 = vsyncadd %s4113, %s4127
          %s4129 = smul.addr %s4125, 2
          %s4130 = smul.addr %s37, 32
          %s4131 = sadd.s32 %s4129, %s4130
          %s4132 = smul.addr %s4131, 128
          %s4133 = scalar_lea.hbm %s11, %s4132
          %s4134 = sshll.u32 %s4116, 4
          %s4135 = int_to_ptr.vmem [resolvable:$true] %s4134
          %4140 = dma.vmem_to_hbm [thread:$0]  %s4135, 2048, %s4133, %s4113, 128, 128, 8
        $region104: #{tpu_custom_call.1} parent=59 // pred_fallthru
          _
        // Predicated region
        $region105: #{tpu_custom_call.1} parent=59 // pred_check
          %p4141 = pneg %p303
        $region106: #{tpu_custom_call.1} parent=59 // pred_check_branch
          %4143 = sbr.rel (%p4141) target = $region108
        $region107: #{tpu_custom_call.1} parent=59 // pred_region
          %s4144 = smul.u32 8, %s38
          %s4146 = ssub.s32 2048, 2048
          %4147 = vsyncadd %s4118, %s4146
          %s4148 = smul.addr %s4144, 2
          %s4149 = smul.addr %s37, 32
          %s4150 = sadd.s32 %s4148, %s4149
          %s4151 = smul.addr %s4150, 128
          %s4152 = scalar_lea.hbm %s12, %s4151
          %s4153 = sshll.u32 %s4121, 4
          %s4154 = int_to_ptr.vmem [resolvable:$true] %s4153
          %4159 = dma.vmem_to_hbm [thread:$0]  %s4154, 2048, %s4152, %s4118, 128, 128, 8
        $region108: #{tpu_custom_call.1} parent=59 // pred_fallthru
          _
      $region60: #{tpu_custom_call.1} parent=5 // pred_fallthru
        _
      %p4160 = scmp.le.s32.totalorder 2, %s28
      // Predicated region
      $region109: #{tpu_custom_call.1} parent=5 // pred_check
        %p4161 = pneg %p4160
      $region110: #{tpu_custom_call.1} parent=5 // pred_check_branch
        %4163 = sbr.rel (%p4161) target = $region112
      $region111: #{tpu_custom_call.1} parent=5 // pred_region
        %s4164 = ssub.s32 %s28, 2
        // Predicated region
        $region113: #{tpu_custom_call.1} parent=111 // pred_check
          %p4165 = pneg %p281
        $region114: #{tpu_custom_call.1} parent=111 // pred_check_branch
          %4167 = sbr.rel (%p4165) target = $region116
        $region115: #{tpu_custom_call.1} parent=111 // pred_region
          %s4168 = sand.u32 %s266, 1
          %s4169 = scalar_lea.sflag [#allocation7], %s4168
          %s4170 = sand.u32 %s266, 1
          %s4171 = smul.addr %s4170, 128
          %s4172 = scalar_lea.vmem [#allocation13], %s4171
          %4173 = dma.done %s4169, 2048
        $region116: #{tpu_custom_call.1} parent=111 // pred_fallthru
          _
        // Predicated region
        $region117: #{tpu_custom_call.1} parent=111 // pred_check
          %p4174 = pneg %p309
        $region118: #{tpu_custom_call.1} parent=111 // pred_check_branch
          %4176 = sbr.rel (%p4174) target = $region120
        $region119: #{tpu_custom_call.1} parent=111 // pred_region
          %s4177 = sand.u32 %s294, 1
          %s4178 = scalar_lea.sflag [#allocation15], %s4177
          %s4179 = sand.u32 %s294, 1
          %s4180 = smul.addr %s4179, 128
          %s4181 = scalar_lea.vmem [#allocation14], %s4180
          %4182 = dma.done %s4178, 2048
        $region120: #{tpu_custom_call.1} parent=111 // pred_fallthru
          _
      $region112: #{tpu_custom_call.1} parent=5 // pred_fallthru
        _
    $region6: #{tpu_custom_call.1} parent=1 // loop_footer
      %s32 = sadd.s32 1, %s28
    $region7: #{tpu_custom_call.1} parent=1 // loop_footer_branch
      %27 = sbr.rel target = $region3
    $region8: #{tpu_custom_call.1} parent=1 // loop_exit
      _
    %4183 = vsyncpa [#allocation6], 1
    %s4184 = scalar_lea.sflag [#allocation6], 1
    %4185 = vsyncpa %s4184, 1
    %4186 = vsyncpa [#allocation9], 1
    %4187 = vsyncpa [#allocation12], 1
    %4188 = vsyncpa [#allocation7], 1
    %s4189 = scalar_lea.sflag [#allocation7], 1
    %4190 = vsyncpa %s4189, 1
    %4191 = vsyncpa [#allocation15], 1
    %s4192 = scalar_lea.sflag [#allocation15], 1
    %4193 = vsyncpa %s4192, 1
  %4194 = vsyncmov [#allocation3]
  %s4195 = vpop.sfrf %4194
  %p4196 = scmp.eq.s32.totalorder %s4195, 0
  %p4197 = pneg %p4196
  %4199 = shalt.err (%p4197)
  %s4200 = scalar_lea.sflag [#allocation3], 1
  %4201 = vsyncmov %s4200
  %s4202 = vpop.sfrf %4201
  %p4203 = scmp.eq.s32.totalorder %s4202, 0
  %p4204 = pneg %p4203
  %4206 = shalt.err (%p4204)

</llo_original>
